<compile_context>
chip_gen: v7x
topology: tpu7x:2x2x1
jax: 0.10.0
libtpu: 0.0.40
codegen_flags: <defaults>
</compile_context>

<pallas_src>
import functools

import jax
import jax.numpy as jnp
import numpy as np
from jax import lax
from jax.experimental import pallas as pl
from jax.experimental.pallas import tpu as pltpu


def _round_up(x, m):
    return (x + m - 1) // m * m


# ----------------------------------------------------------------------------
# Fused Pallas kernel: all reservoir layers, each embedded to convergence
# ----------------------------------------------------------------------------
def _fused_reservoir_kernel(adj_ref, u0_ref, win_t_ref, wrec_t_ref, bias_ref,
                            out_ref, *, num_layers, num_real_nodes, leakage,
                            eps_sq, num_trips):
    n_pad, d_pad = out_ref.shape[1], out_ref.shape[2]

    # Row mask for the convergence norm when nodes were padded, so the
    # Frobenius-norm stopping criterion matches the unpadded reference.
    if n_pad != num_real_nodes:
        rows = lax.broadcasted_iota(jnp.int32, (n_pad, d_pad), 0)
        row_mask = (rows < num_real_nodes).astype(jnp.float32)
    else:
        row_mask = None

    for layer in range(num_layers):
        # Layer input: padded graph signal for layer 0, previous layer's
        # VMEM-resident embedding afterwards (no HBM round-trip).
        u = u0_ref[...] if layer == 0 else out_ref[layer - 1]

        # Input-dependent term is invariant across the fixed-point iteration.
        inp_part = jnp.dot(u, win_t_ref[layer],
                           preferred_element_type=jnp.float32) + bias_ref[layer]

        # Zero initial state (module default); iterate directly on the
        # VMEM-resident output block -- no extra scratch, no final copy.
        out_ref[layer] = jnp.zeros((n_pad, d_pad), jnp.float32)

        def body(_, done, layer=layer, inp_part=inp_part):
            old = out_ref[layer]
            # Neighbour "add" aggregation: A @ state.  Refs are re-read each
            # iteration (cheap VMEM loads) to keep vreg pressure low.
            nagg = jnp.dot(adj_ref[...], old,
                           preferred_element_type=jnp.float32)
            pre = inp_part + jnp.dot(nagg, wrec_t_ref[layer],
                                     preferred_element_type=jnp.float32)
            new = leakage * jnp.tanh(pre) + (1.0 - leakage) * old
            diff = old - new if row_mask is None else (old - new) * row_mask
            ss = jnp.sum(diff * diff)            # squared Frobenius norm
            # Once converged, freeze the state: the reference returns the
            # state computed at the iteration where convergence fired.
            out_ref[layer] = jnp.where(done, old, new)
            return jnp.logical_or(done, ss < eps_sq)

        # Fixed trip count = max_iterations + 1 applications, exactly the
        # reference while-loop's behaviour; unrolled so the scheduler can
        # overlap matmul i+1 with the convergence reduce of iteration i.
        lax.fori_loop(0, num_trips, body, jnp.zeros((), jnp.bool_),
                      unroll=True)


# ----------------------------------------------------------------------------
# StaticGraphReservoir forward wrapper (builds padded operands, one kernel)
# ----------------------------------------------------------------------------
def static_graph_reservoir_forward(params, edge_index, x, num_nodes, *,
                                   fully=False, leakage=0.9, epsilon=1e-5,
                                   max_iterations=8):
    """params: list of dicts {'w_in', 'w_rec', 'bias'} per layer."""
    # TODO(synk): the PyTorch module allows max_iterations=None/0 (unbounded,
    # purely epsilon-driven); the fixed-trip Pallas kernel needs a finite cap.
    assert max_iterations and int(max_iterations) > 0, \
        "Pallas kernel requires a finite max_iterations"

    num_layers = len(params)
    hidden = params[0]['w_rec'].shape[0]
    in_features = params[0]['w_in'].shape[1]

    n_pad = _round_up(max(num_nodes, 8), 8)                 # sublane multiple
    d_pad = _round_up(max(in_features, hidden), 128)        # lane-dense width

    # Dense adjacency A[dst, src] = edge multiplicity ("add" aggregation).
    # TODO(synk): for large graphs stream A from HBM (memory_space=pl.ANY +
    # emit_pipeline K-tiles) or use a sparse gather; dense-resident A is the
    # right call at these sizes but does not scale to N in the thousands.
    src = jnp.asarray(edge_index[0], jnp.int32)
    dst = jnp.asarray(edge_index[1], jnp.int32)
    adj = jnp.zeros((n_pad, n_pad), jnp.float32).at[dst, src].add(1.0)

    # Padded graph signal (zero cols beyond in_features are inert).
    u0 = jnp.zeros((n_pad, d_pad), jnp.float32)
    u0 = u0.at[:num_nodes, :in_features].set(jnp.asarray(x, jnp.float32))

    # Stacked, pre-transposed, zero-padded weights: every matmul in the hot
    # loop is a plain row-major MXU dot on lane-dense [*, d_pad] tiles.
    win_t = jnp.zeros((num_layers, d_pad, d_pad), jnp.float32)
    wrec_t = jnp.zeros((num_layers, d_pad, d_pad), jnp.float32)
    bias = jnp.zeros((num_layers, 1, d_pad), jnp.float32)
    for l, p in enumerate(params):
        w_in = jnp.asarray(p['w_in'], jnp.float32)     # (H, F_in_l)
        w_rec = jnp.asarray(p['w_rec'], jnp.float32)   # (H, H)
        fin_l, h_l = w_in.shape[1], w_rec.shape[0]
        win_t = win_t.at[l, :fin_l, :h_l].set(w_in.T)
        wrec_t = wrec_t.at[l, :h_l, :h_l].set(w_rec.T)
        if p.get('bias') is not None:
            bias = bias.at[l, 0, :h_l].set(jnp.asarray(p['bias'], jnp.float32))

    kernel = functools.partial(
        _fused_reservoir_kernel,
        num_layers=num_layers, num_real_nodes=num_nodes,
        leakage=float(leakage),
        eps_sq=(float(epsilon) ** 2) if epsilon else -1.0,
        num_trips=int(max_iterations) + 1)

    # Raise the scoped-VMEM cap proportionally to the actual footprint
    # (default scoped limits are 16/32 MiB on v5e/v6e-v7x); stay conservative.
    operand_bytes = 4 * (adj.size + u0.size + win_t.size + wrec_t.size
                         + bias.size + num_layers * n_pad * d_pad)
    vmem_limit = int(min(96 * 2 ** 20, max(32 * 2 ** 20, 2 * operand_bytes)))

    def _make_in_specs(single_buffer):
        # grid has a single step: constant operands gain nothing from the
        # default double-buffering, so request single buffering when possible.
        kw = {'pipeline_mode': pl.Buffered(1)} if single_buffer else {}
        return [
            pl.BlockSpec((n_pad, n_pad), lambda i: (0, 0), **kw),          # A
            pl.BlockSpec((n_pad, d_pad), lambda i: (0, 0), **kw),          # U
            pl.BlockSpec((num_layers, d_pad, d_pad),
                         lambda i: (0, 0, 0), **kw),                       # Win^T
            pl.BlockSpec((num_layers, d_pad, d_pad),
                         lambda i: (0, 0, 0), **kw),                       # Wrec^T
            pl.BlockSpec((num_layers, 1, d_pad),
                         lambda i: (0, 0, 0), **kw),                       # bias
        ]

    out = None
    for single_buffer in (True, False):
        try:
            out = pl.pallas_call(
                kernel,
                out_shape=jax.ShapeDtypeStruct((num_layers, n_pad, d_pad),
                                               jnp.float32),
                grid_spec=pltpu.PrefetchScalarGridSpec(
                    num_scalar_prefetch=0,
                    grid=(1,),
                    in_specs=_make_in_specs(single_buffer),
                    out_specs=pl.BlockSpec((num_layers, n_pad, d_pad),
                                           lambda i: (0, 0, 0)),
                ),
                compiler_params=pltpu.CompilerParams(
                    dimension_semantics=("arbitrary",),
                    vmem_limit_bytes=vmem_limit),
            )(adj, u0, win_t, wrec_t, bias)
            break
        except Exception:
            if not single_buffer:
                raise
            # Fall back to default buffering if Buffered(1) is unsupported.

    embeddings = [out[l, :num_nodes, :hidden] for l in range(num_layers)]
    if fully:
        return jnp.concatenate(embeddings, axis=-1)
    return embeddings[-1]   # pooling=None -> node embeddings [N, H]


# ----------------------------------------------------------------------------
# Pure-numpy reference (mirrors the PyTorch module exactly)
# ----------------------------------------------------------------------------
def _ref_layer(adj, u, s0, w_in, w_rec, b, leakage, epsilon, max_iterations):
    old = np.asarray(s0, np.float32)
    it = 0
    while True:
        nagg = adj @ old
        state = leakage * np.tanh(u @ w_in.T + b + nagg @ w_rec.T) \
            + (1.0 - leakage) * old
        if max_iterations and it >= max_iterations:
            break
        if epsilon and np.linalg.norm(old - state) < epsilon:
            break
        old = state
        it += 1
    return state


def _ref_forward(params, edge_index, x, num_nodes, *, leakage, epsilon,
                 max_iterations):
    src, dst = np.asarray(edge_index[0]), np.asarray(edge_index[1])
    adj = np.zeros((num_nodes, num_nodes), np.float32)
    np.add.at(adj, (dst, src), 1.0)
    inp = np.asarray(x, np.float32)
    emb = None
    for p in params:
        H = p['w_rec'].shape[0]
        s0 = np.zeros((num_nodes, H), np.float32)
        emb = _ref_layer(adj, inp, s0, np.asarray(p['w_in']),
                         np.asarray(p['w_rec']), np.asarray(p['bias']),
                         leakage, epsilon, max_iterations)
        inp = emb
    return emb


# ----------------------------------------------------------------------------
if __name__ == "__main__":
    # Config consistent with the module: num_layers=2, in_features=8,
    # hidden_features=32, bias=True, pooling=None, fully=False,
    # max_iterations=8, epsilon=1e-5, leakage=0.9.
    N_NODES = 16
    IN_FEATURES = 8
    HIDDEN = 32
    NUM_LAYERS = 2
    LEAKAGE = 0.9
    EPSILON = 1e-5
    MAX_ITERS = 8

    key = jax.random.PRNGKey(0)
    k_x, k_edges, *k_params = jax.random.split(key, 2 + 3 * NUM_LAYERS)

    # Node features (graph signal)
    x = jax.random.normal(k_x, (N_NODES, IN_FEATURES), jnp.float32)

    # Random sparse directed graph: ring + a few extra edges (deterministic)
    ring_src = jnp.arange(N_NODES, dtype=jnp.int32)
    ring_dst = (ring_src + 1) % N_NODES
    extra_src = jax.random.randint(k_edges, (16,), 0, N_NODES, jnp.int32)
    extra_dst = (extra_src + 3) % N_NODES
    edge_index = jnp.stack([jnp.concatenate([ring_src, extra_src]),
                            jnp.concatenate([ring_dst, extra_dst])])

    # Deterministic reservoir parameters (ESN-style: small spectral scale)
    params = []
    for layer in range(NUM_LAYERS):
        fin = IN_FEATURES if layer == 0 else HIDDEN
        kw_rec, kw_in, kw_b = k_params[3 * layer:3 * layer + 3]
        w_rec = 0.3 * jax.random.uniform(kw_rec, (HIDDEN, HIDDEN),
                                         jnp.float32, -1.0, 1.0) / jnp.sqrt(
            jnp.float32(HIDDEN))
        w_in = 0.5 * jax.random.uniform(kw_in, (HIDDEN, fin),
                                        jnp.float32, -1.0, 1.0)
        bias = 0.1 * jax.random.uniform(kw_b, (HIDDEN,), jnp.float32,
                                        -1.0, 1.0)
        params.append({'w_in': w_in, 'w_rec': w_rec, 'bias': bias})

    out = static_graph_reservoir_forward(
        params, edge_index, x, N_NODES,
        fully=False, leakage=LEAKAGE, epsilon=EPSILON,
        max_iterations=MAX_ITERS)
    out = jax.block_until_ready(out)

    ref = _ref_forward(params, np.asarray(edge_index), np.asarray(x), N_NODES,
                       leakage=LEAKAGE, epsilon=EPSILON,
                       max_iterations=MAX_ITERS)

    np.testing.assert_allclose(np.asarray(out), ref, rtol=1e-4, atol=1e-4)
    print("KERNEL_OK")
</pallas_src>

<mosaic_0001>
module attributes {stable_mosaic.version = 11 : i64} {
  func.func @_fused_reservoir_kernel(%arg0: i32, %arg1: memref<16x16xf32, #tpu.memory_space<vmem>>, %arg2: memref<16x128xf32, #tpu.memory_space<vmem>>, %arg3: memref<2x128x128xf32, #tpu.memory_space<vmem>>, %arg4: memref<2x128x128xf32, #tpu.memory_space<vmem>>, %arg5: memref<2x1x128xf32, #tpu.memory_space<vmem>>, %arg6: memref<2x16x128xf32, #tpu.memory_space<vmem>>) attributes {dimension_semantics = [#tpu.dimension_semantics<arbitrary>], iteration_bounds = array<i64: 1>, scalar_prefetch = 0 : i64, scratch_operands = 0 : i64, tpu.core_type = #tpu.core_type<tc>, window_params = [{pipeline_mode = #tpu.pipeline_mode<synchronous>, transform_indices = @transform_0, window_bounds = array<i64: 16, 16>}, {pipeline_mode = #tpu.pipeline_mode<synchronous>, transform_indices = @transform_1, window_bounds = array<i64: 16, 128>}, {pipeline_mode = #tpu.pipeline_mode<synchronous>, transform_indices = @transform_2, window_bounds = array<i64: 2, 128, 128>}, {pipeline_mode = #tpu.pipeline_mode<synchronous>, transform_indices = @transform_3, window_bounds = array<i64: 2, 128, 128>}, {pipeline_mode = #tpu.pipeline_mode<synchronous>, transform_indices = @transform_4, window_bounds = array<i64: 2, 1, 128>}, {pipeline_mode = #tpu.pipeline_mode<synchronous>, transform_indices = @transform_5, window_bounds = array<i64: 2, 16, 128>}]} {
    %c0 = arith.constant 0 : index
    %c0_0 = arith.constant 0 : index
    %0 = vector.load %arg2[%c0, %c0_0] : memref<16x128xf32, #tpu.memory_space<vmem>>, vector<16x128xf32>
    %c0_1 = arith.constant 0 : index
    %c0_2 = arith.constant 0 : index
    %c0_3 = arith.constant 0 : index
    %1 = vector.load %arg3[%c0_1, %c0_2, %c0_3] : memref<2x128x128xf32, #tpu.memory_space<vmem>>, vector<1x128x128xf32>
    %2 = vector.shape_cast %1 : vector<1x128x128xf32> to vector<128x128xf32>
    %cst = arith.constant dense<0.000000e+00> : vector<16x128xf32>
    %3 = tpu.matmul %0, %2, %cst {dimension_numbers = #tpu.dot_dimension_numbers<[1], [0], [0], [1], [0, 0, 1, 1], [], []>} : vector<16x128xf32>, vector<128x128xf32>, vector<16x128xf32> -> vector<16x128xf32>
    %c0_4 = arith.constant 0 : index
    %c0_5 = arith.constant 0 : index
    %c0_6 = arith.constant 0 : index
    %4 = vector.load %arg5[%c0_4, %c0_5, %c0_6] : memref<2x1x128xf32, #tpu.memory_space<vmem>>, vector<1x1x128xf32>
    %5 = vector.shape_cast %4 : vector<1x1x128xf32> to vector<1x128xf32>
    %6 = vector.broadcast %5 : vector<1x128xf32> to vector<16x128xf32>
    %7 = arith.addf %3, %6 : vector<16x128xf32>
    %cst_7 = arith.constant 0.000000e+00 : f32
    %8 = vector.broadcast %cst_7 : f32 to vector<16x128xf32>
    %c0_8 = arith.constant 0 : index
    %c0_9 = arith.constant 0 : index
    %c0_10 = arith.constant 0 : index
    %9 = vector.load %arg6[%c0_8, %c0_9, %c0_10] : memref<2x16x128xf32, #tpu.memory_space<vmem>>, vector<1x16x128xf32>
    %10 = vector.shape_cast %9 : vector<1x16x128xf32> to vector<16x128xf32>
    %11 = vector.shape_cast %8 : vector<16x128xf32> to vector<1x16x128xf32>
    tpu.vector_store %arg6[%c0_8, %c0_9, %c0_10], %11 {strides = array<i32>} : memref<2x16x128xf32, #tpu.memory_space<vmem>>, vector<1x16x128xf32>,
    %false = arith.constant false
    %c0_i32 = arith.constant 0 : i32
    %c0_11 = arith.constant 0 : index
    %c0_12 = arith.constant 0 : index
    %c0_13 = arith.constant 0 : index
    %12 = vector.load %arg6[%c0_11, %c0_12, %c0_13] : memref<2x16x128xf32, #tpu.memory_space<vmem>>, vector<1x16x128xf32>
    %13 = vector.shape_cast %12 : vector<1x16x128xf32> to vector<16x128xf32>
    %c0_14 = arith.constant 0 : index
    %c0_15 = arith.constant 0 : index
    %14 = vector.load %arg1[%c0_14, %c0_15] : memref<16x16xf32, #tpu.memory_space<vmem>>, vector<16x16xf32>
    %cst_16 = arith.constant dense<0.000000e+00> : vector<16x128xf32>
    %15 = tpu.matmul %14, %13, %cst_16 {dimension_numbers = #tpu.dot_dimension_numbers<[1], [0], [0], [1], [0, 0, 1, 1], [], []>} : vector<16x16xf32>, vector<16x128xf32>, vector<16x128xf32> -> vector<16x128xf32>
    %c0_17 = arith.constant 0 : index
    %c0_18 = arith.constant 0 : index
    %c0_19 = arith.constant 0 : index
    %16 = vector.load %arg4[%c0_17, %c0_18, %c0_19] : memref<2x128x128xf32, #tpu.memory_space<vmem>>, vector<1x128x128xf32>
    %17 = vector.shape_cast %16 : vector<1x128x128xf32> to vector<128x128xf32>
    %cst_20 = arith.constant dense<0.000000e+00> : vector<16x128xf32>
    %18 = tpu.matmul %15, %17, %cst_20 {dimension_numbers = #tpu.dot_dimension_numbers<[1], [0], [0], [1], [0, 0, 1, 1], [], []>} : vector<16x128xf32>, vector<128x128xf32>, vector<16x128xf32> -> vector<16x128xf32>
    %19 = arith.addf %7, %18 : vector<16x128xf32>
    %20 = math.tanh %19 : vector<16x128xf32>
    %cst_21 = arith.constant 0.899999976 : f32
    %21 = vector.broadcast %cst_21 : f32 to vector<16x128xf32>
    %22 = arith.mulf %21, %20 : vector<16x128xf32>
    %cst_22 = arith.constant 1.000000e-01 : f32
    %23 = vector.broadcast %cst_22 : f32 to vector<16x128xf32>
    %24 = arith.mulf %23, %13 : vector<16x128xf32>
    %25 = arith.addf %22, %24 : vector<16x128xf32>
    %26 = arith.subf %13, %25 : vector<16x128xf32>
    %27 = arith.mulf %26, %26 : vector<16x128xf32>
    %28 = vector.shape_cast %27 : vector<16x128xf32> to vector<1x16x128xf32>
    %cst_23 = arith.constant dense<0.000000e+00> : vector<1xf32>
    %29 = vector.multi_reduction <add>, %28, %cst_23 [1, 2] : vector<1x16x128xf32> to vector<1xf32>
    %30 = vector.shape_cast %29 : vector<1xf32> to vector<1x1x1xf32>
    %31 = vector.extract %30[0, 0, 0] : f32 from vector<1x1x1xf32>
    %32 = arith.select %false, %13, %25 : vector<16x128xf32>
    %c0_24 = arith.constant 0 : index
    %c0_25 = arith.constant 0 : index
    %c0_26 = arith.constant 0 : index
    %33 = vector.load %arg6[%c0_24, %c0_25, %c0_26] : memref<2x16x128xf32, #tpu.memory_space<vmem>>, vector<1x16x128xf32>
    %34 = vector.shape_cast %33 : vector<1x16x128xf32> to vector<16x128xf32>
    %35 = vector.shape_cast %32 : vector<16x128xf32> to vector<1x16x128xf32>
    tpu.vector_store %arg6[%c0_24, %c0_25, %c0_26], %35 {strides = array<i32>} : memref<2x16x128xf32, #tpu.memory_space<vmem>>, vector<1x16x128xf32>,
    %cst_27 = arith.constant 1.000000e-10 : f32
    %36 = arith.cmpf olt, %31, %cst_27 : f32
    %37 = arith.ori %false, %36 : i1
    %c1_i32 = arith.constant 1 : i32
    %c0_28 = arith.constant 0 : index
    %c0_29 = arith.constant 0 : index
    %c0_30 = arith.constant 0 : index
    %38 = vector.load %arg6[%c0_28, %c0_29, %c0_30] : memref<2x16x128xf32, #tpu.memory_space<vmem>>, vector<1x16x128xf32>
    %39 = vector.shape_cast %38 : vector<1x16x128xf32> to vector<16x128xf32>
    %c0_31 = arith.constant 0 : index
    %c0_32 = arith.constant 0 : index
    %40 = vector.load %arg1[%c0_31, %c0_32] : memref<16x16xf32, #tpu.memory_space<vmem>>, vector<16x16xf32>
    %cst_33 = arith.constant dense<0.000000e+00> : vector<16x128xf32>
    %41 = tpu.matmul %40, %39, %cst_33 {dimension_numbers = #tpu.dot_dimension_numbers<[1], [0], [0], [1], [0, 0, 1, 1], [], []>} : vector<16x16xf32>, vector<16x128xf32>, vector<16x128xf32> -> vector<16x128xf32>
    %c0_34 = arith.constant 0 : index
    %c0_35 = arith.constant 0 : index
    %c0_36 = arith.constant 0 : index
    %42 = vector.load %arg4[%c0_34, %c0_35, %c0_36] : memref<2x128x128xf32, #tpu.memory_space<vmem>>, vector<1x128x128xf32>
    %43 = vector.shape_cast %42 : vector<1x128x128xf32> to vector<128x128xf32>
    %cst_37 = arith.constant dense<0.000000e+00> : vector<16x128xf32>
    %44 = tpu.matmul %41, %43, %cst_37 {dimension_numbers = #tpu.dot_dimension_numbers<[1], [0], [0], [1], [0, 0, 1, 1], [], []>} : vector<16x128xf32>, vector<128x128xf32>, vector<16x128xf32> -> vector<16x128xf32>
    %45 = arith.addf %7, %44 : vector<16x128xf32>
    %46 = math.tanh %45 : vector<16x128xf32>
    %cst_38 = arith.constant 0.899999976 : f32
    %47 = vector.broadcast %cst_38 : f32 to vector<16x128xf32>
    %48 = arith.mulf %47, %46 : vector<16x128xf32>
    %cst_39 = arith.constant 1.000000e-01 : f32
    %49 = vector.broadcast %cst_39 : f32 to vector<16x128xf32>
    %50 = arith.mulf %49, %39 : vector<16x128xf32>
    %51 = arith.addf %48, %50 : vector<16x128xf32>
    %52 = arith.subf %39, %51 : vector<16x128xf32>
    %53 = arith.mulf %52, %52 : vector<16x128xf32>
    %54 = vector.shape_cast %53 : vector<16x128xf32> to vector<1x16x128xf32>
    %cst_40 = arith.constant dense<0.000000e+00> : vector<1xf32>
    %55 = vector.multi_reduction <add>, %54, %cst_40 [1, 2] : vector<1x16x128xf32> to vector<1xf32>
    %56 = vector.shape_cast %55 : vector<1xf32> to vector<1x1x1xf32>
    %57 = vector.extract %56[0, 0, 0] : f32 from vector<1x1x1xf32>
    %58 = arith.select %37, %39, %51 : vector<16x128xf32>
    %c0_41 = arith.constant 0 : index
    %c0_42 = arith.constant 0 : index
    %c0_43 = arith.constant 0 : index
    %59 = vector.load %arg6[%c0_41, %c0_42, %c0_43] : memref<2x16x128xf32, #tpu.memory_space<vmem>>, vector<1x16x128xf32>
    %60 = vector.shape_cast %59 : vector<1x16x128xf32> to vector<16x128xf32>
    %61 = vector.shape_cast %58 : vector<16x128xf32> to vector<1x16x128xf32>
    tpu.vector_store %arg6[%c0_41, %c0_42, %c0_43], %61 {strides = array<i32>} : memref<2x16x128xf32, #tpu.memory_space<vmem>>, vector<1x16x128xf32>,
    %cst_44 = arith.constant 1.000000e-10 : f32
    %62 = arith.cmpf olt, %57, %cst_44 : f32
    %63 = arith.ori %37, %62 : i1
    %c2_i32 = arith.constant 2 : i32
    %c0_45 = arith.constant 0 : index
    %c0_46 = arith.constant 0 : index
    %c0_47 = arith.constant 0 : index
    %64 = vector.load %arg6[%c0_45, %c0_46, %c0_47] : memref<2x16x128xf32, #tpu.memory_space<vmem>>, vector<1x16x128xf32>
    %65 = vector.shape_cast %64 : vector<1x16x128xf32> to vector<16x128xf32>
    %c0_48 = arith.constant 0 : index
    %c0_49 = arith.constant 0 : index
    %66 = vector.load %arg1[%c0_48, %c0_49] : memref<16x16xf32, #tpu.memory_space<vmem>>, vector<16x16xf32>
    %cst_50 = arith.constant dense<0.000000e+00> : vector<16x128xf32>
    %67 = tpu.matmul %66, %65, %cst_50 {dimension_numbers = #tpu.dot_dimension_numbers<[1], [0], [0], [1], [0, 0, 1, 1], [], []>} : vector<16x16xf32>, vector<16x128xf32>, vector<16x128xf32> -> vector<16x128xf32>
    %c0_51 = arith.constant 0 : index
    %c0_52 = arith.constant 0 : index
    %c0_53 = arith.constant 0 : index
    %68 = vector.load %arg4[%c0_51, %c0_52, %c0_53] : memref<2x128x128xf32, #tpu.memory_space<vmem>>, vector<1x128x128xf32>
    %69 = vector.shape_cast %68 : vector<1x128x128xf32> to vector<128x128xf32>
    %cst_54 = arith.constant dense<0.000000e+00> : vector<16x128xf32>
    %70 = tpu.matmul %67, %69, %cst_54 {dimension_numbers = #tpu.dot_dimension_numbers<[1], [0], [0], [1], [0, 0, 1, 1], [], []>} : vector<16x128xf32>, vector<128x128xf32>, vector<16x128xf32> -> vector<16x128xf32>
    %71 = arith.addf %7, %70 : vector<16x128xf32>
    %72 = math.tanh %71 : vector<16x128xf32>
    %cst_55 = arith.constant 0.899999976 : f32
    %73 = vector.broadcast %cst_55 : f32 to vector<16x128xf32>
    %74 = arith.mulf %73, %72 : vector<16x128xf32>
    %cst_56 = arith.constant 1.000000e-01 : f32
    %75 = vector.broadcast %cst_56 : f32 to vector<16x128xf32>
    %76 = arith.mulf %75, %65 : vector<16x128xf32>
    %77 = arith.addf %74, %76 : vector<16x128xf32>
    %78 = arith.subf %65, %77 : vector<16x128xf32>
    %79 = arith.mulf %78, %78 : vector<16x128xf32>
    %80 = vector.shape_cast %79 : vector<16x128xf32> to vector<1x16x128xf32>
    %cst_57 = arith.constant dense<0.000000e+00> : vector<1xf32>
    %81 = vector.multi_reduction <add>, %80, %cst_57 [1, 2] : vector<1x16x128xf32> to vector<1xf32>
    %82 = vector.shape_cast %81 : vector<1xf32> to vector<1x1x1xf32>
    %83 = vector.extract %82[0, 0, 0] : f32 from vector<1x1x1xf32>
    %84 = arith.select %63, %65, %77 : vector<16x128xf32>
    %c0_58 = arith.constant 0 : index
    %c0_59 = arith.constant 0 : index
    %c0_60 = arith.constant 0 : index
    %85 = vector.load %arg6[%c0_58, %c0_59, %c0_60] : memref<2x16x128xf32, #tpu.memory_space<vmem>>, vector<1x16x128xf32>
    %86 = vector.shape_cast %85 : vector<1x16x128xf32> to vector<16x128xf32>
    %87 = vector.shape_cast %84 : vector<16x128xf32> to vector<1x16x128xf32>
    tpu.vector_store %arg6[%c0_58, %c0_59, %c0_60], %87 {strides = array<i32>} : memref<2x16x128xf32, #tpu.memory_space<vmem>>, vector<1x16x128xf32>,
    %cst_61 = arith.constant 1.000000e-10 : f32
    %88 = arith.cmpf olt, %83, %cst_61 : f32
    %89 = arith.ori %63, %88 : i1
    %c3_i32 = arith.constant 3 : i32
    %c0_62 = arith.constant 0 : index
    %c0_63 = arith.constant 0 : index
    %c0_64 = arith.constant 0 : index
    %90 = vector.load %arg6[%c0_62, %c0_63, %c0_64] : memref<2x16x128xf32, #tpu.memory_space<vmem>>, vector<1x16x128xf32>
    %91 = vector.shape_cast %90 : vector<1x16x128xf32> to vector<16x128xf32>
    %c0_65 = arith.constant 0 : index
    %c0_66 = arith.constant 0 : index
    %92 = vector.load %arg1[%c0_65, %c0_66] : memref<16x16xf32, #tpu.memory_space<vmem>>, vector<16x16xf32>
    %cst_67 = arith.constant dense<0.000000e+00> : vector<16x128xf32>
    %93 = tpu.matmul %92, %91, %cst_67 {dimension_numbers = #tpu.dot_dimension_numbers<[1], [0], [0], [1], [0, 0, 1, 1], [], []>} : vector<16x16xf32>, vector<16x128xf32>, vector<16x128xf32> -> vector<16x128xf32>
    %c0_68 = arith.constant 0 : index
    %c0_69 = arith.constant 0 : index
    %c0_70 = arith.constant 0 : index
    %94 = vector.load %arg4[%c0_68, %c0_69, %c0_70] : memref<2x128x128xf32, #tpu.memory_space<vmem>>, vector<1x128x128xf32>
    %95 = vector.shape_cast %94 : vector<1x128x128xf32> to vector<128x128xf32>
    %cst_71 = arith.constant dense<0.000000e+00> : vector<16x128xf32>
    %96 = tpu.matmul %93, %95, %cst_71 {dimension_numbers = #tpu.dot_dimension_numbers<[1], [0], [0], [1], [0, 0, 1, 1], [], []>} : vector<16x128xf32>, vector<128x128xf32>, vector<16x128xf32> -> vector<16x128xf32>
    %97 = arith.addf %7, %96 : vector<16x128xf32>
    %98 = math.tanh %97 : vector<16x128xf32>
    %cst_72 = arith.constant 0.899999976 : f32
    %99 = vector.broadcast %cst_72 : f32 to vector<16x128xf32>
    %100 = arith.mulf %99, %98 : vector<16x128xf32>
    %cst_73 = arith.constant 1.000000e-01 : f32
    %101 = vector.broadcast %cst_73 : f32 to vector<16x128xf32>
    %102 = arith.mulf %101, %91 : vector<16x128xf32>
    %103 = arith.addf %100, %102 : vector<16x128xf32>
    %104 = arith.subf %91, %103 : vector<16x128xf32>
    %105 = arith.mulf %104, %104 : vector<16x128xf32>
    %106 = vector.shape_cast %105 : vector<16x128xf32> to vector<1x16x128xf32>
    %cst_74 = arith.constant dense<0.000000e+00> : vector<1xf32>
    %107 = vector.multi_reduction <add>, %106, %cst_74 [1, 2] : vector<1x16x128xf32> to vector<1xf32>
    %108 = vector.shape_cast %107 : vector<1xf32> to vector<1x1x1xf32>
    %109 = vector.extract %108[0, 0, 0] : f32 from vector<1x1x1xf32>
    %110 = arith.select %89, %91, %103 : vector<16x128xf32>
    %c0_75 = arith.constant 0 : index
    %c0_76 = arith.constant 0 : index
    %c0_77 = arith.constant 0 : index
    %111 = vector.load %arg6[%c0_75, %c0_76, %c0_77] : memref<2x16x128xf32, #tpu.memory_space<vmem>>, vector<1x16x128xf32>
    %112 = vector.shape_cast %111 : vector<1x16x128xf32> to vector<16x128xf32>
    %113 = vector.shape_cast %110 : vector<16x128xf32> to vector<1x16x128xf32>
    tpu.vector_store %arg6[%c0_75, %c0_76, %c0_77], %113 {strides = array<i32>} : memref<2x16x128xf32, #tpu.memory_space<vmem>>, vector<1x16x128xf32>,
    %cst_78 = arith.constant 1.000000e-10 : f32
    %114 = arith.cmpf olt, %109, %cst_78 : f32
    %115 = arith.ori %89, %114 : i1
    %c4_i32 = arith.constant 4 : i32
    %c0_79 = arith.constant 0 : index
    %c0_80 = arith.constant 0 : index
    %c0_81 = arith.constant 0 : index
    %116 = vector.load %arg6[%c0_79, %c0_80, %c0_81] : memref<2x16x128xf32, #tpu.memory_space<vmem>>, vector<1x16x128xf32>
    %117 = vector.shape_cast %116 : vector<1x16x128xf32> to vector<16x128xf32>
    %c0_82 = arith.constant 0 : index
    %c0_83 = arith.constant 0 : index
    %118 = vector.load %arg1[%c0_82, %c0_83] : memref<16x16xf32, #tpu.memory_space<vmem>>, vector<16x16xf32>
    %cst_84 = arith.constant dense<0.000000e+00> : vector<16x128xf32>
    %119 = tpu.matmul %118, %117, %cst_84 {dimension_numbers = #tpu.dot_dimension_numbers<[1], [0], [0], [1], [0, 0, 1, 1], [], []>} : vector<16x16xf32>, vector<16x128xf32>, vector<16x128xf32> -> vector<16x128xf32>
    %c0_85 = arith.constant 0 : index
    %c0_86 = arith.constant 0 : index
    %c0_87 = arith.constant 0 : index
    %120 = vector.load %arg4[%c0_85, %c0_86, %c0_87] : memref<2x128x128xf32, #tpu.memory_space<vmem>>, vector<1x128x128xf32>
    %121 = vector.shape_cast %120 : vector<1x128x128xf32> to vector<128x128xf32>
    %cst_88 = arith.constant dense<0.000000e+00> : vector<16x128xf32>
    %122 = tpu.matmul %119, %121, %cst_88 {dimension_numbers = #tpu.dot_dimension_numbers<[1], [0], [0], [1], [0, 0, 1, 1], [], []>} : vector<16x128xf32>, vector<128x128xf32>, vector<16x128xf32> -> vector<16x128xf32>
    %123 = arith.addf %7, %122 : vector<16x128xf32>
    %124 = math.tanh %123 : vector<16x128xf32>
    %cst_89 = arith.constant 0.899999976 : f32
    %125 = vector.broadcast %cst_89 : f32 to vector<16x128xf32>
    %126 = arith.mulf %125, %124 : vector<16x128xf32>
    %cst_90 = arith.constant 1.000000e-01 : f32
    %127 = vector.broadcast %cst_90 : f32 to vector<16x128xf32>
    %128 = arith.mulf %127, %117 : vector<16x128xf32>
    %129 = arith.addf %126, %128 : vector<16x128xf32>
    %130 = arith.subf %117, %129 : vector<16x128xf32>
    %131 = arith.mulf %130, %130 : vector<16x128xf32>
    %132 = vector.shape_cast %131 : vector<16x128xf32> to vector<1x16x128xf32>
    %cst_91 = arith.constant dense<0.000000e+00> : vector<1xf32>
    %133 = vector.multi_reduction <add>, %132, %cst_91 [1, 2] : vector<1x16x128xf32> to vector<1xf32>
    %134 = vector.shape_cast %133 : vector<1xf32> to vector<1x1x1xf32>
    %135 = vector.extract %134[0, 0, 0] : f32 from vector<1x1x1xf32>
    %136 = arith.select %115, %117, %129 : vector<16x128xf32>
    %c0_92 = arith.constant 0 : index
    %c0_93 = arith.constant 0 : index
    %c0_94 = arith.constant 0 : index
    %137 = vector.load %arg6[%c0_92, %c0_93, %c0_94] : memref<2x16x128xf32, #tpu.memory_space<vmem>>, vector<1x16x128xf32>
    %138 = vector.shape_cast %137 : vector<1x16x128xf32> to vector<16x128xf32>
    %139 = vector.shape_cast %136 : vector<16x128xf32> to vector<1x16x128xf32>
    tpu.vector_store %arg6[%c0_92, %c0_93, %c0_94], %139 {strides = array<i32>} : memref<2x16x128xf32, #tpu.memory_space<vmem>>, vector<1x16x128xf32>,
    %cst_95 = arith.constant 1.000000e-10 : f32
    %140 = arith.cmpf olt, %135, %cst_95 : f32
    %141 = arith.ori %115, %140 : i1
    %c5_i32 = arith.constant 5 : i32
    %c0_96 = arith.constant 0 : index
    %c0_97 = arith.constant 0 : index
    %c0_98 = arith.constant 0 : index
    %142 = vector.load %arg6[%c0_96, %c0_97, %c0_98] : memref<2x16x128xf32, #tpu.memory_space<vmem>>, vector<1x16x128xf32>
    %143 = vector.shape_cast %142 : vector<1x16x128xf32> to vector<16x128xf32>
    %c0_99 = arith.constant 0 : index
    %c0_100 = arith.constant 0 : index
    %144 = vector.load %arg1[%c0_99, %c0_100] : memref<16x16xf32, #tpu.memory_space<vmem>>, vector<16x16xf32>
    %cst_101 = arith.constant dense<0.000000e+00> : vector<16x128xf32>
    %145 = tpu.matmul %144, %143, %cst_101 {dimension_numbers = #tpu.dot_dimension_numbers<[1], [0], [0], [1], [0, 0, 1, 1], [], []>} : vector<16x16xf32>, vector<16x128xf32>, vector<16x128xf32> -> vector<16x128xf32>
    %c0_102 = arith.constant 0 : index
    %c0_103 = arith.constant 0 : index
    %c0_104 = arith.constant 0 : index
    %146 = vector.load %arg4[%c0_102, %c0_103, %c0_104] : memref<2x128x128xf32, #tpu.memory_space<vmem>>, vector<1x128x128xf32>
    %147 = vector.shape_cast %146 : vector<1x128x128xf32> to vector<128x128xf32>
    %cst_105 = arith.constant dense<0.000000e+00> : vector<16x128xf32>
    %148 = tpu.matmul %145, %147, %cst_105 {dimension_numbers = #tpu.dot_dimension_numbers<[1], [0], [0], [1], [0, 0, 1, 1], [], []>} : vector<16x128xf32>, vector<128x128xf32>, vector<16x128xf32> -> vector<16x128xf32>
    %149 = arith.addf %7, %148 : vector<16x128xf32>
    %150 = math.tanh %149 : vector<16x128xf32>
    %cst_106 = arith.constant 0.899999976 : f32
    %151 = vector.broadcast %cst_106 : f32 to vector<16x128xf32>
    %152 = arith.mulf %151, %150 : vector<16x128xf32>
    %cst_107 = arith.constant 1.000000e-01 : f32
    %153 = vector.broadcast %cst_107 : f32 to vector<16x128xf32>
    %154 = arith.mulf %153, %143 : vector<16x128xf32>
    %155 = arith.addf %152, %154 : vector<16x128xf32>
    %156 = arith.subf %143, %155 : vector<16x128xf32>
    %157 = arith.mulf %156, %156 : vector<16x128xf32>
    %158 = vector.shape_cast %157 : vector<16x128xf32> to vector<1x16x128xf32>
    %cst_108 = arith.constant dense<0.000000e+00> : vector<1xf32>
    %159 = vector.multi_reduction <add>, %158, %cst_108 [1, 2] : vector<1x16x128xf32> to vector<1xf32>
    %160 = vector.shape_cast %159 : vector<1xf32> to vector<1x1x1xf32>
    %161 = vector.extract %160[0, 0, 0] : f32 from vector<1x1x1xf32>
    %162 = arith.select %141, %143, %155 : vector<16x128xf32>
    %c0_109 = arith.constant 0 : index
    %c0_110 = arith.constant 0 : index
    %c0_111 = arith.constant 0 : index
    %163 = vector.load %arg6[%c0_109, %c0_110, %c0_111] : memref<2x16x128xf32, #tpu.memory_space<vmem>>, vector<1x16x128xf32>
    %164 = vector.shape_cast %163 : vector<1x16x128xf32> to vector<16x128xf32>
    %165 = vector.shape_cast %162 : vector<16x128xf32> to vector<1x16x128xf32>
    tpu.vector_store %arg6[%c0_109, %c0_110, %c0_111], %165 {strides = array<i32>} : memref<2x16x128xf32, #tpu.memory_space<vmem>>, vector<1x16x128xf32>,
    %cst_112 = arith.constant 1.000000e-10 : f32
    %166 = arith.cmpf olt, %161, %cst_112 : f32
    %167 = arith.ori %141, %166 : i1
    %c6_i32 = arith.constant 6 : i32
    %c0_113 = arith.constant 0 : index
    %c0_114 = arith.constant 0 : index
    %c0_115 = arith.constant 0 : index
    %168 = vector.load %arg6[%c0_113, %c0_114, %c0_115] : memref<2x16x128xf32, #tpu.memory_space<vmem>>, vector<1x16x128xf32>
    %169 = vector.shape_cast %168 : vector<1x16x128xf32> to vector<16x128xf32>
    %c0_116 = arith.constant 0 : index
    %c0_117 = arith.constant 0 : index
    %170 = vector.load %arg1[%c0_116, %c0_117] : memref<16x16xf32, #tpu.memory_space<vmem>>, vector<16x16xf32>
    %cst_118 = arith.constant dense<0.000000e+00> : vector<16x128xf32>
    %171 = tpu.matmul %170, %169, %cst_118 {dimension_numbers = #tpu.dot_dimension_numbers<[1], [0], [0], [1], [0, 0, 1, 1], [], []>} : vector<16x16xf32>, vector<16x128xf32>, vector<16x128xf32> -> vector<16x128xf32>
    %c0_119 = arith.constant 0 : index
    %c0_120 = arith.constant 0 : index
    %c0_121 = arith.constant 0 : index
    %172 = vector.load %arg4[%c0_119, %c0_120, %c0_121] : memref<2x128x128xf32, #tpu.memory_space<vmem>>, vector<1x128x128xf32>
    %173 = vector.shape_cast %172 : vector<1x128x128xf32> to vector<128x128xf32>
    %cst_122 = arith.constant dense<0.000000e+00> : vector<16x128xf32>
    %174 = tpu.matmul %171, %173, %cst_122 {dimension_numbers = #tpu.dot_dimension_numbers<[1], [0], [0], [1], [0, 0, 1, 1], [], []>} : vector<16x128xf32>, vector<128x128xf32>, vector<16x128xf32> -> vector<16x128xf32>
    %175 = arith.addf %7, %174 : vector<16x128xf32>
    %176 = math.tanh %175 : vector<16x128xf32>
    %cst_123 = arith.constant 0.899999976 : f32
    %177 = vector.broadcast %cst_123 : f32 to vector<16x128xf32>
    %178 = arith.mulf %177, %176 : vector<16x128xf32>
    %cst_124 = arith.constant 1.000000e-01 : f32
    %179 = vector.broadcast %cst_124 : f32 to vector<16x128xf32>
    %180 = arith.mulf %179, %169 : vector<16x128xf32>
    %181 = arith.addf %178, %180 : vector<16x128xf32>
    %182 = arith.subf %169, %181 : vector<16x128xf32>
    %183 = arith.mulf %182, %182 : vector<16x128xf32>
    %184 = vector.shape_cast %183 : vector<16x128xf32> to vector<1x16x128xf32>
    %cst_125 = arith.constant dense<0.000000e+00> : vector<1xf32>
    %185 = vector.multi_reduction <add>, %184, %cst_125 [1, 2] : vector<1x16x128xf32> to vector<1xf32>
    %186 = vector.shape_cast %185 : vector<1xf32> to vector<1x1x1xf32>
    %187 = vector.extract %186[0, 0, 0] : f32 from vector<1x1x1xf32>
    %188 = arith.select %167, %169, %181 : vector<16x128xf32>
    %c0_126 = arith.constant 0 : index
    %c0_127 = arith.constant 0 : index
    %c0_128 = arith.constant 0 : index
    %189 = vector.load %arg6[%c0_126, %c0_127, %c0_128] : memref<2x16x128xf32, #tpu.memory_space<vmem>>, vector<1x16x128xf32>
    %190 = vector.shape_cast %189 : vector<1x16x128xf32> to vector<16x128xf32>
    %191 = vector.shape_cast %188 : vector<16x128xf32> to vector<1x16x128xf32>
    tpu.vector_store %arg6[%c0_126, %c0_127, %c0_128], %191 {strides = array<i32>} : memref<2x16x128xf32, #tpu.memory_space<vmem>>, vector<1x16x128xf32>,
    %cst_129 = arith.constant 1.000000e-10 : f32
    %192 = arith.cmpf olt, %187, %cst_129 : f32
    %193 = arith.ori %167, %192 : i1
    %c7_i32 = arith.constant 7 : i32
    %c0_130 = arith.constant 0 : index
    %c0_131 = arith.constant 0 : index
    %c0_132 = arith.constant 0 : index
    %194 = vector.load %arg6[%c0_130, %c0_131, %c0_132] : memref<2x16x128xf32, #tpu.memory_space<vmem>>, vector<1x16x128xf32>
    %195 = vector.shape_cast %194 : vector<1x16x128xf32> to vector<16x128xf32>
    %c0_133 = arith.constant 0 : index
    %c0_134 = arith.constant 0 : index
    %196 = vector.load %arg1[%c0_133, %c0_134] : memref<16x16xf32, #tpu.memory_space<vmem>>, vector<16x16xf32>
    %cst_135 = arith.constant dense<0.000000e+00> : vector<16x128xf32>
    %197 = tpu.matmul %196, %195, %cst_135 {dimension_numbers = #tpu.dot_dimension_numbers<[1], [0], [0], [1], [0, 0, 1, 1], [], []>} : vector<16x16xf32>, vector<16x128xf32>, vector<16x128xf32> -> vector<16x128xf32>
    %c0_136 = arith.constant 0 : index
    %c0_137 = arith.constant 0 : index
    %c0_138 = arith.constant 0 : index
    %198 = vector.load %arg4[%c0_136, %c0_137, %c0_138] : memref<2x128x128xf32, #tpu.memory_space<vmem>>, vector<1x128x128xf32>
    %199 = vector.shape_cast %198 : vector<1x128x128xf32> to vector<128x128xf32>
    %cst_139 = arith.constant dense<0.000000e+00> : vector<16x128xf32>
    %200 = tpu.matmul %197, %199, %cst_139 {dimension_numbers = #tpu.dot_dimension_numbers<[1], [0], [0], [1], [0, 0, 1, 1], [], []>} : vector<16x128xf32>, vector<128x128xf32>, vector<16x128xf32> -> vector<16x128xf32>
    %201 = arith.addf %7, %200 : vector<16x128xf32>
    %202 = math.tanh %201 : vector<16x128xf32>
    %cst_140 = arith.constant 0.899999976 : f32
    %203 = vector.broadcast %cst_140 : f32 to vector<16x128xf32>
    %204 = arith.mulf %203, %202 : vector<16x128xf32>
    %cst_141 = arith.constant 1.000000e-01 : f32
    %205 = vector.broadcast %cst_141 : f32 to vector<16x128xf32>
    %206 = arith.mulf %205, %195 : vector<16x128xf32>
    %207 = arith.addf %204, %206 : vector<16x128xf32>
    %208 = arith.subf %195, %207 : vector<16x128xf32>
    %209 = arith.mulf %208, %208 : vector<16x128xf32>
    %210 = vector.shape_cast %209 : vector<16x128xf32> to vector<1x16x128xf32>
    %cst_142 = arith.constant dense<0.000000e+00> : vector<1xf32>
    %211 = vector.multi_reduction <add>, %210, %cst_142 [1, 2] : vector<1x16x128xf32> to vector<1xf32>
    %212 = vector.shape_cast %211 : vector<1xf32> to vector<1x1x1xf32>
    %213 = vector.extract %212[0, 0, 0] : f32 from vector<1x1x1xf32>
    %214 = arith.select %193, %195, %207 : vector<16x128xf32>
    %c0_143 = arith.constant 0 : index
    %c0_144 = arith.constant 0 : index
    %c0_145 = arith.constant 0 : index
    %215 = vector.load %arg6[%c0_143, %c0_144, %c0_145] : memref<2x16x128xf32, #tpu.memory_space<vmem>>, vector<1x16x128xf32>
    %216 = vector.shape_cast %215 : vector<1x16x128xf32> to vector<16x128xf32>
    %217 = vector.shape_cast %214 : vector<16x128xf32> to vector<1x16x128xf32>
    tpu.vector_store %arg6[%c0_143, %c0_144, %c0_145], %217 {strides = array<i32>} : memref<2x16x128xf32, #tpu.memory_space<vmem>>, vector<1x16x128xf32>,
    %cst_146 = arith.constant 1.000000e-10 : f32
    %218 = arith.cmpf olt, %213, %cst_146 : f32
    %219 = arith.ori %193, %218 : i1
    %c8_i32 = arith.constant 8 : i32
    %c0_147 = arith.constant 0 : index
    %c0_148 = arith.constant 0 : index
    %c0_149 = arith.constant 0 : index
    %220 = vector.load %arg6[%c0_147, %c0_148, %c0_149] : memref<2x16x128xf32, #tpu.memory_space<vmem>>, vector<1x16x128xf32>
    %221 = vector.shape_cast %220 : vector<1x16x128xf32> to vector<16x128xf32>
    %c0_150 = arith.constant 0 : index
    %c0_151 = arith.constant 0 : index
    %222 = vector.load %arg1[%c0_150, %c0_151] : memref<16x16xf32, #tpu.memory_space<vmem>>, vector<16x16xf32>
    %cst_152 = arith.constant dense<0.000000e+00> : vector<16x128xf32>
    %223 = tpu.matmul %222, %221, %cst_152 {dimension_numbers = #tpu.dot_dimension_numbers<[1], [0], [0], [1], [0, 0, 1, 1], [], []>} : vector<16x16xf32>, vector<16x128xf32>, vector<16x128xf32> -> vector<16x128xf32>
    %c0_153 = arith.constant 0 : index
    %c0_154 = arith.constant 0 : index
    %c0_155 = arith.constant 0 : index
    %224 = vector.load %arg4[%c0_153, %c0_154, %c0_155] : memref<2x128x128xf32, #tpu.memory_space<vmem>>, vector<1x128x128xf32>
    %225 = vector.shape_cast %224 : vector<1x128x128xf32> to vector<128x128xf32>
    %cst_156 = arith.constant dense<0.000000e+00> : vector<16x128xf32>
    %226 = tpu.matmul %223, %225, %cst_156 {dimension_numbers = #tpu.dot_dimension_numbers<[1], [0], [0], [1], [0, 0, 1, 1], [], []>} : vector<16x128xf32>, vector<128x128xf32>, vector<16x128xf32> -> vector<16x128xf32>
    %227 = arith.addf %7, %226 : vector<16x128xf32>
    %228 = math.tanh %227 : vector<16x128xf32>
    %cst_157 = arith.constant 0.899999976 : f32
    %229 = vector.broadcast %cst_157 : f32 to vector<16x128xf32>
    %230 = arith.mulf %229, %228 : vector<16x128xf32>
    %cst_158 = arith.constant 1.000000e-01 : f32
    %231 = vector.broadcast %cst_158 : f32 to vector<16x128xf32>
    %232 = arith.mulf %231, %221 : vector<16x128xf32>
    %233 = arith.addf %230, %232 : vector<16x128xf32>
    %234 = arith.subf %221, %233 : vector<16x128xf32>
    %235 = arith.mulf %234, %234 : vector<16x128xf32>
    %236 = vector.shape_cast %235 : vector<16x128xf32> to vector<1x16x128xf32>
    %cst_159 = arith.constant dense<0.000000e+00> : vector<1xf32>
    %237 = vector.multi_reduction <add>, %236, %cst_159 [1, 2] : vector<1x16x128xf32> to vector<1xf32>
    %238 = vector.shape_cast %237 : vector<1xf32> to vector<1x1x1xf32>
    %239 = vector.extract %238[0, 0, 0] : f32 from vector<1x1x1xf32>
    %240 = arith.select %219, %221, %233 : vector<16x128xf32>
    %c0_160 = arith.constant 0 : index
    %c0_161 = arith.constant 0 : index
    %c0_162 = arith.constant 0 : index
    %241 = vector.load %arg6[%c0_160, %c0_161, %c0_162] : memref<2x16x128xf32, #tpu.memory_space<vmem>>, vector<1x16x128xf32>
    %242 = vector.shape_cast %241 : vector<1x16x128xf32> to vector<16x128xf32>
    %243 = vector.shape_cast %240 : vector<16x128xf32> to vector<1x16x128xf32>
    tpu.vector_store %arg6[%c0_160, %c0_161, %c0_162], %243 {strides = array<i32>} : memref<2x16x128xf32, #tpu.memory_space<vmem>>, vector<1x16x128xf32>,
    %cst_163 = arith.constant 1.000000e-10 : f32
    %244 = arith.cmpf olt, %239, %cst_163 : f32
    %245 = arith.ori %219, %244 : i1
    %c0_164 = arith.constant 0 : index
    %c0_165 = arith.constant 0 : index
    %c0_166 = arith.constant 0 : index
    %246 = vector.load %arg6[%c0_164, %c0_165, %c0_166] : memref<2x16x128xf32, #tpu.memory_space<vmem>>, vector<1x16x128xf32>
    %247 = vector.shape_cast %246 : vector<1x16x128xf32> to vector<16x128xf32>
    %c1 = arith.constant 1 : index
    %c0_167 = arith.constant 0 : index
    %c0_168 = arith.constant 0 : index
    %248 = vector.load %arg3[%c1, %c0_167, %c0_168] : memref<2x128x128xf32, #tpu.memory_space<vmem>>, vector<1x128x128xf32>
    %249 = vector.shape_cast %248 : vector<1x128x128xf32> to vector<128x128xf32>
    %cst_169 = arith.constant dense<0.000000e+00> : vector<16x128xf32>
    %250 = tpu.matmul %247, %249, %cst_169 {dimension_numbers = #tpu.dot_dimension_numbers<[1], [0], [0], [1], [0, 0, 1, 1], [], []>} : vector<16x128xf32>, vector<128x128xf32>, vector<16x128xf32> -> vector<16x128xf32>
    %c1_170 = arith.constant 1 : index
    %c0_171 = arith.constant 0 : index
    %c0_172 = arith.constant 0 : index
    %251 = vector.load %arg5[%c1_170, %c0_171, %c0_172] : memref<2x1x128xf32, #tpu.memory_space<vmem>>, vector<1x1x128xf32>
    %252 = vector.shape_cast %251 : vector<1x1x128xf32> to vector<1x128xf32>
    %253 = vector.broadcast %252 : vector<1x128xf32> to vector<16x128xf32>
    %254 = arith.addf %250, %253 : vector<16x128xf32>
    %cst_173 = arith.constant 0.000000e+00 : f32
    %255 = vector.broadcast %cst_173 : f32 to vector<16x128xf32>
    %c1_174 = arith.constant 1 : index
    %c0_175 = arith.constant 0 : index
    %c0_176 = arith.constant 0 : index
    %256 = vector.load %arg6[%c1_174, %c0_175, %c0_176] : memref<2x16x128xf32, #tpu.memory_space<vmem>>, vector<1x16x128xf32>
    %257 = vector.shape_cast %256 : vector<1x16x128xf32> to vector<16x128xf32>
    %258 = vector.shape_cast %255 : vector<16x128xf32> to vector<1x16x128xf32>
    tpu.vector_store %arg6[%c1_174, %c0_175, %c0_176], %258 {strides = array<i32>} : memref<2x16x128xf32, #tpu.memory_space<vmem>>, vector<1x16x128xf32>,
    %false_177 = arith.constant false
    %c0_i32_178 = arith.constant 0 : i32
    %c1_179 = arith.constant 1 : index
    %c0_180 = arith.constant 0 : index
    %c0_181 = arith.constant 0 : index
    %259 = vector.load %arg6[%c1_179, %c0_180, %c0_181] : memref<2x16x128xf32, #tpu.memory_space<vmem>>, vector<1x16x128xf32>
    %260 = vector.shape_cast %259 : vector<1x16x128xf32> to vector<16x128xf32>
    %c0_182 = arith.constant 0 : index
    %c0_183 = arith.constant 0 : index
    %261 = vector.load %arg1[%c0_182, %c0_183] : memref<16x16xf32, #tpu.memory_space<vmem>>, vector<16x16xf32>
    %cst_184 = arith.constant dense<0.000000e+00> : vector<16x128xf32>
    %262 = tpu.matmul %261, %260, %cst_184 {dimension_numbers = #tpu.dot_dimension_numbers<[1], [0], [0], [1], [0, 0, 1, 1], [], []>} : vector<16x16xf32>, vector<16x128xf32>, vector<16x128xf32> -> vector<16x128xf32>
    %c1_185 = arith.constant 1 : index
    %c0_186 = arith.constant 0 : index
    %c0_187 = arith.constant 0 : index
    %263 = vector.load %arg4[%c1_185, %c0_186, %c0_187] : memref<2x128x128xf32, #tpu.memory_space<vmem>>, vector<1x128x128xf32>
    %264 = vector.shape_cast %263 : vector<1x128x128xf32> to vector<128x128xf32>
    %cst_188 = arith.constant dense<0.000000e+00> : vector<16x128xf32>
    %265 = tpu.matmul %262, %264, %cst_188 {dimension_numbers = #tpu.dot_dimension_numbers<[1], [0], [0], [1], [0, 0, 1, 1], [], []>} : vector<16x128xf32>, vector<128x128xf32>, vector<16x128xf32> -> vector<16x128xf32>
    %266 = arith.addf %254, %265 : vector<16x128xf32>
    %267 = math.tanh %266 : vector<16x128xf32>
    %cst_189 = arith.constant 0.899999976 : f32
    %268 = vector.broadcast %cst_189 : f32 to vector<16x128xf32>
    %269 = arith.mulf %268, %267 : vector<16x128xf32>
    %cst_190 = arith.constant 1.000000e-01 : f32
    %270 = vector.broadcast %cst_190 : f32 to vector<16x128xf32>
    %271 = arith.mulf %270, %260 : vector<16x128xf32>
    %272 = arith.addf %269, %271 : vector<16x128xf32>
    %273 = arith.subf %260, %272 : vector<16x128xf32>
    %274 = arith.mulf %273, %273 : vector<16x128xf32>
    %275 = vector.shape_cast %274 : vector<16x128xf32> to vector<1x16x128xf32>
    %cst_191 = arith.constant dense<0.000000e+00> : vector<1xf32>
    %276 = vector.multi_reduction <add>, %275, %cst_191 [1, 2] : vector<1x16x128xf32> to vector<1xf32>
    %277 = vector.shape_cast %276 : vector<1xf32> to vector<1x1x1xf32>
    %278 = vector.extract %277[0, 0, 0] : f32 from vector<1x1x1xf32>
    %279 = arith.select %false_177, %260, %272 : vector<16x128xf32>
    %c1_192 = arith.constant 1 : index
    %c0_193 = arith.constant 0 : index
    %c0_194 = arith.constant 0 : index
    %280 = vector.load %arg6[%c1_192, %c0_193, %c0_194] : memref<2x16x128xf32, #tpu.memory_space<vmem>>, vector<1x16x128xf32>
    %281 = vector.shape_cast %280 : vector<1x16x128xf32> to vector<16x128xf32>
    %282 = vector.shape_cast %279 : vector<16x128xf32> to vector<1x16x128xf32>
    tpu.vector_store %arg6[%c1_192, %c0_193, %c0_194], %282 {strides = array<i32>} : memref<2x16x128xf32, #tpu.memory_space<vmem>>, vector<1x16x128xf32>,
    %cst_195 = arith.constant 1.000000e-10 : f32
    %283 = arith.cmpf olt, %278, %cst_195 : f32
    %284 = arith.ori %false_177, %283 : i1
    %c1_i32_196 = arith.constant 1 : i32
    %c1_197 = arith.constant 1 : index
    %c0_198 = arith.constant 0 : index
    %c0_199 = arith.constant 0 : index
    %285 = vector.load %arg6[%c1_197, %c0_198, %c0_199] : memref<2x16x128xf32, #tpu.memory_space<vmem>>, vector<1x16x128xf32>
    %286 = vector.shape_cast %285 : vector<1x16x128xf32> to vector<16x128xf32>
    %c0_200 = arith.constant 0 : index
    %c0_201 = arith.constant 0 : index
    %287 = vector.load %arg1[%c0_200, %c0_201] : memref<16x16xf32, #tpu.memory_space<vmem>>, vector<16x16xf32>
    %cst_202 = arith.constant dense<0.000000e+00> : vector<16x128xf32>
    %288 = tpu.matmul %287, %286, %cst_202 {dimension_numbers = #tpu.dot_dimension_numbers<[1], [0], [0], [1], [0, 0, 1, 1], [], []>} : vector<16x16xf32>, vector<16x128xf32>, vector<16x128xf32> -> vector<16x128xf32>
    %c1_203 = arith.constant 1 : index
    %c0_204 = arith.constant 0 : index
    %c0_205 = arith.constant 0 : index
    %289 = vector.load %arg4[%c1_203, %c0_204, %c0_205] : memref<2x128x128xf32, #tpu.memory_space<vmem>>, vector<1x128x128xf32>
    %290 = vector.shape_cast %289 : vector<1x128x128xf32> to vector<128x128xf32>
    %cst_206 = arith.constant dense<0.000000e+00> : vector<16x128xf32>
    %291 = tpu.matmul %288, %290, %cst_206 {dimension_numbers = #tpu.dot_dimension_numbers<[1], [0], [0], [1], [0, 0, 1, 1], [], []>} : vector<16x128xf32>, vector<128x128xf32>, vector<16x128xf32> -> vector<16x128xf32>
    %292 = arith.addf %254, %291 : vector<16x128xf32>
    %293 = math.tanh %292 : vector<16x128xf32>
    %cst_207 = arith.constant 0.899999976 : f32
    %294 = vector.broadcast %cst_207 : f32 to vector<16x128xf32>
    %295 = arith.mulf %294, %293 : vector<16x128xf32>
    %cst_208 = arith.constant 1.000000e-01 : f32
    %296 = vector.broadcast %cst_208 : f32 to vector<16x128xf32>
    %297 = arith.mulf %296, %286 : vector<16x128xf32>
    %298 = arith.addf %295, %297 : vector<16x128xf32>
    %299 = arith.subf %286, %298 : vector<16x128xf32>
    %300 = arith.mulf %299, %299 : vector<16x128xf32>
    %301 = vector.shape_cast %300 : vector<16x128xf32> to vector<1x16x128xf32>
    %cst_209 = arith.constant dense<0.000000e+00> : vector<1xf32>
    %302 = vector.multi_reduction <add>, %301, %cst_209 [1, 2] : vector<1x16x128xf32> to vector<1xf32>
    %303 = vector.shape_cast %302 : vector<1xf32> to vector<1x1x1xf32>
    %304 = vector.extract %303[0, 0, 0] : f32 from vector<1x1x1xf32>
    %305 = arith.select %284, %286, %298 : vector<16x128xf32>
    %c1_210 = arith.constant 1 : index
    %c0_211 = arith.constant 0 : index
    %c0_212 = arith.constant 0 : index
    %306 = vector.load %arg6[%c1_210, %c0_211, %c0_212] : memref<2x16x128xf32, #tpu.memory_space<vmem>>, vector<1x16x128xf32>
    %307 = vector.shape_cast %306 : vector<1x16x128xf32> to vector<16x128xf32>
    %308 = vector.shape_cast %305 : vector<16x128xf32> to vector<1x16x128xf32>
    tpu.vector_store %arg6[%c1_210, %c0_211, %c0_212], %308 {strides = array<i32>} : memref<2x16x128xf32, #tpu.memory_space<vmem>>, vector<1x16x128xf32>,
    %cst_213 = arith.constant 1.000000e-10 : f32
    %309 = arith.cmpf olt, %304, %cst_213 : f32
    %310 = arith.ori %284, %309 : i1
    %c2_i32_214 = arith.constant 2 : i32
    %c1_215 = arith.constant 1 : index
    %c0_216 = arith.constant 0 : index
    %c0_217 = arith.constant 0 : index
    %311 = vector.load %arg6[%c1_215, %c0_216, %c0_217] : memref<2x16x128xf32, #tpu.memory_space<vmem>>, vector<1x16x128xf32>
    %312 = vector.shape_cast %311 : vector<1x16x128xf32> to vector<16x128xf32>
    %c0_218 = arith.constant 0 : index
    %c0_219 = arith.constant 0 : index
    %313 = vector.load %arg1[%c0_218, %c0_219] : memref<16x16xf32, #tpu.memory_space<vmem>>, vector<16x16xf32>
    %cst_220 = arith.constant dense<0.000000e+00> : vector<16x128xf32>
    %314 = tpu.matmul %313, %312, %cst_220 {dimension_numbers = #tpu.dot_dimension_numbers<[1], [0], [0], [1], [0, 0, 1, 1], [], []>} : vector<16x16xf32>, vector<16x128xf32>, vector<16x128xf32> -> vector<16x128xf32>
    %c1_221 = arith.constant 1 : index
    %c0_222 = arith.constant 0 : index
    %c0_223 = arith.constant 0 : index
    %315 = vector.load %arg4[%c1_221, %c0_222, %c0_223] : memref<2x128x128xf32, #tpu.memory_space<vmem>>, vector<1x128x128xf32>
    %316 = vector.shape_cast %315 : vector<1x128x128xf32> to vector<128x128xf32>
    %cst_224 = arith.constant dense<0.000000e+00> : vector<16x128xf32>
    %317 = tpu.matmul %314, %316, %cst_224 {dimension_numbers = #tpu.dot_dimension_numbers<[1], [0], [0], [1], [0, 0, 1, 1], [], []>} : vector<16x128xf32>, vector<128x128xf32>, vector<16x128xf32> -> vector<16x128xf32>
    %318 = arith.addf %254, %317 : vector<16x128xf32>
    %319 = math.tanh %318 : vector<16x128xf32>
    %cst_225 = arith.constant 0.899999976 : f32
    %320 = vector.broadcast %cst_225 : f32 to vector<16x128xf32>
    %321 = arith.mulf %320, %319 : vector<16x128xf32>
    %cst_226 = arith.constant 1.000000e-01 : f32
    %322 = vector.broadcast %cst_226 : f32 to vector<16x128xf32>
    %323 = arith.mulf %322, %312 : vector<16x128xf32>
    %324 = arith.addf %321, %323 : vector<16x128xf32>
    %325 = arith.subf %312, %324 : vector<16x128xf32>
    %326 = arith.mulf %325, %325 : vector<16x128xf32>
    %327 = vector.shape_cast %326 : vector<16x128xf32> to vector<1x16x128xf32>
    %cst_227 = arith.constant dense<0.000000e+00> : vector<1xf32>
    %328 = vector.multi_reduction <add>, %327, %cst_227 [1, 2] : vector<1x16x128xf32> to vector<1xf32>
    %329 = vector.shape_cast %328 : vector<1xf32> to vector<1x1x1xf32>
    %330 = vector.extract %329[0, 0, 0] : f32 from vector<1x1x1xf32>
    %331 = arith.select %310, %312, %324 : vector<16x128xf32>
    %c1_228 = arith.constant 1 : index
    %c0_229 = arith.constant 0 : index
    %c0_230 = arith.constant 0 : index
    %332 = vector.load %arg6[%c1_228, %c0_229, %c0_230] : memref<2x16x128xf32, #tpu.memory_space<vmem>>, vector<1x16x128xf32>
    %333 = vector.shape_cast %332 : vector<1x16x128xf32> to vector<16x128xf32>
    %334 = vector.shape_cast %331 : vector<16x128xf32> to vector<1x16x128xf32>
    tpu.vector_store %arg6[%c1_228, %c0_229, %c0_230], %334 {strides = array<i32>} : memref<2x16x128xf32, #tpu.memory_space<vmem>>, vector<1x16x128xf32>,
    %cst_231 = arith.constant 1.000000e-10 : f32
    %335 = arith.cmpf olt, %330, %cst_231 : f32
    %336 = arith.ori %310, %335 : i1
    %c3_i32_232 = arith.constant 3 : i32
    %c1_233 = arith.constant 1 : index
    %c0_234 = arith.constant 0 : index
    %c0_235 = arith.constant 0 : index
    %337 = vector.load %arg6[%c1_233, %c0_234, %c0_235] : memref<2x16x128xf32, #tpu.memory_space<vmem>>, vector<1x16x128xf32>
    %338 = vector.shape_cast %337 : vector<1x16x128xf32> to vector<16x128xf32>
    %c0_236 = arith.constant 0 : index
    %c0_237 = arith.constant 0 : index
    %339 = vector.load %arg1[%c0_236, %c0_237] : memref<16x16xf32, #tpu.memory_space<vmem>>, vector<16x16xf32>
    %cst_238 = arith.constant dense<0.000000e+00> : vector<16x128xf32>
    %340 = tpu.matmul %339, %338, %cst_238 {dimension_numbers = #tpu.dot_dimension_numbers<[1], [0], [0], [1], [0, 0, 1, 1], [], []>} : vector<16x16xf32>, vector<16x128xf32>, vector<16x128xf32> -> vector<16x128xf32>
    %c1_239 = arith.constant 1 : index
    %c0_240 = arith.constant 0 : index
    %c0_241 = arith.constant 0 : index
    %341 = vector.load %arg4[%c1_239, %c0_240, %c0_241] : memref<2x128x128xf32, #tpu.memory_space<vmem>>, vector<1x128x128xf32>
    %342 = vector.shape_cast %341 : vector<1x128x128xf32> to vector<128x128xf32>
    %cst_242 = arith.constant dense<0.000000e+00> : vector<16x128xf32>
    %343 = tpu.matmul %340, %342, %cst_242 {dimension_numbers = #tpu.dot_dimension_numbers<[1], [0], [0], [1], [0, 0, 1, 1], [], []>} : vector<16x128xf32>, vector<128x128xf32>, vector<16x128xf32> -> vector<16x128xf32>
    %344 = arith.addf %254, %343 : vector<16x128xf32>
    %345 = math.tanh %344 : vector<16x128xf32>
    %cst_243 = arith.constant 0.899999976 : f32
    %346 = vector.broadcast %cst_243 : f32 to vector<16x128xf32>
    %347 = arith.mulf %346, %345 : vector<16x128xf32>
    %cst_244 = arith.constant 1.000000e-01 : f32
    %348 = vector.broadcast %cst_244 : f32 to vector<16x128xf32>
    %349 = arith.mulf %348, %338 : vector<16x128xf32>
    %350 = arith.addf %347, %349 : vector<16x128xf32>
    %351 = arith.subf %338, %350 : vector<16x128xf32>
    %352 = arith.mulf %351, %351 : vector<16x128xf32>
    %353 = vector.shape_cast %352 : vector<16x128xf32> to vector<1x16x128xf32>
    %cst_245 = arith.constant dense<0.000000e+00> : vector<1xf32>
    %354 = vector.multi_reduction <add>, %353, %cst_245 [1, 2] : vector<1x16x128xf32> to vector<1xf32>
    %355 = vector.shape_cast %354 : vector<1xf32> to vector<1x1x1xf32>
    %356 = vector.extract %355[0, 0, 0] : f32 from vector<1x1x1xf32>
    %357 = arith.select %336, %338, %350 : vector<16x128xf32>
    %c1_246 = arith.constant 1 : index
    %c0_247 = arith.constant 0 : index
    %c0_248 = arith.constant 0 : index
    %358 = vector.load %arg6[%c1_246, %c0_247, %c0_248] : memref<2x16x128xf32, #tpu.memory_space<vmem>>, vector<1x16x128xf32>
    %359 = vector.shape_cast %358 : vector<1x16x128xf32> to vector<16x128xf32>
    %360 = vector.shape_cast %357 : vector<16x128xf32> to vector<1x16x128xf32>
    tpu.vector_store %arg6[%c1_246, %c0_247, %c0_248], %360 {strides = array<i32>} : memref<2x16x128xf32, #tpu.memory_space<vmem>>, vector<1x16x128xf32>,
    %cst_249 = arith.constant 1.000000e-10 : f32
    %361 = arith.cmpf olt, %356, %cst_249 : f32
    %362 = arith.ori %336, %361 : i1
    %c4_i32_250 = arith.constant 4 : i32
    %c1_251 = arith.constant 1 : index
    %c0_252 = arith.constant 0 : index
    %c0_253 = arith.constant 0 : index
    %363 = vector.load %arg6[%c1_251, %c0_252, %c0_253] : memref<2x16x128xf32, #tpu.memory_space<vmem>>, vector<1x16x128xf32>
    %364 = vector.shape_cast %363 : vector<1x16x128xf32> to vector<16x128xf32>
    %c0_254 = arith.constant 0 : index
    %c0_255 = arith.constant 0 : index
    %365 = vector.load %arg1[%c0_254, %c0_255] : memref<16x16xf32, #tpu.memory_space<vmem>>, vector<16x16xf32>
    %cst_256 = arith.constant dense<0.000000e+00> : vector<16x128xf32>
    %366 = tpu.matmul %365, %364, %cst_256 {dimension_numbers = #tpu.dot_dimension_numbers<[1], [0], [0], [1], [0, 0, 1, 1], [], []>} : vector<16x16xf32>, vector<16x128xf32>, vector<16x128xf32> -> vector<16x128xf32>
    %c1_257 = arith.constant 1 : index
    %c0_258 = arith.constant 0 : index
    %c0_259 = arith.constant 0 : index
    %367 = vector.load %arg4[%c1_257, %c0_258, %c0_259] : memref<2x128x128xf32, #tpu.memory_space<vmem>>, vector<1x128x128xf32>
    %368 = vector.shape_cast %367 : vector<1x128x128xf32> to vector<128x128xf32>
    %cst_260 = arith.constant dense<0.000000e+00> : vector<16x128xf32>
    %369 = tpu.matmul %366, %368, %cst_260 {dimension_numbers = #tpu.dot_dimension_numbers<[1], [0], [0], [1], [0, 0, 1, 1], [], []>} : vector<16x128xf32>, vector<128x128xf32>, vector<16x128xf32> -> vector<16x128xf32>
    %370 = arith.addf %254, %369 : vector<16x128xf32>
    %371 = math.tanh %370 : vector<16x128xf32>
    %cst_261 = arith.constant 0.899999976 : f32
    %372 = vector.broadcast %cst_261 : f32 to vector<16x128xf32>
    %373 = arith.mulf %372, %371 : vector<16x128xf32>
    %cst_262 = arith.constant 1.000000e-01 : f32
    %374 = vector.broadcast %cst_262 : f32 to vector<16x128xf32>
    %375 = arith.mulf %374, %364 : vector<16x128xf32>
    %376 = arith.addf %373, %375 : vector<16x128xf32>
    %377 = arith.subf %364, %376 : vector<16x128xf32>
    %378 = arith.mulf %377, %377 : vector<16x128xf32>
    %379 = vector.shape_cast %378 : vector<16x128xf32> to vector<1x16x128xf32>
    %cst_263 = arith.constant dense<0.000000e+00> : vector<1xf32>
    %380 = vector.multi_reduction <add>, %379, %cst_263 [1, 2] : vector<1x16x128xf32> to vector<1xf32>
    %381 = vector.shape_cast %380 : vector<1xf32> to vector<1x1x1xf32>
    %382 = vector.extract %381[0, 0, 0] : f32 from vector<1x1x1xf32>
    %383 = arith.select %362, %364, %376 : vector<16x128xf32>
    %c1_264 = arith.constant 1 : index
    %c0_265 = arith.constant 0 : index
    %c0_266 = arith.constant 0 : index
    %384 = vector.load %arg6[%c1_264, %c0_265, %c0_266] : memref<2x16x128xf32, #tpu.memory_space<vmem>>, vector<1x16x128xf32>
    %385 = vector.shape_cast %384 : vector<1x16x128xf32> to vector<16x128xf32>
    %386 = vector.shape_cast %383 : vector<16x128xf32> to vector<1x16x128xf32>
    tpu.vector_store %arg6[%c1_264, %c0_265, %c0_266], %386 {strides = array<i32>} : memref<2x16x128xf32, #tpu.memory_space<vmem>>, vector<1x16x128xf32>,
    %cst_267 = arith.constant 1.000000e-10 : f32
    %387 = arith.cmpf olt, %382, %cst_267 : f32
    %388 = arith.ori %362, %387 : i1
    %c5_i32_268 = arith.constant 5 : i32
    %c1_269 = arith.constant 1 : index
    %c0_270 = arith.constant 0 : index
    %c0_271 = arith.constant 0 : index
    %389 = vector.load %arg6[%c1_269, %c0_270, %c0_271] : memref<2x16x128xf32, #tpu.memory_space<vmem>>, vector<1x16x128xf32>
    %390 = vector.shape_cast %389 : vector<1x16x128xf32> to vector<16x128xf32>
    %c0_272 = arith.constant 0 : index
    %c0_273 = arith.constant 0 : index
    %391 = vector.load %arg1[%c0_272, %c0_273] : memref<16x16xf32, #tpu.memory_space<vmem>>, vector<16x16xf32>
    %cst_274 = arith.constant dense<0.000000e+00> : vector<16x128xf32>
    %392 = tpu.matmul %391, %390, %cst_274 {dimension_numbers = #tpu.dot_dimension_numbers<[1], [0], [0], [1], [0, 0, 1, 1], [], []>} : vector<16x16xf32>, vector<16x128xf32>, vector<16x128xf32> -> vector<16x128xf32>
    %c1_275 = arith.constant 1 : index
    %c0_276 = arith.constant 0 : index
    %c0_277 = arith.constant 0 : index
    %393 = vector.load %arg4[%c1_275, %c0_276, %c0_277] : memref<2x128x128xf32, #tpu.memory_space<vmem>>, vector<1x128x128xf32>
    %394 = vector.shape_cast %393 : vector<1x128x128xf32> to vector<128x128xf32>
    %cst_278 = arith.constant dense<0.000000e+00> : vector<16x128xf32>
    %395 = tpu.matmul %392, %394, %cst_278 {dimension_numbers = #tpu.dot_dimension_numbers<[1], [0], [0], [1], [0, 0, 1, 1], [], []>} : vector<16x128xf32>, vector<128x128xf32>, vector<16x128xf32> -> vector<16x128xf32>
    %396 = arith.addf %254, %395 : vector<16x128xf32>
    %397 = math.tanh %396 : vector<16x128xf32>
    %cst_279 = arith.constant 0.899999976 : f32
    %398 = vector.broadcast %cst_279 : f32 to vector<16x128xf32>
    %399 = arith.mulf %398, %397 : vector<16x128xf32>
    %cst_280 = arith.constant 1.000000e-01 : f32
    %400 = vector.broadcast %cst_280 : f32 to vector<16x128xf32>
    %401 = arith.mulf %400, %390 : vector<16x128xf32>
    %402 = arith.addf %399, %401 : vector<16x128xf32>
    %403 = arith.subf %390, %402 : vector<16x128xf32>
    %404 = arith.mulf %403, %403 : vector<16x128xf32>
    %405 = vector.shape_cast %404 : vector<16x128xf32> to vector<1x16x128xf32>
    %cst_281 = arith.constant dense<0.000000e+00> : vector<1xf32>
    %406 = vector.multi_reduction <add>, %405, %cst_281 [1, 2] : vector<1x16x128xf32> to vector<1xf32>
    %407 = vector.shape_cast %406 : vector<1xf32> to vector<1x1x1xf32>
    %408 = vector.extract %407[0, 0, 0] : f32 from vector<1x1x1xf32>
    %409 = arith.select %388, %390, %402 : vector<16x128xf32>
    %c1_282 = arith.constant 1 : index
    %c0_283 = arith.constant 0 : index
    %c0_284 = arith.constant 0 : index
    %410 = vector.load %arg6[%c1_282, %c0_283, %c0_284] : memref<2x16x128xf32, #tpu.memory_space<vmem>>, vector<1x16x128xf32>
    %411 = vector.shape_cast %410 : vector<1x16x128xf32> to vector<16x128xf32>
    %412 = vector.shape_cast %409 : vector<16x128xf32> to vector<1x16x128xf32>
    tpu.vector_store %arg6[%c1_282, %c0_283, %c0_284], %412 {strides = array<i32>} : memref<2x16x128xf32, #tpu.memory_space<vmem>>, vector<1x16x128xf32>,
    %cst_285 = arith.constant 1.000000e-10 : f32
    %413 = arith.cmpf olt, %408, %cst_285 : f32
    %414 = arith.ori %388, %413 : i1
    %c6_i32_286 = arith.constant 6 : i32
    %c1_287 = arith.constant 1 : index
    %c0_288 = arith.constant 0 : index
    %c0_289 = arith.constant 0 : index
    %415 = vector.load %arg6[%c1_287, %c0_288, %c0_289] : memref<2x16x128xf32, #tpu.memory_space<vmem>>, vector<1x16x128xf32>
    %416 = vector.shape_cast %415 : vector<1x16x128xf32> to vector<16x128xf32>
    %c0_290 = arith.constant 0 : index
    %c0_291 = arith.constant 0 : index
    %417 = vector.load %arg1[%c0_290, %c0_291] : memref<16x16xf32, #tpu.memory_space<vmem>>, vector<16x16xf32>
    %cst_292 = arith.constant dense<0.000000e+00> : vector<16x128xf32>
    %418 = tpu.matmul %417, %416, %cst_292 {dimension_numbers = #tpu.dot_dimension_numbers<[1], [0], [0], [1], [0, 0, 1, 1], [], []>} : vector<16x16xf32>, vector<16x128xf32>, vector<16x128xf32> -> vector<16x128xf32>
    %c1_293 = arith.constant 1 : index
    %c0_294 = arith.constant 0 : index
    %c0_295 = arith.constant 0 : index
    %419 = vector.load %arg4[%c1_293, %c0_294, %c0_295] : memref<2x128x128xf32, #tpu.memory_space<vmem>>, vector<1x128x128xf32>
    %420 = vector.shape_cast %419 : vector<1x128x128xf32> to vector<128x128xf32>
    %cst_296 = arith.constant dense<0.000000e+00> : vector<16x128xf32>
    %421 = tpu.matmul %418, %420, %cst_296 {dimension_numbers = #tpu.dot_dimension_numbers<[1], [0], [0], [1], [0, 0, 1, 1], [], []>} : vector<16x128xf32>, vector<128x128xf32>, vector<16x128xf32> -> vector<16x128xf32>
    %422 = arith.addf %254, %421 : vector<16x128xf32>
    %423 = math.tanh %422 : vector<16x128xf32>
    %cst_297 = arith.constant 0.899999976 : f32
    %424 = vector.broadcast %cst_297 : f32 to vector<16x128xf32>
    %425 = arith.mulf %424, %423 : vector<16x128xf32>
    %cst_298 = arith.constant 1.000000e-01 : f32
    %426 = vector.broadcast %cst_298 : f32 to vector<16x128xf32>
    %427 = arith.mulf %426, %416 : vector<16x128xf32>
    %428 = arith.addf %425, %427 : vector<16x128xf32>
    %429 = arith.subf %416, %428 : vector<16x128xf32>
    %430 = arith.mulf %429, %429 : vector<16x128xf32>
    %431 = vector.shape_cast %430 : vector<16x128xf32> to vector<1x16x128xf32>
    %cst_299 = arith.constant dense<0.000000e+00> : vector<1xf32>
    %432 = vector.multi_reduction <add>, %431, %cst_299 [1, 2] : vector<1x16x128xf32> to vector<1xf32>
    %433 = vector.shape_cast %432 : vector<1xf32> to vector<1x1x1xf32>
    %434 = vector.extract %433[0, 0, 0] : f32 from vector<1x1x1xf32>
    %435 = arith.select %414, %416, %428 : vector<16x128xf32>
    %c1_300 = arith.constant 1 : index
    %c0_301 = arith.constant 0 : index
    %c0_302 = arith.constant 0 : index
    %436 = vector.load %arg6[%c1_300, %c0_301, %c0_302] : memref<2x16x128xf32, #tpu.memory_space<vmem>>, vector<1x16x128xf32>
    %437 = vector.shape_cast %436 : vector<1x16x128xf32> to vector<16x128xf32>
    %438 = vector.shape_cast %435 : vector<16x128xf32> to vector<1x16x128xf32>
    tpu.vector_store %arg6[%c1_300, %c0_301, %c0_302], %438 {strides = array<i32>} : memref<2x16x128xf32, #tpu.memory_space<vmem>>, vector<1x16x128xf32>,
    %cst_303 = arith.constant 1.000000e-10 : f32
    %439 = arith.cmpf olt, %434, %cst_303 : f32
    %440 = arith.ori %414, %439 : i1
    %c7_i32_304 = arith.constant 7 : i32
    %c1_305 = arith.constant 1 : index
    %c0_306 = arith.constant 0 : index
    %c0_307 = arith.constant 0 : index
    %441 = vector.load %arg6[%c1_305, %c0_306, %c0_307] : memref<2x16x128xf32, #tpu.memory_space<vmem>>, vector<1x16x128xf32>
    %442 = vector.shape_cast %441 : vector<1x16x128xf32> to vector<16x128xf32>
    %c0_308 = arith.constant 0 : index
    %c0_309 = arith.constant 0 : index
    %443 = vector.load %arg1[%c0_308, %c0_309] : memref<16x16xf32, #tpu.memory_space<vmem>>, vector<16x16xf32>
    %cst_310 = arith.constant dense<0.000000e+00> : vector<16x128xf32>
    %444 = tpu.matmul %443, %442, %cst_310 {dimension_numbers = #tpu.dot_dimension_numbers<[1], [0], [0], [1], [0, 0, 1, 1], [], []>} : vector<16x16xf32>, vector<16x128xf32>, vector<16x128xf32> -> vector<16x128xf32>
    %c1_311 = arith.constant 1 : index
    %c0_312 = arith.constant 0 : index
    %c0_313 = arith.constant 0 : index
    %445 = vector.load %arg4[%c1_311, %c0_312, %c0_313] : memref<2x128x128xf32, #tpu.memory_space<vmem>>, vector<1x128x128xf32>
    %446 = vector.shape_cast %445 : vector<1x128x128xf32> to vector<128x128xf32>
    %cst_314 = arith.constant dense<0.000000e+00> : vector<16x128xf32>
    %447 = tpu.matmul %444, %446, %cst_314 {dimension_numbers = #tpu.dot_dimension_numbers<[1], [0], [0], [1], [0, 0, 1, 1], [], []>} : vector<16x128xf32>, vector<128x128xf32>, vector<16x128xf32> -> vector<16x128xf32>
    %448 = arith.addf %254, %447 : vector<16x128xf32>
    %449 = math.tanh %448 : vector<16x128xf32>
    %cst_315 = arith.constant 0.899999976 : f32
    %450 = vector.broadcast %cst_315 : f32 to vector<16x128xf32>
    %451 = arith.mulf %450, %449 : vector<16x128xf32>
    %cst_316 = arith.constant 1.000000e-01 : f32
    %452 = vector.broadcast %cst_316 : f32 to vector<16x128xf32>
    %453 = arith.mulf %452, %442 : vector<16x128xf32>
    %454 = arith.addf %451, %453 : vector<16x128xf32>
    %455 = arith.subf %442, %454 : vector<16x128xf32>
    %456 = arith.mulf %455, %455 : vector<16x128xf32>
    %457 = vector.shape_cast %456 : vector<16x128xf32> to vector<1x16x128xf32>
    %cst_317 = arith.constant dense<0.000000e+00> : vector<1xf32>
    %458 = vector.multi_reduction <add>, %457, %cst_317 [1, 2] : vector<1x16x128xf32> to vector<1xf32>
    %459 = vector.shape_cast %458 : vector<1xf32> to vector<1x1x1xf32>
    %460 = vector.extract %459[0, 0, 0] : f32 from vector<1x1x1xf32>
    %461 = arith.select %440, %442, %454 : vector<16x128xf32>
    %c1_318 = arith.constant 1 : index
    %c0_319 = arith.constant 0 : index
    %c0_320 = arith.constant 0 : index
    %462 = vector.load %arg6[%c1_318, %c0_319, %c0_320] : memref<2x16x128xf32, #tpu.memory_space<vmem>>, vector<1x16x128xf32>
    %463 = vector.shape_cast %462 : vector<1x16x128xf32> to vector<16x128xf32>
    %464 = vector.shape_cast %461 : vector<16x128xf32> to vector<1x16x128xf32>
    tpu.vector_store %arg6[%c1_318, %c0_319, %c0_320], %464 {strides = array<i32>} : memref<2x16x128xf32, #tpu.memory_space<vmem>>, vector<1x16x128xf32>,
    %cst_321 = arith.constant 1.000000e-10 : f32
    %465 = arith.cmpf olt, %460, %cst_321 : f32
    %466 = arith.ori %440, %465 : i1
    %c8_i32_322 = arith.constant 8 : i32
    %c1_323 = arith.constant 1 : index
    %c0_324 = arith.constant 0 : index
    %c0_325 = arith.constant 0 : index
    %467 = vector.load %arg6[%c1_323, %c0_324, %c0_325] : memref<2x16x128xf32, #tpu.memory_space<vmem>>, vector<1x16x128xf32>
    %468 = vector.shape_cast %467 : vector<1x16x128xf32> to vector<16x128xf32>
    %c0_326 = arith.constant 0 : index
    %c0_327 = arith.constant 0 : index
    %469 = vector.load %arg1[%c0_326, %c0_327] : memref<16x16xf32, #tpu.memory_space<vmem>>, vector<16x16xf32>
    %cst_328 = arith.constant dense<0.000000e+00> : vector<16x128xf32>
    %470 = tpu.matmul %469, %468, %cst_328 {dimension_numbers = #tpu.dot_dimension_numbers<[1], [0], [0], [1], [0, 0, 1, 1], [], []>} : vector<16x16xf32>, vector<16x128xf32>, vector<16x128xf32> -> vector<16x128xf32>
    %c1_329 = arith.constant 1 : index
    %c0_330 = arith.constant 0 : index
    %c0_331 = arith.constant 0 : index
    %471 = vector.load %arg4[%c1_329, %c0_330, %c0_331] : memref<2x128x128xf32, #tpu.memory_space<vmem>>, vector<1x128x128xf32>
    %472 = vector.shape_cast %471 : vector<1x128x128xf32> to vector<128x128xf32>
    %cst_332 = arith.constant dense<0.000000e+00> : vector<16x128xf32>
    %473 = tpu.matmul %470, %472, %cst_332 {dimension_numbers = #tpu.dot_dimension_numbers<[1], [0], [0], [1], [0, 0, 1, 1], [], []>} : vector<16x128xf32>, vector<128x128xf32>, vector<16x128xf32> -> vector<16x128xf32>
    %474 = arith.addf %254, %473 : vector<16x128xf32>
    %475 = math.tanh %474 : vector<16x128xf32>
    %cst_333 = arith.constant 0.899999976 : f32
    %476 = vector.broadcast %cst_333 : f32 to vector<16x128xf32>
    %477 = arith.mulf %476, %475 : vector<16x128xf32>
    %cst_334 = arith.constant 1.000000e-01 : f32
    %478 = vector.broadcast %cst_334 : f32 to vector<16x128xf32>
    %479 = arith.mulf %478, %468 : vector<16x128xf32>
    %480 = arith.addf %477, %479 : vector<16x128xf32>
    %481 = arith.subf %468, %480 : vector<16x128xf32>
    %482 = arith.mulf %481, %481 : vector<16x128xf32>
    %483 = vector.shape_cast %482 : vector<16x128xf32> to vector<1x16x128xf32>
    %cst_335 = arith.constant dense<0.000000e+00> : vector<1xf32>
    %484 = vector.multi_reduction <add>, %483, %cst_335 [1, 2] : vector<1x16x128xf32> to vector<1xf32>
    %485 = vector.shape_cast %484 : vector<1xf32> to vector<1x1x1xf32>
    %486 = vector.extract %485[0, 0, 0] : f32 from vector<1x1x1xf32>
    %487 = arith.select %466, %468, %480 : vector<16x128xf32>
    %c1_336 = arith.constant 1 : index
    %c0_337 = arith.constant 0 : index
    %c0_338 = arith.constant 0 : index
    %488 = vector.load %arg6[%c1_336, %c0_337, %c0_338] : memref<2x16x128xf32, #tpu.memory_space<vmem>>, vector<1x16x128xf32>
    %489 = vector.shape_cast %488 : vector<1x16x128xf32> to vector<16x128xf32>
    %490 = vector.shape_cast %487 : vector<16x128xf32> to vector<1x16x128xf32>
    tpu.vector_store %arg6[%c1_336, %c0_337, %c0_338], %490 {strides = array<i32>} : memref<2x16x128xf32, #tpu.memory_space<vmem>>, vector<1x16x128xf32>,
    %cst_339 = arith.constant 1.000000e-10 : f32
    %491 = arith.cmpf olt, %486, %cst_339 : f32
    %492 = arith.ori %466, %491 : i1
    return
  }
  func.func @transform_0(%arg0: i32) -> (i32, i32) {
    %c0_i32 = arith.constant 0 : i32
    %c0_i32_0 = arith.constant 0 : i32
    %c0_i32_1 = arith.constant 0 : i32
    return %c0_i32, %c0_i32_0 : i32, i32
  }
  func.func @transform_1(%arg0: i32) -> (i32, i32) {
    %c0_i32 = arith.constant 0 : i32
    %c0_i32_0 = arith.constant 0 : i32
    %c0_i32_1 = arith.constant 0 : i32
    return %c0_i32, %c0_i32_0 : i32, i32
  }
  func.func @transform_2(%arg0: i32) -> (i32, i32, i32) {
    %c0_i32 = arith.constant 0 : i32
    %c0_i32_0 = arith.constant 0 : i32
    %c0_i32_1 = arith.constant 0 : i32
    %c0_i32_2 = arith.constant 0 : i32
    return %c0_i32, %c0_i32_0, %c0_i32_1 : i32, i32, i32
  }
  func.func @transform_3(%arg0: i32) -> (i32, i32, i32) {
    %c0_i32 = arith.constant 0 : i32
    %c0_i32_0 = arith.constant 0 : i32
    %c0_i32_1 = arith.constant 0 : i32
    %c0_i32_2 = arith.constant 0 : i32
    return %c0_i32, %c0_i32_0, %c0_i32_1 : i32, i32, i32
  }
  func.func @transform_4(%arg0: i32) -> (i32, i32, i32) {
    %c0_i32 = arith.constant 0 : i32
    %c0_i32_0 = arith.constant 0 : i32
    %c0_i32_1 = arith.constant 0 : i32
    %c0_i32_2 = arith.constant 0 : i32
    return %c0_i32, %c0_i32_0, %c0_i32_1 : i32, i32, i32
  }
  func.func @transform_5(%arg0: i32) -> (i32, i32, i32) {
    %c0_i32 = arith.constant 0 : i32
    %c0_i32_0 = arith.constant 0 : i32
    %c0_i32_1 = arith.constant 0 : i32
    %c0_i32_2 = arith.constant 0 : i32
    return %c0_i32, %c0_i32_0, %c0_i32_1 : i32, i32, i32
  }
}

module attributes {stable_mosaic.version = 11 : i64} {
  func.func @_fused_reservoir_kernel(%arg0: i32, %arg1: memref<16x16xf32, #tpu.memory_space<vmem>>, %arg2: memref<16x128xf32, #tpu.memory_space<vmem>>, %arg3: memref<2x128x128xf32, #tpu.memory_space<vmem>>, %arg4: memref<2x128x128xf32, #tpu.memory_space<vmem>>, %arg5: memref<2x1x128xf32, #tpu.memory_space<vmem>>, %arg6: memref<2x16x128xf32, #tpu.memory_space<vmem>>) attributes {dimension_semantics = [#tpu.dimension_semantics<arbitrary>], iteration_bounds = array<i64: 1>, scalar_prefetch = 0 : i64, scratch_operands = 0 : i64, tpu.core_type = #tpu.core_type<tc>, window_params = [{pipeline_mode = #tpu.pipeline_mode<synchronous>, transform_indices = @transform_0, window_bounds = array<i64: 16, 16>}, {pipeline_mode = #tpu.pipeline_mode<synchronous>, transform_indices = @transform_1, window_bounds = array<i64: 16, 128>}, {pipeline_mode = #tpu.pipeline_mode<synchronous>, transform_indices = @transform_2, window_bounds = array<i64: 2, 128, 128>}, {pipeline_mode = #tpu.pipeline_mode<synchronous>, transform_indices = @transform_3, window_bounds = array<i64: 2, 128, 128>}, {pipeline_mode = #tpu.pipeline_mode<synchronous>, transform_indices = @transform_4, window_bounds = array<i64: 2, 1, 128>}, {pipeline_mode = #tpu.pipeline_mode<synchronous>, transform_indices = @transform_5, window_bounds = array<i64: 2, 16, 128>}]} {
    %c0 = arith.constant 0 : index
    %c0_0 = arith.constant 0 : index
    %0 = vector.load %arg2[%c0, %c0_0] : memref<16x128xf32, #tpu.memory_space<vmem>>, vector<16x128xf32>
    %c0_1 = arith.constant 0 : index
    %c0_2 = arith.constant 0 : index
    %c0_3 = arith.constant 0 : index
    %1 = vector.load %arg3[%c0_1, %c0_2, %c0_3] : memref<2x128x128xf32, #tpu.memory_space<vmem>>, vector<1x128x128xf32>
    %2 = vector.shape_cast %1 : vector<1x128x128xf32> to vector<128x128xf32>
    %cst = arith.constant dense<0.000000e+00> : vector<16x128xf32>
    %3 = tpu.matmul %0, %2, %cst {dimension_numbers = #tpu.dot_dimension_numbers<[1], [0], [0], [1], [0, 0, 1, 1], [], []>} : vector<16x128xf32>, vector<128x128xf32>, vector<16x128xf32> -> vector<16x128xf32>
    %c0_4 = arith.constant 0 : index
    %c0_5 = arith.constant 0 : index
    %c0_6 = arith.constant 0 : index
    %4 = vector.load %arg5[%c0_4, %c0_5, %c0_6] : memref<2x1x128xf32, #tpu.memory_space<vmem>>, vector<1x1x128xf32>
    %5 = vector.shape_cast %4 : vector<1x1x128xf32> to vector<1x128xf32>
    %6 = vector.broadcast %5 : vector<1x128xf32> to vector<16x128xf32>
    %7 = arith.addf %3, %6 : vector<16x128xf32>
    %cst_7 = arith.constant 0.000000e+00 : f32
    %8 = vector.broadcast %cst_7 : f32 to vector<16x128xf32>
    %c0_8 = arith.constant 0 : index
    %c0_9 = arith.constant 0 : index
    %c0_10 = arith.constant 0 : index
    %9 = vector.load %arg6[%c0_8, %c0_9, %c0_10] : memref<2x16x128xf32, #tpu.memory_space<vmem>>, vector<1x16x128xf32>
    %10 = vector.shape_cast %9 : vector<1x16x128xf32> to vector<16x128xf32>
    %11 = vector.shape_cast %8 : vector<16x128xf32> to vector<1x16x128xf32>
    tpu.vector_store %arg6[%c0_8, %c0_9, %c0_10], %11 {strides = array<i32>} : memref<2x16x128xf32, #tpu.memory_space<vmem>>, vector<1x16x128xf32>,
    %false = arith.constant false
    %c0_i32 = arith.constant 0 : i32
    %c0_11 = arith.constant 0 : index
    %c0_12 = arith.constant 0 : index
    %c0_13 = arith.constant 0 : index
    %12 = vector.load %arg6[%c0_11, %c0_12, %c0_13] : memref<2x16x128xf32, #tpu.memory_space<vmem>>, vector<1x16x128xf32>
    %13 = vector.shape_cast %12 : vector<1x16x128xf32> to vector<16x128xf32>
    %c0_14 = arith.constant 0 : index
    %c0_15 = arith.constant 0 : index
    %14 = vector.load %arg1[%c0_14, %c0_15] : memref<16x16xf32, #tpu.memory_space<vmem>>, vector<16x16xf32>
    %cst_16 = arith.constant dense<0.000000e+00> : vector<16x128xf32>
    %15 = tpu.matmul %14, %13, %cst_16 {dimension_numbers = #tpu.dot_dimension_numbers<[1], [0], [0], [1], [0, 0, 1, 1], [], []>} : vector<16x16xf32>, vector<16x128xf32>, vector<16x128xf32> -> vector<16x128xf32>
    %c0_17 = arith.constant 0 : index
    %c0_18 = arith.constant 0 : index
    %c0_19 = arith.constant 0 : index
    %16 = vector.load %arg4[%c0_17, %c0_18, %c0_19] : memref<2x128x128xf32, #tpu.memory_space<vmem>>, vector<1x128x128xf32>
    %17 = vector.shape_cast %16 : vector<1x128x128xf32> to vector<128x128xf32>
    %cst_20 = arith.constant dense<0.000000e+00> : vector<16x128xf32>
    %18 = tpu.matmul %15, %17, %cst_20 {dimension_numbers = #tpu.dot_dimension_numbers<[1], [0], [0], [1], [0, 0, 1, 1], [], []>} : vector<16x128xf32>, vector<128x128xf32>, vector<16x128xf32> -> vector<16x128xf32>
    %19 = arith.addf %7, %18 : vector<16x128xf32>
    %20 = math.tanh %19 : vector<16x128xf32>
    %cst_21 = arith.constant 0.899999976 : f32
    %21 = vector.broadcast %cst_21 : f32 to vector<16x128xf32>
    %22 = arith.mulf %21, %20 : vector<16x128xf32>
    %cst_22 = arith.constant 1.000000e-01 : f32
    %23 = vector.broadcast %cst_22 : f32 to vector<16x128xf32>
    %24 = arith.mulf %23, %13 : vector<16x128xf32>
    %25 = arith.addf %22, %24 : vector<16x128xf32>
    %26 = arith.subf %13, %25 : vector<16x128xf32>
    %27 = arith.mulf %26, %26 : vector<16x128xf32>
    %28 = vector.shape_cast %27 : vector<16x128xf32> to vector<1x16x128xf32>
    %cst_23 = arith.constant dense<0.000000e+00> : vector<1xf32>
    %29 = vector.multi_reduction <add>, %28, %cst_23 [1, 2] : vector<1x16x128xf32> to vector<1xf32>
    %30 = vector.shape_cast %29 : vector<1xf32> to vector<1x1x1xf32>
    %31 = vector.extract %30[0, 0, 0] : f32 from vector<1x1x1xf32>
    %32 = arith.select %false, %13, %25 : vector<16x128xf32>
    %c0_24 = arith.constant 0 : index
    %c0_25 = arith.constant 0 : index
    %c0_26 = arith.constant 0 : index
    %33 = vector.load %arg6[%c0_24, %c0_25, %c0_26] : memref<2x16x128xf32, #tpu.memory_space<vmem>>, vector<1x16x128xf32>
    %34 = vector.shape_cast %33 : vector<1x16x128xf32> to vector<16x128xf32>
    %35 = vector.shape_cast %32 : vector<16x128xf32> to vector<1x16x128xf32>
    tpu.vector_store %arg6[%c0_24, %c0_25, %c0_26], %35 {strides = array<i32>} : memref<2x16x128xf32, #tpu.memory_space<vmem>>, vector<1x16x128xf32>,
    %cst_27 = arith.constant 1.000000e-10 : f32
    %36 = arith.cmpf olt, %31, %cst_27 : f32
    %37 = arith.ori %false, %36 : i1
    %c1_i32 = arith.constant 1 : i32
    %c0_28 = arith.constant 0 : index
    %c0_29 = arith.constant 0 : index
    %c0_30 = arith.constant 0 : index
    %38 = vector.load %arg6[%c0_28, %c0_29, %c0_30] : memref<2x16x128xf32, #tpu.memory_space<vmem>>, vector<1x16x128xf32>
    %39 = vector.shape_cast %38 : vector<1x16x128xf32> to vector<16x128xf32>
    %c0_31 = arith.constant 0 : index
    %c0_32 = arith.constant 0 : index
    %40 = vector.load %arg1[%c0_31, %c0_32] : memref<16x16xf32, #tpu.memory_space<vmem>>, vector<16x16xf32>
    %cst_33 = arith.constant dense<0.000000e+00> : vector<16x128xf32>
    %41 = tpu.matmul %40, %39, %cst_33 {dimension_numbers = #tpu.dot_dimension_numbers<[1], [0], [0], [1], [0, 0, 1, 1], [], []>} : vector<16x16xf32>, vector<16x128xf32>, vector<16x128xf32> -> vector<16x128xf32>
    %c0_34 = arith.constant 0 : index
    %c0_35 = arith.constant 0 : index
    %c0_36 = arith.constant 0 : index
    %42 = vector.load %arg4[%c0_34, %c0_35, %c0_36] : memref<2x128x128xf32, #tpu.memory_space<vmem>>, vector<1x128x128xf32>
    %43 = vector.shape_cast %42 : vector<1x128x128xf32> to vector<128x128xf32>
    %cst_37 = arith.constant dense<0.000000e+00> : vector<16x128xf32>
    %44 = tpu.matmul %41, %43, %cst_37 {dimension_numbers = #tpu.dot_dimension_numbers<[1], [0], [0], [1], [0, 0, 1, 1], [], []>} : vector<16x128xf32>, vector<128x128xf32>, vector<16x128xf32> -> vector<16x128xf32>
    %45 = arith.addf %7, %44 : vector<16x128xf32>
    %46 = math.tanh %45 : vector<16x128xf32>
    %cst_38 = arith.constant 0.899999976 : f32
    %47 = vector.broadcast %cst_38 : f32 to vector<16x128xf32>
    %48 = arith.mulf %47, %46 : vector<16x128xf32>
    %cst_39 = arith.constant 1.000000e-01 : f32
    %49 = vector.broadcast %cst_39 : f32 to vector<16x128xf32>
    %50 = arith.mulf %49, %39 : vector<16x128xf32>
    %51 = arith.addf %48, %50 : vector<16x128xf32>
    %52 = arith.subf %39, %51 : vector<16x128xf32>
    %53 = arith.mulf %52, %52 : vector<16x128xf32>
    %54 = vector.shape_cast %53 : vector<16x128xf32> to vector<1x16x128xf32>
    %cst_40 = arith.constant dense<0.000000e+00> : vector<1xf32>
    %55 = vector.multi_reduction <add>, %54, %cst_40 [1, 2] : vector<1x16x128xf32> to vector<1xf32>
    %56 = vector.shape_cast %55 : vector<1xf32> to vector<1x1x1xf32>
    %57 = vector.extract %56[0, 0, 0] : f32 from vector<1x1x1xf32>
    %58 = arith.select %37, %39, %51 : vector<16x128xf32>
    %c0_41 = arith.constant 0 : index
    %c0_42 = arith.constant 0 : index
    %c0_43 = arith.constant 0 : index
    %59 = vector.load %arg6[%c0_41, %c0_42, %c0_43] : memref<2x16x128xf32, #tpu.memory_space<vmem>>, vector<1x16x128xf32>
    %60 = vector.shape_cast %59 : vector<1x16x128xf32> to vector<16x128xf32>
    %61 = vector.shape_cast %58 : vector<16x128xf32> to vector<1x16x128xf32>
    tpu.vector_store %arg6[%c0_41, %c0_42, %c0_43], %61 {strides = array<i32>} : memref<2x16x128xf32, #tpu.memory_space<vmem>>, vector<1x16x128xf32>,
    %cst_44 = arith.constant 1.000000e-10 : f32
    %62 = arith.cmpf olt, %57, %cst_44 : f32
    %63 = arith.ori %37, %62 : i1
    %c2_i32 = arith.constant 2 : i32
    %c0_45 = arith.constant 0 : index
    %c0_46 = arith.constant 0 : index
    %c0_47 = arith.constant 0 : index
    %64 = vector.load %arg6[%c0_45, %c0_46, %c0_47] : memref<2x16x128xf32, #tpu.memory_space<vmem>>, vector<1x16x128xf32>
    %65 = vector.shape_cast %64 : vector<1x16x128xf32> to vector<16x128xf32>
    %c0_48 = arith.constant 0 : index
    %c0_49 = arith.constant 0 : index
    %66 = vector.load %arg1[%c0_48, %c0_49] : memref<16x16xf32, #tpu.memory_space<vmem>>, vector<16x16xf32>
    %cst_50 = arith.constant dense<0.000000e+00> : vector<16x128xf32>
    %67 = tpu.matmul %66, %65, %cst_50 {dimension_numbers = #tpu.dot_dimension_numbers<[1], [0], [0], [1], [0, 0, 1, 1], [], []>} : vector<16x16xf32>, vector<16x128xf32>, vector<16x128xf32> -> vector<16x128xf32>
    %c0_51 = arith.constant 0 : index
    %c0_52 = arith.constant 0 : index
    %c0_53 = arith.constant 0 : index
    %68 = vector.load %arg4[%c0_51, %c0_52, %c0_53] : memref<2x128x128xf32, #tpu.memory_space<vmem>>, vector<1x128x128xf32>
    %69 = vector.shape_cast %68 : vector<1x128x128xf32> to vector<128x128xf32>
    %cst_54 = arith.constant dense<0.000000e+00> : vector<16x128xf32>
    %70 = tpu.matmul %67, %69, %cst_54 {dimension_numbers = #tpu.dot_dimension_numbers<[1], [0], [0], [1], [0, 0, 1, 1], [], []>} : vector<16x128xf32>, vector<128x128xf32>, vector<16x128xf32> -> vector<16x128xf32>
    %71 = arith.addf %7, %70 : vector<16x128xf32>
    %72 = math.tanh %71 : vector<16x128xf32>
    %cst_55 = arith.constant 0.899999976 : f32
    %73 = vector.broadcast %cst_55 : f32 to vector<16x128xf32>
    %74 = arith.mulf %73, %72 : vector<16x128xf32>
    %cst_56 = arith.constant 1.000000e-01 : f32
    %75 = vector.broadcast %cst_56 : f32 to vector<16x128xf32>
    %76 = arith.mulf %75, %65 : vector<16x128xf32>
    %77 = arith.addf %74, %76 : vector<16x128xf32>
    %78 = arith.subf %65, %77 : vector<16x128xf32>
    %79 = arith.mulf %78, %78 : vector<16x128xf32>
    %80 = vector.shape_cast %79 : vector<16x128xf32> to vector<1x16x128xf32>
    %cst_57 = arith.constant dense<0.000000e+00> : vector<1xf32>
    %81 = vector.multi_reduction <add>, %80, %cst_57 [1, 2] : vector<1x16x128xf32> to vector<1xf32>
    %82 = vector.shape_cast %81 : vector<1xf32> to vector<1x1x1xf32>
    %83 = vector.extract %82[0, 0, 0] : f32 from vector<1x1x1xf32>
    %84 = arith.select %63, %65, %77 : vector<16x128xf32>
    %c0_58 = arith.constant 0 : index
    %c0_59 = arith.constant 0 : index
    %c0_60 = arith.constant 0 : index
    %85 = vector.load %arg6[%c0_58, %c0_59, %c0_60] : memref<2x16x128xf32, #tpu.memory_space<vmem>>, vector<1x16x128xf32>
    %86 = vector.shape_cast %85 : vector<1x16x128xf32> to vector<16x128xf32>
    %87 = vector.shape_cast %84 : vector<16x128xf32> to vector<1x16x128xf32>
    tpu.vector_store %arg6[%c0_58, %c0_59, %c0_60], %87 {strides = array<i32>} : memref<2x16x128xf32, #tpu.memory_space<vmem>>, vector<1x16x128xf32>,
    %cst_61 = arith.constant 1.000000e-10 : f32
    %88 = arith.cmpf olt, %83, %cst_61 : f32
    %89 = arith.ori %63, %88 : i1
    %c3_i32 = arith.constant 3 : i32
    %c0_62 = arith.constant 0 : index
    %c0_63 = arith.constant 0 : index
    %c0_64 = arith.constant 0 : index
    %90 = vector.load %arg6[%c0_62, %c0_63, %c0_64] : memref<2x16x128xf32, #tpu.memory_space<vmem>>, vector<1x16x128xf32>
    %91 = vector.shape_cast %90 : vector<1x16x128xf32> to vector<16x128xf32>
    %c0_65 = arith.constant 0 : index
    %c0_66 = arith.constant 0 : index
    %92 = vector.load %arg1[%c0_65, %c0_66] : memref<16x16xf32, #tpu.memory_space<vmem>>, vector<16x16xf32>
    %cst_67 = arith.constant dense<0.000000e+00> : vector<16x128xf32>
    %93 = tpu.matmul %92, %91, %cst_67 {dimension_numbers = #tpu.dot_dimension_numbers<[1], [0], [0], [1], [0, 0, 1, 1], [], []>} : vector<16x16xf32>, vector<16x128xf32>, vector<16x128xf32> -> vector<16x128xf32>
    %c0_68 = arith.constant 0 : index
    %c0_69 = arith.constant 0 : index
    %c0_70 = arith.constant 0 : index
    %94 = vector.load %arg4[%c0_68, %c0_69, %c0_70] : memref<2x128x128xf32, #tpu.memory_space<vmem>>, vector<1x128x128xf32>
    %95 = vector.shape_cast %94 : vector<1x128x128xf32> to vector<128x128xf32>
    %cst_71 = arith.constant dense<0.000000e+00> : vector<16x128xf32>
    %96 = tpu.matmul %93, %95, %cst_71 {dimension_numbers = #tpu.dot_dimension_numbers<[1], [0], [0], [1], [0, 0, 1, 1], [], []>} : vector<16x128xf32>, vector<128x128xf32>, vector<16x128xf32> -> vector<16x128xf32>
    %97 = arith.addf %7, %96 : vector<16x128xf32>
    %98 = math.tanh %97 : vector<16x128xf32>
    %cst_72 = arith.constant 0.899999976 : f32
    %99 = vector.broadcast %cst_72 : f32 to vector<16x128xf32>
    %100 = arith.mulf %99, %98 : vector<16x128xf32>
    %cst_73 = arith.constant 1.000000e-01 : f32
    %101 = vector.broadcast %cst_73 : f32 to vector<16x128xf32>
    %102 = arith.mulf %101, %91 : vector<16x128xf32>
    %103 = arith.addf %100, %102 : vector<16x128xf32>
    %104 = arith.subf %91, %103 : vector<16x128xf32>
    %105 = arith.mulf %104, %104 : vector<16x128xf32>
    %106 = vector.shape_cast %105 : vector<16x128xf32> to vector<1x16x128xf32>
    %cst_74 = arith.constant dense<0.000000e+00> : vector<1xf32>
    %107 = vector.multi_reduction <add>, %106, %cst_74 [1, 2] : vector<1x16x128xf32> to vector<1xf32>
    %108 = vector.shape_cast %107 : vector<1xf32> to vector<1x1x1xf32>
    %109 = vector.extract %108[0, 0, 0] : f32 from vector<1x1x1xf32>
    %110 = arith.select %89, %91, %103 : vector<16x128xf32>
    %c0_75 = arith.constant 0 : index
    %c0_76 = arith.constant 0 : index
    %c0_77 = arith.constant 0 : index
    %111 = vector.load %arg6[%c0_75, %c0_76, %c0_77] : memref<2x16x128xf32, #tpu.memory_space<vmem>>, vector<1x16x128xf32>
    %112 = vector.shape_cast %111 : vector<1x16x128xf32> to vector<16x128xf32>
    %113 = vector.shape_cast %110 : vector<16x128xf32> to vector<1x16x128xf32>
    tpu.vector_store %arg6[%c0_75, %c0_76, %c0_77], %113 {strides = array<i32>} : memref<2x16x128xf32, #tpu.memory_space<vmem>>, vector<1x16x128xf32>,
    %cst_78 = arith.constant 1.000000e-10 : f32
    %114 = arith.cmpf olt, %109, %cst_78 : f32
    %115 = arith.ori %89, %114 : i1
    %c4_i32 = arith.constant 4 : i32
    %c0_79 = arith.constant 0 : index
    %c0_80 = arith.constant 0 : index
    %c0_81 = arith.constant 0 : index
    %116 = vector.load %arg6[%c0_79, %c0_80, %c0_81] : memref<2x16x128xf32, #tpu.memory_space<vmem>>, vector<1x16x128xf32>
    %117 = vector.shape_cast %116 : vector<1x16x128xf32> to vector<16x128xf32>
    %c0_82 = arith.constant 0 : index
    %c0_83 = arith.constant 0 : index
    %118 = vector.load %arg1[%c0_82, %c0_83] : memref<16x16xf32, #tpu.memory_space<vmem>>, vector<16x16xf32>
    %cst_84 = arith.constant dense<0.000000e+00> : vector<16x128xf32>
    %119 = tpu.matmul %118, %117, %cst_84 {dimension_numbers = #tpu.dot_dimension_numbers<[1], [0], [0], [1], [0, 0, 1, 1], [], []>} : vector<16x16xf32>, vector<16x128xf32>, vector<16x128xf32> -> vector<16x128xf32>
    %c0_85 = arith.constant 0 : index
    %c0_86 = arith.constant 0 : index
    %c0_87 = arith.constant 0 : index
    %120 = vector.load %arg4[%c0_85, %c0_86, %c0_87] : memref<2x128x128xf32, #tpu.memory_space<vmem>>, vector<1x128x128xf32>
    %121 = vector.shape_cast %120 : vector<1x128x128xf32> to vector<128x128xf32>
    %cst_88 = arith.constant dense<0.000000e+00> : vector<16x128xf32>
    %122 = tpu.matmul %119, %121, %cst_88 {dimension_numbers = #tpu.dot_dimension_numbers<[1], [0], [0], [1], [0, 0, 1, 1], [], []>} : vector<16x128xf32>, vector<128x128xf32>, vector<16x128xf32> -> vector<16x128xf32>
    %123 = arith.addf %7, %122 : vector<16x128xf32>
    %124 = math.tanh %123 : vector<16x128xf32>
    %cst_89 = arith.constant 0.899999976 : f32
    %125 = vector.broadcast %cst_89 : f32 to vector<16x128xf32>
    %126 = arith.mulf %125, %124 : vector<16x128xf32>
    %cst_90 = arith.constant 1.000000e-01 : f32
    %127 = vector.broadcast %cst_90 : f32 to vector<16x128xf32>
    %128 = arith.mulf %127, %117 : vector<16x128xf32>
    %129 = arith.addf %126, %128 : vector<16x128xf32>
    %130 = arith.subf %117, %129 : vector<16x128xf32>
    %131 = arith.mulf %130, %130 : vector<16x128xf32>
    %132 = vector.shape_cast %131 : vector<16x128xf32> to vector<1x16x128xf32>
    %cst_91 = arith.constant dense<0.000000e+00> : vector<1xf32>
    %133 = vector.multi_reduction <add>, %132, %cst_91 [1, 2] : vector<1x16x128xf32> to vector<1xf32>
    %134 = vector.shape_cast %133 : vector<1xf32> to vector<1x1x1xf32>
    %135 = vector.extract %134[0, 0, 0] : f32 from vector<1x1x1xf32>
    %136 = arith.select %115, %117, %129 : vector<16x128xf32>
    %c0_92 = arith.constant 0 : index
    %c0_93 = arith.constant 0 : index
    %c0_94 = arith.constant 0 : index
    %137 = vector.load %arg6[%c0_92, %c0_93, %c0_94] : memref<2x16x128xf32, #tpu.memory_space<vmem>>, vector<1x16x128xf32>
    %138 = vector.shape_cast %137 : vector<1x16x128xf32> to vector<16x128xf32>
    %139 = vector.shape_cast %136 : vector<16x128xf32> to vector<1x16x128xf32>
    tpu.vector_store %arg6[%c0_92, %c0_93, %c0_94], %139 {strides = array<i32>} : memref<2x16x128xf32, #tpu.memory_space<vmem>>, vector<1x16x128xf32>,
    %cst_95 = arith.constant 1.000000e-10 : f32
    %140 = arith.cmpf olt, %135, %cst_95 : f32
    %141 = arith.ori %115, %140 : i1
    %c5_i32 = arith.constant 5 : i32
    %c0_96 = arith.constant 0 : index
    %c0_97 = arith.constant 0 : index
    %c0_98 = arith.constant 0 : index
    %142 = vector.load %arg6[%c0_96, %c0_97, %c0_98] : memref<2x16x128xf32, #tpu.memory_space<vmem>>, vector<1x16x128xf32>
    %143 = vector.shape_cast %142 : vector<1x16x128xf32> to vector<16x128xf32>
    %c0_99 = arith.constant 0 : index
    %c0_100 = arith.constant 0 : index
    %144 = vector.load %arg1[%c0_99, %c0_100] : memref<16x16xf32, #tpu.memory_space<vmem>>, vector<16x16xf32>
    %cst_101 = arith.constant dense<0.000000e+00> : vector<16x128xf32>
    %145 = tpu.matmul %144, %143, %cst_101 {dimension_numbers = #tpu.dot_dimension_numbers<[1], [0], [0], [1], [0, 0, 1, 1], [], []>} : vector<16x16xf32>, vector<16x128xf32>, vector<16x128xf32> -> vector<16x128xf32>
    %c0_102 = arith.constant 0 : index
    %c0_103 = arith.constant 0 : index
    %c0_104 = arith.constant 0 : index
    %146 = vector.load %arg4[%c0_102, %c0_103, %c0_104] : memref<2x128x128xf32, #tpu.memory_space<vmem>>, vector<1x128x128xf32>
    %147 = vector.shape_cast %146 : vector<1x128x128xf32> to vector<128x128xf32>
    %cst_105 = arith.constant dense<0.000000e+00> : vector<16x128xf32>
    %148 = tpu.matmul %145, %147, %cst_105 {dimension_numbers = #tpu.dot_dimension_numbers<[1], [0], [0], [1], [0, 0, 1, 1], [], []>} : vector<16x128xf32>, vector<128x128xf32>, vector<16x128xf32> -> vector<16x128xf32>
    %149 = arith.addf %7, %148 : vector<16x128xf32>
    %150 = math.tanh %149 : vector<16x128xf32>
    %cst_106 = arith.constant 0.899999976 : f32
    %151 = vector.broadcast %cst_106 : f32 to vector<16x128xf32>
    %152 = arith.mulf %151, %150 : vector<16x128xf32>
    %cst_107 = arith.constant 1.000000e-01 : f32
    %153 = vector.broadcast %cst_107 : f32 to vector<16x128xf32>
    %154 = arith.mulf %153, %143 : vector<16x128xf32>
    %155 = arith.addf %152, %154 : vector<16x128xf32>
    %156 = arith.subf %143, %155 : vector<16x128xf32>
    %157 = arith.mulf %156, %156 : vector<16x128xf32>
    %158 = vector.shape_cast %157 : vector<16x128xf32> to vector<1x16x128xf32>
    %cst_108 = arith.constant dense<0.000000e+00> : vector<1xf32>
    %159 = vector.multi_reduction <add>, %158, %cst_108 [1, 2] : vector<1x16x128xf32> to vector<1xf32>
    %160 = vector.shape_cast %159 : vector<1xf32> to vector<1x1x1xf32>
    %161 = vector.extract %160[0, 0, 0] : f32 from vector<1x1x1xf32>
    %162 = arith.select %141, %143, %155 : vector<16x128xf32>
    %c0_109 = arith.constant 0 : index
    %c0_110 = arith.constant 0 : index
    %c0_111 = arith.constant 0 : index
    %163 = vector.load %arg6[%c0_109, %c0_110, %c0_111] : memref<2x16x128xf32, #tpu.memory_space<vmem>>, vector<1x16x128xf32>
    %164 = vector.shape_cast %163 : vector<1x16x128xf32> to vector<16x128xf32>
    %165 = vector.shape_cast %162 : vector<16x128xf32> to vector<1x16x128xf32>
    tpu.vector_store %arg6[%c0_109, %c0_110, %c0_111], %165 {strides = array<i32>} : memref<2x16x128xf32, #tpu.memory_space<vmem>>, vector<1x16x128xf32>,
    %cst_112 = arith.constant 1.000000e-10 : f32
    %166 = arith.cmpf olt, %161, %cst_112 : f32
    %167 = arith.ori %141, %166 : i1
    %c6_i32 = arith.constant 6 : i32
    %c0_113 = arith.constant 0 : index
    %c0_114 = arith.constant 0 : index
    %c0_115 = arith.constant 0 : index
    %168 = vector.load %arg6[%c0_113, %c0_114, %c0_115] : memref<2x16x128xf32, #tpu.memory_space<vmem>>, vector<1x16x128xf32>
    %169 = vector.shape_cast %168 : vector<1x16x128xf32> to vector<16x128xf32>
    %c0_116 = arith.constant 0 : index
    %c0_117 = arith.constant 0 : index
    %170 = vector.load %arg1[%c0_116, %c0_117] : memref<16x16xf32, #tpu.memory_space<vmem>>, vector<16x16xf32>
    %cst_118 = arith.constant dense<0.000000e+00> : vector<16x128xf32>
    %171 = tpu.matmul %170, %169, %cst_118 {dimension_numbers = #tpu.dot_dimension_numbers<[1], [0], [0], [1], [0, 0, 1, 1], [], []>} : vector<16x16xf32>, vector<16x128xf32>, vector<16x128xf32> -> vector<16x128xf32>
    %c0_119 = arith.constant 0 : index
    %c0_120 = arith.constant 0 : index
    %c0_121 = arith.constant 0 : index
    %172 = vector.load %arg4[%c0_119, %c0_120, %c0_121] : memref<2x128x128xf32, #tpu.memory_space<vmem>>, vector<1x128x128xf32>
    %173 = vector.shape_cast %172 : vector<1x128x128xf32> to vector<128x128xf32>
    %cst_122 = arith.constant dense<0.000000e+00> : vector<16x128xf32>
    %174 = tpu.matmul %171, %173, %cst_122 {dimension_numbers = #tpu.dot_dimension_numbers<[1], [0], [0], [1], [0, 0, 1, 1], [], []>} : vector<16x128xf32>, vector<128x128xf32>, vector<16x128xf32> -> vector<16x128xf32>
    %175 = arith.addf %7, %174 : vector<16x128xf32>
    %176 = math.tanh %175 : vector<16x128xf32>
    %cst_123 = arith.constant 0.899999976 : f32
    %177 = vector.broadcast %cst_123 : f32 to vector<16x128xf32>
    %178 = arith.mulf %177, %176 : vector<16x128xf32>
    %cst_124 = arith.constant 1.000000e-01 : f32
    %179 = vector.broadcast %cst_124 : f32 to vector<16x128xf32>
    %180 = arith.mulf %179, %169 : vector<16x128xf32>
    %181 = arith.addf %178, %180 : vector<16x128xf32>
    %182 = arith.subf %169, %181 : vector<16x128xf32>
    %183 = arith.mulf %182, %182 : vector<16x128xf32>
    %184 = vector.shape_cast %183 : vector<16x128xf32> to vector<1x16x128xf32>
    %cst_125 = arith.constant dense<0.000000e+00> : vector<1xf32>
    %185 = vector.multi_reduction <add>, %184, %cst_125 [1, 2] : vector<1x16x128xf32> to vector<1xf32>
    %186 = vector.shape_cast %185 : vector<1xf32> to vector<1x1x1xf32>
    %187 = vector.extract %186[0, 0, 0] : f32 from vector<1x1x1xf32>
    %188 = arith.select %167, %169, %181 : vector<16x128xf32>
    %c0_126 = arith.constant 0 : index
    %c0_127 = arith.constant 0 : index
    %c0_128 = arith.constant 0 : index
    %189 = vector.load %arg6[%c0_126, %c0_127, %c0_128] : memref<2x16x128xf32, #tpu.memory_space<vmem>>, vector<1x16x128xf32>
    %190 = vector.shape_cast %189 : vector<1x16x128xf32> to vector<16x128xf32>
    %191 = vector.shape_cast %188 : vector<16x128xf32> to vector<1x16x128xf32>
    tpu.vector_store %arg6[%c0_126, %c0_127, %c0_128], %191 {strides = array<i32>} : memref<2x16x128xf32, #tpu.memory_space<vmem>>, vector<1x16x128xf32>,
    %cst_129 = arith.constant 1.000000e-10 : f32
    %192 = arith.cmpf olt, %187, %cst_129 : f32
    %193 = arith.ori %167, %192 : i1
    %c7_i32 = arith.constant 7 : i32
    %c0_130 = arith.constant 0 : index
    %c0_131 = arith.constant 0 : index
    %c0_132 = arith.constant 0 : index
    %194 = vector.load %arg6[%c0_130, %c0_131, %c0_132] : memref<2x16x128xf32, #tpu.memory_space<vmem>>, vector<1x16x128xf32>
    %195 = vector.shape_cast %194 : vector<1x16x128xf32> to vector<16x128xf32>
    %c0_133 = arith.constant 0 : index
    %c0_134 = arith.constant 0 : index
    %196 = vector.load %arg1[%c0_133, %c0_134] : memref<16x16xf32, #tpu.memory_space<vmem>>, vector<16x16xf32>
    %cst_135 = arith.constant dense<0.000000e+00> : vector<16x128xf32>
    %197 = tpu.matmul %196, %195, %cst_135 {dimension_numbers = #tpu.dot_dimension_numbers<[1], [0], [0], [1], [0, 0, 1, 1], [], []>} : vector<16x16xf32>, vector<16x128xf32>, vector<16x128xf32> -> vector<16x128xf32>
    %c0_136 = arith.constant 0 : index
    %c0_137 = arith.constant 0 : index
    %c0_138 = arith.constant 0 : index
    %198 = vector.load %arg4[%c0_136, %c0_137, %c0_138] : memref<2x128x128xf32, #tpu.memory_space<vmem>>, vector<1x128x128xf32>
    %199 = vector.shape_cast %198 : vector<1x128x128xf32> to vector<128x128xf32>
    %cst_139 = arith.constant dense<0.000000e+00> : vector<16x128xf32>
    %200 = tpu.matmul %197, %199, %cst_139 {dimension_numbers = #tpu.dot_dimension_numbers<[1], [0], [0], [1], [0, 0, 1, 1], [], []>} : vector<16x128xf32>, vector<128x128xf32>, vector<16x128xf32> -> vector<16x128xf32>
    %201 = arith.addf %7, %200 : vector<16x128xf32>
    %202 = math.tanh %201 : vector<16x128xf32>
    %cst_140 = arith.constant 0.899999976 : f32
    %203 = vector.broadcast %cst_140 : f32 to vector<16x128xf32>
    %204 = arith.mulf %203, %202 : vector<16x128xf32>
    %cst_141 = arith.constant 1.000000e-01 : f32
    %205 = vector.broadcast %cst_141 : f32 to vector<16x128xf32>
    %206 = arith.mulf %205, %195 : vector<16x128xf32>
    %207 = arith.addf %204, %206 : vector<16x128xf32>
    %208 = arith.subf %195, %207 : vector<16x128xf32>
    %209 = arith.mulf %208, %208 : vector<16x128xf32>
    %210 = vector.shape_cast %209 : vector<16x128xf32> to vector<1x16x128xf32>
    %cst_142 = arith.constant dense<0.000000e+00> : vector<1xf32>
    %211 = vector.multi_reduction <add>, %210, %cst_142 [1, 2] : vector<1x16x128xf32> to vector<1xf32>
    %212 = vector.shape_cast %211 : vector<1xf32> to vector<1x1x1xf32>
    %213 = vector.extract %212[0, 0, 0] : f32 from vector<1x1x1xf32>
    %214 = arith.select %193, %195, %207 : vector<16x128xf32>
    %c0_143 = arith.constant 0 : index
    %c0_144 = arith.constant 0 : index
    %c0_145 = arith.constant 0 : index
    %215 = vector.load %arg6[%c0_143, %c0_144, %c0_145] : memref<2x16x128xf32, #tpu.memory_space<vmem>>, vector<1x16x128xf32>
    %216 = vector.shape_cast %215 : vector<1x16x128xf32> to vector<16x128xf32>
    %217 = vector.shape_cast %214 : vector<16x128xf32> to vector<1x16x128xf32>
    tpu.vector_store %arg6[%c0_143, %c0_144, %c0_145], %217 {strides = array<i32>} : memref<2x16x128xf32, #tpu.memory_space<vmem>>, vector<1x16x128xf32>,
    %cst_146 = arith.constant 1.000000e-10 : f32
    %218 = arith.cmpf olt, %213, %cst_146 : f32
    %219 = arith.ori %193, %218 : i1
    %c8_i32 = arith.constant 8 : i32
    %c0_147 = arith.constant 0 : index
    %c0_148 = arith.constant 0 : index
    %c0_149 = arith.constant 0 : index
    %220 = vector.load %arg6[%c0_147, %c0_148, %c0_149] : memref<2x16x128xf32, #tpu.memory_space<vmem>>, vector<1x16x128xf32>
    %221 = vector.shape_cast %220 : vector<1x16x128xf32> to vector<16x128xf32>
    %c0_150 = arith.constant 0 : index
    %c0_151 = arith.constant 0 : index
    %222 = vector.load %arg1[%c0_150, %c0_151] : memref<16x16xf32, #tpu.memory_space<vmem>>, vector<16x16xf32>
    %cst_152 = arith.constant dense<0.000000e+00> : vector<16x128xf32>
    %223 = tpu.matmul %222, %221, %cst_152 {dimension_numbers = #tpu.dot_dimension_numbers<[1], [0], [0], [1], [0, 0, 1, 1], [], []>} : vector<16x16xf32>, vector<16x128xf32>, vector<16x128xf32> -> vector<16x128xf32>
    %c0_153 = arith.constant 0 : index
    %c0_154 = arith.constant 0 : index
    %c0_155 = arith.constant 0 : index
    %224 = vector.load %arg4[%c0_153, %c0_154, %c0_155] : memref<2x128x128xf32, #tpu.memory_space<vmem>>, vector<1x128x128xf32>
    %225 = vector.shape_cast %224 : vector<1x128x128xf32> to vector<128x128xf32>
    %cst_156 = arith.constant dense<0.000000e+00> : vector<16x128xf32>
    %226 = tpu.matmul %223, %225, %cst_156 {dimension_numbers = #tpu.dot_dimension_numbers<[1], [0], [0], [1], [0, 0, 1, 1], [], []>} : vector<16x128xf32>, vector<128x128xf32>, vector<16x128xf32> -> vector<16x128xf32>
    %227 = arith.addf %7, %226 : vector<16x128xf32>
    %228 = math.tanh %227 : vector<16x128xf32>
    %cst_157 = arith.constant 0.899999976 : f32
    %229 = vector.broadcast %cst_157 : f32 to vector<16x128xf32>
    %230 = arith.mulf %229, %228 : vector<16x128xf32>
    %cst_158 = arith.constant 1.000000e-01 : f32
    %231 = vector.broadcast %cst_158 : f32 to vector<16x128xf32>
    %232 = arith.mulf %231, %221 : vector<16x128xf32>
    %233 = arith.addf %230, %232 : vector<16x128xf32>
    %234 = arith.subf %221, %233 : vector<16x128xf32>
    %235 = arith.mulf %234, %234 : vector<16x128xf32>
    %236 = vector.shape_cast %235 : vector<16x128xf32> to vector<1x16x128xf32>
    %cst_159 = arith.constant dense<0.000000e+00> : vector<1xf32>
    %237 = vector.multi_reduction <add>, %236, %cst_159 [1, 2] : vector<1x16x128xf32> to vector<1xf32>
    %238 = vector.shape_cast %237 : vector<1xf32> to vector<1x1x1xf32>
    %239 = vector.extract %238[0, 0, 0] : f32 from vector<1x1x1xf32>
    %240 = arith.select %219, %221, %233 : vector<16x128xf32>
    %c0_160 = arith.constant 0 : index
    %c0_161 = arith.constant 0 : index
    %c0_162 = arith.constant 0 : index
    %241 = vector.load %arg6[%c0_160, %c0_161, %c0_162] : memref<2x16x128xf32, #tpu.memory_space<vmem>>, vector<1x16x128xf32>
    %242 = vector.shape_cast %241 : vector<1x16x128xf32> to vector<16x128xf32>
    %243 = vector.shape_cast %240 : vector<16x128xf32> to vector<1x16x128xf32>
    tpu.vector_store %arg6[%c0_160, %c0_161, %c0_162], %243 {strides = array<i32>} : memref<2x16x128xf32, #tpu.memory_space<vmem>>, vector<1x16x128xf32>,
    %cst_163 = arith.constant 1.000000e-10 : f32
    %244 = arith.cmpf olt, %239, %cst_163 : f32
    %245 = arith.ori %219, %244 : i1
    %c0_164 = arith.constant 0 : index
    %c0_165 = arith.constant 0 : index
    %c0_166 = arith.constant 0 : index
    %246 = vector.load %arg6[%c0_164, %c0_165, %c0_166] : memref<2x16x128xf32, #tpu.memory_space<vmem>>, vector<1x16x128xf32>
    %247 = vector.shape_cast %246 : vector<1x16x128xf32> to vector<16x128xf32>
    %c1 = arith.constant 1 : index
    %c0_167 = arith.constant 0 : index
    %c0_168 = arith.constant 0 : index
    %248 = vector.load %arg3[%c1, %c0_167, %c0_168] : memref<2x128x128xf32, #tpu.memory_space<vmem>>, vector<1x128x128xf32>
    %249 = vector.shape_cast %248 : vector<1x128x128xf32> to vector<128x128xf32>
    %cst_169 = arith.constant dense<0.000000e+00> : vector<16x128xf32>
    %250 = tpu.matmul %247, %249, %cst_169 {dimension_numbers = #tpu.dot_dimension_numbers<[1], [0], [0], [1], [0, 0, 1, 1], [], []>} : vector<16x128xf32>, vector<128x128xf32>, vector<16x128xf32> -> vector<16x128xf32>
    %c1_170 = arith.constant 1 : index
    %c0_171 = arith.constant 0 : index
    %c0_172 = arith.constant 0 : index
    %251 = vector.load %arg5[%c1_170, %c0_171, %c0_172] : memref<2x1x128xf32, #tpu.memory_space<vmem>>, vector<1x1x128xf32>
    %252 = vector.shape_cast %251 : vector<1x1x128xf32> to vector<1x128xf32>
    %253 = vector.broadcast %252 : vector<1x128xf32> to vector<16x128xf32>
    %254 = arith.addf %250, %253 : vector<16x128xf32>
    %cst_173 = arith.constant 0.000000e+00 : f32
    %255 = vector.broadcast %cst_173 : f32 to vector<16x128xf32>
    %c1_174 = arith.constant 1 : index
    %c0_175 = arith.constant 0 : index
    %c0_176 = arith.constant 0 : index
    %256 = vector.load %arg6[%c1_174, %c0_175, %c0_176] : memref<2x16x128xf32, #tpu.memory_space<vmem>>, vector<1x16x128xf32>
    %257 = vector.shape_cast %256 : vector<1x16x128xf32> to vector<16x128xf32>
    %258 = vector.shape_cast %255 : vector<16x128xf32> to vector<1x16x128xf32>
    tpu.vector_store %arg6[%c1_174, %c0_175, %c0_176], %258 {strides = array<i32>} : memref<2x16x128xf32, #tpu.memory_space<vmem>>, vector<1x16x128xf32>,
    %false_177 = arith.constant false
    %c0_i32_178 = arith.constant 0 : i32
    %c1_179 = arith.constant 1 : index
    %c0_180 = arith.constant 0 : index
    %c0_181 = arith.constant 0 : index
    %259 = vector.load %arg6[%c1_179, %c0_180, %c0_181] : memref<2x16x128xf32, #tpu.memory_space<vmem>>, vector<1x16x128xf32>
    %260 = vector.shape_cast %259 : vector<1x16x128xf32> to vector<16x128xf32>
    %c0_182 = arith.constant 0 : index
    %c0_183 = arith.constant 0 : index
    %261 = vector.load %arg1[%c0_182, %c0_183] : memref<16x16xf32, #tpu.memory_space<vmem>>, vector<16x16xf32>
    %cst_184 = arith.constant dense<0.000000e+00> : vector<16x128xf32>
    %262 = tpu.matmul %261, %260, %cst_184 {dimension_numbers = #tpu.dot_dimension_numbers<[1], [0], [0], [1], [0, 0, 1, 1], [], []>} : vector<16x16xf32>, vector<16x128xf32>, vector<16x128xf32> -> vector<16x128xf32>
    %c1_185 = arith.constant 1 : index
    %c0_186 = arith.constant 0 : index
    %c0_187 = arith.constant 0 : index
    %263 = vector.load %arg4[%c1_185, %c0_186, %c0_187] : memref<2x128x128xf32, #tpu.memory_space<vmem>>, vector<1x128x128xf32>
    %264 = vector.shape_cast %263 : vector<1x128x128xf32> to vector<128x128xf32>
    %cst_188 = arith.constant dense<0.000000e+00> : vector<16x128xf32>
    %265 = tpu.matmul %262, %264, %cst_188 {dimension_numbers = #tpu.dot_dimension_numbers<[1], [0], [0], [1], [0, 0, 1, 1], [], []>} : vector<16x128xf32>, vector<128x128xf32>, vector<16x128xf32> -> vector<16x128xf32>
    %266 = arith.addf %254, %265 : vector<16x128xf32>
    %267 = math.tanh %266 : vector<16x128xf32>
    %cst_189 = arith.constant 0.899999976 : f32
    %268 = vector.broadcast %cst_189 : f32 to vector<16x128xf32>
    %269 = arith.mulf %268, %267 : vector<16x128xf32>
    %cst_190 = arith.constant 1.000000e-01 : f32
    %270 = vector.broadcast %cst_190 : f32 to vector<16x128xf32>
    %271 = arith.mulf %270, %260 : vector<16x128xf32>
    %272 = arith.addf %269, %271 : vector<16x128xf32>
    %273 = arith.subf %260, %272 : vector<16x128xf32>
    %274 = arith.mulf %273, %273 : vector<16x128xf32>
    %275 = vector.shape_cast %274 : vector<16x128xf32> to vector<1x16x128xf32>
    %cst_191 = arith.constant dense<0.000000e+00> : vector<1xf32>
    %276 = vector.multi_reduction <add>, %275, %cst_191 [1, 2] : vector<1x16x128xf32> to vector<1xf32>
    %277 = vector.shape_cast %276 : vector<1xf32> to vector<1x1x1xf32>
    %278 = vector.extract %277[0, 0, 0] : f32 from vector<1x1x1xf32>
    %279 = arith.select %false_177, %260, %272 : vector<16x128xf32>
    %c1_192 = arith.constant 1 : index
    %c0_193 = arith.constant 0 : index
    %c0_194 = arith.constant 0 : index
    %280 = vector.load %arg6[%c1_192, %c0_193, %c0_194] : memref<2x16x128xf32, #tpu.memory_space<vmem>>, vector<1x16x128xf32>
    %281 = vector.shape_cast %280 : vector<1x16x128xf32> to vector<16x128xf32>
    %282 = vector.shape_cast %279 : vector<16x128xf32> to vector<1x16x128xf32>
    tpu.vector_store %arg6[%c1_192, %c0_193, %c0_194], %282 {strides = array<i32>} : memref<2x16x128xf32, #tpu.memory_space<vmem>>, vector<1x16x128xf32>,
    %cst_195 = arith.constant 1.000000e-10 : f32
    %283 = arith.cmpf olt, %278, %cst_195 : f32
    %284 = arith.ori %false_177, %283 : i1
    %c1_i32_196 = arith.constant 1 : i32
    %c1_197 = arith.constant 1 : index
    %c0_198 = arith.constant 0 : index
    %c0_199 = arith.constant 0 : index
    %285 = vector.load %arg6[%c1_197, %c0_198, %c0_199] : memref<2x16x128xf32, #tpu.memory_space<vmem>>, vector<1x16x128xf32>
    %286 = vector.shape_cast %285 : vector<1x16x128xf32> to vector<16x128xf32>
    %c0_200 = arith.constant 0 : index
    %c0_201 = arith.constant 0 : index
    %287 = vector.load %arg1[%c0_200, %c0_201] : memref<16x16xf32, #tpu.memory_space<vmem>>, vector<16x16xf32>
    %cst_202 = arith.constant dense<0.000000e+00> : vector<16x128xf32>
    %288 = tpu.matmul %287, %286, %cst_202 {dimension_numbers = #tpu.dot_dimension_numbers<[1], [0], [0], [1], [0, 0, 1, 1], [], []>} : vector<16x16xf32>, vector<16x128xf32>, vector<16x128xf32> -> vector<16x128xf32>
    %c1_203 = arith.constant 1 : index
    %c0_204 = arith.constant 0 : index
    %c0_205 = arith.constant 0 : index
    %289 = vector.load %arg4[%c1_203, %c0_204, %c0_205] : memref<2x128x128xf32, #tpu.memory_space<vmem>>, vector<1x128x128xf32>
    %290 = vector.shape_cast %289 : vector<1x128x128xf32> to vector<128x128xf32>
    %cst_206 = arith.constant dense<0.000000e+00> : vector<16x128xf32>
    %291 = tpu.matmul %288, %290, %cst_206 {dimension_numbers = #tpu.dot_dimension_numbers<[1], [0], [0], [1], [0, 0, 1, 1], [], []>} : vector<16x128xf32>, vector<128x128xf32>, vector<16x128xf32> -> vector<16x128xf32>
    %292 = arith.addf %254, %291 : vector<16x128xf32>
    %293 = math.tanh %292 : vector<16x128xf32>
    %cst_207 = arith.constant 0.899999976 : f32
    %294 = vector.broadcast %cst_207 : f32 to vector<16x128xf32>
    %295 = arith.mulf %294, %293 : vector<16x128xf32>
    %cst_208 = arith.constant 1.000000e-01 : f32
    %296 = vector.broadcast %cst_208 : f32 to vector<16x128xf32>
    %297 = arith.mulf %296, %286 : vector<16x128xf32>
    %298 = arith.addf %295, %297 : vector<16x128xf32>
    %299 = arith.subf %286, %298 : vector<16x128xf32>
    %300 = arith.mulf %299, %299 : vector<16x128xf32>
    %301 = vector.shape_cast %300 : vector<16x128xf32> to vector<1x16x128xf32>
    %cst_209 = arith.constant dense<0.000000e+00> : vector<1xf32>
    %302 = vector.multi_reduction <add>, %301, %cst_209 [1, 2] : vector<1x16x128xf32> to vector<1xf32>
    %303 = vector.shape_cast %302 : vector<1xf32> to vector<1x1x1xf32>
    %304 = vector.extract %303[0, 0, 0] : f32 from vector<1x1x1xf32>
    %305 = arith.select %284, %286, %298 : vector<16x128xf32>
    %c1_210 = arith.constant 1 : index
    %c0_211 = arith.constant 0 : index
    %c0_212 = arith.constant 0 : index
    %306 = vector.load %arg6[%c1_210, %c0_211, %c0_212] : memref<2x16x128xf32, #tpu.memory_space<vmem>>, vector<1x16x128xf32>
    %307 = vector.shape_cast %306 : vector<1x16x128xf32> to vector<16x128xf32>
    %308 = vector.shape_cast %305 : vector<16x128xf32> to vector<1x16x128xf32>
    tpu.vector_store %arg6[%c1_210, %c0_211, %c0_212], %308 {strides = array<i32>} : memref<2x16x128xf32, #tpu.memory_space<vmem>>, vector<1x16x128xf32>,
    %cst_213 = arith.constant 1.000000e-10 : f32
    %309 = arith.cmpf olt, %304, %cst_213 : f32
    %310 = arith.ori %284, %309 : i1
    %c2_i32_214 = arith.constant 2 : i32
    %c1_215 = arith.constant 1 : index
    %c0_216 = arith.constant 0 : index
    %c0_217 = arith.constant 0 : index
    %311 = vector.load %arg6[%c1_215, %c0_216, %c0_217] : memref<2x16x128xf32, #tpu.memory_space<vmem>>, vector<1x16x128xf32>
    %312 = vector.shape_cast %311 : vector<1x16x128xf32> to vector<16x128xf32>
    %c0_218 = arith.constant 0 : index
    %c0_219 = arith.constant 0 : index
    %313 = vector.load %arg1[%c0_218, %c0_219] : memref<16x16xf32, #tpu.memory_space<vmem>>, vector<16x16xf32>
    %cst_220 = arith.constant dense<0.000000e+00> : vector<16x128xf32>
    %314 = tpu.matmul %313, %312, %cst_220 {dimension_numbers = #tpu.dot_dimension_numbers<[1], [0], [0], [1], [0, 0, 1, 1], [], []>} : vector<16x16xf32>, vector<16x128xf32>, vector<16x128xf32> -> vector<16x128xf32>
    %c1_221 = arith.constant 1 : index
    %c0_222 = arith.constant 0 : index
    %c0_223 = arith.constant 0 : index
    %315 = vector.load %arg4[%c1_221, %c0_222, %c0_223] : memref<2x128x128xf32, #tpu.memory_space<vmem>>, vector<1x128x128xf32>
    %316 = vector.shape_cast %315 : vector<1x128x128xf32> to vector<128x128xf32>
    %cst_224 = arith.constant dense<0.000000e+00> : vector<16x128xf32>
    %317 = tpu.matmul %314, %316, %cst_224 {dimension_numbers = #tpu.dot_dimension_numbers<[1], [0], [0], [1], [0, 0, 1, 1], [], []>} : vector<16x128xf32>, vector<128x128xf32>, vector<16x128xf32> -> vector<16x128xf32>
    %318 = arith.addf %254, %317 : vector<16x128xf32>
    %319 = math.tanh %318 : vector<16x128xf32>
    %cst_225 = arith.constant 0.899999976 : f32
    %320 = vector.broadcast %cst_225 : f32 to vector<16x128xf32>
    %321 = arith.mulf %320, %319 : vector<16x128xf32>
    %cst_226 = arith.constant 1.000000e-01 : f32
    %322 = vector.broadcast %cst_226 : f32 to vector<16x128xf32>
    %323 = arith.mulf %322, %312 : vector<16x128xf32>
    %324 = arith.addf %321, %323 : vector<16x128xf32>
    %325 = arith.subf %312, %324 : vector<16x128xf32>
    %326 = arith.mulf %325, %325 : vector<16x128xf32>
    %327 = vector.shape_cast %326 : vector<16x128xf32> to vector<1x16x128xf32>
    %cst_227 = arith.constant dense<0.000000e+00> : vector<1xf32>
    %328 = vector.multi_reduction <add>, %327, %cst_227 [1, 2] : vector<1x16x128xf32> to vector<1xf32>
    %329 = vector.shape_cast %328 : vector<1xf32> to vector<1x1x1xf32>
    %330 = vector.extract %329[0, 0, 0] : f32 from vector<1x1x1xf32>
    %331 = arith.select %310, %312, %324 : vector<16x128xf32>
    %c1_228 = arith.constant 1 : index
    %c0_229 = arith.constant 0 : index
    %c0_230 = arith.constant 0 : index
    %332 = vector.load %arg6[%c1_228, %c0_229, %c0_230] : memref<2x16x128xf32, #tpu.memory_space<vmem>>, vector<1x16x128xf32>
    %333 = vector.shape_cast %332 : vector<1x16x128xf32> to vector<16x128xf32>
    %334 = vector.shape_cast %331 : vector<16x128xf32> to vector<1x16x128xf32>
    tpu.vector_store %arg6[%c1_228, %c0_229, %c0_230], %334 {strides = array<i32>} : memref<2x16x128xf32, #tpu.memory_space<vmem>>, vector<1x16x128xf32>,
    %cst_231 = arith.constant 1.000000e-10 : f32
    %335 = arith.cmpf olt, %330, %cst_231 : f32
    %336 = arith.ori %310, %335 : i1
    %c3_i32_232 = arith.constant 3 : i32
    %c1_233 = arith.constant 1 : index
    %c0_234 = arith.constant 0 : index
    %c0_235 = arith.constant 0 : index
    %337 = vector.load %arg6[%c1_233, %c0_234, %c0_235] : memref<2x16x128xf32, #tpu.memory_space<vmem>>, vector<1x16x128xf32>
    %338 = vector.shape_cast %337 : vector<1x16x128xf32> to vector<16x128xf32>
    %c0_236 = arith.constant 0 : index
    %c0_237 = arith.constant 0 : index
    %339 = vector.load %arg1[%c0_236, %c0_237] : memref<16x16xf32, #tpu.memory_space<vmem>>, vector<16x16xf32>
    %cst_238 = arith.constant dense<0.000000e+00> : vector<16x128xf32>
    %340 = tpu.matmul %339, %338, %cst_238 {dimension_numbers = #tpu.dot_dimension_numbers<[1], [0], [0], [1], [0, 0, 1, 1], [], []>} : vector<16x16xf32>, vector<16x128xf32>, vector<16x128xf32> -> vector<16x128xf32>
    %c1_239 = arith.constant 1 : index
    %c0_240 = arith.constant 0 : index
    %c0_241 = arith.constant 0 : index
    %341 = vector.load %arg4[%c1_239, %c0_240, %c0_241] : memref<2x128x128xf32, #tpu.memory_space<vmem>>, vector<1x128x128xf32>
    %342 = vector.shape_cast %341 : vector<1x128x128xf32> to vector<128x128xf32>
    %cst_242 = arith.constant dense<0.000000e+00> : vector<16x128xf32>
    %343 = tpu.matmul %340, %342, %cst_242 {dimension_numbers = #tpu.dot_dimension_numbers<[1], [0], [0], [1], [0, 0, 1, 1], [], []>} : vector<16x128xf32>, vector<128x128xf32>, vector<16x128xf32> -> vector<16x128xf32>
    %344 = arith.addf %254, %343 : vector<16x128xf32>
    %345 = math.tanh %344 : vector<16x128xf32>
    %cst_243 = arith.constant 0.899999976 : f32
    %346 = vector.broadcast %cst_243 : f32 to vector<16x128xf32>
    %347 = arith.mulf %346, %345 : vector<16x128xf32>
    %cst_244 = arith.constant 1.000000e-01 : f32
    %348 = vector.broadcast %cst_244 : f32 to vector<16x128xf32>
    %349 = arith.mulf %348, %338 : vector<16x128xf32>
    %350 = arith.addf %347, %349 : vector<16x128xf32>
    %351 = arith.subf %338, %350 : vector<16x128xf32>
    %352 = arith.mulf %351, %351 : vector<16x128xf32>
    %353 = vector.shape_cast %352 : vector<16x128xf32> to vector<1x16x128xf32>
    %cst_245 = arith.constant dense<0.000000e+00> : vector<1xf32>
    %354 = vector.multi_reduction <add>, %353, %cst_245 [1, 2] : vector<1x16x128xf32> to vector<1xf32>
    %355 = vector.shape_cast %354 : vector<1xf32> to vector<1x1x1xf32>
    %356 = vector.extract %355[0, 0, 0] : f32 from vector<1x1x1xf32>
    %357 = arith.select %336, %338, %350 : vector<16x128xf32>
    %c1_246 = arith.constant 1 : index
    %c0_247 = arith.constant 0 : index
    %c0_248 = arith.constant 0 : index
    %358 = vector.load %arg6[%c1_246, %c0_247, %c0_248] : memref<2x16x128xf32, #tpu.memory_space<vmem>>, vector<1x16x128xf32>
    %359 = vector.shape_cast %358 : vector<1x16x128xf32> to vector<16x128xf32>
    %360 = vector.shape_cast %357 : vector<16x128xf32> to vector<1x16x128xf32>
    tpu.vector_store %arg6[%c1_246, %c0_247, %c0_248], %360 {strides = array<i32>} : memref<2x16x128xf32, #tpu.memory_space<vmem>>, vector<1x16x128xf32>,
    %cst_249 = arith.constant 1.000000e-10 : f32
    %361 = arith.cmpf olt, %356, %cst_249 : f32
    %362 = arith.ori %336, %361 : i1
    %c4_i32_250 = arith.constant 4 : i32
    %c1_251 = arith.constant 1 : index
    %c0_252 = arith.constant 0 : index
    %c0_253 = arith.constant 0 : index
    %363 = vector.load %arg6[%c1_251, %c0_252, %c0_253] : memref<2x16x128xf32, #tpu.memory_space<vmem>>, vector<1x16x128xf32>
    %364 = vector.shape_cast %363 : vector<1x16x128xf32> to vector<16x128xf32>
    %c0_254 = arith.constant 0 : index
    %c0_255 = arith.constant 0 : index
    %365 = vector.load %arg1[%c0_254, %c0_255] : memref<16x16xf32, #tpu.memory_space<vmem>>, vector<16x16xf32>
    %cst_256 = arith.constant dense<0.000000e+00> : vector<16x128xf32>
    %366 = tpu.matmul %365, %364, %cst_256 {dimension_numbers = #tpu.dot_dimension_numbers<[1], [0], [0], [1], [0, 0, 1, 1], [], []>} : vector<16x16xf32>, vector<16x128xf32>, vector<16x128xf32> -> vector<16x128xf32>
    %c1_257 = arith.constant 1 : index
    %c0_258 = arith.constant 0 : index
    %c0_259 = arith.constant 0 : index
    %367 = vector.load %arg4[%c1_257, %c0_258, %c0_259] : memref<2x128x128xf32, #tpu.memory_space<vmem>>, vector<1x128x128xf32>
    %368 = vector.shape_cast %367 : vector<1x128x128xf32> to vector<128x128xf32>
    %cst_260 = arith.constant dense<0.000000e+00> : vector<16x128xf32>
    %369 = tpu.matmul %366, %368, %cst_260 {dimension_numbers = #tpu.dot_dimension_numbers<[1], [0], [0], [1], [0, 0, 1, 1], [], []>} : vector<16x128xf32>, vector<128x128xf32>, vector<16x128xf32> -> vector<16x128xf32>
    %370 = arith.addf %254, %369 : vector<16x128xf32>
    %371 = math.tanh %370 : vector<16x128xf32>
    %cst_261 = arith.constant 0.899999976 : f32
    %372 = vector.broadcast %cst_261 : f32 to vector<16x128xf32>
    %373 = arith.mulf %372, %371 : vector<16x128xf32>
    %cst_262 = arith.constant 1.000000e-01 : f32
    %374 = vector.broadcast %cst_262 : f32 to vector<16x128xf32>
    %375 = arith.mulf %374, %364 : vector<16x128xf32>
    %376 = arith.addf %373, %375 : vector<16x128xf32>
    %377 = arith.subf %364, %376 : vector<16x128xf32>
    %378 = arith.mulf %377, %377 : vector<16x128xf32>
    %379 = vector.shape_cast %378 : vector<16x128xf32> to vector<1x16x128xf32>
    %cst_263 = arith.constant dense<0.000000e+00> : vector<1xf32>
    %380 = vector.multi_reduction <add>, %379, %cst_263 [1, 2] : vector<1x16x128xf32> to vector<1xf32>
    %381 = vector.shape_cast %380 : vector<1xf32> to vector<1x1x1xf32>
    %382 = vector.extract %381[0, 0, 0] : f32 from vector<1x1x1xf32>
    %383 = arith.select %362, %364, %376 : vector<16x128xf32>
    %c1_264 = arith.constant 1 : index
    %c0_265 = arith.constant 0 : index
    %c0_266 = arith.constant 0 : index
    %384 = vector.load %arg6[%c1_264, %c0_265, %c0_266] : memref<2x16x128xf32, #tpu.memory_space<vmem>>, vector<1x16x128xf32>
    %385 = vector.shape_cast %384 : vector<1x16x128xf32> to vector<16x128xf32>
    %386 = vector.shape_cast %383 : vector<16x128xf32> to vector<1x16x128xf32>
    tpu.vector_store %arg6[%c1_264, %c0_265, %c0_266], %386 {strides = array<i32>} : memref<2x16x128xf32, #tpu.memory_space<vmem>>, vector<1x16x128xf32>,
    %cst_267 = arith.constant 1.000000e-10 : f32
    %387 = arith.cmpf olt, %382, %cst_267 : f32
    %388 = arith.ori %362, %387 : i1
    %c5_i32_268 = arith.constant 5 : i32
    %c1_269 = arith.constant 1 : index
    %c0_270 = arith.constant 0 : index
    %c0_271 = arith.constant 0 : index
    %389 = vector.load %arg6[%c1_269, %c0_270, %c0_271] : memref<2x16x128xf32, #tpu.memory_space<vmem>>, vector<1x16x128xf32>
    %390 = vector.shape_cast %389 : vector<1x16x128xf32> to vector<16x128xf32>
    %c0_272 = arith.constant 0 : index
    %c0_273 = arith.constant 0 : index
    %391 = vector.load %arg1[%c0_272, %c0_273] : memref<16x16xf32, #tpu.memory_space<vmem>>, vector<16x16xf32>
    %cst_274 = arith.constant dense<0.000000e+00> : vector<16x128xf32>
    %392 = tpu.matmul %391, %390, %cst_274 {dimension_numbers = #tpu.dot_dimension_numbers<[1], [0], [0], [1], [0, 0, 1, 1], [], []>} : vector<16x16xf32>, vector<16x128xf32>, vector<16x128xf32> -> vector<16x128xf32>
    %c1_275 = arith.constant 1 : index
    %c0_276 = arith.constant 0 : index
    %c0_277 = arith.constant 0 : index
    %393 = vector.load %arg4[%c1_275, %c0_276, %c0_277] : memref<2x128x128xf32, #tpu.memory_space<vmem>>, vector<1x128x128xf32>
    %394 = vector.shape_cast %393 : vector<1x128x128xf32> to vector<128x128xf32>
    %cst_278 = arith.constant dense<0.000000e+00> : vector<16x128xf32>
    %395 = tpu.matmul %392, %394, %cst_278 {dimension_numbers = #tpu.dot_dimension_numbers<[1], [0], [0], [1], [0, 0, 1, 1], [], []>} : vector<16x128xf32>, vector<128x128xf32>, vector<16x128xf32> -> vector<16x128xf32>
    %396 = arith.addf %254, %395 : vector<16x128xf32>
    %397 = math.tanh %396 : vector<16x128xf32>
    %cst_279 = arith.constant 0.899999976 : f32
    %398 = vector.broadcast %cst_279 : f32 to vector<16x128xf32>
    %399 = arith.mulf %398, %397 : vector<16x128xf32>
    %cst_280 = arith.constant 1.000000e-01 : f32
    %400 = vector.broadcast %cst_280 : f32 to vector<16x128xf32>
    %401 = arith.mulf %400, %390 : vector<16x128xf32>
    %402 = arith.addf %399, %401 : vector<16x128xf32>
    %403 = arith.subf %390, %402 : vector<16x128xf32>
    %404 = arith.mulf %403, %403 : vector<16x128xf32>
    %405 = vector.shape_cast %404 : vector<16x128xf32> to vector<1x16x128xf32>
    %cst_281 = arith.constant dense<0.000000e+00> : vector<1xf32>
    %406 = vector.multi_reduction <add>, %405, %cst_281 [1, 2] : vector<1x16x128xf32> to vector<1xf32>
    %407 = vector.shape_cast %406 : vector<1xf32> to vector<1x1x1xf32>
    %408 = vector.extract %407[0, 0, 0] : f32 from vector<1x1x1xf32>
    %409 = arith.select %388, %390, %402 : vector<16x128xf32>
    %c1_282 = arith.constant 1 : index
    %c0_283 = arith.constant 0 : index
    %c0_284 = arith.constant 0 : index
    %410 = vector.load %arg6[%c1_282, %c0_283, %c0_284] : memref<2x16x128xf32, #tpu.memory_space<vmem>>, vector<1x16x128xf32>
    %411 = vector.shape_cast %410 : vector<1x16x128xf32> to vector<16x128xf32>
    %412 = vector.shape_cast %409 : vector<16x128xf32> to vector<1x16x128xf32>
    tpu.vector_store %arg6[%c1_282, %c0_283, %c0_284], %412 {strides = array<i32>} : memref<2x16x128xf32, #tpu.memory_space<vmem>>, vector<1x16x128xf32>,
    %cst_285 = arith.constant 1.000000e-10 : f32
    %413 = arith.cmpf olt, %408, %cst_285 : f32
    %414 = arith.ori %388, %413 : i1
    %c6_i32_286 = arith.constant 6 : i32
    %c1_287 = arith.constant 1 : index
    %c0_288 = arith.constant 0 : index
    %c0_289 = arith.constant 0 : index
    %415 = vector.load %arg6[%c1_287, %c0_288, %c0_289] : memref<2x16x128xf32, #tpu.memory_space<vmem>>, vector<1x16x128xf32>
    %416 = vector.shape_cast %415 : vector<1x16x128xf32> to vector<16x128xf32>
    %c0_290 = arith.constant 0 : index
    %c0_291 = arith.constant 0 : index
    %417 = vector.load %arg1[%c0_290, %c0_291] : memref<16x16xf32, #tpu.memory_space<vmem>>, vector<16x16xf32>
    %cst_292 = arith.constant dense<0.000000e+00> : vector<16x128xf32>
    %418 = tpu.matmul %417, %416, %cst_292 {dimension_numbers = #tpu.dot_dimension_numbers<[1], [0], [0], [1], [0, 0, 1, 1], [], []>} : vector<16x16xf32>, vector<16x128xf32>, vector<16x128xf32> -> vector<16x128xf32>
    %c1_293 = arith.constant 1 : index
    %c0_294 = arith.constant 0 : index
    %c0_295 = arith.constant 0 : index
    %419 = vector.load %arg4[%c1_293, %c0_294, %c0_295] : memref<2x128x128xf32, #tpu.memory_space<vmem>>, vector<1x128x128xf32>
    %420 = vector.shape_cast %419 : vector<1x128x128xf32> to vector<128x128xf32>
    %cst_296 = arith.constant dense<0.000000e+00> : vector<16x128xf32>
    %421 = tpu.matmul %418, %420, %cst_296 {dimension_numbers = #tpu.dot_dimension_numbers<[1], [0], [0], [1], [0, 0, 1, 1], [], []>} : vector<16x128xf32>, vector<128x128xf32>, vector<16x128xf32> -> vector<16x128xf32>
    %422 = arith.addf %254, %421 : vector<16x128xf32>
    %423 = math.tanh %422 : vector<16x128xf32>
    %cst_297 = arith.constant 0.899999976 : f32
    %424 = vector.broadcast %cst_297 : f32 to vector<16x128xf32>
    %425 = arith.mulf %424, %423 : vector<16x128xf32>
    %cst_298 = arith.constant 1.000000e-01 : f32
    %426 = vector.broadcast %cst_298 : f32 to vector<16x128xf32>
    %427 = arith.mulf %426, %416 : vector<16x128xf32>
    %428 = arith.addf %425, %427 : vector<16x128xf32>
    %429 = arith.subf %416, %428 : vector<16x128xf32>
    %430 = arith.mulf %429, %429 : vector<16x128xf32>
    %431 = vector.shape_cast %430 : vector<16x128xf32> to vector<1x16x128xf32>
    %cst_299 = arith.constant dense<0.000000e+00> : vector<1xf32>
    %432 = vector.multi_reduction <add>, %431, %cst_299 [1, 2] : vector<1x16x128xf32> to vector<1xf32>
    %433 = vector.shape_cast %432 : vector<1xf32> to vector<1x1x1xf32>
    %434 = vector.extract %433[0, 0, 0] : f32 from vector<1x1x1xf32>
    %435 = arith.select %414, %416, %428 : vector<16x128xf32>
    %c1_300 = arith.constant 1 : index
    %c0_301 = arith.constant 0 : index
    %c0_302 = arith.constant 0 : index
    %436 = vector.load %arg6[%c1_300, %c0_301, %c0_302] : memref<2x16x128xf32, #tpu.memory_space<vmem>>, vector<1x16x128xf32>
    %437 = vector.shape_cast %436 : vector<1x16x128xf32> to vector<16x128xf32>
    %438 = vector.shape_cast %435 : vector<16x128xf32> to vector<1x16x128xf32>
    tpu.vector_store %arg6[%c1_300, %c0_301, %c0_302], %438 {strides = array<i32>} : memref<2x16x128xf32, #tpu.memory_space<vmem>>, vector<1x16x128xf32>,
    %cst_303 = arith.constant 1.000000e-10 : f32
    %439 = arith.cmpf olt, %434, %cst_303 : f32
    %440 = arith.ori %414, %439 : i1
    %c7_i32_304 = arith.constant 7 : i32
    %c1_305 = arith.constant 1 : index
    %c0_306 = arith.constant 0 : index
    %c0_307 = arith.constant 0 : index
    %441 = vector.load %arg6[%c1_305, %c0_306, %c0_307] : memref<2x16x128xf32, #tpu.memory_space<vmem>>, vector<1x16x128xf32>
    %442 = vector.shape_cast %441 : vector<1x16x128xf32> to vector<16x128xf32>
    %c0_308 = arith.constant 0 : index
    %c0_309 = arith.constant 0 : index
    %443 = vector.load %arg1[%c0_308, %c0_309] : memref<16x16xf32, #tpu.memory_space<vmem>>, vector<16x16xf32>
    %cst_310 = arith.constant dense<0.000000e+00> : vector<16x128xf32>
    %444 = tpu.matmul %443, %442, %cst_310 {dimension_numbers = #tpu.dot_dimension_numbers<[1], [0], [0], [1], [0, 0, 1, 1], [], []>} : vector<16x16xf32>, vector<16x128xf32>, vector<16x128xf32> -> vector<16x128xf32>
    %c1_311 = arith.constant 1 : index
    %c0_312 = arith.constant 0 : index
    %c0_313 = arith.constant 0 : index
    %445 = vector.load %arg4[%c1_311, %c0_312, %c0_313] : memref<2x128x128xf32, #tpu.memory_space<vmem>>, vector<1x128x128xf32>
    %446 = vector.shape_cast %445 : vector<1x128x128xf32> to vector<128x128xf32>
    %cst_314 = arith.constant dense<0.000000e+00> : vector<16x128xf32>
    %447 = tpu.matmul %444, %446, %cst_314 {dimension_numbers = #tpu.dot_dimension_numbers<[1], [0], [0], [1], [0, 0, 1, 1], [], []>} : vector<16x128xf32>, vector<128x128xf32>, vector<16x128xf32> -> vector<16x128xf32>
    %448 = arith.addf %254, %447 : vector<16x128xf32>
    %449 = math.tanh %448 : vector<16x128xf32>
    %cst_315 = arith.constant 0.899999976 : f32
    %450 = vector.broadcast %cst_315 : f32 to vector<16x128xf32>
    %451 = arith.mulf %450, %449 : vector<16x128xf32>
    %cst_316 = arith.constant 1.000000e-01 : f32
    %452 = vector.broadcast %cst_316 : f32 to vector<16x128xf32>
    %453 = arith.mulf %452, %442 : vector<16x128xf32>
    %454 = arith.addf %451, %453 : vector<16x128xf32>
    %455 = arith.subf %442, %454 : vector<16x128xf32>
    %456 = arith.mulf %455, %455 : vector<16x128xf32>
    %457 = vector.shape_cast %456 : vector<16x128xf32> to vector<1x16x128xf32>
    %cst_317 = arith.constant dense<0.000000e+00> : vector<1xf32>
    %458 = vector.multi_reduction <add>, %457, %cst_317 [1, 2] : vector<1x16x128xf32> to vector<1xf32>
    %459 = vector.shape_cast %458 : vector<1xf32> to vector<1x1x1xf32>
    %460 = vector.extract %459[0, 0, 0] : f32 from vector<1x1x1xf32>
    %461 = arith.select %440, %442, %454 : vector<16x128xf32>
    %c1_318 = arith.constant 1 : index
    %c0_319 = arith.constant 0 : index
    %c0_320 = arith.constant 0 : index
    %462 = vector.load %arg6[%c1_318, %c0_319, %c0_320] : memref<2x16x128xf32, #tpu.memory_space<vmem>>, vector<1x16x128xf32>
    %463 = vector.shape_cast %462 : vector<1x16x128xf32> to vector<16x128xf32>
    %464 = vector.shape_cast %461 : vector<16x128xf32> to vector<1x16x128xf32>
    tpu.vector_store %arg6[%c1_318, %c0_319, %c0_320], %464 {strides = array<i32>} : memref<2x16x128xf32, #tpu.memory_space<vmem>>, vector<1x16x128xf32>,
    %cst_321 = arith.constant 1.000000e-10 : f32
    %465 = arith.cmpf olt, %460, %cst_321 : f32
    %466 = arith.ori %440, %465 : i1
    %c8_i32_322 = arith.constant 8 : i32
    %c1_323 = arith.constant 1 : index
    %c0_324 = arith.constant 0 : index
    %c0_325 = arith.constant 0 : index
    %467 = vector.load %arg6[%c1_323, %c0_324, %c0_325] : memref<2x16x128xf32, #tpu.memory_space<vmem>>, vector<1x16x128xf32>
    %468 = vector.shape_cast %467 : vector<1x16x128xf32> to vector<16x128xf32>
    %c0_326 = arith.constant 0 : index
    %c0_327 = arith.constant 0 : index
    %469 = vector.load %arg1[%c0_326, %c0_327] : memref<16x16xf32, #tpu.memory_space<vmem>>, vector<16x16xf32>
    %cst_328 = arith.constant dense<0.000000e+00> : vector<16x128xf32>
    %470 = tpu.matmul %469, %468, %cst_328 {dimension_numbers = #tpu.dot_dimension_numbers<[1], [0], [0], [1], [0, 0, 1, 1], [], []>} : vector<16x16xf32>, vector<16x128xf32>, vector<16x128xf32> -> vector<16x128xf32>
    %c1_329 = arith.constant 1 : index
    %c0_330 = arith.constant 0 : index
    %c0_331 = arith.constant 0 : index
    %471 = vector.load %arg4[%c1_329, %c0_330, %c0_331] : memref<2x128x128xf32, #tpu.memory_space<vmem>>, vector<1x128x128xf32>
    %472 = vector.shape_cast %471 : vector<1x128x128xf32> to vector<128x128xf32>
    %cst_332 = arith.constant dense<0.000000e+00> : vector<16x128xf32>
    %473 = tpu.matmul %470, %472, %cst_332 {dimension_numbers = #tpu.dot_dimension_numbers<[1], [0], [0], [1], [0, 0, 1, 1], [], []>} : vector<16x128xf32>, vector<128x128xf32>, vector<16x128xf32> -> vector<16x128xf32>
    %474 = arith.addf %254, %473 : vector<16x128xf32>
    %475 = math.tanh %474 : vector<16x128xf32>
    %cst_333 = arith.constant 0.899999976 : f32
    %476 = vector.broadcast %cst_333 : f32 to vector<16x128xf32>
    %477 = arith.mulf %476, %475 : vector<16x128xf32>
    %cst_334 = arith.constant 1.000000e-01 : f32
    %478 = vector.broadcast %cst_334 : f32 to vector<16x128xf32>
    %479 = arith.mulf %478, %468 : vector<16x128xf32>
    %480 = arith.addf %477, %479 : vector<16x128xf32>
    %481 = arith.subf %468, %480 : vector<16x128xf32>
    %482 = arith.mulf %481, %481 : vector<16x128xf32>
    %483 = vector.shape_cast %482 : vector<16x128xf32> to vector<1x16x128xf32>
    %cst_335 = arith.constant dense<0.000000e+00> : vector<1xf32>
    %484 = vector.multi_reduction <add>, %483, %cst_335 [1, 2] : vector<1x16x128xf32> to vector<1xf32>
    %485 = vector.shape_cast %484 : vector<1xf32> to vector<1x1x1xf32>
    %486 = vector.extract %485[0, 0, 0] : f32 from vector<1x1x1xf32>
    %487 = arith.select %466, %468, %480 : vector<16x128xf32>
    %c1_336 = arith.constant 1 : index
    %c0_337 = arith.constant 0 : index
    %c0_338 = arith.constant 0 : index
    %488 = vector.load %arg6[%c1_336, %c0_337, %c0_338] : memref<2x16x128xf32, #tpu.memory_space<vmem>>, vector<1x16x128xf32>
    %489 = vector.shape_cast %488 : vector<1x16x128xf32> to vector<16x128xf32>
    %490 = vector.shape_cast %487 : vector<16x128xf32> to vector<1x16x128xf32>
    tpu.vector_store %arg6[%c1_336, %c0_337, %c0_338], %490 {strides = array<i32>} : memref<2x16x128xf32, #tpu.memory_space<vmem>>, vector<1x16x128xf32>,
    %cst_339 = arith.constant 1.000000e-10 : f32
    %491 = arith.cmpf olt, %486, %cst_339 : f32
    %492 = arith.ori %466, %491 : i1
    return
  }
  func.func @transform_0(%arg0: i32) -> (i32, i32) {
    %c0_i32 = arith.constant 0 : i32
    %c0_i32_0 = arith.constant 0 : i32
    %c0_i32_1 = arith.constant 0 : i32
    return %c0_i32, %c0_i32_0 : i32, i32
  }
  func.func @transform_1(%arg0: i32) -> (i32, i32) {
    %c0_i32 = arith.constant 0 : i32
    %c0_i32_0 = arith.constant 0 : i32
    %c0_i32_1 = arith.constant 0 : i32
    return %c0_i32, %c0_i32_0 : i32, i32
  }
  func.func @transform_2(%arg0: i32) -> (i32, i32, i32) {
    %c0_i32 = arith.constant 0 : i32
    %c0_i32_0 = arith.constant 0 : i32
    %c0_i32_1 = arith.constant 0 : i32
    %c0_i32_2 = arith.constant 0 : i32
    return %c0_i32, %c0_i32_0, %c0_i32_1 : i32, i32, i32
  }
  func.func @transform_3(%arg0: i32) -> (i32, i32, i32) {
    %c0_i32 = arith.constant 0 : i32
    %c0_i32_0 = arith.constant 0 : i32
    %c0_i32_1 = arith.constant 0 : i32
    %c0_i32_2 = arith.constant 0 : i32
    return %c0_i32, %c0_i32_0, %c0_i32_1 : i32, i32, i32
  }
  func.func @transform_4(%arg0: i32) -> (i32, i32, i32) {
    %c0_i32 = arith.constant 0 : i32
    %c0_i32_0 = arith.constant 0 : i32
    %c0_i32_1 = arith.constant 0 : i32
    %c0_i32_2 = arith.constant 0 : i32
    return %c0_i32, %c0_i32_0, %c0_i32_1 : i32, i32, i32
  }
  func.func @transform_5(%arg0: i32) -> (i32, i32, i32) {
    %c0_i32 = arith.constant 0 : i32
    %c0_i32_0 = arith.constant 0 : i32
    %c0_i32_1 = arith.constant 0 : i32
    %c0_i32_2 = arith.constant 0 : i32
    return %c0_i32, %c0_i32_0, %c0_i32_1 : i32, i32, i32
  }
}

</mosaic_0001>

<llo_original>
// kernel: tpu_custom_call.1
$region0: #{tpu_custom_call.1}
  #allocation0 [shape = 'u32[]', space=smem, size = 0x4, offset = 0x4, fixed_abs, tag = 'smem constant byte address 0x4 - core index']
  #allocation1 [shape = 'u32[144,128]{1,0:T(1,128)}', space=vmem, size = 0x12000, scoped, tag = 'internal scratch']
  %s0 = inlined_call_operand.hbm [shape: f32[16,16], index: 0, kind: input, shape index: {}]
  %s1 = inlined_call_operand.hbm [shape: f32[16,128], index: 1, kind: input, shape index: {}]
  %s2 = inlined_call_operand.hbm [shape: f32[2,128,128], index: 2, kind: input, shape index: {}]
  %s3 = inlined_call_operand.hbm [shape: f32[2,128,128], index: 3, kind: input, shape index: {}]
  %s4 = inlined_call_operand.vmem [shape: f32[2,1,128], index: 4, kind: input, shape index: {}]
  %s5 = inlined_call_operand.hbm [shape: f32[2,16,128], index: 5, kind: output, shape index: {}]
  %s6 = sld [smem:[#allocation0]]
  $region46: #{tpu_custom_call.1} parent=0
    _
  %s8 = ssub.s32 1, %s6
  %s9 = scalar_select 0, %s8, %s6
  $region1: #{tpu_custom_call.1} parent=0
    #allocation2 [shape = 'u8[8192]{0}', space=vmem, size = 0x2000, scoped, tag = 'input window, operand 0, single buffered']
    #allocation3 [shape = 's32[1]{0}', space=sflag, size = 0x4, scoped, tag = 'scoped memory for tpu_custom_call.1']
    #allocation4 [shape = 's32[1]{0}', space=sflag, size = 0x4, scoped, tag = 'scoped memory for tpu_custom_call.1']
    #allocation5 [shape = 'u8[8192]{0}', space=vmem, size = 0x2000, scoped, tag = 'input window, operand 1, single buffered']
    #allocation6 [shape = 's32[1]{0}', space=sflag, size = 0x4, scoped, tag = 'scoped memory for tpu_custom_call.1']
    #allocation7 [shape = 'u8[131072]{0}', space=vmem, size = 0x20000, scoped, tag = 'input window, operand 2, single buffered']
    #allocation8 [shape = 'u8[131072]{0}', space=vmem, size = 0x20000, scoped, tag = 'input window, operand 3, single buffered']
    #allocation9 [shape = 's32[1]{0}', space=sflag, size = 0x4, scoped, tag = 'scoped memory for tpu_custom_call.1']
    #allocation10 [shape = 'u8[16384]{0}', space=vmem, size = 0x4000, scoped, tag = 'output window, operand 0, single buffered']
    %10 = vsyncpa [#allocation3], 0
    %11 = vsyncpa [#allocation6], 0
    %12 = vsyncpa [#allocation9], 0
    %13 = vsyncpa [#allocation4], 0
    // Predicated region
    $region2: #{tpu_custom_call.1} parent=1 // pred_check
      _
    $region3: #{tpu_custom_call.1} parent=1 // pred_check_branch
      %15 = sbr.rel (0) target = $region5
    $region4: #{tpu_custom_call.1} parent=1 // pred_region
      %s17 = ssub.s32 256, 256
      %18 = vsyncadd [#allocation3], %s17
      %s19 = sshll.u32 [#allocation2], 4
      %s20 = int_to_ptr.vmem [resolvable:$true] %s19
      %25 = dma.hbm_to_vmem [thread:$0]  %s0, 256, %s20, [#allocation3], 128, 128, 8
    $region5: #{tpu_custom_call.1} parent=1 // pred_fallthru
      _
    // Predicated region
    $region6: #{tpu_custom_call.1} parent=1 // pred_check
      _
    $region7: #{tpu_custom_call.1} parent=1 // pred_check_branch
      %27 = sbr.rel (0) target = $region9
    $region8: #{tpu_custom_call.1} parent=1 // pred_region
      %s29 = ssub.s32 256, 256
      %30 = vsyncadd [#allocation6], %s29
      %s31 = sshll.u32 [#allocation5], 4
      %s32 = int_to_ptr.vmem [resolvable:$true] %s31
      %37 = dma.hbm_to_vmem [thread:$0]  %s1, 256, %s32, [#allocation6], 128, 128, 8
    $region9: #{tpu_custom_call.1} parent=1 // pred_fallthru
      _
    // Predicated region
    $region10: #{tpu_custom_call.1} parent=1 // pred_check
      _
    $region11: #{tpu_custom_call.1} parent=1 // pred_check_branch
      %39 = sbr.rel (0) target = $region13
    $region12: #{tpu_custom_call.1} parent=1 // pred_region
      %s41 = ssub.s32 4096, 4096
      %42 = vsyncadd [#allocation6], %s41
      %s43 = sshll.u32 [#allocation7], 4
      %s44 = int_to_ptr.vmem [resolvable:$true] %s43
      %49 = dma.hbm_to_vmem [thread:$0]  %s2, 4096, %s44, [#allocation6], 128, 128, 8
    $region13: #{tpu_custom_call.1} parent=1 // pred_fallthru
      _
    // Predicated region
    $region14: #{tpu_custom_call.1} parent=1 // pred_check
      _
    $region15: #{tpu_custom_call.1} parent=1 // pred_check_branch
      %51 = sbr.rel (0) target = $region17
    $region16: #{tpu_custom_call.1} parent=1 // pred_region
      %s53 = ssub.s32 4096, 4096
      %54 = vsyncadd [#allocation9], %s53
      %s55 = sshll.u32 [#allocation8], 4
      %s56 = int_to_ptr.vmem [resolvable:$true] %s55
      %61 = dma.hbm_to_vmem [thread:$0]  %s3, 4096, %s56, [#allocation9], 128, 128, 8
    $region17: #{tpu_custom_call.1} parent=1 // pred_fallthru
      _
    // Predicated region
    $region18: #{tpu_custom_call.1} parent=1 // pred_check
      _
    $region19: #{tpu_custom_call.1} parent=1 // pred_check_branch
      %63 = sbr.rel (0) target = $region21
    $region20: #{tpu_custom_call.1} parent=1 // pred_region
      _
    $region21: #{tpu_custom_call.1} parent=1 // pred_fallthru
      _
    // Predicated region
    $region22: #{tpu_custom_call.1} parent=1 // pred_check
      _
    $region23: #{tpu_custom_call.1} parent=1 // pred_check_branch
      %65 = sbr.rel (0) target = $region25
    $region24: #{tpu_custom_call.1} parent=1 // pred_region
      %66 = dma.done [#allocation3], 256
    $region25: #{tpu_custom_call.1} parent=1 // pred_fallthru
      _
    // Predicated region
    $region26: #{tpu_custom_call.1} parent=1 // pred_check
      _
    $region27: #{tpu_custom_call.1} parent=1 // pred_check_branch
      %68 = sbr.rel (0) target = $region29
    $region28: #{tpu_custom_call.1} parent=1 // pred_region
      %69 = dma.done [#allocation6], 256
    $region29: #{tpu_custom_call.1} parent=1 // pred_fallthru
      _
    // Predicated region
    $region30: #{tpu_custom_call.1} parent=1 // pred_check
      _
    $region31: #{tpu_custom_call.1} parent=1 // pred_check_branch
      %71 = sbr.rel (0) target = $region33
    $region32: #{tpu_custom_call.1} parent=1 // pred_region
      %72 = dma.done [#allocation6], 4096
    $region33: #{tpu_custom_call.1} parent=1 // pred_fallthru
      _
    // Predicated region
    $region34: #{tpu_custom_call.1} parent=1 // pred_check
      _
    $region35: #{tpu_custom_call.1} parent=1 // pred_check_branch
      %74 = sbr.rel (0) target = $region37
    $region36: #{tpu_custom_call.1} parent=1 // pred_region
      %75 = dma.done [#allocation9], 4096
    $region37: #{tpu_custom_call.1} parent=1 // pred_fallthru
      _
    %v76 = vld [vmem:[#allocation5] sm:$0xff]
    %v77 = vld [vmem:[#allocation5 + $0x8] sm:$0xff]
    %v78 = vld [vmem:[#allocation7] sm:$0xff]
    %v79 = vld [vmem:[#allocation7 + $0x8] sm:$0xff]
    %v80 = vld [vmem:[#allocation7 + $0x10] sm:$0xff]
    %v81 = vld [vmem:[#allocation7 + $0x18] sm:$0xff]
    %v82 = vld [vmem:[#allocation7 + $0x20] sm:$0xff]
    %v83 = vld [vmem:[#allocation7 + $0x28] sm:$0xff]
    %v84 = vld [vmem:[#allocation7 + $0x30] sm:$0xff]
    %v85 = vld [vmem:[#allocation7 + $0x38] sm:$0xff]
    %v86 = vld [vmem:[#allocation7 + $0x40] sm:$0xff]
    %v87 = vld [vmem:[#allocation7 + $0x48] sm:$0xff]
    %v88 = vld [vmem:[#allocation7 + $0x50] sm:$0xff]
    %v89 = vld [vmem:[#allocation7 + $0x58] sm:$0xff]
    %v90 = vld [vmem:[#allocation7 + $0x60] sm:$0xff]
    %v91 = vld [vmem:[#allocation7 + $0x68] sm:$0xff]
    %v92 = vld [vmem:[#allocation7 + $0x70] sm:$0xff]
    %v93 = vld [vmem:[#allocation7 + $0x78] sm:$0xff]
    %v94 = vld [vmem:[%s4] sm:$0x1]
    %v96 = vlaneseq
    %v97 = vshrl.u32 %v96, 7
    %v98 = vsub.s32 0, %v97
    %v99 = vrot.slane %v94, %v98
    %101 = vmatprep.subr.mxu0 0.0
    %102 = vmatpush1.msra.mxu0 %v78
    %103 = vmatprep.subr.mxu0 0.0
    %104 = vmatpush1.msra.mxu0 %v79
    %105 = vmatprep.subr.mxu0 0.0
    %106 = vmatpush1.msra.mxu0 %v80
    %107 = vmatprep.subr.mxu0 0.0
    %108 = vmatpush1.msra.mxu0 %v81
    %109 = vmatprep.subr.mxu0 0.0
    %110 = vmatpush1.msra.mxu0 %v82
    %111 = vmatprep.subr.mxu0 0.0
    %112 = vmatpush1.msra.mxu0 %v83
    %113 = vmatprep.subr.mxu0 0.0
    %114 = vmatpush1.msra.mxu0 %v84
    %115 = vmatprep.subr.mxu0 0.0
    %116 = vmatpush1.msra.mxu0 %v85
    %117 = vmatprep.subr.mxu0 0.0
    %118 = vmatpush1.msra.mxu0 %v86
    %119 = vmatprep.subr.mxu0 0.0
    %120 = vmatpush1.msra.mxu0 %v87
    %121 = vmatprep.subr.mxu0 0.0
    %122 = vmatpush1.msra.mxu0 %v88
    %123 = vmatprep.subr.mxu0 0.0
    %124 = vmatpush1.msra.mxu0 %v89
    %125 = vmatprep.subr.mxu0 0.0
    %126 = vmatpush1.msra.mxu0 %v90
    %127 = vmatprep.subr.mxu0 0.0
    %128 = vmatpush1.msra.mxu0 %v91
    %129 = vmatprep.subr.mxu0 0.0
    %130 = vmatpush1.msra.mxu0 %v92
    %131 = vmatprep.subr.mxu0 0.0
    %132 = vmatpush1.msra.mxu0 %v93
    %133 = vmatprep.subr.mxu0 0.0
    %134 = vmatpush1.msra.mxu0 0.0
    %135 = vmatprep.subr.mxu0 0.0
    %136 = vmatpush1.msra.mxu0 0.0
    %137 = vmatprep.subr.mxu0 0.0
    %138 = vmatpush1.msra.mxu0 0.0
    %139 = vmatprep.subr.mxu0 0.0
    %140 = vmatpush1.msra.mxu0 0.0
    %141 = vmatprep.subr.mxu0 0.0
    %142 = vmatpush1.msra.mxu0 0.0
    %143 = vmatprep.subr.mxu0 0.0
    %144 = vmatpush1.msra.mxu0 0.0
    %145 = vmatprep.subr.mxu0 0.0
    %146 = vmatpush1.msra.mxu0 0.0
    %147 = vmatprep.subr.mxu0 0.0
    %148 = vmatpush1.msra.mxu0 0.0
    %149 = vmatprep.subr.mxu0 0.0
    %150 = vmatpush1.msra.mxu0 0.0
    %151 = vmatprep.subr.mxu0 0.0
    %152 = vmatpush1.msra.mxu0 0.0
    %153 = vmatprep.subr.mxu0 0.0
    %154 = vmatpush1.msra.mxu0 0.0
    %155 = vmatprep.subr.mxu0 0.0
    %156 = vmatpush1.msra.mxu0 0.0
    %157 = vmatprep.subr.mxu0 0.0
    %158 = vmatpush1.msra.mxu0 0.0
    %159 = vmatprep.subr.mxu0 0.0
    %160 = vmatpush1.msra.mxu0 0.0
    %161 = vmatprep.subr.mxu0 0.0
    %162 = vmatpush1.msra.mxu0 0.0
    %163 = vmatprep.subr.mxu0 0.0
    %164 = vmatpush1.msra.mxu0 0.0
    %165 = vmatprep.mubr.f32.mxu0 0.0
    %166 = vmatmul.mubr.f32.gmra.mrb[0].mxu0 %v76
    %v167 = vpop.f32.mrb[0].mxu0
    %v168 = vadd.f32 %v99, %v167
    %v169 = vpop.f32.mrb[0].mxu0
    %170 = vmatprep.mubr.f32.mxu0 0.0
    %171 = vmatmul.mubr.f32.gmra.mrb[0].mxu0 %v77
    %v172 = vpop.f32.mrb[0].mxu0
    %v173 = vadd.f32 %v99, %v172
    %v174 = vpop.f32.mrb[0].mxu0
    %175 = vdwg.mxu0
    %176 = vst [vmem:[#allocation10] sm:$0xff] 0.0
    %177 = vst [vmem:[#allocation10 + $0x8] sm:$0xff] 0.0
    %v178 = vld [vmem:[#allocation10] sm:$0xff]
    %v179 = vld [vmem:[#allocation10 + $0x8] sm:$0xff]
    %v180 = vld [vmem:[#allocation2] sm:$0xff]
    %v181 = vld [vmem:[#allocation2 + $0x8] sm:$0xff]
    %vm182 = vcmask 130048
    %v184 = vsel %vm182, %v180, 0
    %v187 = vsel %vm182, %v181, 0
    %189 = vmatprep.subr.mxu0 0.0
    %190 = vmatpush1.msra.mxu0 %v178
    %191 = vmatprep.subr.mxu0 0.0
    %192 = vmatpush1.msra.mxu0 %v179
    %193 = vmatprep.subr.mxu0 0.0
    %194 = vmatpush1.msra.mxu0 0.0
    %195 = vmatprep.subr.mxu0 0.0
    %196 = vmatpush1.msra.mxu0 0.0
    %197 = vmatprep.subr.mxu0 0.0
    %198 = vmatpush1.msra.mxu0 0.0
    %199 = vmatprep.subr.mxu0 0.0
    %200 = vmatpush1.msra.mxu0 0.0
    %201 = vmatprep.subr.mxu0 0.0
    %202 = vmatpush1.msra.mxu0 0.0
    %203 = vmatprep.subr.mxu0 0.0
    %204 = vmatpush1.msra.mxu0 0.0
    %205 = vmatprep.subr.mxu0 0.0
    %206 = vmatpush1.msra.mxu0 0.0
    %207 = vmatprep.subr.mxu0 0.0
    %208 = vmatpush1.msra.mxu0 0.0
    %209 = vmatprep.subr.mxu0 0.0
    %210 = vmatpush1.msra.mxu0 0.0
    %211 = vmatprep.subr.mxu0 0.0
    %212 = vmatpush1.msra.mxu0 0.0
    %213 = vmatprep.subr.mxu0 0.0
    %214 = vmatpush1.msra.mxu0 0.0
    %215 = vmatprep.subr.mxu0 0.0
    %216 = vmatpush1.msra.mxu0 0.0
    %217 = vmatprep.subr.mxu0 0.0
    %218 = vmatpush1.msra.mxu0 0.0
    %219 = vmatprep.subr.mxu0 0.0
    %220 = vmatpush1.msra.mxu0 0.0
    %221 = vmatprep.subr.mxu0 0.0
    %222 = vmatpush1.msra.mxu0 0.0
    %223 = vmatprep.subr.mxu0 0.0
    %224 = vmatpush1.msra.mxu0 0.0
    %225 = vmatprep.subr.mxu0 0.0
    %226 = vmatpush1.msra.mxu0 0.0
    %227 = vmatprep.subr.mxu0 0.0
    %228 = vmatpush1.msra.mxu0 0.0
    %229 = vmatprep.subr.mxu0 0.0
    %230 = vmatpush1.msra.mxu0 0.0
    %231 = vmatprep.subr.mxu0 0.0
    %232 = vmatpush1.msra.mxu0 0.0
    %233 = vmatprep.subr.mxu0 0.0
    %234 = vmatpush1.msra.mxu0 0.0
    %235 = vmatprep.subr.mxu0 0.0
    %236 = vmatpush1.msra.mxu0 0.0
    %237 = vmatprep.subr.mxu0 0.0
    %238 = vmatpush1.msra.mxu0 0.0
    %239 = vmatprep.subr.mxu0 0.0
    %240 = vmatpush1.msra.mxu0 0.0
    %241 = vmatprep.subr.mxu0 0.0
    %242 = vmatpush1.msra.mxu0 0.0
    %243 = vmatprep.subr.mxu0 0.0
    %244 = vmatpush1.msra.mxu0 0.0
    %245 = vmatprep.subr.mxu0 0.0
    %246 = vmatpush1.msra.mxu0 0.0
    %247 = vmatprep.subr.mxu0 0.0
    %248 = vmatpush1.msra.mxu0 0.0
    %249 = vmatprep.subr.mxu0 0.0
    %250 = vmatpush1.msra.mxu0 0.0
    %251 = vmatprep.subr.mxu0 0.0
    %252 = vmatpush1.msra.mxu0 0.0
    %253 = vmatprep.mubr.f32.mxu0 0.0
    %254 = vmatmul.mubr.f32.gmra.mrb[0].mxu0 %v184
    %v255 = vpop.f32.mrb[0].mxu0
    %v256 = vadd.f32 0.0, %v255
    %v257 = vpop.f32.mrb[0].mxu0
    %258 = vmatprep.mubr.f32.mxu0 0.0
    %259 = vmatmul.mubr.f32.gmra.mrb[0].mxu0 %v187
    %v260 = vpop.f32.mrb[0].mxu0
    %v261 = vadd.f32 0.0, %v260
    %v262 = vpop.f32.mrb[0].mxu0
    %263 = vdwg.mxu0
    %v264 = vld [vmem:[#allocation8] sm:$0xff]
    %v265 = vld [vmem:[#allocation8 + $0x8] sm:$0xff]
    %v266 = vld [vmem:[#allocation8 + $0x10] sm:$0xff]
    %v267 = vld [vmem:[#allocation8 + $0x18] sm:$0xff]
    %v268 = vld [vmem:[#allocation8 + $0x20] sm:$0xff]
    %v269 = vld [vmem:[#allocation8 + $0x28] sm:$0xff]
    %v270 = vld [vmem:[#allocation8 + $0x30] sm:$0xff]
    %v271 = vld [vmem:[#allocation8 + $0x38] sm:$0xff]
    %v272 = vld [vmem:[#allocation8 + $0x40] sm:$0xff]
    %v273 = vld [vmem:[#allocation8 + $0x48] sm:$0xff]
    %v274 = vld [vmem:[#allocation8 + $0x50] sm:$0xff]
    %v275 = vld [vmem:[#allocation8 + $0x58] sm:$0xff]
    %v276 = vld [vmem:[#allocation8 + $0x60] sm:$0xff]
    %v277 = vld [vmem:[#allocation8 + $0x68] sm:$0xff]
    %v278 = vld [vmem:[#allocation8 + $0x70] sm:$0xff]
    %v279 = vld [vmem:[#allocation8 + $0x78] sm:$0xff]
    %280 = vmatprep.subr.mxu0 0.0
    %281 = vmatpush1.msra.mxu0 %v264
    %282 = vmatprep.subr.mxu0 0.0
    %283 = vmatpush1.msra.mxu0 %v265
    %284 = vmatprep.subr.mxu0 0.0
    %285 = vmatpush1.msra.mxu0 %v266
    %286 = vmatprep.subr.mxu0 0.0
    %287 = vmatpush1.msra.mxu0 %v267
    %288 = vmatprep.subr.mxu0 0.0
    %289 = vmatpush1.msra.mxu0 %v268
    %290 = vmatprep.subr.mxu0 0.0
    %291 = vmatpush1.msra.mxu0 %v269
    %292 = vmatprep.subr.mxu0 0.0
    %293 = vmatpush1.msra.mxu0 %v270
    %294 = vmatprep.subr.mxu0 0.0
    %295 = vmatpush1.msra.mxu0 %v271
    %296 = vmatprep.subr.mxu0 0.0
    %297 = vmatpush1.msra.mxu0 %v272
    %298 = vmatprep.subr.mxu0 0.0
    %299 = vmatpush1.msra.mxu0 %v273
    %300 = vmatprep.subr.mxu0 0.0
    %301 = vmatpush1.msra.mxu0 %v274
    %302 = vmatprep.subr.mxu0 0.0
    %303 = vmatpush1.msra.mxu0 %v275
    %304 = vmatprep.subr.mxu0 0.0
    %305 = vmatpush1.msra.mxu0 %v276
    %306 = vmatprep.subr.mxu0 0.0
    %307 = vmatpush1.msra.mxu0 %v277
    %308 = vmatprep.subr.mxu0 0.0
    %309 = vmatpush1.msra.mxu0 %v278
    %310 = vmatprep.subr.mxu0 0.0
    %311 = vmatpush1.msra.mxu0 %v279
    %312 = vmatprep.subr.mxu0 0.0
    %313 = vmatpush1.msra.mxu0 0.0
    %314 = vmatprep.subr.mxu0 0.0
    %315 = vmatpush1.msra.mxu0 0.0
    %316 = vmatprep.subr.mxu0 0.0
    %317 = vmatpush1.msra.mxu0 0.0
    %318 = vmatprep.subr.mxu0 0.0
    %319 = vmatpush1.msra.mxu0 0.0
    %320 = vmatprep.subr.mxu0 0.0
    %321 = vmatpush1.msra.mxu0 0.0
    %322 = vmatprep.subr.mxu0 0.0
    %323 = vmatpush1.msra.mxu0 0.0
    %324 = vmatprep.subr.mxu0 0.0
    %325 = vmatpush1.msra.mxu0 0.0
    %326 = vmatprep.subr.mxu0 0.0
    %327 = vmatpush1.msra.mxu0 0.0
    %328 = vmatprep.subr.mxu0 0.0
    %329 = vmatpush1.msra.mxu0 0.0
    %330 = vmatprep.subr.mxu0 0.0
    %331 = vmatpush1.msra.mxu0 0.0
    %332 = vmatprep.subr.mxu0 0.0
    %333 = vmatpush1.msra.mxu0 0.0
    %334 = vmatprep.subr.mxu0 0.0
    %335 = vmatpush1.msra.mxu0 0.0
    %336 = vmatprep.subr.mxu0 0.0
    %337 = vmatpush1.msra.mxu0 0.0
    %338 = vmatprep.subr.mxu0 0.0
    %339 = vmatpush1.msra.mxu0 0.0
    %340 = vmatprep.subr.mxu0 0.0
    %341 = vmatpush1.msra.mxu0 0.0
    %342 = vmatprep.subr.mxu0 0.0
    %343 = vmatpush1.msra.mxu0 0.0
    %344 = vmatprep.mubr.f32.mxu0 0.0
    %345 = vmatmul.mubr.f32.gmra.mrb[0].mxu0 %v256
    %v346 = vpop.f32.mrb[0].mxu0
    %v347 = vadd.f32 0.0, %v346
    %v348 = vpop.f32.mrb[0].mxu0
    %349 = vmatprep.mubr.f32.mxu0 0.0
    %350 = vmatmul.mubr.f32.gmra.mrb[0].mxu0 %v261
    %v351 = vpop.f32.mrb[0].mxu0
    %v352 = vadd.f32 0.0, %v351
    %v353 = vpop.f32.mrb[0].mxu0
    %354 = vdwg.mxu0
    %v355 = vadd.f32 %v168, %v347
    %v356 = vadd.f32 %v173, %v352
    %v357 = vtanh.pop %v355
    %v358 = vtanh.pop %v356
    %v359 = vmul.f32 %v357, 0.9
    %v360 = vmul.f32 %v358, 0.9
    %v361 = vmul.f32 %v178, 0.1
    %v362 = vmul.f32 %v179, 0.1
    %v363 = vadd.f32 %v359, %v361
    %v364 = vadd.f32 %v360, %v362
    %v365 = vsub.f32 %v178, %v363
    %v366 = vsub.f32 %v179, %v364
    %v367 = vmul.f32 %v365, %v365
    %v368 = vmul.f32 %v366, %v366
    %v369 = vadd.f32 %v367, %v368
    %370 = vadd.xlane.f32.xlu0 %v369
    %v371 = vpop.xlane.xlu0 %370
    %v372 = vrot.slane %v371, 4
    %v373 = vadd.f32 %v371, %v372
    %v374 = vrot.slane %v373, 2
    %v375 = vadd.f32 %v373, %v374
    %v376 = vrot.slane %v375, 1
    %v377 = vadd.f32 %v375, %v376
    %s378 = vtos %v377
    %379 = vst [vmem:[#allocation10] sm:$0xff] %v363
    %380 = vst [vmem:[#allocation10 + $0x8] sm:$0xff] %v364
    %p381 = scmp.lt.f32.partialorder %s378, 1e-10
    %v382 = vld [vmem:[#allocation10] sm:$0xff]
    %v383 = vld [vmem:[#allocation10 + $0x8] sm:$0xff]
    %v384 = vld [vmem:[#allocation2] sm:$0xff]
    %v385 = vld [vmem:[#allocation2 + $0x8] sm:$0xff]
    %v387 = vsel %vm182, %v384, 0
    %v390 = vsel %vm182, %v385, 0
    %392 = vmatprep.subr.mxu0 0.0
    %393 = vmatpush1.msra.mxu0 %v382
    %394 = vmatprep.subr.mxu0 0.0
    %395 = vmatpush1.msra.mxu0 %v383
    %396 = vmatprep.subr.mxu0 0.0
    %397 = vmatpush1.msra.mxu0 0.0
    %398 = vmatprep.subr.mxu0 0.0
    %399 = vmatpush1.msra.mxu0 0.0
    %400 = vmatprep.subr.mxu0 0.0
    %401 = vmatpush1.msra.mxu0 0.0
    %402 = vmatprep.subr.mxu0 0.0
    %403 = vmatpush1.msra.mxu0 0.0
    %404 = vmatprep.subr.mxu0 0.0
    %405 = vmatpush1.msra.mxu0 0.0
    %406 = vmatprep.subr.mxu0 0.0
    %407 = vmatpush1.msra.mxu0 0.0
    %408 = vmatprep.subr.mxu0 0.0
    %409 = vmatpush1.msra.mxu0 0.0
    %410 = vmatprep.subr.mxu0 0.0
    %411 = vmatpush1.msra.mxu0 0.0
    %412 = vmatprep.subr.mxu0 0.0
    %413 = vmatpush1.msra.mxu0 0.0
    %414 = vmatprep.subr.mxu0 0.0
    %415 = vmatpush1.msra.mxu0 0.0
    %416 = vmatprep.subr.mxu0 0.0
    %417 = vmatpush1.msra.mxu0 0.0
    %418 = vmatprep.subr.mxu0 0.0
    %419 = vmatpush1.msra.mxu0 0.0
    %420 = vmatprep.subr.mxu0 0.0
    %421 = vmatpush1.msra.mxu0 0.0
    %422 = vmatprep.subr.mxu0 0.0
    %423 = vmatpush1.msra.mxu0 0.0
    %424 = vmatprep.subr.mxu0 0.0
    %425 = vmatpush1.msra.mxu0 0.0
    %426 = vmatprep.subr.mxu0 0.0
    %427 = vmatpush1.msra.mxu0 0.0
    %428 = vmatprep.subr.mxu0 0.0
    %429 = vmatpush1.msra.mxu0 0.0
    %430 = vmatprep.subr.mxu0 0.0
    %431 = vmatpush1.msra.mxu0 0.0
    %432 = vmatprep.subr.mxu0 0.0
    %433 = vmatpush1.msra.mxu0 0.0
    %434 = vmatprep.subr.mxu0 0.0
    %435 = vmatpush1.msra.mxu0 0.0
    %436 = vmatprep.subr.mxu0 0.0
    %437 = vmatpush1.msra.mxu0 0.0
    %438 = vmatprep.subr.mxu0 0.0
    %439 = vmatpush1.msra.mxu0 0.0
    %440 = vmatprep.subr.mxu0 0.0
    %441 = vmatpush1.msra.mxu0 0.0
    %442 = vmatprep.subr.mxu0 0.0
    %443 = vmatpush1.msra.mxu0 0.0
    %444 = vmatprep.subr.mxu0 0.0
    %445 = vmatpush1.msra.mxu0 0.0
    %446 = vmatprep.subr.mxu0 0.0
    %447 = vmatpush1.msra.mxu0 0.0
    %448 = vmatprep.subr.mxu0 0.0
    %449 = vmatpush1.msra.mxu0 0.0
    %450 = vmatprep.subr.mxu0 0.0
    %451 = vmatpush1.msra.mxu0 0.0
    %452 = vmatprep.subr.mxu0 0.0
    %453 = vmatpush1.msra.mxu0 0.0
    %454 = vmatprep.subr.mxu0 0.0
    %455 = vmatpush1.msra.mxu0 0.0
    %456 = vmatprep.mubr.f32.mxu0 0.0
    %457 = vmatmul.mubr.f32.gmra.mrb[0].mxu0 %v387
    %v458 = vpop.f32.mrb[0].mxu0
    %v459 = vadd.f32 0.0, %v458
    %v460 = vpop.f32.mrb[0].mxu0
    %461 = vmatprep.mubr.f32.mxu0 0.0
    %462 = vmatmul.mubr.f32.gmra.mrb[0].mxu0 %v390
    %v463 = vpop.f32.mrb[0].mxu0
    %v464 = vadd.f32 0.0, %v463
    %v465 = vpop.f32.mrb[0].mxu0
    %466 = vdwg.mxu0
    %v467 = vld [vmem:[#allocation8] sm:$0xff]
    %v468 = vld [vmem:[#allocation8 + $0x8] sm:$0xff]
    %v469 = vld [vmem:[#allocation8 + $0x10] sm:$0xff]
    %v470 = vld [vmem:[#allocation8 + $0x18] sm:$0xff]
    %v471 = vld [vmem:[#allocation8 + $0x20] sm:$0xff]
    %v472 = vld [vmem:[#allocation8 + $0x28] sm:$0xff]
    %v473 = vld [vmem:[#allocation8 + $0x30] sm:$0xff]
    %v474 = vld [vmem:[#allocation8 + $0x38] sm:$0xff]
    %v475 = vld [vmem:[#allocation8 + $0x40] sm:$0xff]
    %v476 = vld [vmem:[#allocation8 + $0x48] sm:$0xff]
    %v477 = vld [vmem:[#allocation8 + $0x50] sm:$0xff]
    %v478 = vld [vmem:[#allocation8 + $0x58] sm:$0xff]
    %v479 = vld [vmem:[#allocation8 + $0x60] sm:$0xff]
    %v480 = vld [vmem:[#allocation8 + $0x68] sm:$0xff]
    %v481 = vld [vmem:[#allocation8 + $0x70] sm:$0xff]
    %v482 = vld [vmem:[#allocation8 + $0x78] sm:$0xff]
    %483 = vmatprep.subr.mxu0 0.0
    %484 = vmatpush1.msra.mxu0 %v467
    %485 = vmatprep.subr.mxu0 0.0
    %486 = vmatpush1.msra.mxu0 %v468
    %487 = vmatprep.subr.mxu0 0.0
    %488 = vmatpush1.msra.mxu0 %v469
    %489 = vmatprep.subr.mxu0 0.0
    %490 = vmatpush1.msra.mxu0 %v470
    %491 = vmatprep.subr.mxu0 0.0
    %492 = vmatpush1.msra.mxu0 %v471
    %493 = vmatprep.subr.mxu0 0.0
    %494 = vmatpush1.msra.mxu0 %v472
    %495 = vmatprep.subr.mxu0 0.0
    %496 = vmatpush1.msra.mxu0 %v473
    %497 = vmatprep.subr.mxu0 0.0
    %498 = vmatpush1.msra.mxu0 %v474
    %499 = vmatprep.subr.mxu0 0.0
    %500 = vmatpush1.msra.mxu0 %v475
    %501 = vmatprep.subr.mxu0 0.0
    %502 = vmatpush1.msra.mxu0 %v476
    %503 = vmatprep.subr.mxu0 0.0
    %504 = vmatpush1.msra.mxu0 %v477
    %505 = vmatprep.subr.mxu0 0.0
    %506 = vmatpush1.msra.mxu0 %v478
    %507 = vmatprep.subr.mxu0 0.0
    %508 = vmatpush1.msra.mxu0 %v479
    %509 = vmatprep.subr.mxu0 0.0
    %510 = vmatpush1.msra.mxu0 %v480
    %511 = vmatprep.subr.mxu0 0.0
    %512 = vmatpush1.msra.mxu0 %v481
    %513 = vmatprep.subr.mxu0 0.0
    %514 = vmatpush1.msra.mxu0 %v482
    %515 = vmatprep.subr.mxu0 0.0
    %516 = vmatpush1.msra.mxu0 0.0
    %517 = vmatprep.subr.mxu0 0.0
    %518 = vmatpush1.msra.mxu0 0.0
    %519 = vmatprep.subr.mxu0 0.0
    %520 = vmatpush1.msra.mxu0 0.0
    %521 = vmatprep.subr.mxu0 0.0
    %522 = vmatpush1.msra.mxu0 0.0
    %523 = vmatprep.subr.mxu0 0.0
    %524 = vmatpush1.msra.mxu0 0.0
    %525 = vmatprep.subr.mxu0 0.0
    %526 = vmatpush1.msra.mxu0 0.0
    %527 = vmatprep.subr.mxu0 0.0
    %528 = vmatpush1.msra.mxu0 0.0
    %529 = vmatprep.subr.mxu0 0.0
    %530 = vmatpush1.msra.mxu0 0.0
    %531 = vmatprep.subr.mxu0 0.0
    %532 = vmatpush1.msra.mxu0 0.0
    %533 = vmatprep.subr.mxu0 0.0
    %534 = vmatpush1.msra.mxu0 0.0
    %535 = vmatprep.subr.mxu0 0.0
    %536 = vmatpush1.msra.mxu0 0.0
    %537 = vmatprep.subr.mxu0 0.0
    %538 = vmatpush1.msra.mxu0 0.0
    %539 = vmatprep.subr.mxu0 0.0
    %540 = vmatpush1.msra.mxu0 0.0
    %541 = vmatprep.subr.mxu0 0.0
    %542 = vmatpush1.msra.mxu0 0.0
    %543 = vmatprep.subr.mxu0 0.0
    %544 = vmatpush1.msra.mxu0 0.0
    %545 = vmatprep.subr.mxu0 0.0
    %546 = vmatpush1.msra.mxu0 0.0
    %547 = vmatprep.mubr.f32.mxu0 0.0
    %548 = vmatmul.mubr.f32.gmra.mrb[0].mxu0 %v459
    %v549 = vpop.f32.mrb[0].mxu0
    %v550 = vadd.f32 0.0, %v549
    %v551 = vpop.f32.mrb[0].mxu0
    %552 = vmatprep.mubr.f32.mxu0 0.0
    %553 = vmatmul.mubr.f32.gmra.mrb[0].mxu0 %v464
    %v554 = vpop.f32.mrb[0].mxu0
    %v555 = vadd.f32 0.0, %v554
    %v556 = vpop.f32.mrb[0].mxu0
    %557 = vdwg.mxu0
    %v558 = vadd.f32 %v168, %v550
    %v559 = vadd.f32 %v173, %v555
    %v560 = vtanh.pop %v558
    %v561 = vtanh.pop %v559
    %v562 = vmul.f32 %v560, 0.9
    %v563 = vmul.f32 %v561, 0.9
    %v564 = vmul.f32 %v382, 0.1
    %v565 = vmul.f32 %v383, 0.1
    %v566 = vadd.f32 %v562, %v564
    %v567 = vadd.f32 %v563, %v565
    %v568 = vsub.f32 %v382, %v566
    %v569 = vsub.f32 %v383, %v567
    %v570 = vmul.f32 %v568, %v568
    %v571 = vmul.f32 %v569, %v569
    %v572 = vadd.f32 %v570, %v571
    %573 = vadd.xlane.f32.xlu0 %v572
    %v574 = vpop.xlane.xlu0 %573
    %v575 = vrot.slane %v574, 4
    %v576 = vadd.f32 %v574, %v575
    %v577 = vrot.slane %v576, 2
    %v578 = vadd.f32 %v576, %v577
    %v579 = vrot.slane %v578, 1
    %v580 = vadd.f32 %v578, %v579
    %s581 = vtos %v580
    %s582 = scalar_select %p381, 1, 0
    %v583 = vstv %s582
    %vm584 = vcmp.eq.s32.totalorder %v583, 1
    %v585 = vsel %vm584, %v382, %v566
    %v586 = vsel %vm584, %v383, %v567
    %587 = vst [vmem:[#allocation10] sm:$0xff] %v585
    %588 = vst [vmem:[#allocation10 + $0x8] sm:$0xff] %v586
    %p589 = scmp.lt.f32.partialorder %s581, 1e-10
    %p590 = por %p381, %p589
    %v591 = vld [vmem:[#allocation10] sm:$0xff]
    %v592 = vld [vmem:[#allocation10 + $0x8] sm:$0xff]
    %v593 = vld [vmem:[#allocation2] sm:$0xff]
    %v594 = vld [vmem:[#allocation2 + $0x8] sm:$0xff]
    %v596 = vsel %vm182, %v593, 0
    %v599 = vsel %vm182, %v594, 0
    %601 = vmatprep.subr.mxu0 0.0
    %602 = vmatpush1.msra.mxu0 %v591
    %603 = vmatprep.subr.mxu0 0.0
    %604 = vmatpush1.msra.mxu0 %v592
    %605 = vmatprep.subr.mxu0 0.0
    %606 = vmatpush1.msra.mxu0 0.0
    %607 = vmatprep.subr.mxu0 0.0
    %608 = vmatpush1.msra.mxu0 0.0
    %609 = vmatprep.subr.mxu0 0.0
    %610 = vmatpush1.msra.mxu0 0.0
    %611 = vmatprep.subr.mxu0 0.0
    %612 = vmatpush1.msra.mxu0 0.0
    %613 = vmatprep.subr.mxu0 0.0
    %614 = vmatpush1.msra.mxu0 0.0
    %615 = vmatprep.subr.mxu0 0.0
    %616 = vmatpush1.msra.mxu0 0.0
    %617 = vmatprep.subr.mxu0 0.0
    %618 = vmatpush1.msra.mxu0 0.0
    %619 = vmatprep.subr.mxu0 0.0
    %620 = vmatpush1.msra.mxu0 0.0
    %621 = vmatprep.subr.mxu0 0.0
    %622 = vmatpush1.msra.mxu0 0.0
    %623 = vmatprep.subr.mxu0 0.0
    %624 = vmatpush1.msra.mxu0 0.0
    %625 = vmatprep.subr.mxu0 0.0
    %626 = vmatpush1.msra.mxu0 0.0
    %627 = vmatprep.subr.mxu0 0.0
    %628 = vmatpush1.msra.mxu0 0.0
    %629 = vmatprep.subr.mxu0 0.0
    %630 = vmatpush1.msra.mxu0 0.0
    %631 = vmatprep.subr.mxu0 0.0
    %632 = vmatpush1.msra.mxu0 0.0
    %633 = vmatprep.subr.mxu0 0.0
    %634 = vmatpush1.msra.mxu0 0.0
    %635 = vmatprep.subr.mxu0 0.0
    %636 = vmatpush1.msra.mxu0 0.0
    %637 = vmatprep.subr.mxu0 0.0
    %638 = vmatpush1.msra.mxu0 0.0
    %639 = vmatprep.subr.mxu0 0.0
    %640 = vmatpush1.msra.mxu0 0.0
    %641 = vmatprep.subr.mxu0 0.0
    %642 = vmatpush1.msra.mxu0 0.0
    %643 = vmatprep.subr.mxu0 0.0
    %644 = vmatpush1.msra.mxu0 0.0
    %645 = vmatprep.subr.mxu0 0.0
    %646 = vmatpush1.msra.mxu0 0.0
    %647 = vmatprep.subr.mxu0 0.0
    %648 = vmatpush1.msra.mxu0 0.0
    %649 = vmatprep.subr.mxu0 0.0
    %650 = vmatpush1.msra.mxu0 0.0
    %651 = vmatprep.subr.mxu0 0.0
    %652 = vmatpush1.msra.mxu0 0.0
    %653 = vmatprep.subr.mxu0 0.0
    %654 = vmatpush1.msra.mxu0 0.0
    %655 = vmatprep.subr.mxu0 0.0
    %656 = vmatpush1.msra.mxu0 0.0
    %657 = vmatprep.subr.mxu0 0.0
    %658 = vmatpush1.msra.mxu0 0.0
    %659 = vmatprep.subr.mxu0 0.0
    %660 = vmatpush1.msra.mxu0 0.0
    %661 = vmatprep.subr.mxu0 0.0
    %662 = vmatpush1.msra.mxu0 0.0
    %663 = vmatprep.subr.mxu0 0.0
    %664 = vmatpush1.msra.mxu0 0.0
    %665 = vmatprep.mubr.f32.mxu0 0.0
    %666 = vmatmul.mubr.f32.gmra.mrb[0].mxu0 %v596
    %v667 = vpop.f32.mrb[0].mxu0
    %v668 = vadd.f32 0.0, %v667
    %v669 = vpop.f32.mrb[0].mxu0
    %670 = vmatprep.mubr.f32.mxu0 0.0
    %671 = vmatmul.mubr.f32.gmra.mrb[0].mxu0 %v599
    %v672 = vpop.f32.mrb[0].mxu0
    %v673 = vadd.f32 0.0, %v672
    %v674 = vpop.f32.mrb[0].mxu0
    %675 = vdwg.mxu0
    %v676 = vld [vmem:[#allocation8] sm:$0xff]
    %v677 = vld [vmem:[#allocation8 + $0x8] sm:$0xff]
    %v678 = vld [vmem:[#allocation8 + $0x10] sm:$0xff]
    %v679 = vld [vmem:[#allocation8 + $0x18] sm:$0xff]
    %v680 = vld [vmem:[#allocation8 + $0x20] sm:$0xff]
    %v681 = vld [vmem:[#allocation8 + $0x28] sm:$0xff]
    %v682 = vld [vmem:[#allocation8 + $0x30] sm:$0xff]
    %v683 = vld [vmem:[#allocation8 + $0x38] sm:$0xff]
    %v684 = vld [vmem:[#allocation8 + $0x40] sm:$0xff]
    %v685 = vld [vmem:[#allocation8 + $0x48] sm:$0xff]
    %v686 = vld [vmem:[#allocation8 + $0x50] sm:$0xff]
    %v687 = vld [vmem:[#allocation8 + $0x58] sm:$0xff]
    %v688 = vld [vmem:[#allocation8 + $0x60] sm:$0xff]
    %v689 = vld [vmem:[#allocation8 + $0x68] sm:$0xff]
    %v690 = vld [vmem:[#allocation8 + $0x70] sm:$0xff]
    %v691 = vld [vmem:[#allocation8 + $0x78] sm:$0xff]
    %692 = vmatprep.subr.mxu0 0.0
    %693 = vmatpush1.msra.mxu0 %v676
    %694 = vmatprep.subr.mxu0 0.0
    %695 = vmatpush1.msra.mxu0 %v677
    %696 = vmatprep.subr.mxu0 0.0
    %697 = vmatpush1.msra.mxu0 %v678
    %698 = vmatprep.subr.mxu0 0.0
    %699 = vmatpush1.msra.mxu0 %v679
    %700 = vmatprep.subr.mxu0 0.0
    %701 = vmatpush1.msra.mxu0 %v680
    %702 = vmatprep.subr.mxu0 0.0
    %703 = vmatpush1.msra.mxu0 %v681
    %704 = vmatprep.subr.mxu0 0.0
    %705 = vmatpush1.msra.mxu0 %v682
    %706 = vmatprep.subr.mxu0 0.0
    %707 = vmatpush1.msra.mxu0 %v683
    %708 = vmatprep.subr.mxu0 0.0
    %709 = vmatpush1.msra.mxu0 %v684
    %710 = vmatprep.subr.mxu0 0.0
    %711 = vmatpush1.msra.mxu0 %v685
    %712 = vmatprep.subr.mxu0 0.0
    %713 = vmatpush1.msra.mxu0 %v686
    %714 = vmatprep.subr.mxu0 0.0
    %715 = vmatpush1.msra.mxu0 %v687
    %716 = vmatprep.subr.mxu0 0.0
    %717 = vmatpush1.msra.mxu0 %v688
    %718 = vmatprep.subr.mxu0 0.0
    %719 = vmatpush1.msra.mxu0 %v689
    %720 = vmatprep.subr.mxu0 0.0
    %721 = vmatpush1.msra.mxu0 %v690
    %722 = vmatprep.subr.mxu0 0.0
    %723 = vmatpush1.msra.mxu0 %v691
    %724 = vmatprep.subr.mxu0 0.0
    %725 = vmatpush1.msra.mxu0 0.0
    %726 = vmatprep.subr.mxu0 0.0
    %727 = vmatpush1.msra.mxu0 0.0
    %728 = vmatprep.subr.mxu0 0.0
    %729 = vmatpush1.msra.mxu0 0.0
    %730 = vmatprep.subr.mxu0 0.0
    %731 = vmatpush1.msra.mxu0 0.0
    %732 = vmatprep.subr.mxu0 0.0
    %733 = vmatpush1.msra.mxu0 0.0
    %734 = vmatprep.subr.mxu0 0.0
    %735 = vmatpush1.msra.mxu0 0.0
    %736 = vmatprep.subr.mxu0 0.0
    %737 = vmatpush1.msra.mxu0 0.0
    %738 = vmatprep.subr.mxu0 0.0
    %739 = vmatpush1.msra.mxu0 0.0
    %740 = vmatprep.subr.mxu0 0.0
    %741 = vmatpush1.msra.mxu0 0.0
    %742 = vmatprep.subr.mxu0 0.0
    %743 = vmatpush1.msra.mxu0 0.0
    %744 = vmatprep.subr.mxu0 0.0
    %745 = vmatpush1.msra.mxu0 0.0
    %746 = vmatprep.subr.mxu0 0.0
    %747 = vmatpush1.msra.mxu0 0.0
    %748 = vmatprep.subr.mxu0 0.0
    %749 = vmatpush1.msra.mxu0 0.0
    %750 = vmatprep.subr.mxu0 0.0
    %751 = vmatpush1.msra.mxu0 0.0
    %752 = vmatprep.subr.mxu0 0.0
    %753 = vmatpush1.msra.mxu0 0.0
    %754 = vmatprep.subr.mxu0 0.0
    %755 = vmatpush1.msra.mxu0 0.0
    %756 = vmatprep.mubr.f32.mxu0 0.0
    %757 = vmatmul.mubr.f32.gmra.mrb[0].mxu0 %v668
    %v758 = vpop.f32.mrb[0].mxu0
    %v759 = vadd.f32 0.0, %v758
    %v760 = vpop.f32.mrb[0].mxu0
    %761 = vmatprep.mubr.f32.mxu0 0.0
    %762 = vmatmul.mubr.f32.gmra.mrb[0].mxu0 %v673
    %v763 = vpop.f32.mrb[0].mxu0
    %v764 = vadd.f32 0.0, %v763
    %v765 = vpop.f32.mrb[0].mxu0
    %766 = vdwg.mxu0
    %v767 = vadd.f32 %v168, %v759
    %v768 = vadd.f32 %v173, %v764
    %v769 = vtanh.pop %v767
    %v770 = vtanh.pop %v768
    %v771 = vmul.f32 %v769, 0.9
    %v772 = vmul.f32 %v770, 0.9
    %v773 = vmul.f32 %v591, 0.1
    %v774 = vmul.f32 %v592, 0.1
    %v775 = vadd.f32 %v771, %v773
    %v776 = vadd.f32 %v772, %v774
    %v777 = vsub.f32 %v591, %v775
    %v778 = vsub.f32 %v592, %v776
    %v779 = vmul.f32 %v777, %v777
    %v780 = vmul.f32 %v778, %v778
    %v781 = vadd.f32 %v779, %v780
    %782 = vadd.xlane.f32.xlu0 %v781
    %v783 = vpop.xlane.xlu0 %782
    %v784 = vrot.slane %v783, 4
    %v785 = vadd.f32 %v783, %v784
    %v786 = vrot.slane %v785, 2
    %v787 = vadd.f32 %v785, %v786
    %v788 = vrot.slane %v787, 1
    %v789 = vadd.f32 %v787, %v788
    %s790 = vtos %v789
    %s791 = scalar_select %p590, 1, 0
    %v792 = vstv %s791
    %vm793 = vcmp.eq.s32.totalorder %v792, 1
    %v794 = vsel %vm793, %v591, %v775
    %v795 = vsel %vm793, %v592, %v776
    %796 = vst [vmem:[#allocation10] sm:$0xff] %v794
    %797 = vst [vmem:[#allocation10 + $0x8] sm:$0xff] %v795
    %p798 = scmp.lt.f32.partialorder %s790, 1e-10
    %p799 = por %p590, %p798
    %v800 = vld [vmem:[#allocation10] sm:$0xff]
    %v801 = vld [vmem:[#allocation10 + $0x8] sm:$0xff]
    %v802 = vld [vmem:[#allocation2] sm:$0xff]
    %v803 = vld [vmem:[#allocation2 + $0x8] sm:$0xff]
    %v805 = vsel %vm182, %v802, 0
    %v808 = vsel %vm182, %v803, 0
    %810 = vmatprep.subr.mxu0 0.0
    %811 = vmatpush1.msra.mxu0 %v800
    %812 = vmatprep.subr.mxu0 0.0
    %813 = vmatpush1.msra.mxu0 %v801
    %814 = vmatprep.subr.mxu0 0.0
    %815 = vmatpush1.msra.mxu0 0.0
    %816 = vmatprep.subr.mxu0 0.0
    %817 = vmatpush1.msra.mxu0 0.0
    %818 = vmatprep.subr.mxu0 0.0
    %819 = vmatpush1.msra.mxu0 0.0
    %820 = vmatprep.subr.mxu0 0.0
    %821 = vmatpush1.msra.mxu0 0.0
    %822 = vmatprep.subr.mxu0 0.0
    %823 = vmatpush1.msra.mxu0 0.0
    %824 = vmatprep.subr.mxu0 0.0
    %825 = vmatpush1.msra.mxu0 0.0
    %826 = vmatprep.subr.mxu0 0.0
    %827 = vmatpush1.msra.mxu0 0.0
    %828 = vmatprep.subr.mxu0 0.0
    %829 = vmatpush1.msra.mxu0 0.0
    %830 = vmatprep.subr.mxu0 0.0
    %831 = vmatpush1.msra.mxu0 0.0
    %832 = vmatprep.subr.mxu0 0.0
    %833 = vmatpush1.msra.mxu0 0.0
    %834 = vmatprep.subr.mxu0 0.0
    %835 = vmatpush1.msra.mxu0 0.0
    %836 = vmatprep.subr.mxu0 0.0
    %837 = vmatpush1.msra.mxu0 0.0
    %838 = vmatprep.subr.mxu0 0.0
    %839 = vmatpush1.msra.mxu0 0.0
    %840 = vmatprep.subr.mxu0 0.0
    %841 = vmatpush1.msra.mxu0 0.0
    %842 = vmatprep.subr.mxu0 0.0
    %843 = vmatpush1.msra.mxu0 0.0
    %844 = vmatprep.subr.mxu0 0.0
    %845 = vmatpush1.msra.mxu0 0.0
    %846 = vmatprep.subr.mxu0 0.0
    %847 = vmatpush1.msra.mxu0 0.0
    %848 = vmatprep.subr.mxu0 0.0
    %849 = vmatpush1.msra.mxu0 0.0
    %850 = vmatprep.subr.mxu0 0.0
    %851 = vmatpush1.msra.mxu0 0.0
    %852 = vmatprep.subr.mxu0 0.0
    %853 = vmatpush1.msra.mxu0 0.0
    %854 = vmatprep.subr.mxu0 0.0
    %855 = vmatpush1.msra.mxu0 0.0
    %856 = vmatprep.subr.mxu0 0.0
    %857 = vmatpush1.msra.mxu0 0.0
    %858 = vmatprep.subr.mxu0 0.0
    %859 = vmatpush1.msra.mxu0 0.0
    %860 = vmatprep.subr.mxu0 0.0
    %861 = vmatpush1.msra.mxu0 0.0
    %862 = vmatprep.subr.mxu0 0.0
    %863 = vmatpush1.msra.mxu0 0.0
    %864 = vmatprep.subr.mxu0 0.0
    %865 = vmatpush1.msra.mxu0 0.0
    %866 = vmatprep.subr.mxu0 0.0
    %867 = vmatpush1.msra.mxu0 0.0
    %868 = vmatprep.subr.mxu0 0.0
    %869 = vmatpush1.msra.mxu0 0.0
    %870 = vmatprep.subr.mxu0 0.0
    %871 = vmatpush1.msra.mxu0 0.0
    %872 = vmatprep.subr.mxu0 0.0
    %873 = vmatpush1.msra.mxu0 0.0
    %874 = vmatprep.mubr.f32.mxu0 0.0
    %875 = vmatmul.mubr.f32.gmra.mrb[0].mxu0 %v805
    %v876 = vpop.f32.mrb[0].mxu0
    %v877 = vadd.f32 0.0, %v876
    %v878 = vpop.f32.mrb[0].mxu0
    %879 = vmatprep.mubr.f32.mxu0 0.0
    %880 = vmatmul.mubr.f32.gmra.mrb[0].mxu0 %v808
    %v881 = vpop.f32.mrb[0].mxu0
    %v882 = vadd.f32 0.0, %v881
    %v883 = vpop.f32.mrb[0].mxu0
    %884 = vdwg.mxu0
    %v885 = vld [vmem:[#allocation8] sm:$0xff]
    %v886 = vld [vmem:[#allocation8 + $0x8] sm:$0xff]
    %v887 = vld [vmem:[#allocation8 + $0x10] sm:$0xff]
    %v888 = vld [vmem:[#allocation8 + $0x18] sm:$0xff]
    %v889 = vld [vmem:[#allocation8 + $0x20] sm:$0xff]
    %v890 = vld [vmem:[#allocation8 + $0x28] sm:$0xff]
    %v891 = vld [vmem:[#allocation8 + $0x30] sm:$0xff]
    %v892 = vld [vmem:[#allocation8 + $0x38] sm:$0xff]
    %v893 = vld [vmem:[#allocation8 + $0x40] sm:$0xff]
    %v894 = vld [vmem:[#allocation8 + $0x48] sm:$0xff]
    %v895 = vld [vmem:[#allocation8 + $0x50] sm:$0xff]
    %v896 = vld [vmem:[#allocation8 + $0x58] sm:$0xff]
    %v897 = vld [vmem:[#allocation8 + $0x60] sm:$0xff]
    %v898 = vld [vmem:[#allocation8 + $0x68] sm:$0xff]
    %v899 = vld [vmem:[#allocation8 + $0x70] sm:$0xff]
    %v900 = vld [vmem:[#allocation8 + $0x78] sm:$0xff]
    %901 = vmatprep.subr.mxu0 0.0
    %902 = vmatpush1.msra.mxu0 %v885
    %903 = vmatprep.subr.mxu0 0.0
    %904 = vmatpush1.msra.mxu0 %v886
    %905 = vmatprep.subr.mxu0 0.0
    %906 = vmatpush1.msra.mxu0 %v887
    %907 = vmatprep.subr.mxu0 0.0
    %908 = vmatpush1.msra.mxu0 %v888
    %909 = vmatprep.subr.mxu0 0.0
    %910 = vmatpush1.msra.mxu0 %v889
    %911 = vmatprep.subr.mxu0 0.0
    %912 = vmatpush1.msra.mxu0 %v890
    %913 = vmatprep.subr.mxu0 0.0
    %914 = vmatpush1.msra.mxu0 %v891
    %915 = vmatprep.subr.mxu0 0.0
    %916 = vmatpush1.msra.mxu0 %v892
    %917 = vmatprep.subr.mxu0 0.0
    %918 = vmatpush1.msra.mxu0 %v893
    %919 = vmatprep.subr.mxu0 0.0
    %920 = vmatpush1.msra.mxu0 %v894
    %921 = vmatprep.subr.mxu0 0.0
    %922 = vmatpush1.msra.mxu0 %v895
    %923 = vmatprep.subr.mxu0 0.0
    %924 = vmatpush1.msra.mxu0 %v896
    %925 = vmatprep.subr.mxu0 0.0
    %926 = vmatpush1.msra.mxu0 %v897
    %927 = vmatprep.subr.mxu0 0.0
    %928 = vmatpush1.msra.mxu0 %v898
    %929 = vmatprep.subr.mxu0 0.0
    %930 = vmatpush1.msra.mxu0 %v899
    %931 = vmatprep.subr.mxu0 0.0
    %932 = vmatpush1.msra.mxu0 %v900
    %933 = vmatprep.subr.mxu0 0.0
    %934 = vmatpush1.msra.mxu0 0.0
    %935 = vmatprep.subr.mxu0 0.0
    %936 = vmatpush1.msra.mxu0 0.0
    %937 = vmatprep.subr.mxu0 0.0
    %938 = vmatpush1.msra.mxu0 0.0
    %939 = vmatprep.subr.mxu0 0.0
    %940 = vmatpush1.msra.mxu0 0.0
    %941 = vmatprep.subr.mxu0 0.0
    %942 = vmatpush1.msra.mxu0 0.0
    %943 = vmatprep.subr.mxu0 0.0
    %944 = vmatpush1.msra.mxu0 0.0
    %945 = vmatprep.subr.mxu0 0.0
    %946 = vmatpush1.msra.mxu0 0.0
    %947 = vmatprep.subr.mxu0 0.0
    %948 = vmatpush1.msra.mxu0 0.0
    %949 = vmatprep.subr.mxu0 0.0
    %950 = vmatpush1.msra.mxu0 0.0
    %951 = vmatprep.subr.mxu0 0.0
    %952 = vmatpush1.msra.mxu0 0.0
    %953 = vmatprep.subr.mxu0 0.0
    %954 = vmatpush1.msra.mxu0 0.0
    %955 = vmatprep.subr.mxu0 0.0
    %956 = vmatpush1.msra.mxu0 0.0
    %957 = vmatprep.subr.mxu0 0.0
    %958 = vmatpush1.msra.mxu0 0.0
    %959 = vmatprep.subr.mxu0 0.0
    %960 = vmatpush1.msra.mxu0 0.0
    %961 = vmatprep.subr.mxu0 0.0
    %962 = vmatpush1.msra.mxu0 0.0
    %963 = vmatprep.subr.mxu0 0.0
    %964 = vmatpush1.msra.mxu0 0.0
    %965 = vmatprep.mubr.f32.mxu0 0.0
    %966 = vmatmul.mubr.f32.gmra.mrb[0].mxu0 %v877
    %v967 = vpop.f32.mrb[0].mxu0
    %v968 = vadd.f32 0.0, %v967
    %v969 = vpop.f32.mrb[0].mxu0
    %970 = vmatprep.mubr.f32.mxu0 0.0
    %971 = vmatmul.mubr.f32.gmra.mrb[0].mxu0 %v882
    %v972 = vpop.f32.mrb[0].mxu0
    %v973 = vadd.f32 0.0, %v972
    %v974 = vpop.f32.mrb[0].mxu0
    %975 = vdwg.mxu0
    %v976 = vadd.f32 %v168, %v968
    %v977 = vadd.f32 %v173, %v973
    %v978 = vtanh.pop %v976
    %v979 = vtanh.pop %v977
    %v980 = vmul.f32 %v978, 0.9
    %v981 = vmul.f32 %v979, 0.9
    %v982 = vmul.f32 %v800, 0.1
    %v983 = vmul.f32 %v801, 0.1
    %v984 = vadd.f32 %v980, %v982
    %v985 = vadd.f32 %v981, %v983
    %v986 = vsub.f32 %v800, %v984
    %v987 = vsub.f32 %v801, %v985
    %v988 = vmul.f32 %v986, %v986
    %v989 = vmul.f32 %v987, %v987
    %v990 = vadd.f32 %v988, %v989
    %991 = vadd.xlane.f32.xlu0 %v990
    %v992 = vpop.xlane.xlu0 %991
    %v993 = vrot.slane %v992, 4
    %v994 = vadd.f32 %v992, %v993
    %v995 = vrot.slane %v994, 2
    %v996 = vadd.f32 %v994, %v995
    %v997 = vrot.slane %v996, 1
    %v998 = vadd.f32 %v996, %v997
    %s999 = vtos %v998
    %s1000 = scalar_select %p799, 1, 0
    %v1001 = vstv %s1000
    %vm1002 = vcmp.eq.s32.totalorder %v1001, 1
    %v1003 = vsel %vm1002, %v800, %v984
    %v1004 = vsel %vm1002, %v801, %v985
    %1005 = vst [vmem:[#allocation10] sm:$0xff] %v1003
    %1006 = vst [vmem:[#allocation10 + $0x8] sm:$0xff] %v1004
    %p1007 = scmp.lt.f32.partialorder %s999, 1e-10
    %p1008 = por %p799, %p1007
    %v1009 = vld [vmem:[#allocation10] sm:$0xff]
    %v1010 = vld [vmem:[#allocation10 + $0x8] sm:$0xff]
    %v1011 = vld [vmem:[#allocation2] sm:$0xff]
    %v1012 = vld [vmem:[#allocation2 + $0x8] sm:$0xff]
    %v1014 = vsel %vm182, %v1011, 0
    %v1017 = vsel %vm182, %v1012, 0
    %1019 = vmatprep.subr.mxu0 0.0
    %1020 = vmatpush1.msra.mxu0 %v1009
    %1021 = vmatprep.subr.mxu0 0.0
    %1022 = vmatpush1.msra.mxu0 %v1010
    %1023 = vmatprep.subr.mxu0 0.0
    %1024 = vmatpush1.msra.mxu0 0.0
    %1025 = vmatprep.subr.mxu0 0.0
    %1026 = vmatpush1.msra.mxu0 0.0
    %1027 = vmatprep.subr.mxu0 0.0
    %1028 = vmatpush1.msra.mxu0 0.0
    %1029 = vmatprep.subr.mxu0 0.0
    %1030 = vmatpush1.msra.mxu0 0.0
    %1031 = vmatprep.subr.mxu0 0.0
    %1032 = vmatpush1.msra.mxu0 0.0
    %1033 = vmatprep.subr.mxu0 0.0
    %1034 = vmatpush1.msra.mxu0 0.0
    %1035 = vmatprep.subr.mxu0 0.0
    %1036 = vmatpush1.msra.mxu0 0.0
    %1037 = vmatprep.subr.mxu0 0.0
    %1038 = vmatpush1.msra.mxu0 0.0
    %1039 = vmatprep.subr.mxu0 0.0
    %1040 = vmatpush1.msra.mxu0 0.0
    %1041 = vmatprep.subr.mxu0 0.0
    %1042 = vmatpush1.msra.mxu0 0.0
    %1043 = vmatprep.subr.mxu0 0.0
    %1044 = vmatpush1.msra.mxu0 0.0
    %1045 = vmatprep.subr.mxu0 0.0
    %1046 = vmatpush1.msra.mxu0 0.0
    %1047 = vmatprep.subr.mxu0 0.0
    %1048 = vmatpush1.msra.mxu0 0.0
    %1049 = vmatprep.subr.mxu0 0.0
    %1050 = vmatpush1.msra.mxu0 0.0
    %1051 = vmatprep.subr.mxu0 0.0
    %1052 = vmatpush1.msra.mxu0 0.0
    %1053 = vmatprep.subr.mxu0 0.0
    %1054 = vmatpush1.msra.mxu0 0.0
    %1055 = vmatprep.subr.mxu0 0.0
    %1056 = vmatpush1.msra.mxu0 0.0
    %1057 = vmatprep.subr.mxu0 0.0
    %1058 = vmatpush1.msra.mxu0 0.0
    %1059 = vmatprep.subr.mxu0 0.0
    %1060 = vmatpush1.msra.mxu0 0.0
    %1061 = vmatprep.subr.mxu0 0.0
    %1062 = vmatpush1.msra.mxu0 0.0
    %1063 = vmatprep.subr.mxu0 0.0
    %1064 = vmatpush1.msra.mxu0 0.0
    %1065 = vmatprep.subr.mxu0 0.0
    %1066 = vmatpush1.msra.mxu0 0.0
    %1067 = vmatprep.subr.mxu0 0.0
    %1068 = vmatpush1.msra.mxu0 0.0
    %1069 = vmatprep.subr.mxu0 0.0
    %1070 = vmatpush1.msra.mxu0 0.0
    %1071 = vmatprep.subr.mxu0 0.0
    %1072 = vmatpush1.msra.mxu0 0.0
    %1073 = vmatprep.subr.mxu0 0.0
    %1074 = vmatpush1.msra.mxu0 0.0
    %1075 = vmatprep.subr.mxu0 0.0
    %1076 = vmatpush1.msra.mxu0 0.0
    %1077 = vmatprep.subr.mxu0 0.0
    %1078 = vmatpush1.msra.mxu0 0.0
    %1079 = vmatprep.subr.mxu0 0.0
    %1080 = vmatpush1.msra.mxu0 0.0
    %1081 = vmatprep.subr.mxu0 0.0
    %1082 = vmatpush1.msra.mxu0 0.0
    %1083 = vmatprep.mubr.f32.mxu0 0.0
    %1084 = vmatmul.mubr.f32.gmra.mrb[0].mxu0 %v1014
    %v1085 = vpop.f32.mrb[0].mxu0
    %v1086 = vadd.f32 0.0, %v1085
    %v1087 = vpop.f32.mrb[0].mxu0
    %1088 = vmatprep.mubr.f32.mxu0 0.0
    %1089 = vmatmul.mubr.f32.gmra.mrb[0].mxu0 %v1017
    %v1090 = vpop.f32.mrb[0].mxu0
    %v1091 = vadd.f32 0.0, %v1090
    %v1092 = vpop.f32.mrb[0].mxu0
    %1093 = vdwg.mxu0
    %v1094 = vld [vmem:[#allocation8] sm:$0xff]
    %v1095 = vld [vmem:[#allocation8 + $0x8] sm:$0xff]
    %v1096 = vld [vmem:[#allocation8 + $0x10] sm:$0xff]
    %v1097 = vld [vmem:[#allocation8 + $0x18] sm:$0xff]
    %v1098 = vld [vmem:[#allocation8 + $0x20] sm:$0xff]
    %v1099 = vld [vmem:[#allocation8 + $0x28] sm:$0xff]
    %v1100 = vld [vmem:[#allocation8 + $0x30] sm:$0xff]
    %v1101 = vld [vmem:[#allocation8 + $0x38] sm:$0xff]
    %v1102 = vld [vmem:[#allocation8 + $0x40] sm:$0xff]
    %v1103 = vld [vmem:[#allocation8 + $0x48] sm:$0xff]
    %v1104 = vld [vmem:[#allocation8 + $0x50] sm:$0xff]
    %v1105 = vld [vmem:[#allocation8 + $0x58] sm:$0xff]
    %v1106 = vld [vmem:[#allocation8 + $0x60] sm:$0xff]
    %v1107 = vld [vmem:[#allocation8 + $0x68] sm:$0xff]
    %v1108 = vld [vmem:[#allocation8 + $0x70] sm:$0xff]
    %v1109 = vld [vmem:[#allocation8 + $0x78] sm:$0xff]
    %1110 = vmatprep.subr.mxu0 0.0
    %1111 = vmatpush1.msra.mxu0 %v1094
    %1112 = vmatprep.subr.mxu0 0.0
    %1113 = vmatpush1.msra.mxu0 %v1095
    %1114 = vmatprep.subr.mxu0 0.0
    %1115 = vmatpush1.msra.mxu0 %v1096
    %1116 = vmatprep.subr.mxu0 0.0
    %1117 = vmatpush1.msra.mxu0 %v1097
    %1118 = vmatprep.subr.mxu0 0.0
    %1119 = vmatpush1.msra.mxu0 %v1098
    %1120 = vmatprep.subr.mxu0 0.0
    %1121 = vmatpush1.msra.mxu0 %v1099
    %1122 = vmatprep.subr.mxu0 0.0
    %1123 = vmatpush1.msra.mxu0 %v1100
    %1124 = vmatprep.subr.mxu0 0.0
    %1125 = vmatpush1.msra.mxu0 %v1101
    %1126 = vmatprep.subr.mxu0 0.0
    %1127 = vmatpush1.msra.mxu0 %v1102
    %1128 = vmatprep.subr.mxu0 0.0
    %1129 = vmatpush1.msra.mxu0 %v1103
    %1130 = vmatprep.subr.mxu0 0.0
    %1131 = vmatpush1.msra.mxu0 %v1104
    %1132 = vmatprep.subr.mxu0 0.0
    %1133 = vmatpush1.msra.mxu0 %v1105
    %1134 = vmatprep.subr.mxu0 0.0
    %1135 = vmatpush1.msra.mxu0 %v1106
    %1136 = vmatprep.subr.mxu0 0.0
    %1137 = vmatpush1.msra.mxu0 %v1107
    %1138 = vmatprep.subr.mxu0 0.0
    %1139 = vmatpush1.msra.mxu0 %v1108
    %1140 = vmatprep.subr.mxu0 0.0
    %1141 = vmatpush1.msra.mxu0 %v1109
    %1142 = vmatprep.subr.mxu0 0.0
    %1143 = vmatpush1.msra.mxu0 0.0
    %1144 = vmatprep.subr.mxu0 0.0
    %1145 = vmatpush1.msra.mxu0 0.0
    %1146 = vmatprep.subr.mxu0 0.0
    %1147 = vmatpush1.msra.mxu0 0.0
    %1148 = vmatprep.subr.mxu0 0.0
    %1149 = vmatpush1.msra.mxu0 0.0
    %1150 = vmatprep.subr.mxu0 0.0
    %1151 = vmatpush1.msra.mxu0 0.0
    %1152 = vmatprep.subr.mxu0 0.0
    %1153 = vmatpush1.msra.mxu0 0.0
    %1154 = vmatprep.subr.mxu0 0.0
    %1155 = vmatpush1.msra.mxu0 0.0
    %1156 = vmatprep.subr.mxu0 0.0
    %1157 = vmatpush1.msra.mxu0 0.0
    %1158 = vmatprep.subr.mxu0 0.0
    %1159 = vmatpush1.msra.mxu0 0.0
    %1160 = vmatprep.subr.mxu0 0.0
    %1161 = vmatpush1.msra.mxu0 0.0
    %1162 = vmatprep.subr.mxu0 0.0
    %1163 = vmatpush1.msra.mxu0 0.0
    %1164 = vmatprep.subr.mxu0 0.0
    %1165 = vmatpush1.msra.mxu0 0.0
    %1166 = vmatprep.subr.mxu0 0.0
    %1167 = vmatpush1.msra.mxu0 0.0
    %1168 = vmatprep.subr.mxu0 0.0
    %1169 = vmatpush1.msra.mxu0 0.0
    %1170 = vmatprep.subr.mxu0 0.0
    %1171 = vmatpush1.msra.mxu0 0.0
    %1172 = vmatprep.subr.mxu0 0.0
    %1173 = vmatpush1.msra.mxu0 0.0
    %1174 = vmatprep.mubr.f32.mxu0 0.0
    %1175 = vmatmul.mubr.f32.gmra.mrb[0].mxu0 %v1086
    %v1176 = vpop.f32.mrb[0].mxu0
    %v1177 = vadd.f32 0.0, %v1176
    %v1178 = vpop.f32.mrb[0].mxu0
    %1179 = vmatprep.mubr.f32.mxu0 0.0
    %1180 = vmatmul.mubr.f32.gmra.mrb[0].mxu0 %v1091
    %v1181 = vpop.f32.mrb[0].mxu0
    %v1182 = vadd.f32 0.0, %v1181
    %v1183 = vpop.f32.mrb[0].mxu0
    %1184 = vdwg.mxu0
    %v1185 = vadd.f32 %v168, %v1177
    %v1186 = vadd.f32 %v173, %v1182
    %v1187 = vtanh.pop %v1185
    %v1188 = vtanh.pop %v1186
    %v1189 = vmul.f32 %v1187, 0.9
    %v1190 = vmul.f32 %v1188, 0.9
    %v1191 = vmul.f32 %v1009, 0.1
    %v1192 = vmul.f32 %v1010, 0.1
    %v1193 = vadd.f32 %v1189, %v1191
    %v1194 = vadd.f32 %v1190, %v1192
    %v1195 = vsub.f32 %v1009, %v1193
    %v1196 = vsub.f32 %v1010, %v1194
    %v1197 = vmul.f32 %v1195, %v1195
    %v1198 = vmul.f32 %v1196, %v1196
    %v1199 = vadd.f32 %v1197, %v1198
    %1200 = vadd.xlane.f32.xlu0 %v1199
    %v1201 = vpop.xlane.xlu0 %1200
    %v1202 = vrot.slane %v1201, 4
    %v1203 = vadd.f32 %v1201, %v1202
    %v1204 = vrot.slane %v1203, 2
    %v1205 = vadd.f32 %v1203, %v1204
    %v1206 = vrot.slane %v1205, 1
    %v1207 = vadd.f32 %v1205, %v1206
    %s1208 = vtos %v1207
    %s1209 = scalar_select %p1008, 1, 0
    %v1210 = vstv %s1209
    %vm1211 = vcmp.eq.s32.totalorder %v1210, 1
    %v1212 = vsel %vm1211, %v1009, %v1193
    %v1213 = vsel %vm1211, %v1010, %v1194
    %1214 = vst [vmem:[#allocation10] sm:$0xff] %v1212
    %1215 = vst [vmem:[#allocation10 + $0x8] sm:$0xff] %v1213
    %p1216 = scmp.lt.f32.partialorder %s1208, 1e-10
    %p1217 = por %p1008, %p1216
    %v1218 = vld [vmem:[#allocation10] sm:$0xff]
    %v1219 = vld [vmem:[#allocation10 + $0x8] sm:$0xff]
    %v1220 = vld [vmem:[#allocation2] sm:$0xff]
    %v1221 = vld [vmem:[#allocation2 + $0x8] sm:$0xff]
    %v1223 = vsel %vm182, %v1220, 0
    %v1226 = vsel %vm182, %v1221, 0
    %1228 = vmatprep.subr.mxu0 0.0
    %1229 = vmatpush1.msra.mxu0 %v1218
    %1230 = vmatprep.subr.mxu0 0.0
    %1231 = vmatpush1.msra.mxu0 %v1219
    %1232 = vmatprep.subr.mxu0 0.0
    %1233 = vmatpush1.msra.mxu0 0.0
    %1234 = vmatprep.subr.mxu0 0.0
    %1235 = vmatpush1.msra.mxu0 0.0
    %1236 = vmatprep.subr.mxu0 0.0
    %1237 = vmatpush1.msra.mxu0 0.0
    %1238 = vmatprep.subr.mxu0 0.0
    %1239 = vmatpush1.msra.mxu0 0.0
    %1240 = vmatprep.subr.mxu0 0.0
    %1241 = vmatpush1.msra.mxu0 0.0
    %1242 = vmatprep.subr.mxu0 0.0
    %1243 = vmatpush1.msra.mxu0 0.0
    %1244 = vmatprep.subr.mxu0 0.0
    %1245 = vmatpush1.msra.mxu0 0.0
    %1246 = vmatprep.subr.mxu0 0.0
    %1247 = vmatpush1.msra.mxu0 0.0
    %1248 = vmatprep.subr.mxu0 0.0
    %1249 = vmatpush1.msra.mxu0 0.0
    %1250 = vmatprep.subr.mxu0 0.0
    %1251 = vmatpush1.msra.mxu0 0.0
    %1252 = vmatprep.subr.mxu0 0.0
    %1253 = vmatpush1.msra.mxu0 0.0
    %1254 = vmatprep.subr.mxu0 0.0
    %1255 = vmatpush1.msra.mxu0 0.0
    %1256 = vmatprep.subr.mxu0 0.0
    %1257 = vmatpush1.msra.mxu0 0.0
    %1258 = vmatprep.subr.mxu0 0.0
    %1259 = vmatpush1.msra.mxu0 0.0
    %1260 = vmatprep.subr.mxu0 0.0
    %1261 = vmatpush1.msra.mxu0 0.0
    %1262 = vmatprep.subr.mxu0 0.0
    %1263 = vmatpush1.msra.mxu0 0.0
    %1264 = vmatprep.subr.mxu0 0.0
    %1265 = vmatpush1.msra.mxu0 0.0
    %1266 = vmatprep.subr.mxu0 0.0
    %1267 = vmatpush1.msra.mxu0 0.0
    %1268 = vmatprep.subr.mxu0 0.0
    %1269 = vmatpush1.msra.mxu0 0.0
    %1270 = vmatprep.subr.mxu0 0.0
    %1271 = vmatpush1.msra.mxu0 0.0
    %1272 = vmatprep.subr.mxu0 0.0
    %1273 = vmatpush1.msra.mxu0 0.0
    %1274 = vmatprep.subr.mxu0 0.0
    %1275 = vmatpush1.msra.mxu0 0.0
    %1276 = vmatprep.subr.mxu0 0.0
    %1277 = vmatpush1.msra.mxu0 0.0
    %1278 = vmatprep.subr.mxu0 0.0
    %1279 = vmatpush1.msra.mxu0 0.0
    %1280 = vmatprep.subr.mxu0 0.0
    %1281 = vmatpush1.msra.mxu0 0.0
    %1282 = vmatprep.subr.mxu0 0.0
    %1283 = vmatpush1.msra.mxu0 0.0
    %1284 = vmatprep.subr.mxu0 0.0
    %1285 = vmatpush1.msra.mxu0 0.0
    %1286 = vmatprep.subr.mxu0 0.0
    %1287 = vmatpush1.msra.mxu0 0.0
    %1288 = vmatprep.subr.mxu0 0.0
    %1289 = vmatpush1.msra.mxu0 0.0
    %1290 = vmatprep.subr.mxu0 0.0
    %1291 = vmatpush1.msra.mxu0 0.0
    %1292 = vmatprep.mubr.f32.mxu0 0.0
    %1293 = vmatmul.mubr.f32.gmra.mrb[0].mxu0 %v1223
    %v1294 = vpop.f32.mrb[0].mxu0
    %v1295 = vadd.f32 0.0, %v1294
    %v1296 = vpop.f32.mrb[0].mxu0
    %1297 = vmatprep.mubr.f32.mxu0 0.0
    %1298 = vmatmul.mubr.f32.gmra.mrb[0].mxu0 %v1226
    %v1299 = vpop.f32.mrb[0].mxu0
    %v1300 = vadd.f32 0.0, %v1299
    %v1301 = vpop.f32.mrb[0].mxu0
    %1302 = vdwg.mxu0
    %v1303 = vld [vmem:[#allocation8] sm:$0xff]
    %v1304 = vld [vmem:[#allocation8 + $0x8] sm:$0xff]
    %v1305 = vld [vmem:[#allocation8 + $0x10] sm:$0xff]
    %v1306 = vld [vmem:[#allocation8 + $0x18] sm:$0xff]
    %v1307 = vld [vmem:[#allocation8 + $0x20] sm:$0xff]
    %v1308 = vld [vmem:[#allocation8 + $0x28] sm:$0xff]
    %v1309 = vld [vmem:[#allocation8 + $0x30] sm:$0xff]
    %v1310 = vld [vmem:[#allocation8 + $0x38] sm:$0xff]
    %v1311 = vld [vmem:[#allocation8 + $0x40] sm:$0xff]
    %v1312 = vld [vmem:[#allocation8 + $0x48] sm:$0xff]
    %v1313 = vld [vmem:[#allocation8 + $0x50] sm:$0xff]
    %v1314 = vld [vmem:[#allocation8 + $0x58] sm:$0xff]
    %v1315 = vld [vmem:[#allocation8 + $0x60] sm:$0xff]
    %v1316 = vld [vmem:[#allocation8 + $0x68] sm:$0xff]
    %v1317 = vld [vmem:[#allocation8 + $0x70] sm:$0xff]
    %v1318 = vld [vmem:[#allocation8 + $0x78] sm:$0xff]
    %1319 = vmatprep.subr.mxu0 0.0
    %1320 = vmatpush1.msra.mxu0 %v1303
    %1321 = vmatprep.subr.mxu0 0.0
    %1322 = vmatpush1.msra.mxu0 %v1304
    %1323 = vmatprep.subr.mxu0 0.0
    %1324 = vmatpush1.msra.mxu0 %v1305
    %1325 = vmatprep.subr.mxu0 0.0
    %1326 = vmatpush1.msra.mxu0 %v1306
    %1327 = vmatprep.subr.mxu0 0.0
    %1328 = vmatpush1.msra.mxu0 %v1307
    %1329 = vmatprep.subr.mxu0 0.0
    %1330 = vmatpush1.msra.mxu0 %v1308
    %1331 = vmatprep.subr.mxu0 0.0
    %1332 = vmatpush1.msra.mxu0 %v1309
    %1333 = vmatprep.subr.mxu0 0.0
    %1334 = vmatpush1.msra.mxu0 %v1310
    %1335 = vmatprep.subr.mxu0 0.0
    %1336 = vmatpush1.msra.mxu0 %v1311
    %1337 = vmatprep.subr.mxu0 0.0
    %1338 = vmatpush1.msra.mxu0 %v1312
    %1339 = vmatprep.subr.mxu0 0.0
    %1340 = vmatpush1.msra.mxu0 %v1313
    %1341 = vmatprep.subr.mxu0 0.0
    %1342 = vmatpush1.msra.mxu0 %v1314
    %1343 = vmatprep.subr.mxu0 0.0
    %1344 = vmatpush1.msra.mxu0 %v1315
    %1345 = vmatprep.subr.mxu0 0.0
    %1346 = vmatpush1.msra.mxu0 %v1316
    %1347 = vmatprep.subr.mxu0 0.0
    %1348 = vmatpush1.msra.mxu0 %v1317
    %1349 = vmatprep.subr.mxu0 0.0
    %1350 = vmatpush1.msra.mxu0 %v1318
    %1351 = vmatprep.subr.mxu0 0.0
    %1352 = vmatpush1.msra.mxu0 0.0
    %1353 = vmatprep.subr.mxu0 0.0
    %1354 = vmatpush1.msra.mxu0 0.0
    %1355 = vmatprep.subr.mxu0 0.0
    %1356 = vmatpush1.msra.mxu0 0.0
    %1357 = vmatprep.subr.mxu0 0.0
    %1358 = vmatpush1.msra.mxu0 0.0
    %1359 = vmatprep.subr.mxu0 0.0
    %1360 = vmatpush1.msra.mxu0 0.0
    %1361 = vmatprep.subr.mxu0 0.0
    %1362 = vmatpush1.msra.mxu0 0.0
    %1363 = vmatprep.subr.mxu0 0.0
    %1364 = vmatpush1.msra.mxu0 0.0
    %1365 = vmatprep.subr.mxu0 0.0
    %1366 = vmatpush1.msra.mxu0 0.0
    %1367 = vmatprep.subr.mxu0 0.0
    %1368 = vmatpush1.msra.mxu0 0.0
    %1369 = vmatprep.subr.mxu0 0.0
    %1370 = vmatpush1.msra.mxu0 0.0
    %1371 = vmatprep.subr.mxu0 0.0
    %1372 = vmatpush1.msra.mxu0 0.0
    %1373 = vmatprep.subr.mxu0 0.0
    %1374 = vmatpush1.msra.mxu0 0.0
    %1375 = vmatprep.subr.mxu0 0.0
    %1376 = vmatpush1.msra.mxu0 0.0
    %1377 = vmatprep.subr.mxu0 0.0
    %1378 = vmatpush1.msra.mxu0 0.0
    %1379 = vmatprep.subr.mxu0 0.0
    %1380 = vmatpush1.msra.mxu0 0.0
    %1381 = vmatprep.subr.mxu0 0.0
    %1382 = vmatpush1.msra.mxu0 0.0
    %1383 = vmatprep.mubr.f32.mxu0 0.0
    %1384 = vmatmul.mubr.f32.gmra.mrb[0].mxu0 %v1295
    %v1385 = vpop.f32.mrb[0].mxu0
    %v1386 = vadd.f32 0.0, %v1385
    %v1387 = vpop.f32.mrb[0].mxu0
    %1388 = vmatprep.mubr.f32.mxu0 0.0
    %1389 = vmatmul.mubr.f32.gmra.mrb[0].mxu0 %v1300
    %v1390 = vpop.f32.mrb[0].mxu0
    %v1391 = vadd.f32 0.0, %v1390
    %v1392 = vpop.f32.mrb[0].mxu0
    %1393 = vdwg.mxu0
    %v1394 = vadd.f32 %v168, %v1386
    %v1395 = vadd.f32 %v173, %v1391
    %v1396 = vtanh.pop %v1394
    %v1397 = vtanh.pop %v1395
    %v1398 = vmul.f32 %v1396, 0.9
    %v1399 = vmul.f32 %v1397, 0.9
    %v1400 = vmul.f32 %v1218, 0.1
    %v1401 = vmul.f32 %v1219, 0.1
    %v1402 = vadd.f32 %v1398, %v1400
    %v1403 = vadd.f32 %v1399, %v1401
    %v1404 = vsub.f32 %v1218, %v1402
    %v1405 = vsub.f32 %v1219, %v1403
    %v1406 = vmul.f32 %v1404, %v1404
    %v1407 = vmul.f32 %v1405, %v1405
    %v1408 = vadd.f32 %v1406, %v1407
    %1409 = vadd.xlane.f32.xlu0 %v1408
    %v1410 = vpop.xlane.xlu0 %1409
    %v1411 = vrot.slane %v1410, 4
    %v1412 = vadd.f32 %v1410, %v1411
    %v1413 = vrot.slane %v1412, 2
    %v1414 = vadd.f32 %v1412, %v1413
    %v1415 = vrot.slane %v1414, 1
    %v1416 = vadd.f32 %v1414, %v1415
    %s1417 = vtos %v1416
    %s1418 = scalar_select %p1217, 1, 0
    %v1419 = vstv %s1418
    %vm1420 = vcmp.eq.s32.totalorder %v1419, 1
    %v1421 = vsel %vm1420, %v1218, %v1402
    %v1422 = vsel %vm1420, %v1219, %v1403
    %1423 = vst [vmem:[#allocation10] sm:$0xff] %v1421
    %1424 = vst [vmem:[#allocation10 + $0x8] sm:$0xff] %v1422
    %p1425 = scmp.lt.f32.partialorder %s1417, 1e-10
    %p1426 = por %p1217, %p1425
    %v1427 = vld [vmem:[#allocation10] sm:$0xff]
    %v1428 = vld [vmem:[#allocation10 + $0x8] sm:$0xff]
    %v1429 = vld [vmem:[#allocation2] sm:$0xff]
    %v1430 = vld [vmem:[#allocation2 + $0x8] sm:$0xff]
    %v1432 = vsel %vm182, %v1429, 0
    %v1435 = vsel %vm182, %v1430, 0
    %1437 = vmatprep.subr.mxu0 0.0
    %1438 = vmatpush1.msra.mxu0 %v1427
    %1439 = vmatprep.subr.mxu0 0.0
    %1440 = vmatpush1.msra.mxu0 %v1428
    %1441 = vmatprep.subr.mxu0 0.0
    %1442 = vmatpush1.msra.mxu0 0.0
    %1443 = vmatprep.subr.mxu0 0.0
    %1444 = vmatpush1.msra.mxu0 0.0
    %1445 = vmatprep.subr.mxu0 0.0
    %1446 = vmatpush1.msra.mxu0 0.0
    %1447 = vmatprep.subr.mxu0 0.0
    %1448 = vmatpush1.msra.mxu0 0.0
    %1449 = vmatprep.subr.mxu0 0.0
    %1450 = vmatpush1.msra.mxu0 0.0
    %1451 = vmatprep.subr.mxu0 0.0
    %1452 = vmatpush1.msra.mxu0 0.0
    %1453 = vmatprep.subr.mxu0 0.0
    %1454 = vmatpush1.msra.mxu0 0.0
    %1455 = vmatprep.subr.mxu0 0.0
    %1456 = vmatpush1.msra.mxu0 0.0
    %1457 = vmatprep.subr.mxu0 0.0
    %1458 = vmatpush1.msra.mxu0 0.0
    %1459 = vmatprep.subr.mxu0 0.0
    %1460 = vmatpush1.msra.mxu0 0.0
    %1461 = vmatprep.subr.mxu0 0.0
    %1462 = vmatpush1.msra.mxu0 0.0
    %1463 = vmatprep.subr.mxu0 0.0
    %1464 = vmatpush1.msra.mxu0 0.0
    %1465 = vmatprep.subr.mxu0 0.0
    %1466 = vmatpush1.msra.mxu0 0.0
    %1467 = vmatprep.subr.mxu0 0.0
    %1468 = vmatpush1.msra.mxu0 0.0
    %1469 = vmatprep.subr.mxu0 0.0
    %1470 = vmatpush1.msra.mxu0 0.0
    %1471 = vmatprep.subr.mxu0 0.0
    %1472 = vmatpush1.msra.mxu0 0.0
    %1473 = vmatprep.subr.mxu0 0.0
    %1474 = vmatpush1.msra.mxu0 0.0
    %1475 = vmatprep.subr.mxu0 0.0
    %1476 = vmatpush1.msra.mxu0 0.0
    %1477 = vmatprep.subr.mxu0 0.0
    %1478 = vmatpush1.msra.mxu0 0.0
    %1479 = vmatprep.subr.mxu0 0.0
    %1480 = vmatpush1.msra.mxu0 0.0
    %1481 = vmatprep.subr.mxu0 0.0
    %1482 = vmatpush1.msra.mxu0 0.0
    %1483 = vmatprep.subr.mxu0 0.0
    %1484 = vmatpush1.msra.mxu0 0.0
    %1485 = vmatprep.subr.mxu0 0.0
    %1486 = vmatpush1.msra.mxu0 0.0
    %1487 = vmatprep.subr.mxu0 0.0
    %1488 = vmatpush1.msra.mxu0 0.0
    %1489 = vmatprep.subr.mxu0 0.0
    %1490 = vmatpush1.msra.mxu0 0.0
    %1491 = vmatprep.subr.mxu0 0.0
    %1492 = vmatpush1.msra.mxu0 0.0
    %1493 = vmatprep.subr.mxu0 0.0
    %1494 = vmatpush1.msra.mxu0 0.0
    %1495 = vmatprep.subr.mxu0 0.0
    %1496 = vmatpush1.msra.mxu0 0.0
    %1497 = vmatprep.subr.mxu0 0.0
    %1498 = vmatpush1.msra.mxu0 0.0
    %1499 = vmatprep.subr.mxu0 0.0
    %1500 = vmatpush1.msra.mxu0 0.0
    %1501 = vmatprep.mubr.f32.mxu0 0.0
    %1502 = vmatmul.mubr.f32.gmra.mrb[0].mxu0 %v1432
    %v1503 = vpop.f32.mrb[0].mxu0
    %v1504 = vadd.f32 0.0, %v1503
    %v1505 = vpop.f32.mrb[0].mxu0
    %1506 = vmatprep.mubr.f32.mxu0 0.0
    %1507 = vmatmul.mubr.f32.gmra.mrb[0].mxu0 %v1435
    %v1508 = vpop.f32.mrb[0].mxu0
    %v1509 = vadd.f32 0.0, %v1508
    %v1510 = vpop.f32.mrb[0].mxu0
    %1511 = vdwg.mxu0
    %v1512 = vld [vmem:[#allocation8] sm:$0xff]
    %v1513 = vld [vmem:[#allocation8 + $0x8] sm:$0xff]
    %v1514 = vld [vmem:[#allocation8 + $0x10] sm:$0xff]
    %v1515 = vld [vmem:[#allocation8 + $0x18] sm:$0xff]
    %v1516 = vld [vmem:[#allocation8 + $0x20] sm:$0xff]
    %v1517 = vld [vmem:[#allocation8 + $0x28] sm:$0xff]
    %v1518 = vld [vmem:[#allocation8 + $0x30] sm:$0xff]
    %v1519 = vld [vmem:[#allocation8 + $0x38] sm:$0xff]
    %v1520 = vld [vmem:[#allocation8 + $0x40] sm:$0xff]
    %v1521 = vld [vmem:[#allocation8 + $0x48] sm:$0xff]
    %v1522 = vld [vmem:[#allocation8 + $0x50] sm:$0xff]
    %v1523 = vld [vmem:[#allocation8 + $0x58] sm:$0xff]
    %v1524 = vld [vmem:[#allocation8 + $0x60] sm:$0xff]
    %v1525 = vld [vmem:[#allocation8 + $0x68] sm:$0xff]
    %v1526 = vld [vmem:[#allocation8 + $0x70] sm:$0xff]
    %v1527 = vld [vmem:[#allocation8 + $0x78] sm:$0xff]
    %1528 = vmatprep.subr.mxu0 0.0
    %1529 = vmatpush1.msra.mxu0 %v1512
    %1530 = vmatprep.subr.mxu0 0.0
    %1531 = vmatpush1.msra.mxu0 %v1513
    %1532 = vmatprep.subr.mxu0 0.0
    %1533 = vmatpush1.msra.mxu0 %v1514
    %1534 = vmatprep.subr.mxu0 0.0
    %1535 = vmatpush1.msra.mxu0 %v1515
    %1536 = vmatprep.subr.mxu0 0.0
    %1537 = vmatpush1.msra.mxu0 %v1516
    %1538 = vmatprep.subr.mxu0 0.0
    %1539 = vmatpush1.msra.mxu0 %v1517
    %1540 = vmatprep.subr.mxu0 0.0
    %1541 = vmatpush1.msra.mxu0 %v1518
    %1542 = vmatprep.subr.mxu0 0.0
    %1543 = vmatpush1.msra.mxu0 %v1519
    %1544 = vmatprep.subr.mxu0 0.0
    %1545 = vmatpush1.msra.mxu0 %v1520
    %1546 = vmatprep.subr.mxu0 0.0
    %1547 = vmatpush1.msra.mxu0 %v1521
    %1548 = vmatprep.subr.mxu0 0.0
    %1549 = vmatpush1.msra.mxu0 %v1522
    %1550 = vmatprep.subr.mxu0 0.0
    %1551 = vmatpush1.msra.mxu0 %v1523
    %1552 = vmatprep.subr.mxu0 0.0
    %1553 = vmatpush1.msra.mxu0 %v1524
    %1554 = vmatprep.subr.mxu0 0.0
    %1555 = vmatpush1.msra.mxu0 %v1525
    %1556 = vmatprep.subr.mxu0 0.0
    %1557 = vmatpush1.msra.mxu0 %v1526
    %1558 = vmatprep.subr.mxu0 0.0
    %1559 = vmatpush1.msra.mxu0 %v1527
    %1560 = vmatprep.subr.mxu0 0.0
    %1561 = vmatpush1.msra.mxu0 0.0
    %1562 = vmatprep.subr.mxu0 0.0
    %1563 = vmatpush1.msra.mxu0 0.0
    %1564 = vmatprep.subr.mxu0 0.0
    %1565 = vmatpush1.msra.mxu0 0.0
    %1566 = vmatprep.subr.mxu0 0.0
    %1567 = vmatpush1.msra.mxu0 0.0
    %1568 = vmatprep.subr.mxu0 0.0
    %1569 = vmatpush1.msra.mxu0 0.0
    %1570 = vmatprep.subr.mxu0 0.0
    %1571 = vmatpush1.msra.mxu0 0.0
    %1572 = vmatprep.subr.mxu0 0.0
    %1573 = vmatpush1.msra.mxu0 0.0
    %1574 = vmatprep.subr.mxu0 0.0
    %1575 = vmatpush1.msra.mxu0 0.0
    %1576 = vmatprep.subr.mxu0 0.0
    %1577 = vmatpush1.msra.mxu0 0.0
    %1578 = vmatprep.subr.mxu0 0.0
    %1579 = vmatpush1.msra.mxu0 0.0
    %1580 = vmatprep.subr.mxu0 0.0
    %1581 = vmatpush1.msra.mxu0 0.0
    %1582 = vmatprep.subr.mxu0 0.0
    %1583 = vmatpush1.msra.mxu0 0.0
    %1584 = vmatprep.subr.mxu0 0.0
    %1585 = vmatpush1.msra.mxu0 0.0
    %1586 = vmatprep.subr.mxu0 0.0
    %1587 = vmatpush1.msra.mxu0 0.0
    %1588 = vmatprep.subr.mxu0 0.0
    %1589 = vmatpush1.msra.mxu0 0.0
    %1590 = vmatprep.subr.mxu0 0.0
    %1591 = vmatpush1.msra.mxu0 0.0
    %1592 = vmatprep.mubr.f32.mxu0 0.0
    %1593 = vmatmul.mubr.f32.gmra.mrb[0].mxu0 %v1504
    %v1594 = vpop.f32.mrb[0].mxu0
    %v1595 = vadd.f32 0.0, %v1594
    %v1596 = vpop.f32.mrb[0].mxu0
    %1597 = vmatprep.mubr.f32.mxu0 0.0
    %1598 = vmatmul.mubr.f32.gmra.mrb[0].mxu0 %v1509
    %v1599 = vpop.f32.mrb[0].mxu0
    %v1600 = vadd.f32 0.0, %v1599
    %v1601 = vpop.f32.mrb[0].mxu0
    %1602 = vdwg.mxu0
    %v1603 = vadd.f32 %v168, %v1595
    %v1604 = vadd.f32 %v173, %v1600
    %v1605 = vtanh.pop %v1603
    %v1606 = vtanh.pop %v1604
    %v1607 = vmul.f32 %v1605, 0.9
    %v1608 = vmul.f32 %v1606, 0.9
    %v1609 = vmul.f32 %v1427, 0.1
    %v1610 = vmul.f32 %v1428, 0.1
    %v1611 = vadd.f32 %v1607, %v1609
    %v1612 = vadd.f32 %v1608, %v1610
    %v1613 = vsub.f32 %v1427, %v1611
    %v1614 = vsub.f32 %v1428, %v1612
    %v1615 = vmul.f32 %v1613, %v1613
    %v1616 = vmul.f32 %v1614, %v1614
    %v1617 = vadd.f32 %v1615, %v1616
    %1618 = vadd.xlane.f32.xlu0 %v1617
    %v1619 = vpop.xlane.xlu0 %1618
    %v1620 = vrot.slane %v1619, 4
    %v1621 = vadd.f32 %v1619, %v1620
    %v1622 = vrot.slane %v1621, 2
    %v1623 = vadd.f32 %v1621, %v1622
    %v1624 = vrot.slane %v1623, 1
    %v1625 = vadd.f32 %v1623, %v1624
    %s1626 = vtos %v1625
    %s1627 = scalar_select %p1426, 1, 0
    %v1628 = vstv %s1627
    %vm1629 = vcmp.eq.s32.totalorder %v1628, 1
    %v1630 = vsel %vm1629, %v1427, %v1611
    %v1631 = vsel %vm1629, %v1428, %v1612
    %1632 = vst [vmem:[#allocation10] sm:$0xff] %v1630
    %1633 = vst [vmem:[#allocation10 + $0x8] sm:$0xff] %v1631
    %p1634 = scmp.lt.f32.partialorder %s1626, 1e-10
    %p1635 = por %p1426, %p1634
    %v1636 = vld [vmem:[#allocation10] sm:$0xff]
    %v1637 = vld [vmem:[#allocation10 + $0x8] sm:$0xff]
    %v1638 = vld [vmem:[#allocation2] sm:$0xff]
    %v1639 = vld [vmem:[#allocation2 + $0x8] sm:$0xff]
    %v1641 = vsel %vm182, %v1638, 0
    %v1644 = vsel %vm182, %v1639, 0
    %1646 = vmatprep.subr.mxu0 0.0
    %1647 = vmatpush1.msra.mxu0 %v1636
    %1648 = vmatprep.subr.mxu0 0.0
    %1649 = vmatpush1.msra.mxu0 %v1637
    %1650 = vmatprep.subr.mxu0 0.0
    %1651 = vmatpush1.msra.mxu0 0.0
    %1652 = vmatprep.subr.mxu0 0.0
    %1653 = vmatpush1.msra.mxu0 0.0
    %1654 = vmatprep.subr.mxu0 0.0
    %1655 = vmatpush1.msra.mxu0 0.0
    %1656 = vmatprep.subr.mxu0 0.0
    %1657 = vmatpush1.msra.mxu0 0.0
    %1658 = vmatprep.subr.mxu0 0.0
    %1659 = vmatpush1.msra.mxu0 0.0
    %1660 = vmatprep.subr.mxu0 0.0
    %1661 = vmatpush1.msra.mxu0 0.0
    %1662 = vmatprep.subr.mxu0 0.0
    %1663 = vmatpush1.msra.mxu0 0.0
    %1664 = vmatprep.subr.mxu0 0.0
    %1665 = vmatpush1.msra.mxu0 0.0
    %1666 = vmatprep.subr.mxu0 0.0
    %1667 = vmatpush1.msra.mxu0 0.0
    %1668 = vmatprep.subr.mxu0 0.0
    %1669 = vmatpush1.msra.mxu0 0.0
    %1670 = vmatprep.subr.mxu0 0.0
    %1671 = vmatpush1.msra.mxu0 0.0
    %1672 = vmatprep.subr.mxu0 0.0
    %1673 = vmatpush1.msra.mxu0 0.0
    %1674 = vmatprep.subr.mxu0 0.0
    %1675 = vmatpush1.msra.mxu0 0.0
    %1676 = vmatprep.subr.mxu0 0.0
    %1677 = vmatpush1.msra.mxu0 0.0
    %1678 = vmatprep.subr.mxu0 0.0
    %1679 = vmatpush1.msra.mxu0 0.0
    %1680 = vmatprep.subr.mxu0 0.0
    %1681 = vmatpush1.msra.mxu0 0.0
    %1682 = vmatprep.subr.mxu0 0.0
    %1683 = vmatpush1.msra.mxu0 0.0
    %1684 = vmatprep.subr.mxu0 0.0
    %1685 = vmatpush1.msra.mxu0 0.0
    %1686 = vmatprep.subr.mxu0 0.0
    %1687 = vmatpush1.msra.mxu0 0.0
    %1688 = vmatprep.subr.mxu0 0.0
    %1689 = vmatpush1.msra.mxu0 0.0
    %1690 = vmatprep.subr.mxu0 0.0
    %1691 = vmatpush1.msra.mxu0 0.0
    %1692 = vmatprep.subr.mxu0 0.0
    %1693 = vmatpush1.msra.mxu0 0.0
    %1694 = vmatprep.subr.mxu0 0.0
    %1695 = vmatpush1.msra.mxu0 0.0
    %1696 = vmatprep.subr.mxu0 0.0
    %1697 = vmatpush1.msra.mxu0 0.0
    %1698 = vmatprep.subr.mxu0 0.0
    %1699 = vmatpush1.msra.mxu0 0.0
    %1700 = vmatprep.subr.mxu0 0.0
    %1701 = vmatpush1.msra.mxu0 0.0
    %1702 = vmatprep.subr.mxu0 0.0
    %1703 = vmatpush1.msra.mxu0 0.0
    %1704 = vmatprep.subr.mxu0 0.0
    %1705 = vmatpush1.msra.mxu0 0.0
    %1706 = vmatprep.subr.mxu0 0.0
    %1707 = vmatpush1.msra.mxu0 0.0
    %1708 = vmatprep.subr.mxu0 0.0
    %1709 = vmatpush1.msra.mxu0 0.0
    %1710 = vmatprep.mubr.f32.mxu0 0.0
    %1711 = vmatmul.mubr.f32.gmra.mrb[0].mxu0 %v1641
    %v1712 = vpop.f32.mrb[0].mxu0
    %v1713 = vadd.f32 0.0, %v1712
    %v1714 = vpop.f32.mrb[0].mxu0
    %1715 = vmatprep.mubr.f32.mxu0 0.0
    %1716 = vmatmul.mubr.f32.gmra.mrb[0].mxu0 %v1644
    %v1717 = vpop.f32.mrb[0].mxu0
    %v1718 = vadd.f32 0.0, %v1717
    %v1719 = vpop.f32.mrb[0].mxu0
    %1720 = vdwg.mxu0
    %v1721 = vld [vmem:[#allocation8] sm:$0xff]
    %v1722 = vld [vmem:[#allocation8 + $0x8] sm:$0xff]
    %v1723 = vld [vmem:[#allocation8 + $0x10] sm:$0xff]
    %v1724 = vld [vmem:[#allocation8 + $0x18] sm:$0xff]
    %v1725 = vld [vmem:[#allocation8 + $0x20] sm:$0xff]
    %v1726 = vld [vmem:[#allocation8 + $0x28] sm:$0xff]
    %v1727 = vld [vmem:[#allocation8 + $0x30] sm:$0xff]
    %v1728 = vld [vmem:[#allocation8 + $0x38] sm:$0xff]
    %v1729 = vld [vmem:[#allocation8 + $0x40] sm:$0xff]
    %v1730 = vld [vmem:[#allocation8 + $0x48] sm:$0xff]
    %v1731 = vld [vmem:[#allocation8 + $0x50] sm:$0xff]
    %v1732 = vld [vmem:[#allocation8 + $0x58] sm:$0xff]
    %v1733 = vld [vmem:[#allocation8 + $0x60] sm:$0xff]
    %v1734 = vld [vmem:[#allocation8 + $0x68] sm:$0xff]
    %v1735 = vld [vmem:[#allocation8 + $0x70] sm:$0xff]
    %v1736 = vld [vmem:[#allocation8 + $0x78] sm:$0xff]
    %1737 = vmatprep.subr.mxu0 0.0
    %1738 = vmatpush1.msra.mxu0 %v1721
    %1739 = vmatprep.subr.mxu0 0.0
    %1740 = vmatpush1.msra.mxu0 %v1722
    %1741 = vmatprep.subr.mxu0 0.0
    %1742 = vmatpush1.msra.mxu0 %v1723
    %1743 = vmatprep.subr.mxu0 0.0
    %1744 = vmatpush1.msra.mxu0 %v1724
    %1745 = vmatprep.subr.mxu0 0.0
    %1746 = vmatpush1.msra.mxu0 %v1725
    %1747 = vmatprep.subr.mxu0 0.0
    %1748 = vmatpush1.msra.mxu0 %v1726
    %1749 = vmatprep.subr.mxu0 0.0
    %1750 = vmatpush1.msra.mxu0 %v1727
    %1751 = vmatprep.subr.mxu0 0.0
    %1752 = vmatpush1.msra.mxu0 %v1728
    %1753 = vmatprep.subr.mxu0 0.0
    %1754 = vmatpush1.msra.mxu0 %v1729
    %1755 = vmatprep.subr.mxu0 0.0
    %1756 = vmatpush1.msra.mxu0 %v1730
    %1757 = vmatprep.subr.mxu0 0.0
    %1758 = vmatpush1.msra.mxu0 %v1731
    %1759 = vmatprep.subr.mxu0 0.0
    %1760 = vmatpush1.msra.mxu0 %v1732
    %1761 = vmatprep.subr.mxu0 0.0
    %1762 = vmatpush1.msra.mxu0 %v1733
    %1763 = vmatprep.subr.mxu0 0.0
    %1764 = vmatpush1.msra.mxu0 %v1734
    %1765 = vmatprep.subr.mxu0 0.0
    %1766 = vmatpush1.msra.mxu0 %v1735
    %1767 = vmatprep.subr.mxu0 0.0
    %1768 = vmatpush1.msra.mxu0 %v1736
    %1769 = vmatprep.subr.mxu0 0.0
    %1770 = vmatpush1.msra.mxu0 0.0
    %1771 = vmatprep.subr.mxu0 0.0
    %1772 = vmatpush1.msra.mxu0 0.0
    %1773 = vmatprep.subr.mxu0 0.0
    %1774 = vmatpush1.msra.mxu0 0.0
    %1775 = vmatprep.subr.mxu0 0.0
    %1776 = vmatpush1.msra.mxu0 0.0
    %1777 = vmatprep.subr.mxu0 0.0
    %1778 = vmatpush1.msra.mxu0 0.0
    %1779 = vmatprep.subr.mxu0 0.0
    %1780 = vmatpush1.msra.mxu0 0.0
    %1781 = vmatprep.subr.mxu0 0.0
    %1782 = vmatpush1.msra.mxu0 0.0
    %1783 = vmatprep.subr.mxu0 0.0
    %1784 = vmatpush1.msra.mxu0 0.0
    %1785 = vmatprep.subr.mxu0 0.0
    %1786 = vmatpush1.msra.mxu0 0.0
    %1787 = vmatprep.subr.mxu0 0.0
    %1788 = vmatpush1.msra.mxu0 0.0
    %1789 = vmatprep.subr.mxu0 0.0
    %1790 = vmatpush1.msra.mxu0 0.0
    %1791 = vmatprep.subr.mxu0 0.0
    %1792 = vmatpush1.msra.mxu0 0.0
    %1793 = vmatprep.subr.mxu0 0.0
    %1794 = vmatpush1.msra.mxu0 0.0
    %1795 = vmatprep.subr.mxu0 0.0
    %1796 = vmatpush1.msra.mxu0 0.0
    %1797 = vmatprep.subr.mxu0 0.0
    %1798 = vmatpush1.msra.mxu0 0.0
    %1799 = vmatprep.subr.mxu0 0.0
    %1800 = vmatpush1.msra.mxu0 0.0
    %1801 = vmatprep.mubr.f32.mxu0 0.0
    %1802 = vmatmul.mubr.f32.gmra.mrb[0].mxu0 %v1713
    %v1803 = vpop.f32.mrb[0].mxu0
    %v1804 = vadd.f32 0.0, %v1803
    %v1805 = vpop.f32.mrb[0].mxu0
    %1806 = vmatprep.mubr.f32.mxu0 0.0
    %1807 = vmatmul.mubr.f32.gmra.mrb[0].mxu0 %v1718
    %v1808 = vpop.f32.mrb[0].mxu0
    %v1809 = vadd.f32 0.0, %v1808
    %v1810 = vpop.f32.mrb[0].mxu0
    %1811 = vdwg.mxu0
    %v1812 = vadd.f32 %v168, %v1804
    %v1813 = vadd.f32 %v173, %v1809
    %v1814 = vtanh.pop %v1812
    %v1815 = vtanh.pop %v1813
    %v1816 = vmul.f32 %v1814, 0.9
    %v1817 = vmul.f32 %v1815, 0.9
    %v1818 = vmul.f32 %v1636, 0.1
    %v1819 = vmul.f32 %v1637, 0.1
    %v1820 = vadd.f32 %v1816, %v1818
    %v1821 = vadd.f32 %v1817, %v1819
    %v1822 = vsub.f32 %v1636, %v1820
    %v1823 = vsub.f32 %v1637, %v1821
    %v1824 = vmul.f32 %v1822, %v1822
    %v1825 = vmul.f32 %v1823, %v1823
    %v1826 = vadd.f32 %v1824, %v1825
    %1827 = vadd.xlane.f32.xlu0 %v1826
    %v1828 = vpop.xlane.xlu0 %1827
    %v1829 = vrot.slane %v1828, 4
    %v1830 = vadd.f32 %v1828, %v1829
    %v1831 = vrot.slane %v1830, 2
    %v1832 = vadd.f32 %v1830, %v1831
    %v1833 = vrot.slane %v1832, 1
    %v1834 = vadd.f32 %v1832, %v1833
    %s1835 = vtos %v1834
    %s1836 = scalar_select %p1635, 1, 0
    %v1837 = vstv %s1836
    %vm1838 = vcmp.eq.s32.totalorder %v1837, 1
    %v1839 = vsel %vm1838, %v1636, %v1820
    %v1840 = vsel %vm1838, %v1637, %v1821
    %1841 = vst [vmem:[#allocation10] sm:$0xff] %v1839
    %1842 = vst [vmem:[#allocation10 + $0x8] sm:$0xff] %v1840
    %p1843 = scmp.lt.f32.partialorder %s1835, 1e-10
    %p1844 = por %p1635, %p1843
    %v1845 = vld [vmem:[#allocation10] sm:$0xff]
    %v1846 = vld [vmem:[#allocation10 + $0x8] sm:$0xff]
    %v1847 = vld [vmem:[#allocation2] sm:$0xff]
    %v1848 = vld [vmem:[#allocation2 + $0x8] sm:$0xff]
    %v1850 = vsel %vm182, %v1847, 0
    %v1853 = vsel %vm182, %v1848, 0
    %1855 = vmatprep.subr.mxu0 0.0
    %1856 = vmatpush1.msra.mxu0 %v1845
    %1857 = vmatprep.subr.mxu0 0.0
    %1858 = vmatpush1.msra.mxu0 %v1846
    %1859 = vmatprep.subr.mxu0 0.0
    %1860 = vmatpush1.msra.mxu0 0.0
    %1861 = vmatprep.subr.mxu0 0.0
    %1862 = vmatpush1.msra.mxu0 0.0
    %1863 = vmatprep.subr.mxu0 0.0
    %1864 = vmatpush1.msra.mxu0 0.0
    %1865 = vmatprep.subr.mxu0 0.0
    %1866 = vmatpush1.msra.mxu0 0.0
    %1867 = vmatprep.subr.mxu0 0.0
    %1868 = vmatpush1.msra.mxu0 0.0
    %1869 = vmatprep.subr.mxu0 0.0
    %1870 = vmatpush1.msra.mxu0 0.0
    %1871 = vmatprep.subr.mxu0 0.0
    %1872 = vmatpush1.msra.mxu0 0.0
    %1873 = vmatprep.subr.mxu0 0.0
    %1874 = vmatpush1.msra.mxu0 0.0
    %1875 = vmatprep.subr.mxu0 0.0
    %1876 = vmatpush1.msra.mxu0 0.0
    %1877 = vmatprep.subr.mxu0 0.0
    %1878 = vmatpush1.msra.mxu0 0.0
    %1879 = vmatprep.subr.mxu0 0.0
    %1880 = vmatpush1.msra.mxu0 0.0
    %1881 = vmatprep.subr.mxu0 0.0
    %1882 = vmatpush1.msra.mxu0 0.0
    %1883 = vmatprep.subr.mxu0 0.0
    %1884 = vmatpush1.msra.mxu0 0.0
    %1885 = vmatprep.subr.mxu0 0.0
    %1886 = vmatpush1.msra.mxu0 0.0
    %1887 = vmatprep.subr.mxu0 0.0
    %1888 = vmatpush1.msra.mxu0 0.0
    %1889 = vmatprep.subr.mxu0 0.0
    %1890 = vmatpush1.msra.mxu0 0.0
    %1891 = vmatprep.subr.mxu0 0.0
    %1892 = vmatpush1.msra.mxu0 0.0
    %1893 = vmatprep.subr.mxu0 0.0
    %1894 = vmatpush1.msra.mxu0 0.0
    %1895 = vmatprep.subr.mxu0 0.0
    %1896 = vmatpush1.msra.mxu0 0.0
    %1897 = vmatprep.subr.mxu0 0.0
    %1898 = vmatpush1.msra.mxu0 0.0
    %1899 = vmatprep.subr.mxu0 0.0
    %1900 = vmatpush1.msra.mxu0 0.0
    %1901 = vmatprep.subr.mxu0 0.0
    %1902 = vmatpush1.msra.mxu0 0.0
    %1903 = vmatprep.subr.mxu0 0.0
    %1904 = vmatpush1.msra.mxu0 0.0
    %1905 = vmatprep.subr.mxu0 0.0
    %1906 = vmatpush1.msra.mxu0 0.0
    %1907 = vmatprep.subr.mxu0 0.0
    %1908 = vmatpush1.msra.mxu0 0.0
    %1909 = vmatprep.subr.mxu0 0.0
    %1910 = vmatpush1.msra.mxu0 0.0
    %1911 = vmatprep.subr.mxu0 0.0
    %1912 = vmatpush1.msra.mxu0 0.0
    %1913 = vmatprep.subr.mxu0 0.0
    %1914 = vmatpush1.msra.mxu0 0.0
    %1915 = vmatprep.subr.mxu0 0.0
    %1916 = vmatpush1.msra.mxu0 0.0
    %1917 = vmatprep.subr.mxu0 0.0
    %1918 = vmatpush1.msra.mxu0 0.0
    %1919 = vmatprep.mubr.f32.mxu0 0.0
    %1920 = vmatmul.mubr.f32.gmra.mrb[0].mxu0 %v1850
    %v1921 = vpop.f32.mrb[0].mxu0
    %v1922 = vadd.f32 0.0, %v1921
    %v1923 = vpop.f32.mrb[0].mxu0
    %1924 = vmatprep.mubr.f32.mxu0 0.0
    %1925 = vmatmul.mubr.f32.gmra.mrb[0].mxu0 %v1853
    %v1926 = vpop.f32.mrb[0].mxu0
    %v1927 = vadd.f32 0.0, %v1926
    %v1928 = vpop.f32.mrb[0].mxu0
    %1929 = vdwg.mxu0
    %v1930 = vld [vmem:[#allocation8] sm:$0xff]
    %v1931 = vld [vmem:[#allocation8 + $0x8] sm:$0xff]
    %v1932 = vld [vmem:[#allocation8 + $0x10] sm:$0xff]
    %v1933 = vld [vmem:[#allocation8 + $0x18] sm:$0xff]
    %v1934 = vld [vmem:[#allocation8 + $0x20] sm:$0xff]
    %v1935 = vld [vmem:[#allocation8 + $0x28] sm:$0xff]
    %v1936 = vld [vmem:[#allocation8 + $0x30] sm:$0xff]
    %v1937 = vld [vmem:[#allocation8 + $0x38] sm:$0xff]
    %v1938 = vld [vmem:[#allocation8 + $0x40] sm:$0xff]
    %v1939 = vld [vmem:[#allocation8 + $0x48] sm:$0xff]
    %v1940 = vld [vmem:[#allocation8 + $0x50] sm:$0xff]
    %v1941 = vld [vmem:[#allocation8 + $0x58] sm:$0xff]
    %v1942 = vld [vmem:[#allocation8 + $0x60] sm:$0xff]
    %v1943 = vld [vmem:[#allocation8 + $0x68] sm:$0xff]
    %v1944 = vld [vmem:[#allocation8 + $0x70] sm:$0xff]
    %v1945 = vld [vmem:[#allocation8 + $0x78] sm:$0xff]
    %1946 = vmatprep.subr.mxu0 0.0
    %1947 = vmatpush1.msra.mxu0 %v1930
    %1948 = vmatprep.subr.mxu0 0.0
    %1949 = vmatpush1.msra.mxu0 %v1931
    %1950 = vmatprep.subr.mxu0 0.0
    %1951 = vmatpush1.msra.mxu0 %v1932
    %1952 = vmatprep.subr.mxu0 0.0
    %1953 = vmatpush1.msra.mxu0 %v1933
    %1954 = vmatprep.subr.mxu0 0.0
    %1955 = vmatpush1.msra.mxu0 %v1934
    %1956 = vmatprep.subr.mxu0 0.0
    %1957 = vmatpush1.msra.mxu0 %v1935
    %1958 = vmatprep.subr.mxu0 0.0
    %1959 = vmatpush1.msra.mxu0 %v1936
    %1960 = vmatprep.subr.mxu0 0.0
    %1961 = vmatpush1.msra.mxu0 %v1937
    %1962 = vmatprep.subr.mxu0 0.0
    %1963 = vmatpush1.msra.mxu0 %v1938
    %1964 = vmatprep.subr.mxu0 0.0
    %1965 = vmatpush1.msra.mxu0 %v1939
    %1966 = vmatprep.subr.mxu0 0.0
    %1967 = vmatpush1.msra.mxu0 %v1940
    %1968 = vmatprep.subr.mxu0 0.0
    %1969 = vmatpush1.msra.mxu0 %v1941
    %1970 = vmatprep.subr.mxu0 0.0
    %1971 = vmatpush1.msra.mxu0 %v1942
    %1972 = vmatprep.subr.mxu0 0.0
    %1973 = vmatpush1.msra.mxu0 %v1943
    %1974 = vmatprep.subr.mxu0 0.0
    %1975 = vmatpush1.msra.mxu0 %v1944
    %1976 = vmatprep.subr.mxu0 0.0
    %1977 = vmatpush1.msra.mxu0 %v1945
    %1978 = vmatprep.subr.mxu0 0.0
    %1979 = vmatpush1.msra.mxu0 0.0
    %1980 = vmatprep.subr.mxu0 0.0
    %1981 = vmatpush1.msra.mxu0 0.0
    %1982 = vmatprep.subr.mxu0 0.0
    %1983 = vmatpush1.msra.mxu0 0.0
    %1984 = vmatprep.subr.mxu0 0.0
    %1985 = vmatpush1.msra.mxu0 0.0
    %1986 = vmatprep.subr.mxu0 0.0
    %1987 = vmatpush1.msra.mxu0 0.0
    %1988 = vmatprep.subr.mxu0 0.0
    %1989 = vmatpush1.msra.mxu0 0.0
    %1990 = vmatprep.subr.mxu0 0.0
    %1991 = vmatpush1.msra.mxu0 0.0
    %1992 = vmatprep.subr.mxu0 0.0
    %1993 = vmatpush1.msra.mxu0 0.0
    %1994 = vmatprep.subr.mxu0 0.0
    %1995 = vmatpush1.msra.mxu0 0.0
    %1996 = vmatprep.subr.mxu0 0.0
    %1997 = vmatpush1.msra.mxu0 0.0
    %1998 = vmatprep.subr.mxu0 0.0
    %1999 = vmatpush1.msra.mxu0 0.0
    %2000 = vmatprep.subr.mxu0 0.0
    %2001 = vmatpush1.msra.mxu0 0.0
    %2002 = vmatprep.subr.mxu0 0.0
    %2003 = vmatpush1.msra.mxu0 0.0
    %2004 = vmatprep.subr.mxu0 0.0
    %2005 = vmatpush1.msra.mxu0 0.0
    %2006 = vmatprep.subr.mxu0 0.0
    %2007 = vmatpush1.msra.mxu0 0.0
    %2008 = vmatprep.subr.mxu0 0.0
    %2009 = vmatpush1.msra.mxu0 0.0
    %2010 = vmatprep.mubr.f32.mxu0 0.0
    %2011 = vmatmul.mubr.f32.gmra.mrb[0].mxu0 %v1922
    %v2012 = vpop.f32.mrb[0].mxu0
    %v2013 = vadd.f32 0.0, %v2012
    %v2014 = vpop.f32.mrb[0].mxu0
    %2015 = vmatprep.mubr.f32.mxu0 0.0
    %2016 = vmatmul.mubr.f32.gmra.mrb[0].mxu0 %v1927
    %v2017 = vpop.f32.mrb[0].mxu0
    %v2018 = vadd.f32 0.0, %v2017
    %v2019 = vpop.f32.mrb[0].mxu0
    %2020 = vdwg.mxu0
    %v2021 = vadd.f32 %v168, %v2013
    %v2022 = vadd.f32 %v173, %v2018
    %v2023 = vtanh.pop %v2021
    %v2024 = vtanh.pop %v2022
    %v2025 = vmul.f32 %v2023, 0.9
    %v2026 = vmul.f32 %v2024, 0.9
    %v2027 = vmul.f32 %v1845, 0.1
    %v2028 = vmul.f32 %v1846, 0.1
    %v2029 = vadd.f32 %v2025, %v2027
    %v2030 = vadd.f32 %v2026, %v2028
    %s2031 = scalar_select %p1844, 1, 0
    %v2032 = vstv %s2031
    %vm2033 = vcmp.eq.s32.totalorder %v2032, 1
    %v2034 = vsel %vm2033, %v1845, %v2029
    %v2035 = vsel %vm2033, %v1846, %v2030
    %2036 = vst [vmem:[#allocation10] sm:$0xff] %v2034
    %2037 = vst [vmem:[#allocation10 + $0x8] sm:$0xff] %v2035
    %v2038 = vld [vmem:[#allocation10] sm:$0xff]
    %v2039 = vld [vmem:[#allocation10 + $0x8] sm:$0xff]
    %s2040 = scalar_lea.vmem [#allocation7], 128
    %v2041 = vld [vmem:[%s2040] sm:$0xff]
    %v2042 = vld [vmem:[%s2040 + $0x8] sm:$0xff]
    %v2043 = vld [vmem:[%s2040 + $0x10] sm:$0xff]
    %v2044 = vld [vmem:[%s2040 + $0x18] sm:$0xff]
    %v2045 = vld [vmem:[%s2040 + $0x20] sm:$0xff]
    %v2046 = vld [vmem:[%s2040 + $0x28] sm:$0xff]
    %v2047 = vld [vmem:[%s2040 + $0x30] sm:$0xff]
    %v2048 = vld [vmem:[%s2040 + $0x38] sm:$0xff]
    %v2049 = vld [vmem:[%s2040 + $0x40] sm:$0xff]
    %v2050 = vld [vmem:[%s2040 + $0x48] sm:$0xff]
    %v2051 = vld [vmem:[%s2040 + $0x50] sm:$0xff]
    %v2052 = vld [vmem:[%s2040 + $0x58] sm:$0xff]
    %v2053 = vld [vmem:[%s2040 + $0x60] sm:$0xff]
    %v2054 = vld [vmem:[%s2040 + $0x68] sm:$0xff]
    %v2055 = vld [vmem:[%s2040 + $0x70] sm:$0xff]
    %v2056 = vld [vmem:[%s2040 + $0x78] sm:$0xff]
    %s2057 = scalar_lea.vmem %s4, 1
    %v2058 = vld [vmem:[%s2057] sm:$0x1]
    %v2060 = vlaneseq
    %v2061 = vshrl.u32 %v2060, 7
    %v2062 = vsub.s32 0, %v2061
    %v2063 = vrot.slane %v2058, %v2062
    %2065 = vmatprep.subr.mxu0 0.0
    %2066 = vmatpush1.msra.mxu0 %v2041
    %2067 = vmatprep.subr.mxu0 0.0
    %2068 = vmatpush1.msra.mxu0 %v2042
    %2069 = vmatprep.subr.mxu0 0.0
    %2070 = vmatpush1.msra.mxu0 %v2043
    %2071 = vmatprep.subr.mxu0 0.0
    %2072 = vmatpush1.msra.mxu0 %v2044
    %2073 = vmatprep.subr.mxu0 0.0
    %2074 = vmatpush1.msra.mxu0 %v2045
    %2075 = vmatprep.subr.mxu0 0.0
    %2076 = vmatpush1.msra.mxu0 %v2046
    %2077 = vmatprep.subr.mxu0 0.0
    %2078 = vmatpush1.msra.mxu0 %v2047
    %2079 = vmatprep.subr.mxu0 0.0
    %2080 = vmatpush1.msra.mxu0 %v2048
    %2081 = vmatprep.subr.mxu0 0.0
    %2082 = vmatpush1.msra.mxu0 %v2049
    %2083 = vmatprep.subr.mxu0 0.0
    %2084 = vmatpush1.msra.mxu0 %v2050
    %2085 = vmatprep.subr.mxu0 0.0
    %2086 = vmatpush1.msra.mxu0 %v2051
    %2087 = vmatprep.subr.mxu0 0.0
    %2088 = vmatpush1.msra.mxu0 %v2052
    %2089 = vmatprep.subr.mxu0 0.0
    %2090 = vmatpush1.msra.mxu0 %v2053
    %2091 = vmatprep.subr.mxu0 0.0
    %2092 = vmatpush1.msra.mxu0 %v2054
    %2093 = vmatprep.subr.mxu0 0.0
    %2094 = vmatpush1.msra.mxu0 %v2055
    %2095 = vmatprep.subr.mxu0 0.0
    %2096 = vmatpush1.msra.mxu0 %v2056
    %2097 = vmatprep.subr.mxu0 0.0
    %2098 = vmatpush1.msra.mxu0 0.0
    %2099 = vmatprep.subr.mxu0 0.0
    %2100 = vmatpush1.msra.mxu0 0.0
    %2101 = vmatprep.subr.mxu0 0.0
    %2102 = vmatpush1.msra.mxu0 0.0
    %2103 = vmatprep.subr.mxu0 0.0
    %2104 = vmatpush1.msra.mxu0 0.0
    %2105 = vmatprep.subr.mxu0 0.0
    %2106 = vmatpush1.msra.mxu0 0.0
    %2107 = vmatprep.subr.mxu0 0.0
    %2108 = vmatpush1.msra.mxu0 0.0
    %2109 = vmatprep.subr.mxu0 0.0
    %2110 = vmatpush1.msra.mxu0 0.0
    %2111 = vmatprep.subr.mxu0 0.0
    %2112 = vmatpush1.msra.mxu0 0.0
    %2113 = vmatprep.subr.mxu0 0.0
    %2114 = vmatpush1.msra.mxu0 0.0
    %2115 = vmatprep.subr.mxu0 0.0
    %2116 = vmatpush1.msra.mxu0 0.0
    %2117 = vmatprep.subr.mxu0 0.0
    %2118 = vmatpush1.msra.mxu0 0.0
    %2119 = vmatprep.subr.mxu0 0.0
    %2120 = vmatpush1.msra.mxu0 0.0
    %2121 = vmatprep.subr.mxu0 0.0
    %2122 = vmatpush1.msra.mxu0 0.0
    %2123 = vmatprep.subr.mxu0 0.0
    %2124 = vmatpush1.msra.mxu0 0.0
    %2125 = vmatprep.subr.mxu0 0.0
    %2126 = vmatpush1.msra.mxu0 0.0
    %2127 = vmatprep.subr.mxu0 0.0
    %2128 = vmatpush1.msra.mxu0 0.0
    %2129 = vmatprep.mubr.f32.mxu0 0.0
    %2130 = vmatmul.mubr.f32.gmra.mrb[0].mxu0 %v2038
    %v2131 = vpop.f32.mrb[0].mxu0
    %v2132 = vadd.f32 %v2063, %v2131
    %v2133 = vpop.f32.mrb[0].mxu0
    %2134 = vmatprep.mubr.f32.mxu0 0.0
    %2135 = vmatmul.mubr.f32.gmra.mrb[0].mxu0 %v2039
    %v2136 = vpop.f32.mrb[0].mxu0
    %v2137 = vadd.f32 %v2063, %v2136
    %v2138 = vpop.f32.mrb[0].mxu0
    %2139 = vdwg.mxu0
    %s2140 = scalar_lea.vmem [#allocation10], 16
    %2141 = vst [vmem:[%s2140] sm:$0xff] 0.0
    %2142 = vst [vmem:[%s2140 + $0x8] sm:$0xff] 0.0
    %v2143 = vld [vmem:[%s2140] sm:$0xff]
    %v2144 = vld [vmem:[%s2140 + $0x8] sm:$0xff]
    %v2145 = vld [vmem:[#allocation2] sm:$0xff]
    %v2146 = vld [vmem:[#allocation2 + $0x8] sm:$0xff]
    %v2148 = vsel %vm182, %v2145, 0
    %v2151 = vsel %vm182, %v2146, 0
    %2153 = vmatprep.subr.mxu0 0.0
    %2154 = vmatpush1.msra.mxu0 %v2143
    %2155 = vmatprep.subr.mxu0 0.0
    %2156 = vmatpush1.msra.mxu0 %v2144
    %2157 = vmatprep.subr.mxu0 0.0
    %2158 = vmatpush1.msra.mxu0 0.0
    %2159 = vmatprep.subr.mxu0 0.0
    %2160 = vmatpush1.msra.mxu0 0.0
    %2161 = vmatprep.subr.mxu0 0.0
    %2162 = vmatpush1.msra.mxu0 0.0
    %2163 = vmatprep.subr.mxu0 0.0
    %2164 = vmatpush1.msra.mxu0 0.0
    %2165 = vmatprep.subr.mxu0 0.0
    %2166 = vmatpush1.msra.mxu0 0.0
    %2167 = vmatprep.subr.mxu0 0.0
    %2168 = vmatpush1.msra.mxu0 0.0
    %2169 = vmatprep.subr.mxu0 0.0
    %2170 = vmatpush1.msra.mxu0 0.0
    %2171 = vmatprep.subr.mxu0 0.0
    %2172 = vmatpush1.msra.mxu0 0.0
    %2173 = vmatprep.subr.mxu0 0.0
    %2174 = vmatpush1.msra.mxu0 0.0
    %2175 = vmatprep.subr.mxu0 0.0
    %2176 = vmatpush1.msra.mxu0 0.0
    %2177 = vmatprep.subr.mxu0 0.0
    %2178 = vmatpush1.msra.mxu0 0.0
    %2179 = vmatprep.subr.mxu0 0.0
    %2180 = vmatpush1.msra.mxu0 0.0
    %2181 = vmatprep.subr.mxu0 0.0
    %2182 = vmatpush1.msra.mxu0 0.0
    %2183 = vmatprep.subr.mxu0 0.0
    %2184 = vmatpush1.msra.mxu0 0.0
    %2185 = vmatprep.subr.mxu0 0.0
    %2186 = vmatpush1.msra.mxu0 0.0
    %2187 = vmatprep.subr.mxu0 0.0
    %2188 = vmatpush1.msra.mxu0 0.0
    %2189 = vmatprep.subr.mxu0 0.0
    %2190 = vmatpush1.msra.mxu0 0.0
    %2191 = vmatprep.subr.mxu0 0.0
    %2192 = vmatpush1.msra.mxu0 0.0
    %2193 = vmatprep.subr.mxu0 0.0
    %2194 = vmatpush1.msra.mxu0 0.0
    %2195 = vmatprep.subr.mxu0 0.0
    %2196 = vmatpush1.msra.mxu0 0.0
    %2197 = vmatprep.subr.mxu0 0.0
    %2198 = vmatpush1.msra.mxu0 0.0
    %2199 = vmatprep.subr.mxu0 0.0
    %2200 = vmatpush1.msra.mxu0 0.0
    %2201 = vmatprep.subr.mxu0 0.0
    %2202 = vmatpush1.msra.mxu0 0.0
    %2203 = vmatprep.subr.mxu0 0.0
    %2204 = vmatpush1.msra.mxu0 0.0
    %2205 = vmatprep.subr.mxu0 0.0
    %2206 = vmatpush1.msra.mxu0 0.0
    %2207 = vmatprep.subr.mxu0 0.0
    %2208 = vmatpush1.msra.mxu0 0.0
    %2209 = vmatprep.subr.mxu0 0.0
    %2210 = vmatpush1.msra.mxu0 0.0
    %2211 = vmatprep.subr.mxu0 0.0
    %2212 = vmatpush1.msra.mxu0 0.0
    %2213 = vmatprep.subr.mxu0 0.0
    %2214 = vmatpush1.msra.mxu0 0.0
    %2215 = vmatprep.subr.mxu0 0.0
    %2216 = vmatpush1.msra.mxu0 0.0
    %2217 = vmatprep.mubr.f32.mxu0 0.0
    %2218 = vmatmul.mubr.f32.gmra.mrb[0].mxu0 %v2148
    %v2219 = vpop.f32.mrb[0].mxu0
    %v2220 = vadd.f32 0.0, %v2219
    %v2221 = vpop.f32.mrb[0].mxu0
    %2222 = vmatprep.mubr.f32.mxu0 0.0
    %2223 = vmatmul.mubr.f32.gmra.mrb[0].mxu0 %v2151
    %v2224 = vpop.f32.mrb[0].mxu0
    %v2225 = vadd.f32 0.0, %v2224
    %v2226 = vpop.f32.mrb[0].mxu0
    %2227 = vdwg.mxu0
    %s2228 = scalar_lea.vmem [#allocation8], 128
    %v2229 = vld [vmem:[%s2228] sm:$0xff]
    %v2230 = vld [vmem:[%s2228 + $0x8] sm:$0xff]
    %v2231 = vld [vmem:[%s2228 + $0x10] sm:$0xff]
    %v2232 = vld [vmem:[%s2228 + $0x18] sm:$0xff]
    %v2233 = vld [vmem:[%s2228 + $0x20] sm:$0xff]
    %v2234 = vld [vmem:[%s2228 + $0x28] sm:$0xff]
    %v2235 = vld [vmem:[%s2228 + $0x30] sm:$0xff]
    %v2236 = vld [vmem:[%s2228 + $0x38] sm:$0xff]
    %v2237 = vld [vmem:[%s2228 + $0x40] sm:$0xff]
    %v2238 = vld [vmem:[%s2228 + $0x48] sm:$0xff]
    %v2239 = vld [vmem:[%s2228 + $0x50] sm:$0xff]
    %v2240 = vld [vmem:[%s2228 + $0x58] sm:$0xff]
    %v2241 = vld [vmem:[%s2228 + $0x60] sm:$0xff]
    %v2242 = vld [vmem:[%s2228 + $0x68] sm:$0xff]
    %v2243 = vld [vmem:[%s2228 + $0x70] sm:$0xff]
    %v2244 = vld [vmem:[%s2228 + $0x78] sm:$0xff]
    %2245 = vmatprep.subr.mxu0 0.0
    %2246 = vmatpush1.msra.mxu0 %v2229
    %2247 = vmatprep.subr.mxu0 0.0
    %2248 = vmatpush1.msra.mxu0 %v2230
    %2249 = vmatprep.subr.mxu0 0.0
    %2250 = vmatpush1.msra.mxu0 %v2231
    %2251 = vmatprep.subr.mxu0 0.0
    %2252 = vmatpush1.msra.mxu0 %v2232
    %2253 = vmatprep.subr.mxu0 0.0
    %2254 = vmatpush1.msra.mxu0 %v2233
    %2255 = vmatprep.subr.mxu0 0.0
    %2256 = vmatpush1.msra.mxu0 %v2234
    %2257 = vmatprep.subr.mxu0 0.0
    %2258 = vmatpush1.msra.mxu0 %v2235
    %2259 = vmatprep.subr.mxu0 0.0
    %2260 = vmatpush1.msra.mxu0 %v2236
    %2261 = vmatprep.subr.mxu0 0.0
    %2262 = vmatpush1.msra.mxu0 %v2237
    %2263 = vmatprep.subr.mxu0 0.0
    %2264 = vmatpush1.msra.mxu0 %v2238
    %2265 = vmatprep.subr.mxu0 0.0
    %2266 = vmatpush1.msra.mxu0 %v2239
    %2267 = vmatprep.subr.mxu0 0.0
    %2268 = vmatpush1.msra.mxu0 %v2240
    %2269 = vmatprep.subr.mxu0 0.0
    %2270 = vmatpush1.msra.mxu0 %v2241
    %2271 = vmatprep.subr.mxu0 0.0
    %2272 = vmatpush1.msra.mxu0 %v2242
    %2273 = vmatprep.subr.mxu0 0.0
    %2274 = vmatpush1.msra.mxu0 %v2243
    %2275 = vmatprep.subr.mxu0 0.0
    %2276 = vmatpush1.msra.mxu0 %v2244
    %2277 = vmatprep.subr.mxu0 0.0
    %2278 = vmatpush1.msra.mxu0 0.0
    %2279 = vmatprep.subr.mxu0 0.0
    %2280 = vmatpush1.msra.mxu0 0.0
    %2281 = vmatprep.subr.mxu0 0.0
    %2282 = vmatpush1.msra.mxu0 0.0
    %2283 = vmatprep.subr.mxu0 0.0
    %2284 = vmatpush1.msra.mxu0 0.0
    %2285 = vmatprep.subr.mxu0 0.0
    %2286 = vmatpush1.msra.mxu0 0.0
    %2287 = vmatprep.subr.mxu0 0.0
    %2288 = vmatpush1.msra.mxu0 0.0
    %2289 = vmatprep.subr.mxu0 0.0
    %2290 = vmatpush1.msra.mxu0 0.0
    %2291 = vmatprep.subr.mxu0 0.0
    %2292 = vmatpush1.msra.mxu0 0.0
    %2293 = vmatprep.subr.mxu0 0.0
    %2294 = vmatpush1.msra.mxu0 0.0
    %2295 = vmatprep.subr.mxu0 0.0
    %2296 = vmatpush1.msra.mxu0 0.0
    %2297 = vmatprep.subr.mxu0 0.0
    %2298 = vmatpush1.msra.mxu0 0.0
    %2299 = vmatprep.subr.mxu0 0.0
    %2300 = vmatpush1.msra.mxu0 0.0
    %2301 = vmatprep.subr.mxu0 0.0
    %2302 = vmatpush1.msra.mxu0 0.0
    %2303 = vmatprep.subr.mxu0 0.0
    %2304 = vmatpush1.msra.mxu0 0.0
    %2305 = vmatprep.subr.mxu0 0.0
    %2306 = vmatpush1.msra.mxu0 0.0
    %2307 = vmatprep.subr.mxu0 0.0
    %2308 = vmatpush1.msra.mxu0 0.0
    %2309 = vmatprep.mubr.f32.mxu0 0.0
    %2310 = vmatmul.mubr.f32.gmra.mrb[0].mxu0 %v2220
    %v2311 = vpop.f32.mrb[0].mxu0
    %v2312 = vadd.f32 0.0, %v2311
    %v2313 = vpop.f32.mrb[0].mxu0
    %2314 = vmatprep.mubr.f32.mxu0 0.0
    %2315 = vmatmul.mubr.f32.gmra.mrb[0].mxu0 %v2225
    %v2316 = vpop.f32.mrb[0].mxu0
    %v2317 = vadd.f32 0.0, %v2316
    %v2318 = vpop.f32.mrb[0].mxu0
    %2319 = vdwg.mxu0
    %v2320 = vadd.f32 %v2132, %v2312
    %v2321 = vadd.f32 %v2137, %v2317
    %v2322 = vtanh.pop %v2320
    %v2323 = vtanh.pop %v2321
    %v2324 = vmul.f32 %v2322, 0.9
    %v2325 = vmul.f32 %v2323, 0.9
    %v2326 = vmul.f32 %v2143, 0.1
    %v2327 = vmul.f32 %v2144, 0.1
    %v2328 = vadd.f32 %v2324, %v2326
    %v2329 = vadd.f32 %v2325, %v2327
    %v2330 = vsub.f32 %v2143, %v2328
    %v2331 = vsub.f32 %v2144, %v2329
    %v2332 = vmul.f32 %v2330, %v2330
    %v2333 = vmul.f32 %v2331, %v2331
    %v2334 = vadd.f32 %v2332, %v2333
    %2335 = vadd.xlane.f32.xlu0 %v2334
    %v2336 = vpop.xlane.xlu0 %2335
    %v2337 = vrot.slane %v2336, 4
    %v2338 = vadd.f32 %v2336, %v2337
    %v2339 = vrot.slane %v2338, 2
    %v2340 = vadd.f32 %v2338, %v2339
    %v2341 = vrot.slane %v2340, 1
    %v2342 = vadd.f32 %v2340, %v2341
    %s2343 = vtos %v2342
    %2344 = vst [vmem:[%s2140] sm:$0xff] %v2328
    %2345 = vst [vmem:[%s2140 + $0x8] sm:$0xff] %v2329
    %p2346 = scmp.lt.f32.partialorder %s2343, 1e-10
    %v2347 = vld [vmem:[%s2140] sm:$0xff]
    %v2348 = vld [vmem:[%s2140 + $0x8] sm:$0xff]
    %v2349 = vld [vmem:[#allocation2] sm:$0xff]
    %v2350 = vld [vmem:[#allocation2 + $0x8] sm:$0xff]
    %v2352 = vsel %vm182, %v2349, 0
    %v2355 = vsel %vm182, %v2350, 0
    %2357 = vmatprep.subr.mxu0 0.0
    %2358 = vmatpush1.msra.mxu0 %v2347
    %2359 = vmatprep.subr.mxu0 0.0
    %2360 = vmatpush1.msra.mxu0 %v2348
    %2361 = vmatprep.subr.mxu0 0.0
    %2362 = vmatpush1.msra.mxu0 0.0
    %2363 = vmatprep.subr.mxu0 0.0
    %2364 = vmatpush1.msra.mxu0 0.0
    %2365 = vmatprep.subr.mxu0 0.0
    %2366 = vmatpush1.msra.mxu0 0.0
    %2367 = vmatprep.subr.mxu0 0.0
    %2368 = vmatpush1.msra.mxu0 0.0
    %2369 = vmatprep.subr.mxu0 0.0
    %2370 = vmatpush1.msra.mxu0 0.0
    %2371 = vmatprep.subr.mxu0 0.0
    %2372 = vmatpush1.msra.mxu0 0.0
    %2373 = vmatprep.subr.mxu0 0.0
    %2374 = vmatpush1.msra.mxu0 0.0
    %2375 = vmatprep.subr.mxu0 0.0
    %2376 = vmatpush1.msra.mxu0 0.0
    %2377 = vmatprep.subr.mxu0 0.0
    %2378 = vmatpush1.msra.mxu0 0.0
    %2379 = vmatprep.subr.mxu0 0.0
    %2380 = vmatpush1.msra.mxu0 0.0
    %2381 = vmatprep.subr.mxu0 0.0
    %2382 = vmatpush1.msra.mxu0 0.0
    %2383 = vmatprep.subr.mxu0 0.0
    %2384 = vmatpush1.msra.mxu0 0.0
    %2385 = vmatprep.subr.mxu0 0.0
    %2386 = vmatpush1.msra.mxu0 0.0
    %2387 = vmatprep.subr.mxu0 0.0
    %2388 = vmatpush1.msra.mxu0 0.0
    %2389 = vmatprep.subr.mxu0 0.0
    %2390 = vmatpush1.msra.mxu0 0.0
    %2391 = vmatprep.subr.mxu0 0.0
    %2392 = vmatpush1.msra.mxu0 0.0
    %2393 = vmatprep.subr.mxu0 0.0
    %2394 = vmatpush1.msra.mxu0 0.0
    %2395 = vmatprep.subr.mxu0 0.0
    %2396 = vmatpush1.msra.mxu0 0.0
    %2397 = vmatprep.subr.mxu0 0.0
    %2398 = vmatpush1.msra.mxu0 0.0
    %2399 = vmatprep.subr.mxu0 0.0
    %2400 = vmatpush1.msra.mxu0 0.0
    %2401 = vmatprep.subr.mxu0 0.0
    %2402 = vmatpush1.msra.mxu0 0.0
    %2403 = vmatprep.subr.mxu0 0.0
    %2404 = vmatpush1.msra.mxu0 0.0
    %2405 = vmatprep.subr.mxu0 0.0
    %2406 = vmatpush1.msra.mxu0 0.0
    %2407 = vmatprep.subr.mxu0 0.0
    %2408 = vmatpush1.msra.mxu0 0.0
    %2409 = vmatprep.subr.mxu0 0.0
    %2410 = vmatpush1.msra.mxu0 0.0
    %2411 = vmatprep.subr.mxu0 0.0
    %2412 = vmatpush1.msra.mxu0 0.0
    %2413 = vmatprep.subr.mxu0 0.0
    %2414 = vmatpush1.msra.mxu0 0.0
    %2415 = vmatprep.subr.mxu0 0.0
    %2416 = vmatpush1.msra.mxu0 0.0
    %2417 = vmatprep.subr.mxu0 0.0
    %2418 = vmatpush1.msra.mxu0 0.0
    %2419 = vmatprep.subr.mxu0 0.0
    %2420 = vmatpush1.msra.mxu0 0.0
    %2421 = vmatprep.mubr.f32.mxu0 0.0
    %2422 = vmatmul.mubr.f32.gmra.mrb[0].mxu0 %v2352
    %v2423 = vpop.f32.mrb[0].mxu0
    %v2424 = vadd.f32 0.0, %v2423
    %v2425 = vpop.f32.mrb[0].mxu0
    %2426 = vmatprep.mubr.f32.mxu0 0.0
    %2427 = vmatmul.mubr.f32.gmra.mrb[0].mxu0 %v2355
    %v2428 = vpop.f32.mrb[0].mxu0
    %v2429 = vadd.f32 0.0, %v2428
    %v2430 = vpop.f32.mrb[0].mxu0
    %2431 = vdwg.mxu0
    %v2432 = vld [vmem:[%s2228] sm:$0xff]
    %v2433 = vld [vmem:[%s2228 + $0x8] sm:$0xff]
    %v2434 = vld [vmem:[%s2228 + $0x10] sm:$0xff]
    %v2435 = vld [vmem:[%s2228 + $0x18] sm:$0xff]
    %v2436 = vld [vmem:[%s2228 + $0x20] sm:$0xff]
    %v2437 = vld [vmem:[%s2228 + $0x28] sm:$0xff]
    %v2438 = vld [vmem:[%s2228 + $0x30] sm:$0xff]
    %v2439 = vld [vmem:[%s2228 + $0x38] sm:$0xff]
    %v2440 = vld [vmem:[%s2228 + $0x40] sm:$0xff]
    %v2441 = vld [vmem:[%s2228 + $0x48] sm:$0xff]
    %v2442 = vld [vmem:[%s2228 + $0x50] sm:$0xff]
    %v2443 = vld [vmem:[%s2228 + $0x58] sm:$0xff]
    %v2444 = vld [vmem:[%s2228 + $0x60] sm:$0xff]
    %v2445 = vld [vmem:[%s2228 + $0x68] sm:$0xff]
    %v2446 = vld [vmem:[%s2228 + $0x70] sm:$0xff]
    %v2447 = vld [vmem:[%s2228 + $0x78] sm:$0xff]
    %2448 = vmatprep.subr.mxu0 0.0
    %2449 = vmatpush1.msra.mxu0 %v2432
    %2450 = vmatprep.subr.mxu0 0.0
    %2451 = vmatpush1.msra.mxu0 %v2433
    %2452 = vmatprep.subr.mxu0 0.0
    %2453 = vmatpush1.msra.mxu0 %v2434
    %2454 = vmatprep.subr.mxu0 0.0
    %2455 = vmatpush1.msra.mxu0 %v2435
    %2456 = vmatprep.subr.mxu0 0.0
    %2457 = vmatpush1.msra.mxu0 %v2436
    %2458 = vmatprep.subr.mxu0 0.0
    %2459 = vmatpush1.msra.mxu0 %v2437
    %2460 = vmatprep.subr.mxu0 0.0
    %2461 = vmatpush1.msra.mxu0 %v2438
    %2462 = vmatprep.subr.mxu0 0.0
    %2463 = vmatpush1.msra.mxu0 %v2439
    %2464 = vmatprep.subr.mxu0 0.0
    %2465 = vmatpush1.msra.mxu0 %v2440
    %2466 = vmatprep.subr.mxu0 0.0
    %2467 = vmatpush1.msra.mxu0 %v2441
    %2468 = vmatprep.subr.mxu0 0.0
    %2469 = vmatpush1.msra.mxu0 %v2442
    %2470 = vmatprep.subr.mxu0 0.0
    %2471 = vmatpush1.msra.mxu0 %v2443
    %2472 = vmatprep.subr.mxu0 0.0
    %2473 = vmatpush1.msra.mxu0 %v2444
    %2474 = vmatprep.subr.mxu0 0.0
    %2475 = vmatpush1.msra.mxu0 %v2445
    %2476 = vmatprep.subr.mxu0 0.0
    %2477 = vmatpush1.msra.mxu0 %v2446
    %2478 = vmatprep.subr.mxu0 0.0
    %2479 = vmatpush1.msra.mxu0 %v2447
    %2480 = vmatprep.subr.mxu0 0.0
    %2481 = vmatpush1.msra.mxu0 0.0
    %2482 = vmatprep.subr.mxu0 0.0
    %2483 = vmatpush1.msra.mxu0 0.0
    %2484 = vmatprep.subr.mxu0 0.0
    %2485 = vmatpush1.msra.mxu0 0.0
    %2486 = vmatprep.subr.mxu0 0.0
    %2487 = vmatpush1.msra.mxu0 0.0
    %2488 = vmatprep.subr.mxu0 0.0
    %2489 = vmatpush1.msra.mxu0 0.0
    %2490 = vmatprep.subr.mxu0 0.0
    %2491 = vmatpush1.msra.mxu0 0.0
    %2492 = vmatprep.subr.mxu0 0.0
    %2493 = vmatpush1.msra.mxu0 0.0
    %2494 = vmatprep.subr.mxu0 0.0
    %2495 = vmatpush1.msra.mxu0 0.0
    %2496 = vmatprep.subr.mxu0 0.0
    %2497 = vmatpush1.msra.mxu0 0.0
    %2498 = vmatprep.subr.mxu0 0.0
    %2499 = vmatpush1.msra.mxu0 0.0
    %2500 = vmatprep.subr.mxu0 0.0
    %2501 = vmatpush1.msra.mxu0 0.0
    %2502 = vmatprep.subr.mxu0 0.0
    %2503 = vmatpush1.msra.mxu0 0.0
    %2504 = vmatprep.subr.mxu0 0.0
    %2505 = vmatpush1.msra.mxu0 0.0
    %2506 = vmatprep.subr.mxu0 0.0
    %2507 = vmatpush1.msra.mxu0 0.0
    %2508 = vmatprep.subr.mxu0 0.0
    %2509 = vmatpush1.msra.mxu0 0.0
    %2510 = vmatprep.subr.mxu0 0.0
    %2511 = vmatpush1.msra.mxu0 0.0
    %2512 = vmatprep.mubr.f32.mxu0 0.0
    %2513 = vmatmul.mubr.f32.gmra.mrb[0].mxu0 %v2424
    %v2514 = vpop.f32.mrb[0].mxu0
    %v2515 = vadd.f32 0.0, %v2514
    %v2516 = vpop.f32.mrb[0].mxu0
    %2517 = vmatprep.mubr.f32.mxu0 0.0
    %2518 = vmatmul.mubr.f32.gmra.mrb[0].mxu0 %v2429
    %v2519 = vpop.f32.mrb[0].mxu0
    %v2520 = vadd.f32 0.0, %v2519
    %v2521 = vpop.f32.mrb[0].mxu0
    %2522 = vdwg.mxu0
    %v2523 = vadd.f32 %v2132, %v2515
    %v2524 = vadd.f32 %v2137, %v2520
    %v2525 = vtanh.pop %v2523
    %v2526 = vtanh.pop %v2524
    %v2527 = vmul.f32 %v2525, 0.9
    %v2528 = vmul.f32 %v2526, 0.9
    %v2529 = vmul.f32 %v2347, 0.1
    %v2530 = vmul.f32 %v2348, 0.1
    %v2531 = vadd.f32 %v2527, %v2529
    %v2532 = vadd.f32 %v2528, %v2530
    %v2533 = vsub.f32 %v2347, %v2531
    %v2534 = vsub.f32 %v2348, %v2532
    %v2535 = vmul.f32 %v2533, %v2533
    %v2536 = vmul.f32 %v2534, %v2534
    %v2537 = vadd.f32 %v2535, %v2536
    %2538 = vadd.xlane.f32.xlu0 %v2537
    %v2539 = vpop.xlane.xlu0 %2538
    %v2540 = vrot.slane %v2539, 4
    %v2541 = vadd.f32 %v2539, %v2540
    %v2542 = vrot.slane %v2541, 2
    %v2543 = vadd.f32 %v2541, %v2542
    %v2544 = vrot.slane %v2543, 1
    %v2545 = vadd.f32 %v2543, %v2544
    %s2546 = vtos %v2545
    %s2547 = scalar_select %p2346, 1, 0
    %v2548 = vstv %s2547
    %vm2549 = vcmp.eq.s32.totalorder %v2548, 1
    %v2550 = vsel %vm2549, %v2347, %v2531
    %v2551 = vsel %vm2549, %v2348, %v2532
    %2552 = vst [vmem:[%s2140] sm:$0xff] %v2550
    %2553 = vst [vmem:[%s2140 + $0x8] sm:$0xff] %v2551
    %p2554 = scmp.lt.f32.partialorder %s2546, 1e-10
    %p2555 = por %p2346, %p2554
    %v2556 = vld [vmem:[%s2140] sm:$0xff]
    %v2557 = vld [vmem:[%s2140 + $0x8] sm:$0xff]
    %v2558 = vld [vmem:[#allocation2] sm:$0xff]
    %v2559 = vld [vmem:[#allocation2 + $0x8] sm:$0xff]
    %v2561 = vsel %vm182, %v2558, 0
    %v2564 = vsel %vm182, %v2559, 0
    %2566 = vmatprep.subr.mxu0 0.0
    %2567 = vmatpush1.msra.mxu0 %v2556
    %2568 = vmatprep.subr.mxu0 0.0
    %2569 = vmatpush1.msra.mxu0 %v2557
    %2570 = vmatprep.subr.mxu0 0.0
    %2571 = vmatpush1.msra.mxu0 0.0
    %2572 = vmatprep.subr.mxu0 0.0
    %2573 = vmatpush1.msra.mxu0 0.0
    %2574 = vmatprep.subr.mxu0 0.0
    %2575 = vmatpush1.msra.mxu0 0.0
    %2576 = vmatprep.subr.mxu0 0.0
    %2577 = vmatpush1.msra.mxu0 0.0
    %2578 = vmatprep.subr.mxu0 0.0
    %2579 = vmatpush1.msra.mxu0 0.0
    %2580 = vmatprep.subr.mxu0 0.0
    %2581 = vmatpush1.msra.mxu0 0.0
    %2582 = vmatprep.subr.mxu0 0.0
    %2583 = vmatpush1.msra.mxu0 0.0
    %2584 = vmatprep.subr.mxu0 0.0
    %2585 = vmatpush1.msra.mxu0 0.0
    %2586 = vmatprep.subr.mxu0 0.0
    %2587 = vmatpush1.msra.mxu0 0.0
    %2588 = vmatprep.subr.mxu0 0.0
    %2589 = vmatpush1.msra.mxu0 0.0
    %2590 = vmatprep.subr.mxu0 0.0
    %2591 = vmatpush1.msra.mxu0 0.0
    %2592 = vmatprep.subr.mxu0 0.0
    %2593 = vmatpush1.msra.mxu0 0.0
    %2594 = vmatprep.subr.mxu0 0.0
    %2595 = vmatpush1.msra.mxu0 0.0
    %2596 = vmatprep.subr.mxu0 0.0
    %2597 = vmatpush1.msra.mxu0 0.0
    %2598 = vmatprep.subr.mxu0 0.0
    %2599 = vmatpush1.msra.mxu0 0.0
    %2600 = vmatprep.subr.mxu0 0.0
    %2601 = vmatpush1.msra.mxu0 0.0
    %2602 = vmatprep.subr.mxu0 0.0
    %2603 = vmatpush1.msra.mxu0 0.0
    %2604 = vmatprep.subr.mxu0 0.0
    %2605 = vmatpush1.msra.mxu0 0.0
    %2606 = vmatprep.subr.mxu0 0.0
    %2607 = vmatpush1.msra.mxu0 0.0
    %2608 = vmatprep.subr.mxu0 0.0
    %2609 = vmatpush1.msra.mxu0 0.0
    %2610 = vmatprep.subr.mxu0 0.0
    %2611 = vmatpush1.msra.mxu0 0.0
    %2612 = vmatprep.subr.mxu0 0.0
    %2613 = vmatpush1.msra.mxu0 0.0
    %2614 = vmatprep.subr.mxu0 0.0
    %2615 = vmatpush1.msra.mxu0 0.0
    %2616 = vmatprep.subr.mxu0 0.0
    %2617 = vmatpush1.msra.mxu0 0.0
    %2618 = vmatprep.subr.mxu0 0.0
    %2619 = vmatpush1.msra.mxu0 0.0
    %2620 = vmatprep.subr.mxu0 0.0
    %2621 = vmatpush1.msra.mxu0 0.0
    %2622 = vmatprep.subr.mxu0 0.0
    %2623 = vmatpush1.msra.mxu0 0.0
    %2624 = vmatprep.subr.mxu0 0.0
    %2625 = vmatpush1.msra.mxu0 0.0
    %2626 = vmatprep.subr.mxu0 0.0
    %2627 = vmatpush1.msra.mxu0 0.0
    %2628 = vmatprep.subr.mxu0 0.0
    %2629 = vmatpush1.msra.mxu0 0.0
    %2630 = vmatprep.mubr.f32.mxu0 0.0
    %2631 = vmatmul.mubr.f32.gmra.mrb[0].mxu0 %v2561
    %v2632 = vpop.f32.mrb[0].mxu0
    %v2633 = vadd.f32 0.0, %v2632
    %v2634 = vpop.f32.mrb[0].mxu0
    %2635 = vmatprep.mubr.f32.mxu0 0.0
    %2636 = vmatmul.mubr.f32.gmra.mrb[0].mxu0 %v2564
    %v2637 = vpop.f32.mrb[0].mxu0
    %v2638 = vadd.f32 0.0, %v2637
    %v2639 = vpop.f32.mrb[0].mxu0
    %2640 = vdwg.mxu0
    %v2641 = vld [vmem:[%s2228] sm:$0xff]
    %v2642 = vld [vmem:[%s2228 + $0x8] sm:$0xff]
    %v2643 = vld [vmem:[%s2228 + $0x10] sm:$0xff]
    %v2644 = vld [vmem:[%s2228 + $0x18] sm:$0xff]
    %v2645 = vld [vmem:[%s2228 + $0x20] sm:$0xff]
    %v2646 = vld [vmem:[%s2228 + $0x28] sm:$0xff]
    %v2647 = vld [vmem:[%s2228 + $0x30] sm:$0xff]
    %v2648 = vld [vmem:[%s2228 + $0x38] sm:$0xff]
    %v2649 = vld [vmem:[%s2228 + $0x40] sm:$0xff]
    %v2650 = vld [vmem:[%s2228 + $0x48] sm:$0xff]
    %v2651 = vld [vmem:[%s2228 + $0x50] sm:$0xff]
    %v2652 = vld [vmem:[%s2228 + $0x58] sm:$0xff]
    %v2653 = vld [vmem:[%s2228 + $0x60] sm:$0xff]
    %v2654 = vld [vmem:[%s2228 + $0x68] sm:$0xff]
    %v2655 = vld [vmem:[%s2228 + $0x70] sm:$0xff]
    %v2656 = vld [vmem:[%s2228 + $0x78] sm:$0xff]
    %2657 = vmatprep.subr.mxu0 0.0
    %2658 = vmatpush1.msra.mxu0 %v2641
    %2659 = vmatprep.subr.mxu0 0.0
    %2660 = vmatpush1.msra.mxu0 %v2642
    %2661 = vmatprep.subr.mxu0 0.0
    %2662 = vmatpush1.msra.mxu0 %v2643
    %2663 = vmatprep.subr.mxu0 0.0
    %2664 = vmatpush1.msra.mxu0 %v2644
    %2665 = vmatprep.subr.mxu0 0.0
    %2666 = vmatpush1.msra.mxu0 %v2645
    %2667 = vmatprep.subr.mxu0 0.0
    %2668 = vmatpush1.msra.mxu0 %v2646
    %2669 = vmatprep.subr.mxu0 0.0
    %2670 = vmatpush1.msra.mxu0 %v2647
    %2671 = vmatprep.subr.mxu0 0.0
    %2672 = vmatpush1.msra.mxu0 %v2648
    %2673 = vmatprep.subr.mxu0 0.0
    %2674 = vmatpush1.msra.mxu0 %v2649
    %2675 = vmatprep.subr.mxu0 0.0
    %2676 = vmatpush1.msra.mxu0 %v2650
    %2677 = vmatprep.subr.mxu0 0.0
    %2678 = vmatpush1.msra.mxu0 %v2651
    %2679 = vmatprep.subr.mxu0 0.0
    %2680 = vmatpush1.msra.mxu0 %v2652
    %2681 = vmatprep.subr.mxu0 0.0
    %2682 = vmatpush1.msra.mxu0 %v2653
    %2683 = vmatprep.subr.mxu0 0.0
    %2684 = vmatpush1.msra.mxu0 %v2654
    %2685 = vmatprep.subr.mxu0 0.0
    %2686 = vmatpush1.msra.mxu0 %v2655
    %2687 = vmatprep.subr.mxu0 0.0
    %2688 = vmatpush1.msra.mxu0 %v2656
    %2689 = vmatprep.subr.mxu0 0.0
    %2690 = vmatpush1.msra.mxu0 0.0
    %2691 = vmatprep.subr.mxu0 0.0
    %2692 = vmatpush1.msra.mxu0 0.0
    %2693 = vmatprep.subr.mxu0 0.0
    %2694 = vmatpush1.msra.mxu0 0.0
    %2695 = vmatprep.subr.mxu0 0.0
    %2696 = vmatpush1.msra.mxu0 0.0
    %2697 = vmatprep.subr.mxu0 0.0
    %2698 = vmatpush1.msra.mxu0 0.0
    %2699 = vmatprep.subr.mxu0 0.0
    %2700 = vmatpush1.msra.mxu0 0.0
    %2701 = vmatprep.subr.mxu0 0.0
    %2702 = vmatpush1.msra.mxu0 0.0
    %2703 = vmatprep.subr.mxu0 0.0
    %2704 = vmatpush1.msra.mxu0 0.0
    %2705 = vmatprep.subr.mxu0 0.0
    %2706 = vmatpush1.msra.mxu0 0.0
    %2707 = vmatprep.subr.mxu0 0.0
    %2708 = vmatpush1.msra.mxu0 0.0
    %2709 = vmatprep.subr.mxu0 0.0
    %2710 = vmatpush1.msra.mxu0 0.0
    %2711 = vmatprep.subr.mxu0 0.0
    %2712 = vmatpush1.msra.mxu0 0.0
    %2713 = vmatprep.subr.mxu0 0.0
    %2714 = vmatpush1.msra.mxu0 0.0
    %2715 = vmatprep.subr.mxu0 0.0
    %2716 = vmatpush1.msra.mxu0 0.0
    %2717 = vmatprep.subr.mxu0 0.0
    %2718 = vmatpush1.msra.mxu0 0.0
    %2719 = vmatprep.subr.mxu0 0.0
    %2720 = vmatpush1.msra.mxu0 0.0
    %2721 = vmatprep.mubr.f32.mxu0 0.0
    %2722 = vmatmul.mubr.f32.gmra.mrb[0].mxu0 %v2633
    %v2723 = vpop.f32.mrb[0].mxu0
    %v2724 = vadd.f32 0.0, %v2723
    %v2725 = vpop.f32.mrb[0].mxu0
    %2726 = vmatprep.mubr.f32.mxu0 0.0
    %2727 = vmatmul.mubr.f32.gmra.mrb[0].mxu0 %v2638
    %v2728 = vpop.f32.mrb[0].mxu0
    %v2729 = vadd.f32 0.0, %v2728
    %v2730 = vpop.f32.mrb[0].mxu0
    %2731 = vdwg.mxu0
    %v2732 = vadd.f32 %v2132, %v2724
    %v2733 = vadd.f32 %v2137, %v2729
    %v2734 = vtanh.pop %v2732
    %v2735 = vtanh.pop %v2733
    %v2736 = vmul.f32 %v2734, 0.9
    %v2737 = vmul.f32 %v2735, 0.9
    %v2738 = vmul.f32 %v2556, 0.1
    %v2739 = vmul.f32 %v2557, 0.1
    %v2740 = vadd.f32 %v2736, %v2738
    %v2741 = vadd.f32 %v2737, %v2739
    %v2742 = vsub.f32 %v2556, %v2740
    %v2743 = vsub.f32 %v2557, %v2741
    %v2744 = vmul.f32 %v2742, %v2742
    %v2745 = vmul.f32 %v2743, %v2743
    %v2746 = vadd.f32 %v2744, %v2745
    %2747 = vadd.xlane.f32.xlu0 %v2746
    %v2748 = vpop.xlane.xlu0 %2747
    %v2749 = vrot.slane %v2748, 4
    %v2750 = vadd.f32 %v2748, %v2749
    %v2751 = vrot.slane %v2750, 2
    %v2752 = vadd.f32 %v2750, %v2751
    %v2753 = vrot.slane %v2752, 1
    %v2754 = vadd.f32 %v2752, %v2753
    %s2755 = vtos %v2754
    %s2756 = scalar_select %p2555, 1, 0
    %v2757 = vstv %s2756
    %vm2758 = vcmp.eq.s32.totalorder %v2757, 1
    %v2759 = vsel %vm2758, %v2556, %v2740
    %v2760 = vsel %vm2758, %v2557, %v2741
    %2761 = vst [vmem:[%s2140] sm:$0xff] %v2759
    %2762 = vst [vmem:[%s2140 + $0x8] sm:$0xff] %v2760
    %p2763 = scmp.lt.f32.partialorder %s2755, 1e-10
    %p2764 = por %p2555, %p2763
    %v2765 = vld [vmem:[%s2140] sm:$0xff]
    %v2766 = vld [vmem:[%s2140 + $0x8] sm:$0xff]
    %v2767 = vld [vmem:[#allocation2] sm:$0xff]
    %v2768 = vld [vmem:[#allocation2 + $0x8] sm:$0xff]
    %v2770 = vsel %vm182, %v2767, 0
    %v2773 = vsel %vm182, %v2768, 0
    %2775 = vmatprep.subr.mxu0 0.0
    %2776 = vmatpush1.msra.mxu0 %v2765
    %2777 = vmatprep.subr.mxu0 0.0
    %2778 = vmatpush1.msra.mxu0 %v2766
    %2779 = vmatprep.subr.mxu0 0.0
    %2780 = vmatpush1.msra.mxu0 0.0
    %2781 = vmatprep.subr.mxu0 0.0
    %2782 = vmatpush1.msra.mxu0 0.0
    %2783 = vmatprep.subr.mxu0 0.0
    %2784 = vmatpush1.msra.mxu0 0.0
    %2785 = vmatprep.subr.mxu0 0.0
    %2786 = vmatpush1.msra.mxu0 0.0
    %2787 = vmatprep.subr.mxu0 0.0
    %2788 = vmatpush1.msra.mxu0 0.0
    %2789 = vmatprep.subr.mxu0 0.0
    %2790 = vmatpush1.msra.mxu0 0.0
    %2791 = vmatprep.subr.mxu0 0.0
    %2792 = vmatpush1.msra.mxu0 0.0
    %2793 = vmatprep.subr.mxu0 0.0
    %2794 = vmatpush1.msra.mxu0 0.0
    %2795 = vmatprep.subr.mxu0 0.0
    %2796 = vmatpush1.msra.mxu0 0.0
    %2797 = vmatprep.subr.mxu0 0.0
    %2798 = vmatpush1.msra.mxu0 0.0
    %2799 = vmatprep.subr.mxu0 0.0
    %2800 = vmatpush1.msra.mxu0 0.0
    %2801 = vmatprep.subr.mxu0 0.0
    %2802 = vmatpush1.msra.mxu0 0.0
    %2803 = vmatprep.subr.mxu0 0.0
    %2804 = vmatpush1.msra.mxu0 0.0
    %2805 = vmatprep.subr.mxu0 0.0
    %2806 = vmatpush1.msra.mxu0 0.0
    %2807 = vmatprep.subr.mxu0 0.0
    %2808 = vmatpush1.msra.mxu0 0.0
    %2809 = vmatprep.subr.mxu0 0.0
    %2810 = vmatpush1.msra.mxu0 0.0
    %2811 = vmatprep.subr.mxu0 0.0
    %2812 = vmatpush1.msra.mxu0 0.0
    %2813 = vmatprep.subr.mxu0 0.0
    %2814 = vmatpush1.msra.mxu0 0.0
    %2815 = vmatprep.subr.mxu0 0.0
    %2816 = vmatpush1.msra.mxu0 0.0
    %2817 = vmatprep.subr.mxu0 0.0
    %2818 = vmatpush1.msra.mxu0 0.0
    %2819 = vmatprep.subr.mxu0 0.0
    %2820 = vmatpush1.msra.mxu0 0.0
    %2821 = vmatprep.subr.mxu0 0.0
    %2822 = vmatpush1.msra.mxu0 0.0
    %2823 = vmatprep.subr.mxu0 0.0
    %2824 = vmatpush1.msra.mxu0 0.0
    %2825 = vmatprep.subr.mxu0 0.0
    %2826 = vmatpush1.msra.mxu0 0.0
    %2827 = vmatprep.subr.mxu0 0.0
    %2828 = vmatpush1.msra.mxu0 0.0
    %2829 = vmatprep.subr.mxu0 0.0
    %2830 = vmatpush1.msra.mxu0 0.0
    %2831 = vmatprep.subr.mxu0 0.0
    %2832 = vmatpush1.msra.mxu0 0.0
    %2833 = vmatprep.subr.mxu0 0.0
    %2834 = vmatpush1.msra.mxu0 0.0
    %2835 = vmatprep.subr.mxu0 0.0
    %2836 = vmatpush1.msra.mxu0 0.0
    %2837 = vmatprep.subr.mxu0 0.0
    %2838 = vmatpush1.msra.mxu0 0.0
    %2839 = vmatprep.mubr.f32.mxu0 0.0
    %2840 = vmatmul.mubr.f32.gmra.mrb[0].mxu0 %v2770
    %v2841 = vpop.f32.mrb[0].mxu0
    %v2842 = vadd.f32 0.0, %v2841
    %v2843 = vpop.f32.mrb[0].mxu0
    %2844 = vmatprep.mubr.f32.mxu0 0.0
    %2845 = vmatmul.mubr.f32.gmra.mrb[0].mxu0 %v2773
    %v2846 = vpop.f32.mrb[0].mxu0
    %v2847 = vadd.f32 0.0, %v2846
    %v2848 = vpop.f32.mrb[0].mxu0
    %2849 = vdwg.mxu0
    %v2850 = vld [vmem:[%s2228] sm:$0xff]
    %v2851 = vld [vmem:[%s2228 + $0x8] sm:$0xff]
    %v2852 = vld [vmem:[%s2228 + $0x10] sm:$0xff]
    %v2853 = vld [vmem:[%s2228 + $0x18] sm:$0xff]
    %v2854 = vld [vmem:[%s2228 + $0x20] sm:$0xff]
    %v2855 = vld [vmem:[%s2228 + $0x28] sm:$0xff]
    %v2856 = vld [vmem:[%s2228 + $0x30] sm:$0xff]
    %v2857 = vld [vmem:[%s2228 + $0x38] sm:$0xff]
    %v2858 = vld [vmem:[%s2228 + $0x40] sm:$0xff]
    %v2859 = vld [vmem:[%s2228 + $0x48] sm:$0xff]
    %v2860 = vld [vmem:[%s2228 + $0x50] sm:$0xff]
    %v2861 = vld [vmem:[%s2228 + $0x58] sm:$0xff]
    %v2862 = vld [vmem:[%s2228 + $0x60] sm:$0xff]
    %v2863 = vld [vmem:[%s2228 + $0x68] sm:$0xff]
    %v2864 = vld [vmem:[%s2228 + $0x70] sm:$0xff]
    %v2865 = vld [vmem:[%s2228 + $0x78] sm:$0xff]
    %2866 = vmatprep.subr.mxu0 0.0
    %2867 = vmatpush1.msra.mxu0 %v2850
    %2868 = vmatprep.subr.mxu0 0.0
    %2869 = vmatpush1.msra.mxu0 %v2851
    %2870 = vmatprep.subr.mxu0 0.0
    %2871 = vmatpush1.msra.mxu0 %v2852
    %2872 = vmatprep.subr.mxu0 0.0
    %2873 = vmatpush1.msra.mxu0 %v2853
    %2874 = vmatprep.subr.mxu0 0.0
    %2875 = vmatpush1.msra.mxu0 %v2854
    %2876 = vmatprep.subr.mxu0 0.0
    %2877 = vmatpush1.msra.mxu0 %v2855
    %2878 = vmatprep.subr.mxu0 0.0
    %2879 = vmatpush1.msra.mxu0 %v2856
    %2880 = vmatprep.subr.mxu0 0.0
    %2881 = vmatpush1.msra.mxu0 %v2857
    %2882 = vmatprep.subr.mxu0 0.0
    %2883 = vmatpush1.msra.mxu0 %v2858
    %2884 = vmatprep.subr.mxu0 0.0
    %2885 = vmatpush1.msra.mxu0 %v2859
    %2886 = vmatprep.subr.mxu0 0.0
    %2887 = vmatpush1.msra.mxu0 %v2860
    %2888 = vmatprep.subr.mxu0 0.0
    %2889 = vmatpush1.msra.mxu0 %v2861
    %2890 = vmatprep.subr.mxu0 0.0
    %2891 = vmatpush1.msra.mxu0 %v2862
    %2892 = vmatprep.subr.mxu0 0.0
    %2893 = vmatpush1.msra.mxu0 %v2863
    %2894 = vmatprep.subr.mxu0 0.0
    %2895 = vmatpush1.msra.mxu0 %v2864
    %2896 = vmatprep.subr.mxu0 0.0
    %2897 = vmatpush1.msra.mxu0 %v2865
    %2898 = vmatprep.subr.mxu0 0.0
    %2899 = vmatpush1.msra.mxu0 0.0
    %2900 = vmatprep.subr.mxu0 0.0
    %2901 = vmatpush1.msra.mxu0 0.0
    %2902 = vmatprep.subr.mxu0 0.0
    %2903 = vmatpush1.msra.mxu0 0.0
    %2904 = vmatprep.subr.mxu0 0.0
    %2905 = vmatpush1.msra.mxu0 0.0
    %2906 = vmatprep.subr.mxu0 0.0
    %2907 = vmatpush1.msra.mxu0 0.0
    %2908 = vmatprep.subr.mxu0 0.0
    %2909 = vmatpush1.msra.mxu0 0.0
    %2910 = vmatprep.subr.mxu0 0.0
    %2911 = vmatpush1.msra.mxu0 0.0
    %2912 = vmatprep.subr.mxu0 0.0
    %2913 = vmatpush1.msra.mxu0 0.0
    %2914 = vmatprep.subr.mxu0 0.0
    %2915 = vmatpush1.msra.mxu0 0.0
    %2916 = vmatprep.subr.mxu0 0.0
    %2917 = vmatpush1.msra.mxu0 0.0
    %2918 = vmatprep.subr.mxu0 0.0
    %2919 = vmatpush1.msra.mxu0 0.0
    %2920 = vmatprep.subr.mxu0 0.0
    %2921 = vmatpush1.msra.mxu0 0.0
    %2922 = vmatprep.subr.mxu0 0.0
    %2923 = vmatpush1.msra.mxu0 0.0
    %2924 = vmatprep.subr.mxu0 0.0
    %2925 = vmatpush1.msra.mxu0 0.0
    %2926 = vmatprep.subr.mxu0 0.0
    %2927 = vmatpush1.msra.mxu0 0.0
    %2928 = vmatprep.subr.mxu0 0.0
    %2929 = vmatpush1.msra.mxu0 0.0
    %2930 = vmatprep.mubr.f32.mxu0 0.0
    %2931 = vmatmul.mubr.f32.gmra.mrb[0].mxu0 %v2842
    %v2932 = vpop.f32.mrb[0].mxu0
    %v2933 = vadd.f32 0.0, %v2932
    %v2934 = vpop.f32.mrb[0].mxu0
    %2935 = vmatprep.mubr.f32.mxu0 0.0
    %2936 = vmatmul.mubr.f32.gmra.mrb[0].mxu0 %v2847
    %v2937 = vpop.f32.mrb[0].mxu0
    %v2938 = vadd.f32 0.0, %v2937
    %v2939 = vpop.f32.mrb[0].mxu0
    %2940 = vdwg.mxu0
    %v2941 = vadd.f32 %v2132, %v2933
    %v2942 = vadd.f32 %v2137, %v2938
    %v2943 = vtanh.pop %v2941
    %v2944 = vtanh.pop %v2942
    %v2945 = vmul.f32 %v2943, 0.9
    %v2946 = vmul.f32 %v2944, 0.9
    %v2947 = vmul.f32 %v2765, 0.1
    %v2948 = vmul.f32 %v2766, 0.1
    %v2949 = vadd.f32 %v2945, %v2947
    %v2950 = vadd.f32 %v2946, %v2948
    %v2951 = vsub.f32 %v2765, %v2949
    %v2952 = vsub.f32 %v2766, %v2950
    %v2953 = vmul.f32 %v2951, %v2951
    %v2954 = vmul.f32 %v2952, %v2952
    %v2955 = vadd.f32 %v2953, %v2954
    %2956 = vadd.xlane.f32.xlu0 %v2955
    %v2957 = vpop.xlane.xlu0 %2956
    %v2958 = vrot.slane %v2957, 4
    %v2959 = vadd.f32 %v2957, %v2958
    %v2960 = vrot.slane %v2959, 2
    %v2961 = vadd.f32 %v2959, %v2960
    %v2962 = vrot.slane %v2961, 1
    %v2963 = vadd.f32 %v2961, %v2962
    %s2964 = vtos %v2963
    %s2965 = scalar_select %p2764, 1, 0
    %v2966 = vstv %s2965
    %vm2967 = vcmp.eq.s32.totalorder %v2966, 1
    %v2968 = vsel %vm2967, %v2765, %v2949
    %v2969 = vsel %vm2967, %v2766, %v2950
    %2970 = vst [vmem:[%s2140] sm:$0xff] %v2968
    %2971 = vst [vmem:[%s2140 + $0x8] sm:$0xff] %v2969
    %p2972 = scmp.lt.f32.partialorder %s2964, 1e-10
    %p2973 = por %p2764, %p2972
    %v2974 = vld [vmem:[%s2140] sm:$0xff]
    %v2975 = vld [vmem:[%s2140 + $0x8] sm:$0xff]
    %v2976 = vld [vmem:[#allocation2] sm:$0xff]
    %v2977 = vld [vmem:[#allocation2 + $0x8] sm:$0xff]
    %v2979 = vsel %vm182, %v2976, 0
    %v2982 = vsel %vm182, %v2977, 0
    %2984 = vmatprep.subr.mxu0 0.0
    %2985 = vmatpush1.msra.mxu0 %v2974
    %2986 = vmatprep.subr.mxu0 0.0
    %2987 = vmatpush1.msra.mxu0 %v2975
    %2988 = vmatprep.subr.mxu0 0.0
    %2989 = vmatpush1.msra.mxu0 0.0
    %2990 = vmatprep.subr.mxu0 0.0
    %2991 = vmatpush1.msra.mxu0 0.0
    %2992 = vmatprep.subr.mxu0 0.0
    %2993 = vmatpush1.msra.mxu0 0.0
    %2994 = vmatprep.subr.mxu0 0.0
    %2995 = vmatpush1.msra.mxu0 0.0
    %2996 = vmatprep.subr.mxu0 0.0
    %2997 = vmatpush1.msra.mxu0 0.0
    %2998 = vmatprep.subr.mxu0 0.0
    %2999 = vmatpush1.msra.mxu0 0.0
    %3000 = vmatprep.subr.mxu0 0.0
    %3001 = vmatpush1.msra.mxu0 0.0
    %3002 = vmatprep.subr.mxu0 0.0
    %3003 = vmatpush1.msra.mxu0 0.0
    %3004 = vmatprep.subr.mxu0 0.0
    %3005 = vmatpush1.msra.mxu0 0.0
    %3006 = vmatprep.subr.mxu0 0.0
    %3007 = vmatpush1.msra.mxu0 0.0
    %3008 = vmatprep.subr.mxu0 0.0
    %3009 = vmatpush1.msra.mxu0 0.0
    %3010 = vmatprep.subr.mxu0 0.0
    %3011 = vmatpush1.msra.mxu0 0.0
    %3012 = vmatprep.subr.mxu0 0.0
    %3013 = vmatpush1.msra.mxu0 0.0
    %3014 = vmatprep.subr.mxu0 0.0
    %3015 = vmatpush1.msra.mxu0 0.0
    %3016 = vmatprep.subr.mxu0 0.0
    %3017 = vmatpush1.msra.mxu0 0.0
    %3018 = vmatprep.subr.mxu0 0.0
    %3019 = vmatpush1.msra.mxu0 0.0
    %3020 = vmatprep.subr.mxu0 0.0
    %3021 = vmatpush1.msra.mxu0 0.0
    %3022 = vmatprep.subr.mxu0 0.0
    %3023 = vmatpush1.msra.mxu0 0.0
    %3024 = vmatprep.subr.mxu0 0.0
    %3025 = vmatpush1.msra.mxu0 0.0
    %3026 = vmatprep.subr.mxu0 0.0
    %3027 = vmatpush1.msra.mxu0 0.0
    %3028 = vmatprep.subr.mxu0 0.0
    %3029 = vmatpush1.msra.mxu0 0.0
    %3030 = vmatprep.subr.mxu0 0.0
    %3031 = vmatpush1.msra.mxu0 0.0
    %3032 = vmatprep.subr.mxu0 0.0
    %3033 = vmatpush1.msra.mxu0 0.0
    %3034 = vmatprep.subr.mxu0 0.0
    %3035 = vmatpush1.msra.mxu0 0.0
    %3036 = vmatprep.subr.mxu0 0.0
    %3037 = vmatpush1.msra.mxu0 0.0
    %3038 = vmatprep.subr.mxu0 0.0
    %3039 = vmatpush1.msra.mxu0 0.0
    %3040 = vmatprep.subr.mxu0 0.0
    %3041 = vmatpush1.msra.mxu0 0.0
    %3042 = vmatprep.subr.mxu0 0.0
    %3043 = vmatpush1.msra.mxu0 0.0
    %3044 = vmatprep.subr.mxu0 0.0
    %3045 = vmatpush1.msra.mxu0 0.0
    %3046 = vmatprep.subr.mxu0 0.0
    %3047 = vmatpush1.msra.mxu0 0.0
    %3048 = vmatprep.mubr.f32.mxu0 0.0
    %3049 = vmatmul.mubr.f32.gmra.mrb[0].mxu0 %v2979
    %v3050 = vpop.f32.mrb[0].mxu0
    %v3051 = vadd.f32 0.0, %v3050
    %v3052 = vpop.f32.mrb[0].mxu0
    %3053 = vmatprep.mubr.f32.mxu0 0.0
    %3054 = vmatmul.mubr.f32.gmra.mrb[0].mxu0 %v2982
    %v3055 = vpop.f32.mrb[0].mxu0
    %v3056 = vadd.f32 0.0, %v3055
    %v3057 = vpop.f32.mrb[0].mxu0
    %3058 = vdwg.mxu0
    %v3059 = vld [vmem:[%s2228] sm:$0xff]
    %v3060 = vld [vmem:[%s2228 + $0x8] sm:$0xff]
    %v3061 = vld [vmem:[%s2228 + $0x10] sm:$0xff]
    %v3062 = vld [vmem:[%s2228 + $0x18] sm:$0xff]
    %v3063 = vld [vmem:[%s2228 + $0x20] sm:$0xff]
    %v3064 = vld [vmem:[%s2228 + $0x28] sm:$0xff]
    %v3065 = vld [vmem:[%s2228 + $0x30] sm:$0xff]
    %v3066 = vld [vmem:[%s2228 + $0x38] sm:$0xff]
    %v3067 = vld [vmem:[%s2228 + $0x40] sm:$0xff]
    %v3068 = vld [vmem:[%s2228 + $0x48] sm:$0xff]
    %v3069 = vld [vmem:[%s2228 + $0x50] sm:$0xff]
    %v3070 = vld [vmem:[%s2228 + $0x58] sm:$0xff]
    %v3071 = vld [vmem:[%s2228 + $0x60] sm:$0xff]
    %v3072 = vld [vmem:[%s2228 + $0x68] sm:$0xff]
    %v3073 = vld [vmem:[%s2228 + $0x70] sm:$0xff]
    %v3074 = vld [vmem:[%s2228 + $0x78] sm:$0xff]
    %3075 = vmatprep.subr.mxu0 0.0
    %3076 = vmatpush1.msra.mxu0 %v3059
    %3077 = vmatprep.subr.mxu0 0.0
    %3078 = vmatpush1.msra.mxu0 %v3060
    %3079 = vmatprep.subr.mxu0 0.0
    %3080 = vmatpush1.msra.mxu0 %v3061
    %3081 = vmatprep.subr.mxu0 0.0
    %3082 = vmatpush1.msra.mxu0 %v3062
    %3083 = vmatprep.subr.mxu0 0.0
    %3084 = vmatpush1.msra.mxu0 %v3063
    %3085 = vmatprep.subr.mxu0 0.0
    %3086 = vmatpush1.msra.mxu0 %v3064
    %3087 = vmatprep.subr.mxu0 0.0
    %3088 = vmatpush1.msra.mxu0 %v3065
    %3089 = vmatprep.subr.mxu0 0.0
    %3090 = vmatpush1.msra.mxu0 %v3066
    %3091 = vmatprep.subr.mxu0 0.0
    %3092 = vmatpush1.msra.mxu0 %v3067
    %3093 = vmatprep.subr.mxu0 0.0
    %3094 = vmatpush1.msra.mxu0 %v3068
    %3095 = vmatprep.subr.mxu0 0.0
    %3096 = vmatpush1.msra.mxu0 %v3069
    %3097 = vmatprep.subr.mxu0 0.0
    %3098 = vmatpush1.msra.mxu0 %v3070
    %3099 = vmatprep.subr.mxu0 0.0
    %3100 = vmatpush1.msra.mxu0 %v3071
    %3101 = vmatprep.subr.mxu0 0.0
    %3102 = vmatpush1.msra.mxu0 %v3072
    %3103 = vmatprep.subr.mxu0 0.0
    %3104 = vmatpush1.msra.mxu0 %v3073
    %3105 = vmatprep.subr.mxu0 0.0
    %3106 = vmatpush1.msra.mxu0 %v3074
    %3107 = vmatprep.subr.mxu0 0.0
    %3108 = vmatpush1.msra.mxu0 0.0
    %3109 = vmatprep.subr.mxu0 0.0
    %3110 = vmatpush1.msra.mxu0 0.0
    %3111 = vmatprep.subr.mxu0 0.0
    %3112 = vmatpush1.msra.mxu0 0.0
    %3113 = vmatprep.subr.mxu0 0.0
    %3114 = vmatpush1.msra.mxu0 0.0
    %3115 = vmatprep.subr.mxu0 0.0
    %3116 = vmatpush1.msra.mxu0 0.0
    %3117 = vmatprep.subr.mxu0 0.0
    %3118 = vmatpush1.msra.mxu0 0.0
    %3119 = vmatprep.subr.mxu0 0.0
    %3120 = vmatpush1.msra.mxu0 0.0
    %3121 = vmatprep.subr.mxu0 0.0
    %3122 = vmatpush1.msra.mxu0 0.0
    %3123 = vmatprep.subr.mxu0 0.0
    %3124 = vmatpush1.msra.mxu0 0.0
    %3125 = vmatprep.subr.mxu0 0.0
    %3126 = vmatpush1.msra.mxu0 0.0
    %3127 = vmatprep.subr.mxu0 0.0
    %3128 = vmatpush1.msra.mxu0 0.0
    %3129 = vmatprep.subr.mxu0 0.0
    %3130 = vmatpush1.msra.mxu0 0.0
    %3131 = vmatprep.subr.mxu0 0.0
    %3132 = vmatpush1.msra.mxu0 0.0
    %3133 = vmatprep.subr.mxu0 0.0
    %3134 = vmatpush1.msra.mxu0 0.0
    %3135 = vmatprep.subr.mxu0 0.0
    %3136 = vmatpush1.msra.mxu0 0.0
    %3137 = vmatprep.subr.mxu0 0.0
    %3138 = vmatpush1.msra.mxu0 0.0
    %3139 = vmatprep.mubr.f32.mxu0 0.0
    %3140 = vmatmul.mubr.f32.gmra.mrb[0].mxu0 %v3051
    %v3141 = vpop.f32.mrb[0].mxu0
    %v3142 = vadd.f32 0.0, %v3141
    %v3143 = vpop.f32.mrb[0].mxu0
    %3144 = vmatprep.mubr.f32.mxu0 0.0
    %3145 = vmatmul.mubr.f32.gmra.mrb[0].mxu0 %v3056
    %v3146 = vpop.f32.mrb[0].mxu0
    %v3147 = vadd.f32 0.0, %v3146
    %v3148 = vpop.f32.mrb[0].mxu0
    %3149 = vdwg.mxu0
    %v3150 = vadd.f32 %v2132, %v3142
    %v3151 = vadd.f32 %v2137, %v3147
    %v3152 = vtanh.pop %v3150
    %v3153 = vtanh.pop %v3151
    %v3154 = vmul.f32 %v3152, 0.9
    %v3155 = vmul.f32 %v3153, 0.9
    %v3156 = vmul.f32 %v2974, 0.1
    %v3157 = vmul.f32 %v2975, 0.1
    %v3158 = vadd.f32 %v3154, %v3156
    %v3159 = vadd.f32 %v3155, %v3157
    %v3160 = vsub.f32 %v2974, %v3158
    %v3161 = vsub.f32 %v2975, %v3159
    %v3162 = vmul.f32 %v3160, %v3160
    %v3163 = vmul.f32 %v3161, %v3161
    %v3164 = vadd.f32 %v3162, %v3163
    %3165 = vadd.xlane.f32.xlu0 %v3164
    %v3166 = vpop.xlane.xlu0 %3165
    %v3167 = vrot.slane %v3166, 4
    %v3168 = vadd.f32 %v3166, %v3167
    %v3169 = vrot.slane %v3168, 2
    %v3170 = vadd.f32 %v3168, %v3169
    %v3171 = vrot.slane %v3170, 1
    %v3172 = vadd.f32 %v3170, %v3171
    %s3173 = vtos %v3172
    %s3174 = scalar_select %p2973, 1, 0
    %v3175 = vstv %s3174
    %vm3176 = vcmp.eq.s32.totalorder %v3175, 1
    %v3177 = vsel %vm3176, %v2974, %v3158
    %v3178 = vsel %vm3176, %v2975, %v3159
    %3179 = vst [vmem:[%s2140] sm:$0xff] %v3177
    %3180 = vst [vmem:[%s2140 + $0x8] sm:$0xff] %v3178
    %p3181 = scmp.lt.f32.partialorder %s3173, 1e-10
    %p3182 = por %p2973, %p3181
    %v3183 = vld [vmem:[%s2140] sm:$0xff]
    %v3184 = vld [vmem:[%s2140 + $0x8] sm:$0xff]
    %v3185 = vld [vmem:[#allocation2] sm:$0xff]
    %v3186 = vld [vmem:[#allocation2 + $0x8] sm:$0xff]
    %v3188 = vsel %vm182, %v3185, 0
    %v3191 = vsel %vm182, %v3186, 0
    %3193 = vmatprep.subr.mxu0 0.0
    %3194 = vmatpush1.msra.mxu0 %v3183
    %3195 = vmatprep.subr.mxu0 0.0
    %3196 = vmatpush1.msra.mxu0 %v3184
    %3197 = vmatprep.subr.mxu0 0.0
    %3198 = vmatpush1.msra.mxu0 0.0
    %3199 = vmatprep.subr.mxu0 0.0
    %3200 = vmatpush1.msra.mxu0 0.0
    %3201 = vmatprep.subr.mxu0 0.0
    %3202 = vmatpush1.msra.mxu0 0.0
    %3203 = vmatprep.subr.mxu0 0.0
    %3204 = vmatpush1.msra.mxu0 0.0
    %3205 = vmatprep.subr.mxu0 0.0
    %3206 = vmatpush1.msra.mxu0 0.0
    %3207 = vmatprep.subr.mxu0 0.0
    %3208 = vmatpush1.msra.mxu0 0.0
    %3209 = vmatprep.subr.mxu0 0.0
    %3210 = vmatpush1.msra.mxu0 0.0
    %3211 = vmatprep.subr.mxu0 0.0
    %3212 = vmatpush1.msra.mxu0 0.0
    %3213 = vmatprep.subr.mxu0 0.0
    %3214 = vmatpush1.msra.mxu0 0.0
    %3215 = vmatprep.subr.mxu0 0.0
    %3216 = vmatpush1.msra.mxu0 0.0
    %3217 = vmatprep.subr.mxu0 0.0
    %3218 = vmatpush1.msra.mxu0 0.0
    %3219 = vmatprep.subr.mxu0 0.0
    %3220 = vmatpush1.msra.mxu0 0.0
    %3221 = vmatprep.subr.mxu0 0.0
    %3222 = vmatpush1.msra.mxu0 0.0
    %3223 = vmatprep.subr.mxu0 0.0
    %3224 = vmatpush1.msra.mxu0 0.0
    %3225 = vmatprep.subr.mxu0 0.0
    %3226 = vmatpush1.msra.mxu0 0.0
    %3227 = vmatprep.subr.mxu0 0.0
    %3228 = vmatpush1.msra.mxu0 0.0
    %3229 = vmatprep.subr.mxu0 0.0
    %3230 = vmatpush1.msra.mxu0 0.0
    %3231 = vmatprep.subr.mxu0 0.0
    %3232 = vmatpush1.msra.mxu0 0.0
    %3233 = vmatprep.subr.mxu0 0.0
    %3234 = vmatpush1.msra.mxu0 0.0
    %3235 = vmatprep.subr.mxu0 0.0
    %3236 = vmatpush1.msra.mxu0 0.0
    %3237 = vmatprep.subr.mxu0 0.0
    %3238 = vmatpush1.msra.mxu0 0.0
    %3239 = vmatprep.subr.mxu0 0.0
    %3240 = vmatpush1.msra.mxu0 0.0
    %3241 = vmatprep.subr.mxu0 0.0
    %3242 = vmatpush1.msra.mxu0 0.0
    %3243 = vmatprep.subr.mxu0 0.0
    %3244 = vmatpush1.msra.mxu0 0.0
    %3245 = vmatprep.subr.mxu0 0.0
    %3246 = vmatpush1.msra.mxu0 0.0
    %3247 = vmatprep.subr.mxu0 0.0
    %3248 = vmatpush1.msra.mxu0 0.0
    %3249 = vmatprep.subr.mxu0 0.0
    %3250 = vmatpush1.msra.mxu0 0.0
    %3251 = vmatprep.subr.mxu0 0.0
    %3252 = vmatpush1.msra.mxu0 0.0
    %3253 = vmatprep.subr.mxu0 0.0
    %3254 = vmatpush1.msra.mxu0 0.0
    %3255 = vmatprep.subr.mxu0 0.0
    %3256 = vmatpush1.msra.mxu0 0.0
    %3257 = vmatprep.mubr.f32.mxu0 0.0
    %3258 = vmatmul.mubr.f32.gmra.mrb[0].mxu0 %v3188
    %v3259 = vpop.f32.mrb[0].mxu0
    %v3260 = vadd.f32 0.0, %v3259
    %v3261 = vpop.f32.mrb[0].mxu0
    %3262 = vmatprep.mubr.f32.mxu0 0.0
    %3263 = vmatmul.mubr.f32.gmra.mrb[0].mxu0 %v3191
    %v3264 = vpop.f32.mrb[0].mxu0
    %v3265 = vadd.f32 0.0, %v3264
    %v3266 = vpop.f32.mrb[0].mxu0
    %3267 = vdwg.mxu0
    %v3268 = vld [vmem:[%s2228] sm:$0xff]
    %v3269 = vld [vmem:[%s2228 + $0x8] sm:$0xff]
    %v3270 = vld [vmem:[%s2228 + $0x10] sm:$0xff]
    %v3271 = vld [vmem:[%s2228 + $0x18] sm:$0xff]
    %v3272 = vld [vmem:[%s2228 + $0x20] sm:$0xff]
    %v3273 = vld [vmem:[%s2228 + $0x28] sm:$0xff]
    %v3274 = vld [vmem:[%s2228 + $0x30] sm:$0xff]
    %v3275 = vld [vmem:[%s2228 + $0x38] sm:$0xff]
    %v3276 = vld [vmem:[%s2228 + $0x40] sm:$0xff]
    %v3277 = vld [vmem:[%s2228 + $0x48] sm:$0xff]
    %v3278 = vld [vmem:[%s2228 + $0x50] sm:$0xff]
    %v3279 = vld [vmem:[%s2228 + $0x58] sm:$0xff]
    %v3280 = vld [vmem:[%s2228 + $0x60] sm:$0xff]
    %v3281 = vld [vmem:[%s2228 + $0x68] sm:$0xff]
    %v3282 = vld [vmem:[%s2228 + $0x70] sm:$0xff]
    %v3283 = vld [vmem:[%s2228 + $0x78] sm:$0xff]
    %3284 = vmatprep.subr.mxu0 0.0
    %3285 = vmatpush1.msra.mxu0 %v3268
    %3286 = vmatprep.subr.mxu0 0.0
    %3287 = vmatpush1.msra.mxu0 %v3269
    %3288 = vmatprep.subr.mxu0 0.0
    %3289 = vmatpush1.msra.mxu0 %v3270
    %3290 = vmatprep.subr.mxu0 0.0
    %3291 = vmatpush1.msra.mxu0 %v3271
    %3292 = vmatprep.subr.mxu0 0.0
    %3293 = vmatpush1.msra.mxu0 %v3272
    %3294 = vmatprep.subr.mxu0 0.0
    %3295 = vmatpush1.msra.mxu0 %v3273
    %3296 = vmatprep.subr.mxu0 0.0
    %3297 = vmatpush1.msra.mxu0 %v3274
    %3298 = vmatprep.subr.mxu0 0.0
    %3299 = vmatpush1.msra.mxu0 %v3275
    %3300 = vmatprep.subr.mxu0 0.0
    %3301 = vmatpush1.msra.mxu0 %v3276
    %3302 = vmatprep.subr.mxu0 0.0
    %3303 = vmatpush1.msra.mxu0 %v3277
    %3304 = vmatprep.subr.mxu0 0.0
    %3305 = vmatpush1.msra.mxu0 %v3278
    %3306 = vmatprep.subr.mxu0 0.0
    %3307 = vmatpush1.msra.mxu0 %v3279
    %3308 = vmatprep.subr.mxu0 0.0
    %3309 = vmatpush1.msra.mxu0 %v3280
    %3310 = vmatprep.subr.mxu0 0.0
    %3311 = vmatpush1.msra.mxu0 %v3281
    %3312 = vmatprep.subr.mxu0 0.0
    %3313 = vmatpush1.msra.mxu0 %v3282
    %3314 = vmatprep.subr.mxu0 0.0
    %3315 = vmatpush1.msra.mxu0 %v3283
    %3316 = vmatprep.subr.mxu0 0.0
    %3317 = vmatpush1.msra.mxu0 0.0
    %3318 = vmatprep.subr.mxu0 0.0
    %3319 = vmatpush1.msra.mxu0 0.0
    %3320 = vmatprep.subr.mxu0 0.0
    %3321 = vmatpush1.msra.mxu0 0.0
    %3322 = vmatprep.subr.mxu0 0.0
    %3323 = vmatpush1.msra.mxu0 0.0
    %3324 = vmatprep.subr.mxu0 0.0
    %3325 = vmatpush1.msra.mxu0 0.0
    %3326 = vmatprep.subr.mxu0 0.0
    %3327 = vmatpush1.msra.mxu0 0.0
    %3328 = vmatprep.subr.mxu0 0.0
    %3329 = vmatpush1.msra.mxu0 0.0
    %3330 = vmatprep.subr.mxu0 0.0
    %3331 = vmatpush1.msra.mxu0 0.0
    %3332 = vmatprep.subr.mxu0 0.0
    %3333 = vmatpush1.msra.mxu0 0.0
    %3334 = vmatprep.subr.mxu0 0.0
    %3335 = vmatpush1.msra.mxu0 0.0
    %3336 = vmatprep.subr.mxu0 0.0
    %3337 = vmatpush1.msra.mxu0 0.0
    %3338 = vmatprep.subr.mxu0 0.0
    %3339 = vmatpush1.msra.mxu0 0.0
    %3340 = vmatprep.subr.mxu0 0.0
    %3341 = vmatpush1.msra.mxu0 0.0
    %3342 = vmatprep.subr.mxu0 0.0
    %3343 = vmatpush1.msra.mxu0 0.0
    %3344 = vmatprep.subr.mxu0 0.0
    %3345 = vmatpush1.msra.mxu0 0.0
    %3346 = vmatprep.subr.mxu0 0.0
    %3347 = vmatpush1.msra.mxu0 0.0
    %3348 = vmatprep.mubr.f32.mxu0 0.0
    %3349 = vmatmul.mubr.f32.gmra.mrb[0].mxu0 %v3260
    %v3350 = vpop.f32.mrb[0].mxu0
    %v3351 = vadd.f32 0.0, %v3350
    %v3352 = vpop.f32.mrb[0].mxu0
    %3353 = vmatprep.mubr.f32.mxu0 0.0
    %3354 = vmatmul.mubr.f32.gmra.mrb[0].mxu0 %v3265
    %v3355 = vpop.f32.mrb[0].mxu0
    %v3356 = vadd.f32 0.0, %v3355
    %v3357 = vpop.f32.mrb[0].mxu0
    %3358 = vdwg.mxu0
    %v3359 = vadd.f32 %v2132, %v3351
    %v3360 = vadd.f32 %v2137, %v3356
    %v3361 = vtanh.pop %v3359
    %v3362 = vtanh.pop %v3360
    %v3363 = vmul.f32 %v3361, 0.9
    %v3364 = vmul.f32 %v3362, 0.9
    %v3365 = vmul.f32 %v3183, 0.1
    %v3366 = vmul.f32 %v3184, 0.1
    %v3367 = vadd.f32 %v3363, %v3365
    %v3368 = vadd.f32 %v3364, %v3366
    %v3369 = vsub.f32 %v3183, %v3367
    %v3370 = vsub.f32 %v3184, %v3368
    %v3371 = vmul.f32 %v3369, %v3369
    %v3372 = vmul.f32 %v3370, %v3370
    %v3373 = vadd.f32 %v3371, %v3372
    %3374 = vadd.xlane.f32.xlu0 %v3373
    %v3375 = vpop.xlane.xlu0 %3374
    %v3376 = vrot.slane %v3375, 4
    %v3377 = vadd.f32 %v3375, %v3376
    %v3378 = vrot.slane %v3377, 2
    %v3379 = vadd.f32 %v3377, %v3378
    %v3380 = vrot.slane %v3379, 1
    %v3381 = vadd.f32 %v3379, %v3380
    %s3382 = vtos %v3381
    %s3383 = scalar_select %p3182, 1, 0
    %v3384 = vstv %s3383
    %vm3385 = vcmp.eq.s32.totalorder %v3384, 1
    %v3386 = vsel %vm3385, %v3183, %v3367
    %v3387 = vsel %vm3385, %v3184, %v3368
    %3388 = vst [vmem:[%s2140] sm:$0xff] %v3386
    %3389 = vst [vmem:[%s2140 + $0x8] sm:$0xff] %v3387
    %p3390 = scmp.lt.f32.partialorder %s3382, 1e-10
    %p3391 = por %p3182, %p3390
    %v3392 = vld [vmem:[%s2140] sm:$0xff]
    %v3393 = vld [vmem:[%s2140 + $0x8] sm:$0xff]
    %v3394 = vld [vmem:[#allocation2] sm:$0xff]
    %v3395 = vld [vmem:[#allocation2 + $0x8] sm:$0xff]
    %v3397 = vsel %vm182, %v3394, 0
    %v3400 = vsel %vm182, %v3395, 0
    %3402 = vmatprep.subr.mxu0 0.0
    %3403 = vmatpush1.msra.mxu0 %v3392
    %3404 = vmatprep.subr.mxu0 0.0
    %3405 = vmatpush1.msra.mxu0 %v3393
    %3406 = vmatprep.subr.mxu0 0.0
    %3407 = vmatpush1.msra.mxu0 0.0
    %3408 = vmatprep.subr.mxu0 0.0
    %3409 = vmatpush1.msra.mxu0 0.0
    %3410 = vmatprep.subr.mxu0 0.0
    %3411 = vmatpush1.msra.mxu0 0.0
    %3412 = vmatprep.subr.mxu0 0.0
    %3413 = vmatpush1.msra.mxu0 0.0
    %3414 = vmatprep.subr.mxu0 0.0
    %3415 = vmatpush1.msra.mxu0 0.0
    %3416 = vmatprep.subr.mxu0 0.0
    %3417 = vmatpush1.msra.mxu0 0.0
    %3418 = vmatprep.subr.mxu0 0.0
    %3419 = vmatpush1.msra.mxu0 0.0
    %3420 = vmatprep.subr.mxu0 0.0
    %3421 = vmatpush1.msra.mxu0 0.0
    %3422 = vmatprep.subr.mxu0 0.0
    %3423 = vmatpush1.msra.mxu0 0.0
    %3424 = vmatprep.subr.mxu0 0.0
    %3425 = vmatpush1.msra.mxu0 0.0
    %3426 = vmatprep.subr.mxu0 0.0
    %3427 = vmatpush1.msra.mxu0 0.0
    %3428 = vmatprep.subr.mxu0 0.0
    %3429 = vmatpush1.msra.mxu0 0.0
    %3430 = vmatprep.subr.mxu0 0.0
    %3431 = vmatpush1.msra.mxu0 0.0
    %3432 = vmatprep.subr.mxu0 0.0
    %3433 = vmatpush1.msra.mxu0 0.0
    %3434 = vmatprep.subr.mxu0 0.0
    %3435 = vmatpush1.msra.mxu0 0.0
    %3436 = vmatprep.subr.mxu0 0.0
    %3437 = vmatpush1.msra.mxu0 0.0
    %3438 = vmatprep.subr.mxu0 0.0
    %3439 = vmatpush1.msra.mxu0 0.0
    %3440 = vmatprep.subr.mxu0 0.0
    %3441 = vmatpush1.msra.mxu0 0.0
    %3442 = vmatprep.subr.mxu0 0.0
    %3443 = vmatpush1.msra.mxu0 0.0
    %3444 = vmatprep.subr.mxu0 0.0
    %3445 = vmatpush1.msra.mxu0 0.0
    %3446 = vmatprep.subr.mxu0 0.0
    %3447 = vmatpush1.msra.mxu0 0.0
    %3448 = vmatprep.subr.mxu0 0.0
    %3449 = vmatpush1.msra.mxu0 0.0
    %3450 = vmatprep.subr.mxu0 0.0
    %3451 = vmatpush1.msra.mxu0 0.0
    %3452 = vmatprep.subr.mxu0 0.0
    %3453 = vmatpush1.msra.mxu0 0.0
    %3454 = vmatprep.subr.mxu0 0.0
    %3455 = vmatpush1.msra.mxu0 0.0
    %3456 = vmatprep.subr.mxu0 0.0
    %3457 = vmatpush1.msra.mxu0 0.0
    %3458 = vmatprep.subr.mxu0 0.0
    %3459 = vmatpush1.msra.mxu0 0.0
    %3460 = vmatprep.subr.mxu0 0.0
    %3461 = vmatpush1.msra.mxu0 0.0
    %3462 = vmatprep.subr.mxu0 0.0
    %3463 = vmatpush1.msra.mxu0 0.0
    %3464 = vmatprep.subr.mxu0 0.0
    %3465 = vmatpush1.msra.mxu0 0.0
    %3466 = vmatprep.mubr.f32.mxu0 0.0
    %3467 = vmatmul.mubr.f32.gmra.mrb[0].mxu0 %v3397
    %v3468 = vpop.f32.mrb[0].mxu0
    %v3469 = vadd.f32 0.0, %v3468
    %v3470 = vpop.f32.mrb[0].mxu0
    %3471 = vmatprep.mubr.f32.mxu0 0.0
    %3472 = vmatmul.mubr.f32.gmra.mrb[0].mxu0 %v3400
    %v3473 = vpop.f32.mrb[0].mxu0
    %v3474 = vadd.f32 0.0, %v3473
    %v3475 = vpop.f32.mrb[0].mxu0
    %3476 = vdwg.mxu0
    %v3477 = vld [vmem:[%s2228] sm:$0xff]
    %v3478 = vld [vmem:[%s2228 + $0x8] sm:$0xff]
    %v3479 = vld [vmem:[%s2228 + $0x10] sm:$0xff]
    %v3480 = vld [vmem:[%s2228 + $0x18] sm:$0xff]
    %v3481 = vld [vmem:[%s2228 + $0x20] sm:$0xff]
    %v3482 = vld [vmem:[%s2228 + $0x28] sm:$0xff]
    %v3483 = vld [vmem:[%s2228 + $0x30] sm:$0xff]
    %v3484 = vld [vmem:[%s2228 + $0x38] sm:$0xff]
    %v3485 = vld [vmem:[%s2228 + $0x40] sm:$0xff]
    %v3486 = vld [vmem:[%s2228 + $0x48] sm:$0xff]
    %v3487 = vld [vmem:[%s2228 + $0x50] sm:$0xff]
    %v3488 = vld [vmem:[%s2228 + $0x58] sm:$0xff]
    %v3489 = vld [vmem:[%s2228 + $0x60] sm:$0xff]
    %v3490 = vld [vmem:[%s2228 + $0x68] sm:$0xff]
    %v3491 = vld [vmem:[%s2228 + $0x70] sm:$0xff]
    %v3492 = vld [vmem:[%s2228 + $0x78] sm:$0xff]
    %3493 = vmatprep.subr.mxu0 0.0
    %3494 = vmatpush1.msra.mxu0 %v3477
    %3495 = vmatprep.subr.mxu0 0.0
    %3496 = vmatpush1.msra.mxu0 %v3478
    %3497 = vmatprep.subr.mxu0 0.0
    %3498 = vmatpush1.msra.mxu0 %v3479
    %3499 = vmatprep.subr.mxu0 0.0
    %3500 = vmatpush1.msra.mxu0 %v3480
    %3501 = vmatprep.subr.mxu0 0.0
    %3502 = vmatpush1.msra.mxu0 %v3481
    %3503 = vmatprep.subr.mxu0 0.0
    %3504 = vmatpush1.msra.mxu0 %v3482
    %3505 = vmatprep.subr.mxu0 0.0
    %3506 = vmatpush1.msra.mxu0 %v3483
    %3507 = vmatprep.subr.mxu0 0.0
    %3508 = vmatpush1.msra.mxu0 %v3484
    %3509 = vmatprep.subr.mxu0 0.0
    %3510 = vmatpush1.msra.mxu0 %v3485
    %3511 = vmatprep.subr.mxu0 0.0
    %3512 = vmatpush1.msra.mxu0 %v3486
    %3513 = vmatprep.subr.mxu0 0.0
    %3514 = vmatpush1.msra.mxu0 %v3487
    %3515 = vmatprep.subr.mxu0 0.0
    %3516 = vmatpush1.msra.mxu0 %v3488
    %3517 = vmatprep.subr.mxu0 0.0
    %3518 = vmatpush1.msra.mxu0 %v3489
    %3519 = vmatprep.subr.mxu0 0.0
    %3520 = vmatpush1.msra.mxu0 %v3490
    %3521 = vmatprep.subr.mxu0 0.0
    %3522 = vmatpush1.msra.mxu0 %v3491
    %3523 = vmatprep.subr.mxu0 0.0
    %3524 = vmatpush1.msra.mxu0 %v3492
    %3525 = vmatprep.subr.mxu0 0.0
    %3526 = vmatpush1.msra.mxu0 0.0
    %3527 = vmatprep.subr.mxu0 0.0
    %3528 = vmatpush1.msra.mxu0 0.0
    %3529 = vmatprep.subr.mxu0 0.0
    %3530 = vmatpush1.msra.mxu0 0.0
    %3531 = vmatprep.subr.mxu0 0.0
    %3532 = vmatpush1.msra.mxu0 0.0
    %3533 = vmatprep.subr.mxu0 0.0
    %3534 = vmatpush1.msra.mxu0 0.0
    %3535 = vmatprep.subr.mxu0 0.0
    %3536 = vmatpush1.msra.mxu0 0.0
    %3537 = vmatprep.subr.mxu0 0.0
    %3538 = vmatpush1.msra.mxu0 0.0
    %3539 = vmatprep.subr.mxu0 0.0
    %3540 = vmatpush1.msra.mxu0 0.0
    %3541 = vmatprep.subr.mxu0 0.0
    %3542 = vmatpush1.msra.mxu0 0.0
    %3543 = vmatprep.subr.mxu0 0.0
    %3544 = vmatpush1.msra.mxu0 0.0
    %3545 = vmatprep.subr.mxu0 0.0
    %3546 = vmatpush1.msra.mxu0 0.0
    %3547 = vmatprep.subr.mxu0 0.0
    %3548 = vmatpush1.msra.mxu0 0.0
    %3549 = vmatprep.subr.mxu0 0.0
    %3550 = vmatpush1.msra.mxu0 0.0
    %3551 = vmatprep.subr.mxu0 0.0
    %3552 = vmatpush1.msra.mxu0 0.0
    %3553 = vmatprep.subr.mxu0 0.0
    %3554 = vmatpush1.msra.mxu0 0.0
    %3555 = vmatprep.subr.mxu0 0.0
    %3556 = vmatpush1.msra.mxu0 0.0
    %3557 = vmatprep.mubr.f32.mxu0 0.0
    %3558 = vmatmul.mubr.f32.gmra.mrb[0].mxu0 %v3469
    %v3559 = vpop.f32.mrb[0].mxu0
    %v3560 = vadd.f32 0.0, %v3559
    %v3561 = vpop.f32.mrb[0].mxu0
    %3562 = vmatprep.mubr.f32.mxu0 0.0
    %3563 = vmatmul.mubr.f32.gmra.mrb[0].mxu0 %v3474
    %v3564 = vpop.f32.mrb[0].mxu0
    %v3565 = vadd.f32 0.0, %v3564
    %v3566 = vpop.f32.mrb[0].mxu0
    %3567 = vdwg.mxu0
    %v3568 = vadd.f32 %v2132, %v3560
    %v3569 = vadd.f32 %v2137, %v3565
    %v3570 = vtanh.pop %v3568
    %v3571 = vtanh.pop %v3569
    %v3572 = vmul.f32 %v3570, 0.9
    %v3573 = vmul.f32 %v3571, 0.9
    %v3574 = vmul.f32 %v3392, 0.1
    %v3575 = vmul.f32 %v3393, 0.1
    %v3576 = vadd.f32 %v3572, %v3574
    %v3577 = vadd.f32 %v3573, %v3575
    %v3578 = vsub.f32 %v3392, %v3576
    %v3579 = vsub.f32 %v3393, %v3577
    %v3580 = vmul.f32 %v3578, %v3578
    %v3581 = vmul.f32 %v3579, %v3579
    %v3582 = vadd.f32 %v3580, %v3581
    %3583 = vadd.xlane.f32.xlu0 %v3582
    %v3584 = vpop.xlane.xlu0 %3583
    %v3585 = vrot.slane %v3584, 4
    %v3586 = vadd.f32 %v3584, %v3585
    %v3587 = vrot.slane %v3586, 2
    %v3588 = vadd.f32 %v3586, %v3587
    %v3589 = vrot.slane %v3588, 1
    %v3590 = vadd.f32 %v3588, %v3589
    %s3591 = vtos %v3590
    %s3592 = scalar_select %p3391, 1, 0
    %v3593 = vstv %s3592
    %vm3594 = vcmp.eq.s32.totalorder %v3593, 1
    %v3595 = vsel %vm3594, %v3392, %v3576
    %v3596 = vsel %vm3594, %v3393, %v3577
    %3597 = vst [vmem:[%s2140] sm:$0xff] %v3595
    %3598 = vst [vmem:[%s2140 + $0x8] sm:$0xff] %v3596
    %p3599 = scmp.lt.f32.partialorder %s3591, 1e-10
    %p3600 = por %p3391, %p3599
    %v3601 = vld [vmem:[%s2140] sm:$0xff]
    %v3602 = vld [vmem:[%s2140 + $0x8] sm:$0xff]
    %v3603 = vld [vmem:[#allocation2] sm:$0xff]
    %v3604 = vld [vmem:[#allocation2 + $0x8] sm:$0xff]
    %v3606 = vsel %vm182, %v3603, 0
    %v3609 = vsel %vm182, %v3604, 0
    %3611 = vmatprep.subr.mxu0 0.0
    %3612 = vmatpush1.msra.mxu0 %v3601
    %3613 = vmatprep.subr.mxu0 0.0
    %3614 = vmatpush1.msra.mxu0 %v3602
    %3615 = vmatprep.subr.mxu0 0.0
    %3616 = vmatpush1.msra.mxu0 0.0
    %3617 = vmatprep.subr.mxu0 0.0
    %3618 = vmatpush1.msra.mxu0 0.0
    %3619 = vmatprep.subr.mxu0 0.0
    %3620 = vmatpush1.msra.mxu0 0.0
    %3621 = vmatprep.subr.mxu0 0.0
    %3622 = vmatpush1.msra.mxu0 0.0
    %3623 = vmatprep.subr.mxu0 0.0
    %3624 = vmatpush1.msra.mxu0 0.0
    %3625 = vmatprep.subr.mxu0 0.0
    %3626 = vmatpush1.msra.mxu0 0.0
    %3627 = vmatprep.subr.mxu0 0.0
    %3628 = vmatpush1.msra.mxu0 0.0
    %3629 = vmatprep.subr.mxu0 0.0
    %3630 = vmatpush1.msra.mxu0 0.0
    %3631 = vmatprep.subr.mxu0 0.0
    %3632 = vmatpush1.msra.mxu0 0.0
    %3633 = vmatprep.subr.mxu0 0.0
    %3634 = vmatpush1.msra.mxu0 0.0
    %3635 = vmatprep.subr.mxu0 0.0
    %3636 = vmatpush1.msra.mxu0 0.0
    %3637 = vmatprep.subr.mxu0 0.0
    %3638 = vmatpush1.msra.mxu0 0.0
    %3639 = vmatprep.subr.mxu0 0.0
    %3640 = vmatpush1.msra.mxu0 0.0
    %3641 = vmatprep.subr.mxu0 0.0
    %3642 = vmatpush1.msra.mxu0 0.0
    %3643 = vmatprep.subr.mxu0 0.0
    %3644 = vmatpush1.msra.mxu0 0.0
    %3645 = vmatprep.subr.mxu0 0.0
    %3646 = vmatpush1.msra.mxu0 0.0
    %3647 = vmatprep.subr.mxu0 0.0
    %3648 = vmatpush1.msra.mxu0 0.0
    %3649 = vmatprep.subr.mxu0 0.0
    %3650 = vmatpush1.msra.mxu0 0.0
    %3651 = vmatprep.subr.mxu0 0.0
    %3652 = vmatpush1.msra.mxu0 0.0
    %3653 = vmatprep.subr.mxu0 0.0
    %3654 = vmatpush1.msra.mxu0 0.0
    %3655 = vmatprep.subr.mxu0 0.0
    %3656 = vmatpush1.msra.mxu0 0.0
    %3657 = vmatprep.subr.mxu0 0.0
    %3658 = vmatpush1.msra.mxu0 0.0
    %3659 = vmatprep.subr.mxu0 0.0
    %3660 = vmatpush1.msra.mxu0 0.0
    %3661 = vmatprep.subr.mxu0 0.0
    %3662 = vmatpush1.msra.mxu0 0.0
    %3663 = vmatprep.subr.mxu0 0.0
    %3664 = vmatpush1.msra.mxu0 0.0
    %3665 = vmatprep.subr.mxu0 0.0
    %3666 = vmatpush1.msra.mxu0 0.0
    %3667 = vmatprep.subr.mxu0 0.0
    %3668 = vmatpush1.msra.mxu0 0.0
    %3669 = vmatprep.subr.mxu0 0.0
    %3670 = vmatpush1.msra.mxu0 0.0
    %3671 = vmatprep.subr.mxu0 0.0
    %3672 = vmatpush1.msra.mxu0 0.0
    %3673 = vmatprep.subr.mxu0 0.0
    %3674 = vmatpush1.msra.mxu0 0.0
    %3675 = vmatprep.mubr.f32.mxu0 0.0
    %3676 = vmatmul.mubr.f32.gmra.mrb[0].mxu0 %v3606
    %v3677 = vpop.f32.mrb[0].mxu0
    %v3678 = vadd.f32 0.0, %v3677
    %v3679 = vpop.f32.mrb[0].mxu0
    %3680 = vmatprep.mubr.f32.mxu0 0.0
    %3681 = vmatmul.mubr.f32.gmra.mrb[0].mxu0 %v3609
    %v3682 = vpop.f32.mrb[0].mxu0
    %v3683 = vadd.f32 0.0, %v3682
    %v3684 = vpop.f32.mrb[0].mxu0
    %3685 = vdwg.mxu0
    %v3686 = vld [vmem:[%s2228] sm:$0xff]
    %v3687 = vld [vmem:[%s2228 + $0x8] sm:$0xff]
    %v3688 = vld [vmem:[%s2228 + $0x10] sm:$0xff]
    %v3689 = vld [vmem:[%s2228 + $0x18] sm:$0xff]
    %v3690 = vld [vmem:[%s2228 + $0x20] sm:$0xff]
    %v3691 = vld [vmem:[%s2228 + $0x28] sm:$0xff]
    %v3692 = vld [vmem:[%s2228 + $0x30] sm:$0xff]
    %v3693 = vld [vmem:[%s2228 + $0x38] sm:$0xff]
    %v3694 = vld [vmem:[%s2228 + $0x40] sm:$0xff]
    %v3695 = vld [vmem:[%s2228 + $0x48] sm:$0xff]
    %v3696 = vld [vmem:[%s2228 + $0x50] sm:$0xff]
    %v3697 = vld [vmem:[%s2228 + $0x58] sm:$0xff]
    %v3698 = vld [vmem:[%s2228 + $0x60] sm:$0xff]
    %v3699 = vld [vmem:[%s2228 + $0x68] sm:$0xff]
    %v3700 = vld [vmem:[%s2228 + $0x70] sm:$0xff]
    %v3701 = vld [vmem:[%s2228 + $0x78] sm:$0xff]
    %3702 = vmatprep.subr.mxu0 0.0
    %3703 = vmatpush1.msra.mxu0 %v3686
    %3704 = vmatprep.subr.mxu0 0.0
    %3705 = vmatpush1.msra.mxu0 %v3687
    %3706 = vmatprep.subr.mxu0 0.0
    %3707 = vmatpush1.msra.mxu0 %v3688
    %3708 = vmatprep.subr.mxu0 0.0
    %3709 = vmatpush1.msra.mxu0 %v3689
    %3710 = vmatprep.subr.mxu0 0.0
    %3711 = vmatpush1.msra.mxu0 %v3690
    %3712 = vmatprep.subr.mxu0 0.0
    %3713 = vmatpush1.msra.mxu0 %v3691
    %3714 = vmatprep.subr.mxu0 0.0
    %3715 = vmatpush1.msra.mxu0 %v3692
    %3716 = vmatprep.subr.mxu0 0.0
    %3717 = vmatpush1.msra.mxu0 %v3693
    %3718 = vmatprep.subr.mxu0 0.0
    %3719 = vmatpush1.msra.mxu0 %v3694
    %3720 = vmatprep.subr.mxu0 0.0
    %3721 = vmatpush1.msra.mxu0 %v3695
    %3722 = vmatprep.subr.mxu0 0.0
    %3723 = vmatpush1.msra.mxu0 %v3696
    %3724 = vmatprep.subr.mxu0 0.0
    %3725 = vmatpush1.msra.mxu0 %v3697
    %3726 = vmatprep.subr.mxu0 0.0
    %3727 = vmatpush1.msra.mxu0 %v3698
    %3728 = vmatprep.subr.mxu0 0.0
    %3729 = vmatpush1.msra.mxu0 %v3699
    %3730 = vmatprep.subr.mxu0 0.0
    %3731 = vmatpush1.msra.mxu0 %v3700
    %3732 = vmatprep.subr.mxu0 0.0
    %3733 = vmatpush1.msra.mxu0 %v3701
    %3734 = vmatprep.subr.mxu0 0.0
    %3735 = vmatpush1.msra.mxu0 0.0
    %3736 = vmatprep.subr.mxu0 0.0
    %3737 = vmatpush1.msra.mxu0 0.0
    %3738 = vmatprep.subr.mxu0 0.0
    %3739 = vmatpush1.msra.mxu0 0.0
    %3740 = vmatprep.subr.mxu0 0.0
    %3741 = vmatpush1.msra.mxu0 0.0
    %3742 = vmatprep.subr.mxu0 0.0
    %3743 = vmatpush1.msra.mxu0 0.0
    %3744 = vmatprep.subr.mxu0 0.0
    %3745 = vmatpush1.msra.mxu0 0.0
    %3746 = vmatprep.subr.mxu0 0.0
    %3747 = vmatpush1.msra.mxu0 0.0
    %3748 = vmatprep.subr.mxu0 0.0
    %3749 = vmatpush1.msra.mxu0 0.0
    %3750 = vmatprep.subr.mxu0 0.0
    %3751 = vmatpush1.msra.mxu0 0.0
    %3752 = vmatprep.subr.mxu0 0.0
    %3753 = vmatpush1.msra.mxu0 0.0
    %3754 = vmatprep.subr.mxu0 0.0
    %3755 = vmatpush1.msra.mxu0 0.0
    %3756 = vmatprep.subr.mxu0 0.0
    %3757 = vmatpush1.msra.mxu0 0.0
    %3758 = vmatprep.subr.mxu0 0.0
    %3759 = vmatpush1.msra.mxu0 0.0
    %3760 = vmatprep.subr.mxu0 0.0
    %3761 = vmatpush1.msra.mxu0 0.0
    %3762 = vmatprep.subr.mxu0 0.0
    %3763 = vmatpush1.msra.mxu0 0.0
    %3764 = vmatprep.subr.mxu0 0.0
    %3765 = vmatpush1.msra.mxu0 0.0
    %3766 = vmatprep.mubr.f32.mxu0 0.0
    %3767 = vmatmul.mubr.f32.gmra.mrb[0].mxu0 %v3678
    %v3768 = vpop.f32.mrb[0].mxu0
    %v3769 = vadd.f32 0.0, %v3768
    %v3770 = vpop.f32.mrb[0].mxu0
    %3771 = vmatprep.mubr.f32.mxu0 0.0
    %3772 = vmatmul.mubr.f32.gmra.mrb[0].mxu0 %v3683
    %v3773 = vpop.f32.mrb[0].mxu0
    %v3774 = vadd.f32 0.0, %v3773
    %v3775 = vpop.f32.mrb[0].mxu0
    %3776 = vdwg.mxu0
    %v3777 = vadd.f32 %v2132, %v3769
    %v3778 = vadd.f32 %v2137, %v3774
    %v3779 = vtanh.pop %v3777
    %v3780 = vtanh.pop %v3778
    %v3781 = vmul.f32 %v3779, 0.9
    %v3782 = vmul.f32 %v3780, 0.9
    %v3783 = vmul.f32 %v3601, 0.1
    %v3784 = vmul.f32 %v3602, 0.1
    %v3785 = vadd.f32 %v3781, %v3783
    %v3786 = vadd.f32 %v3782, %v3784
    %v3787 = vsub.f32 %v3601, %v3785
    %v3788 = vsub.f32 %v3602, %v3786
    %v3789 = vmul.f32 %v3787, %v3787
    %v3790 = vmul.f32 %v3788, %v3788
    %v3791 = vadd.f32 %v3789, %v3790
    %3792 = vadd.xlane.f32.xlu0 %v3791
    %v3793 = vpop.xlane.xlu0 %3792
    %v3794 = vrot.slane %v3793, 4
    %v3795 = vadd.f32 %v3793, %v3794
    %v3796 = vrot.slane %v3795, 2
    %v3797 = vadd.f32 %v3795, %v3796
    %v3798 = vrot.slane %v3797, 1
    %v3799 = vadd.f32 %v3797, %v3798
    %s3800 = vtos %v3799
    %s3801 = scalar_select %p3600, 1, 0
    %v3802 = vstv %s3801
    %vm3803 = vcmp.eq.s32.totalorder %v3802, 1
    %v3804 = vsel %vm3803, %v3601, %v3785
    %v3805 = vsel %vm3803, %v3602, %v3786
    %3806 = vst [vmem:[%s2140] sm:$0xff] %v3804
    %3807 = vst [vmem:[%s2140 + $0x8] sm:$0xff] %v3805
    %p3808 = scmp.lt.f32.partialorder %s3800, 1e-10
    %p3809 = por %p3600, %p3808
    %v3810 = vld [vmem:[%s2140] sm:$0xff]
    %v3811 = vld [vmem:[%s2140 + $0x8] sm:$0xff]
    %v3812 = vld [vmem:[#allocation2] sm:$0xff]
    %v3813 = vld [vmem:[#allocation2 + $0x8] sm:$0xff]
    %v3815 = vsel %vm182, %v3812, 0
    %v3818 = vsel %vm182, %v3813, 0
    %3820 = vmatprep.subr.mxu0 0.0
    %3821 = vmatpush1.msra.mxu0 %v3810
    %3822 = vmatprep.subr.mxu0 0.0
    %3823 = vmatpush1.msra.mxu0 %v3811
    %3824 = vmatprep.subr.mxu0 0.0
    %3825 = vmatpush1.msra.mxu0 0.0
    %3826 = vmatprep.subr.mxu0 0.0
    %3827 = vmatpush1.msra.mxu0 0.0
    %3828 = vmatprep.subr.mxu0 0.0
    %3829 = vmatpush1.msra.mxu0 0.0
    %3830 = vmatprep.subr.mxu0 0.0
    %3831 = vmatpush1.msra.mxu0 0.0
    %3832 = vmatprep.subr.mxu0 0.0
    %3833 = vmatpush1.msra.mxu0 0.0
    %3834 = vmatprep.subr.mxu0 0.0
    %3835 = vmatpush1.msra.mxu0 0.0
    %3836 = vmatprep.subr.mxu0 0.0
    %3837 = vmatpush1.msra.mxu0 0.0
    %3838 = vmatprep.subr.mxu0 0.0
    %3839 = vmatpush1.msra.mxu0 0.0
    %3840 = vmatprep.subr.mxu0 0.0
    %3841 = vmatpush1.msra.mxu0 0.0
    %3842 = vmatprep.subr.mxu0 0.0
    %3843 = vmatpush1.msra.mxu0 0.0
    %3844 = vmatprep.subr.mxu0 0.0
    %3845 = vmatpush1.msra.mxu0 0.0
    %3846 = vmatprep.subr.mxu0 0.0
    %3847 = vmatpush1.msra.mxu0 0.0
    %3848 = vmatprep.subr.mxu0 0.0
    %3849 = vmatpush1.msra.mxu0 0.0
    %3850 = vmatprep.subr.mxu0 0.0
    %3851 = vmatpush1.msra.mxu0 0.0
    %3852 = vmatprep.subr.mxu0 0.0
    %3853 = vmatpush1.msra.mxu0 0.0
    %3854 = vmatprep.subr.mxu0 0.0
    %3855 = vmatpush1.msra.mxu0 0.0
    %3856 = vmatprep.subr.mxu0 0.0
    %3857 = vmatpush1.msra.mxu0 0.0
    %3858 = vmatprep.subr.mxu0 0.0
    %3859 = vmatpush1.msra.mxu0 0.0
    %3860 = vmatprep.subr.mxu0 0.0
    %3861 = vmatpush1.msra.mxu0 0.0
    %3862 = vmatprep.subr.mxu0 0.0
    %3863 = vmatpush1.msra.mxu0 0.0
    %3864 = vmatprep.subr.mxu0 0.0
    %3865 = vmatpush1.msra.mxu0 0.0
    %3866 = vmatprep.subr.mxu0 0.0
    %3867 = vmatpush1.msra.mxu0 0.0
    %3868 = vmatprep.subr.mxu0 0.0
    %3869 = vmatpush1.msra.mxu0 0.0
    %3870 = vmatprep.subr.mxu0 0.0
    %3871 = vmatpush1.msra.mxu0 0.0
    %3872 = vmatprep.subr.mxu0 0.0
    %3873 = vmatpush1.msra.mxu0 0.0
    %3874 = vmatprep.subr.mxu0 0.0
    %3875 = vmatpush1.msra.mxu0 0.0
    %3876 = vmatprep.subr.mxu0 0.0
    %3877 = vmatpush1.msra.mxu0 0.0
    %3878 = vmatprep.subr.mxu0 0.0
    %3879 = vmatpush1.msra.mxu0 0.0
    %3880 = vmatprep.subr.mxu0 0.0
    %3881 = vmatpush1.msra.mxu0 0.0
    %3882 = vmatprep.subr.mxu0 0.0
    %3883 = vmatpush1.msra.mxu0 0.0
    %3884 = vmatprep.mubr.f32.mxu0 0.0
    %3885 = vmatmul.mubr.f32.gmra.mrb[0].mxu0 %v3815
    %v3886 = vpop.f32.mrb[0].mxu0
    %v3887 = vadd.f32 0.0, %v3886
    %v3888 = vpop.f32.mrb[0].mxu0
    %3889 = vmatprep.mubr.f32.mxu0 0.0
    %3890 = vmatmul.mubr.f32.gmra.mrb[0].mxu0 %v3818
    %v3891 = vpop.f32.mrb[0].mxu0
    %v3892 = vadd.f32 0.0, %v3891
    %v3893 = vpop.f32.mrb[0].mxu0
    %3894 = vdwg.mxu0
    %v3895 = vld [vmem:[%s2228] sm:$0xff]
    %v3896 = vld [vmem:[%s2228 + $0x8] sm:$0xff]
    %v3897 = vld [vmem:[%s2228 + $0x10] sm:$0xff]
    %v3898 = vld [vmem:[%s2228 + $0x18] sm:$0xff]
    %v3899 = vld [vmem:[%s2228 + $0x20] sm:$0xff]
    %v3900 = vld [vmem:[%s2228 + $0x28] sm:$0xff]
    %v3901 = vld [vmem:[%s2228 + $0x30] sm:$0xff]
    %v3902 = vld [vmem:[%s2228 + $0x38] sm:$0xff]
    %v3903 = vld [vmem:[%s2228 + $0x40] sm:$0xff]
    %v3904 = vld [vmem:[%s2228 + $0x48] sm:$0xff]
    %v3905 = vld [vmem:[%s2228 + $0x50] sm:$0xff]
    %v3906 = vld [vmem:[%s2228 + $0x58] sm:$0xff]
    %v3907 = vld [vmem:[%s2228 + $0x60] sm:$0xff]
    %v3908 = vld [vmem:[%s2228 + $0x68] sm:$0xff]
    %v3909 = vld [vmem:[%s2228 + $0x70] sm:$0xff]
    %v3910 = vld [vmem:[%s2228 + $0x78] sm:$0xff]
    %3911 = vmatprep.subr.mxu0 0.0
    %3912 = vmatpush1.msra.mxu0 %v3895
    %3913 = vmatprep.subr.mxu0 0.0
    %3914 = vmatpush1.msra.mxu0 %v3896
    %3915 = vmatprep.subr.mxu0 0.0
    %3916 = vmatpush1.msra.mxu0 %v3897
    %3917 = vmatprep.subr.mxu0 0.0
    %3918 = vmatpush1.msra.mxu0 %v3898
    %3919 = vmatprep.subr.mxu0 0.0
    %3920 = vmatpush1.msra.mxu0 %v3899
    %3921 = vmatprep.subr.mxu0 0.0
    %3922 = vmatpush1.msra.mxu0 %v3900
    %3923 = vmatprep.subr.mxu0 0.0
    %3924 = vmatpush1.msra.mxu0 %v3901
    %3925 = vmatprep.subr.mxu0 0.0
    %3926 = vmatpush1.msra.mxu0 %v3902
    %3927 = vmatprep.subr.mxu0 0.0
    %3928 = vmatpush1.msra.mxu0 %v3903
    %3929 = vmatprep.subr.mxu0 0.0
    %3930 = vmatpush1.msra.mxu0 %v3904
    %3931 = vmatprep.subr.mxu0 0.0
    %3932 = vmatpush1.msra.mxu0 %v3905
    %3933 = vmatprep.subr.mxu0 0.0
    %3934 = vmatpush1.msra.mxu0 %v3906
    %3935 = vmatprep.subr.mxu0 0.0
    %3936 = vmatpush1.msra.mxu0 %v3907
    %3937 = vmatprep.subr.mxu0 0.0
    %3938 = vmatpush1.msra.mxu0 %v3908
    %3939 = vmatprep.subr.mxu0 0.0
    %3940 = vmatpush1.msra.mxu0 %v3909
    %3941 = vmatprep.subr.mxu0 0.0
    %3942 = vmatpush1.msra.mxu0 %v3910
    %3943 = vmatprep.subr.mxu0 0.0
    %3944 = vmatpush1.msra.mxu0 0.0
    %3945 = vmatprep.subr.mxu0 0.0
    %3946 = vmatpush1.msra.mxu0 0.0
    %3947 = vmatprep.subr.mxu0 0.0
    %3948 = vmatpush1.msra.mxu0 0.0
    %3949 = vmatprep.subr.mxu0 0.0
    %3950 = vmatpush1.msra.mxu0 0.0
    %3951 = vmatprep.subr.mxu0 0.0
    %3952 = vmatpush1.msra.mxu0 0.0
    %3953 = vmatprep.subr.mxu0 0.0
    %3954 = vmatpush1.msra.mxu0 0.0
    %3955 = vmatprep.subr.mxu0 0.0
    %3956 = vmatpush1.msra.mxu0 0.0
    %3957 = vmatprep.subr.mxu0 0.0
    %3958 = vmatpush1.msra.mxu0 0.0
    %3959 = vmatprep.subr.mxu0 0.0
    %3960 = vmatpush1.msra.mxu0 0.0
    %3961 = vmatprep.subr.mxu0 0.0
    %3962 = vmatpush1.msra.mxu0 0.0
    %3963 = vmatprep.subr.mxu0 0.0
    %3964 = vmatpush1.msra.mxu0 0.0
    %3965 = vmatprep.subr.mxu0 0.0
    %3966 = vmatpush1.msra.mxu0 0.0
    %3967 = vmatprep.subr.mxu0 0.0
    %3968 = vmatpush1.msra.mxu0 0.0
    %3969 = vmatprep.subr.mxu0 0.0
    %3970 = vmatpush1.msra.mxu0 0.0
    %3971 = vmatprep.subr.mxu0 0.0
    %3972 = vmatpush1.msra.mxu0 0.0
    %3973 = vmatprep.subr.mxu0 0.0
    %3974 = vmatpush1.msra.mxu0 0.0
    %3975 = vmatprep.mubr.f32.mxu0 0.0
    %3976 = vmatmul.mubr.f32.gmra.mrb[0].mxu0 %v3887
    %v3977 = vpop.f32.mrb[0].mxu0
    %v3978 = vadd.f32 0.0, %v3977
    %v3979 = vpop.f32.mrb[0].mxu0
    %3980 = vmatprep.mubr.f32.mxu0 0.0
    %3981 = vmatmul.mubr.f32.gmra.mrb[0].mxu0 %v3892
    %v3982 = vpop.f32.mrb[0].mxu0
    %v3983 = vadd.f32 0.0, %v3982
    %v3984 = vpop.f32.mrb[0].mxu0
    %3985 = vdwg.mxu0
    %v3986 = vadd.f32 %v2132, %v3978
    %v3987 = vadd.f32 %v2137, %v3983
    %v3988 = vtanh.pop %v3986
    %v3989 = vtanh.pop %v3987
    %v3990 = vmul.f32 %v3988, 0.9
    %v3991 = vmul.f32 %v3989, 0.9
    %v3992 = vmul.f32 %v3810, 0.1
    %v3993 = vmul.f32 %v3811, 0.1
    %v3994 = vadd.f32 %v3990, %v3992
    %v3995 = vadd.f32 %v3991, %v3993
    %s3996 = scalar_select %p3809, 1, 0
    %v3997 = vstv %s3996
    %vm3998 = vcmp.eq.s32.totalorder %v3997, 1
    %v3999 = vsel %vm3998, %v3810, %v3994
    %v4000 = vsel %vm3998, %v3811, %v3995
    %4001 = vst [vmem:[%s2140] sm:$0xff] %v3999
    %4002 = vst [vmem:[%s2140 + $0x8] sm:$0xff] %v4000
    // Predicated region
    $region38: #{tpu_custom_call.1} parent=1 // pred_check
      _
    $region39: #{tpu_custom_call.1} parent=1 // pred_check_branch
      %4004 = sbr.rel (0) target = $region41
    $region40: #{tpu_custom_call.1} parent=1 // pred_region
      %s4006 = ssub.s32 512, 512
      %4007 = vsyncadd [#allocation4], %s4006
      %s4008 = sshll.u32 [#allocation10], 4
      %s4009 = int_to_ptr.vmem [resolvable:$true] %s4008
      %4014 = dma.vmem_to_hbm [thread:$0]  %s4009, 512, %s5, [#allocation4], 128, 128, 8
    $region41: #{tpu_custom_call.1} parent=1 // pred_fallthru
      _
    // Predicated region
    $region42: #{tpu_custom_call.1} parent=1 // pred_check
      _
    $region43: #{tpu_custom_call.1} parent=1 // pred_check_branch
      %4016 = sbr.rel (0) target = $region45
    $region44: #{tpu_custom_call.1} parent=1 // pred_region
      %4017 = dma.done [#allocation4], 512
    $region45: #{tpu_custom_call.1} parent=1 // pred_fallthru
      _
    %4018 = vsyncpa [#allocation3], 1
    %4019 = vsyncpa [#allocation6], 1
    %4020 = vsyncpa [#allocation9], 1
    %4021 = vsyncpa [#allocation4], 1

// kernel: tpu_custom_call.1
$region0: #{tpu_custom_call.1}
  #allocation0 [shape = 'u32[]', space=smem, size = 0x4, offset = 0x4, fixed_abs, tag = 'smem constant byte address 0x4 - core index']
  #allocation1 [shape = 'u32[144,128]{1,0:T(1,128)}', space=vmem, size = 0x12000, scoped, tag = 'internal scratch']
  %s0 = inlined_call_operand.hbm [shape: f32[16,16], index: 0, kind: input, shape index: {}]
  %s1 = inlined_call_operand.hbm [shape: f32[16,128], index: 1, kind: input, shape index: {}]
  %s2 = inlined_call_operand.hbm [shape: f32[2,128,128], index: 2, kind: input, shape index: {}]
  %s3 = inlined_call_operand.hbm [shape: f32[2,128,128], index: 3, kind: input, shape index: {}]
  %s4 = inlined_call_operand.vmem [shape: f32[2,1,128], index: 4, kind: input, shape index: {}]
  %s5 = inlined_call_operand.hbm [shape: f32[2,16,128], index: 5, kind: output, shape index: {}]
  %s6 = sld [smem:[#allocation0]]
  $region46: #{tpu_custom_call.1} parent=0
    _
  %s8 = ssub.s32 1, %s6
  %s9 = scalar_select 0, %s8, %s6
  $region1: #{tpu_custom_call.1} parent=0
    #allocation2 [shape = 'u8[8192]{0}', space=vmem, size = 0x2000, scoped, tag = 'input window, operand 0, single buffered']
    #allocation3 [shape = 's32[1]{0}', space=sflag, size = 0x4, scoped, tag = 'scoped memory for tpu_custom_call.1']
    #allocation4 [shape = 's32[1]{0}', space=sflag, size = 0x4, scoped, tag = 'scoped memory for tpu_custom_call.1']
    #allocation5 [shape = 'u8[8192]{0}', space=vmem, size = 0x2000, scoped, tag = 'input window, operand 1, single buffered']
    #allocation6 [shape = 's32[1]{0}', space=sflag, size = 0x4, scoped, tag = 'scoped memory for tpu_custom_call.1']
    #allocation7 [shape = 'u8[131072]{0}', space=vmem, size = 0x20000, scoped, tag = 'input window, operand 2, single buffered']
    #allocation8 [shape = 'u8[131072]{0}', space=vmem, size = 0x20000, scoped, tag = 'input window, operand 3, single buffered']
    #allocation9 [shape = 's32[1]{0}', space=sflag, size = 0x4, scoped, tag = 'scoped memory for tpu_custom_call.1']
    #allocation10 [shape = 'u8[16384]{0}', space=vmem, size = 0x4000, scoped, tag = 'output window, operand 0, single buffered']
    %10 = vsyncpa [#allocation3], 0
    %11 = vsyncpa [#allocation6], 0
    %12 = vsyncpa [#allocation9], 0
    %13 = vsyncpa [#allocation4], 0
    // Predicated region
    $region2: #{tpu_custom_call.1} parent=1 // pred_check
      _
    $region3: #{tpu_custom_call.1} parent=1 // pred_check_branch
      %15 = sbr.rel (0) target = $region5
    $region4: #{tpu_custom_call.1} parent=1 // pred_region
      %s17 = ssub.s32 256, 256
      %18 = vsyncadd [#allocation3], %s17
      %s19 = sshll.u32 [#allocation2], 4
      %s20 = int_to_ptr.vmem [resolvable:$true] %s19
      %25 = dma.hbm_to_vmem [thread:$0]  %s0, 256, %s20, [#allocation3], 128, 128, 8
    $region5: #{tpu_custom_call.1} parent=1 // pred_fallthru
      _
    // Predicated region
    $region6: #{tpu_custom_call.1} parent=1 // pred_check
      _
    $region7: #{tpu_custom_call.1} parent=1 // pred_check_branch
      %27 = sbr.rel (0) target = $region9
    $region8: #{tpu_custom_call.1} parent=1 // pred_region
      %s29 = ssub.s32 256, 256
      %30 = vsyncadd [#allocation6], %s29
      %s31 = sshll.u32 [#allocation5], 4
      %s32 = int_to_ptr.vmem [resolvable:$true] %s31
      %37 = dma.hbm_to_vmem [thread:$0]  %s1, 256, %s32, [#allocation6], 128, 128, 8
    $region9: #{tpu_custom_call.1} parent=1 // pred_fallthru
      _
    // Predicated region
    $region10: #{tpu_custom_call.1} parent=1 // pred_check
      _
    $region11: #{tpu_custom_call.1} parent=1 // pred_check_branch
      %39 = sbr.rel (0) target = $region13
    $region12: #{tpu_custom_call.1} parent=1 // pred_region
      %s41 = ssub.s32 4096, 4096
      %42 = vsyncadd [#allocation6], %s41
      %s43 = sshll.u32 [#allocation7], 4
      %s44 = int_to_ptr.vmem [resolvable:$true] %s43
      %49 = dma.hbm_to_vmem [thread:$0]  %s2, 4096, %s44, [#allocation6], 128, 128, 8
    $region13: #{tpu_custom_call.1} parent=1 // pred_fallthru
      _
    // Predicated region
    $region14: #{tpu_custom_call.1} parent=1 // pred_check
      _
    $region15: #{tpu_custom_call.1} parent=1 // pred_check_branch
      %51 = sbr.rel (0) target = $region17
    $region16: #{tpu_custom_call.1} parent=1 // pred_region
      %s53 = ssub.s32 4096, 4096
      %54 = vsyncadd [#allocation9], %s53
      %s55 = sshll.u32 [#allocation8], 4
      %s56 = int_to_ptr.vmem [resolvable:$true] %s55
      %61 = dma.hbm_to_vmem [thread:$0]  %s3, 4096, %s56, [#allocation9], 128, 128, 8
    $region17: #{tpu_custom_call.1} parent=1 // pred_fallthru
      _
    // Predicated region
    $region18: #{tpu_custom_call.1} parent=1 // pred_check
      _
    $region19: #{tpu_custom_call.1} parent=1 // pred_check_branch
      %63 = sbr.rel (0) target = $region21
    $region20: #{tpu_custom_call.1} parent=1 // pred_region
      _
    $region21: #{tpu_custom_call.1} parent=1 // pred_fallthru
      _
    // Predicated region
    $region22: #{tpu_custom_call.1} parent=1 // pred_check
      _
    $region23: #{tpu_custom_call.1} parent=1 // pred_check_branch
      %65 = sbr.rel (0) target = $region25
    $region24: #{tpu_custom_call.1} parent=1 // pred_region
      %66 = dma.done [#allocation3], 256
    $region25: #{tpu_custom_call.1} parent=1 // pred_fallthru
      _
    // Predicated region
    $region26: #{tpu_custom_call.1} parent=1 // pred_check
      _
    $region27: #{tpu_custom_call.1} parent=1 // pred_check_branch
      %68 = sbr.rel (0) target = $region29
    $region28: #{tpu_custom_call.1} parent=1 // pred_region
      %69 = dma.done [#allocation6], 256
    $region29: #{tpu_custom_call.1} parent=1 // pred_fallthru
      _
    // Predicated region
    $region30: #{tpu_custom_call.1} parent=1 // pred_check
      _
    $region31: #{tpu_custom_call.1} parent=1 // pred_check_branch
      %71 = sbr.rel (0) target = $region33
    $region32: #{tpu_custom_call.1} parent=1 // pred_region
      %72 = dma.done [#allocation6], 4096
    $region33: #{tpu_custom_call.1} parent=1 // pred_fallthru
      _
    // Predicated region
    $region34: #{tpu_custom_call.1} parent=1 // pred_check
      _
    $region35: #{tpu_custom_call.1} parent=1 // pred_check_branch
      %74 = sbr.rel (0) target = $region37
    $region36: #{tpu_custom_call.1} parent=1 // pred_region
      %75 = dma.done [#allocation9], 4096
    $region37: #{tpu_custom_call.1} parent=1 // pred_fallthru
      _
    %v76 = vld [vmem:[#allocation5] sm:$0xff]
    %v77 = vld [vmem:[#allocation5 + $0x8] sm:$0xff]
    %v78 = vld [vmem:[#allocation7] sm:$0xff]
    %v79 = vld [vmem:[#allocation7 + $0x8] sm:$0xff]
    %v80 = vld [vmem:[#allocation7 + $0x10] sm:$0xff]
    %v81 = vld [vmem:[#allocation7 + $0x18] sm:$0xff]
    %v82 = vld [vmem:[#allocation7 + $0x20] sm:$0xff]
    %v83 = vld [vmem:[#allocation7 + $0x28] sm:$0xff]
    %v84 = vld [vmem:[#allocation7 + $0x30] sm:$0xff]
    %v85 = vld [vmem:[#allocation7 + $0x38] sm:$0xff]
    %v86 = vld [vmem:[#allocation7 + $0x40] sm:$0xff]
    %v87 = vld [vmem:[#allocation7 + $0x48] sm:$0xff]
    %v88 = vld [vmem:[#allocation7 + $0x50] sm:$0xff]
    %v89 = vld [vmem:[#allocation7 + $0x58] sm:$0xff]
    %v90 = vld [vmem:[#allocation7 + $0x60] sm:$0xff]
    %v91 = vld [vmem:[#allocation7 + $0x68] sm:$0xff]
    %v92 = vld [vmem:[#allocation7 + $0x70] sm:$0xff]
    %v93 = vld [vmem:[#allocation7 + $0x78] sm:$0xff]
    %v94 = vld [vmem:[%s4] sm:$0x1]
    %v96 = vlaneseq
    %v97 = vshrl.u32 %v96, 7
    %v98 = vsub.s32 0, %v97
    %v99 = vrot.slane %v94, %v98
    %101 = vmatprep.subr.mxu0 0.0
    %102 = vmatpush1.msra.mxu0 %v78
    %103 = vmatprep.subr.mxu0 0.0
    %104 = vmatpush1.msra.mxu0 %v79
    %105 = vmatprep.subr.mxu0 0.0
    %106 = vmatpush1.msra.mxu0 %v80
    %107 = vmatprep.subr.mxu0 0.0
    %108 = vmatpush1.msra.mxu0 %v81
    %109 = vmatprep.subr.mxu0 0.0
    %110 = vmatpush1.msra.mxu0 %v82
    %111 = vmatprep.subr.mxu0 0.0
    %112 = vmatpush1.msra.mxu0 %v83
    %113 = vmatprep.subr.mxu0 0.0
    %114 = vmatpush1.msra.mxu0 %v84
    %115 = vmatprep.subr.mxu0 0.0
    %116 = vmatpush1.msra.mxu0 %v85
    %117 = vmatprep.subr.mxu0 0.0
    %118 = vmatpush1.msra.mxu0 %v86
    %119 = vmatprep.subr.mxu0 0.0
    %120 = vmatpush1.msra.mxu0 %v87
    %121 = vmatprep.subr.mxu0 0.0
    %122 = vmatpush1.msra.mxu0 %v88
    %123 = vmatprep.subr.mxu0 0.0
    %124 = vmatpush1.msra.mxu0 %v89
    %125 = vmatprep.subr.mxu0 0.0
    %126 = vmatpush1.msra.mxu0 %v90
    %127 = vmatprep.subr.mxu0 0.0
    %128 = vmatpush1.msra.mxu0 %v91
    %129 = vmatprep.subr.mxu0 0.0
    %130 = vmatpush1.msra.mxu0 %v92
    %131 = vmatprep.subr.mxu0 0.0
    %132 = vmatpush1.msra.mxu0 %v93
    %133 = vmatprep.subr.mxu0 0.0
    %134 = vmatpush1.msra.mxu0 0.0
    %135 = vmatprep.subr.mxu0 0.0
    %136 = vmatpush1.msra.mxu0 0.0
    %137 = vmatprep.subr.mxu0 0.0
    %138 = vmatpush1.msra.mxu0 0.0
    %139 = vmatprep.subr.mxu0 0.0
    %140 = vmatpush1.msra.mxu0 0.0
    %141 = vmatprep.subr.mxu0 0.0
    %142 = vmatpush1.msra.mxu0 0.0
    %143 = vmatprep.subr.mxu0 0.0
    %144 = vmatpush1.msra.mxu0 0.0
    %145 = vmatprep.subr.mxu0 0.0
    %146 = vmatpush1.msra.mxu0 0.0
    %147 = vmatprep.subr.mxu0 0.0
    %148 = vmatpush1.msra.mxu0 0.0
    %149 = vmatprep.subr.mxu0 0.0
    %150 = vmatpush1.msra.mxu0 0.0
    %151 = vmatprep.subr.mxu0 0.0
    %152 = vmatpush1.msra.mxu0 0.0
    %153 = vmatprep.subr.mxu0 0.0
    %154 = vmatpush1.msra.mxu0 0.0
    %155 = vmatprep.subr.mxu0 0.0
    %156 = vmatpush1.msra.mxu0 0.0
    %157 = vmatprep.subr.mxu0 0.0
    %158 = vmatpush1.msra.mxu0 0.0
    %159 = vmatprep.subr.mxu0 0.0
    %160 = vmatpush1.msra.mxu0 0.0
    %161 = vmatprep.subr.mxu0 0.0
    %162 = vmatpush1.msra.mxu0 0.0
    %163 = vmatprep.subr.mxu0 0.0
    %164 = vmatpush1.msra.mxu0 0.0
    %165 = vmatprep.mubr.f32.mxu0 0.0
    %166 = vmatmul.mubr.f32.gmra.mrb[0].mxu0 %v76
    %v167 = vpop.f32.mrb[0].mxu0
    %v168 = vadd.f32 %v99, %v167
    %v169 = vpop.f32.mrb[0].mxu0
    %170 = vmatprep.mubr.f32.mxu0 0.0
    %171 = vmatmul.mubr.f32.gmra.mrb[0].mxu0 %v77
    %v172 = vpop.f32.mrb[0].mxu0
    %v173 = vadd.f32 %v99, %v172
    %v174 = vpop.f32.mrb[0].mxu0
    %175 = vdwg.mxu0
    %176 = vst [vmem:[#allocation10] sm:$0xff] 0.0
    %177 = vst [vmem:[#allocation10 + $0x8] sm:$0xff] 0.0
    %v178 = vld [vmem:[#allocation10] sm:$0xff]
    %v179 = vld [vmem:[#allocation10 + $0x8] sm:$0xff]
    %v180 = vld [vmem:[#allocation2] sm:$0xff]
    %v181 = vld [vmem:[#allocation2 + $0x8] sm:$0xff]
    %vm182 = vcmask 130048
    %v184 = vsel %vm182, %v180, 0
    %v187 = vsel %vm182, %v181, 0
    %189 = vmatprep.subr.mxu0 0.0
    %190 = vmatpush1.msra.mxu0 %v178
    %191 = vmatprep.subr.mxu0 0.0
    %192 = vmatpush1.msra.mxu0 %v179
    %193 = vmatprep.subr.mxu0 0.0
    %194 = vmatpush1.msra.mxu0 0.0
    %195 = vmatprep.subr.mxu0 0.0
    %196 = vmatpush1.msra.mxu0 0.0
    %197 = vmatprep.subr.mxu0 0.0
    %198 = vmatpush1.msra.mxu0 0.0
    %199 = vmatprep.subr.mxu0 0.0
    %200 = vmatpush1.msra.mxu0 0.0
    %201 = vmatprep.subr.mxu0 0.0
    %202 = vmatpush1.msra.mxu0 0.0
    %203 = vmatprep.subr.mxu0 0.0
    %204 = vmatpush1.msra.mxu0 0.0
    %205 = vmatprep.subr.mxu0 0.0
    %206 = vmatpush1.msra.mxu0 0.0
    %207 = vmatprep.subr.mxu0 0.0
    %208 = vmatpush1.msra.mxu0 0.0
    %209 = vmatprep.subr.mxu0 0.0
    %210 = vmatpush1.msra.mxu0 0.0
    %211 = vmatprep.subr.mxu0 0.0
    %212 = vmatpush1.msra.mxu0 0.0
    %213 = vmatprep.subr.mxu0 0.0
    %214 = vmatpush1.msra.mxu0 0.0
    %215 = vmatprep.subr.mxu0 0.0
    %216 = vmatpush1.msra.mxu0 0.0
    %217 = vmatprep.subr.mxu0 0.0
    %218 = vmatpush1.msra.mxu0 0.0
    %219 = vmatprep.subr.mxu0 0.0
    %220 = vmatpush1.msra.mxu0 0.0
    %221 = vmatprep.subr.mxu0 0.0
    %222 = vmatpush1.msra.mxu0 0.0
    %223 = vmatprep.subr.mxu0 0.0
    %224 = vmatpush1.msra.mxu0 0.0
    %225 = vmatprep.subr.mxu0 0.0
    %226 = vmatpush1.msra.mxu0 0.0
    %227 = vmatprep.subr.mxu0 0.0
    %228 = vmatpush1.msra.mxu0 0.0
    %229 = vmatprep.subr.mxu0 0.0
    %230 = vmatpush1.msra.mxu0 0.0
    %231 = vmatprep.subr.mxu0 0.0
    %232 = vmatpush1.msra.mxu0 0.0
    %233 = vmatprep.subr.mxu0 0.0
    %234 = vmatpush1.msra.mxu0 0.0
    %235 = vmatprep.subr.mxu0 0.0
    %236 = vmatpush1.msra.mxu0 0.0
    %237 = vmatprep.subr.mxu0 0.0
    %238 = vmatpush1.msra.mxu0 0.0
    %239 = vmatprep.subr.mxu0 0.0
    %240 = vmatpush1.msra.mxu0 0.0
    %241 = vmatprep.subr.mxu0 0.0
    %242 = vmatpush1.msra.mxu0 0.0
    %243 = vmatprep.subr.mxu0 0.0
    %244 = vmatpush1.msra.mxu0 0.0
    %245 = vmatprep.subr.mxu0 0.0
    %246 = vmatpush1.msra.mxu0 0.0
    %247 = vmatprep.subr.mxu0 0.0
    %248 = vmatpush1.msra.mxu0 0.0
    %249 = vmatprep.subr.mxu0 0.0
    %250 = vmatpush1.msra.mxu0 0.0
    %251 = vmatprep.subr.mxu0 0.0
    %252 = vmatpush1.msra.mxu0 0.0
    %253 = vmatprep.mubr.f32.mxu0 0.0
    %254 = vmatmul.mubr.f32.gmra.mrb[0].mxu0 %v184
    %v255 = vpop.f32.mrb[0].mxu0
    %v256 = vadd.f32 0.0, %v255
    %v257 = vpop.f32.mrb[0].mxu0
    %258 = vmatprep.mubr.f32.mxu0 0.0
    %259 = vmatmul.mubr.f32.gmra.mrb[0].mxu0 %v187
    %v260 = vpop.f32.mrb[0].mxu0
    %v261 = vadd.f32 0.0, %v260
    %v262 = vpop.f32.mrb[0].mxu0
    %263 = vdwg.mxu0
    %v264 = vld [vmem:[#allocation8] sm:$0xff]
    %v265 = vld [vmem:[#allocation8 + $0x8] sm:$0xff]
    %v266 = vld [vmem:[#allocation8 + $0x10] sm:$0xff]
    %v267 = vld [vmem:[#allocation8 + $0x18] sm:$0xff]
    %v268 = vld [vmem:[#allocation8 + $0x20] sm:$0xff]
    %v269 = vld [vmem:[#allocation8 + $0x28] sm:$0xff]
    %v270 = vld [vmem:[#allocation8 + $0x30] sm:$0xff]
    %v271 = vld [vmem:[#allocation8 + $0x38] sm:$0xff]
    %v272 = vld [vmem:[#allocation8 + $0x40] sm:$0xff]
    %v273 = vld [vmem:[#allocation8 + $0x48] sm:$0xff]
    %v274 = vld [vmem:[#allocation8 + $0x50] sm:$0xff]
    %v275 = vld [vmem:[#allocation8 + $0x58] sm:$0xff]
    %v276 = vld [vmem:[#allocation8 + $0x60] sm:$0xff]
    %v277 = vld [vmem:[#allocation8 + $0x68] sm:$0xff]
    %v278 = vld [vmem:[#allocation8 + $0x70] sm:$0xff]
    %v279 = vld [vmem:[#allocation8 + $0x78] sm:$0xff]
    %280 = vmatprep.subr.mxu0 0.0
    %281 = vmatpush1.msra.mxu0 %v264
    %282 = vmatprep.subr.mxu0 0.0
    %283 = vmatpush1.msra.mxu0 %v265
    %284 = vmatprep.subr.mxu0 0.0
    %285 = vmatpush1.msra.mxu0 %v266
    %286 = vmatprep.subr.mxu0 0.0
    %287 = vmatpush1.msra.mxu0 %v267
    %288 = vmatprep.subr.mxu0 0.0
    %289 = vmatpush1.msra.mxu0 %v268
    %290 = vmatprep.subr.mxu0 0.0
    %291 = vmatpush1.msra.mxu0 %v269
    %292 = vmatprep.subr.mxu0 0.0
    %293 = vmatpush1.msra.mxu0 %v270
    %294 = vmatprep.subr.mxu0 0.0
    %295 = vmatpush1.msra.mxu0 %v271
    %296 = vmatprep.subr.mxu0 0.0
    %297 = vmatpush1.msra.mxu0 %v272
    %298 = vmatprep.subr.mxu0 0.0
    %299 = vmatpush1.msra.mxu0 %v273
    %300 = vmatprep.subr.mxu0 0.0
    %301 = vmatpush1.msra.mxu0 %v274
    %302 = vmatprep.subr.mxu0 0.0
    %303 = vmatpush1.msra.mxu0 %v275
    %304 = vmatprep.subr.mxu0 0.0
    %305 = vmatpush1.msra.mxu0 %v276
    %306 = vmatprep.subr.mxu0 0.0
    %307 = vmatpush1.msra.mxu0 %v277
    %308 = vmatprep.subr.mxu0 0.0
    %309 = vmatpush1.msra.mxu0 %v278
    %310 = vmatprep.subr.mxu0 0.0
    %311 = vmatpush1.msra.mxu0 %v279
    %312 = vmatprep.subr.mxu0 0.0
    %313 = vmatpush1.msra.mxu0 0.0
    %314 = vmatprep.subr.mxu0 0.0
    %315 = vmatpush1.msra.mxu0 0.0
    %316 = vmatprep.subr.mxu0 0.0
    %317 = vmatpush1.msra.mxu0 0.0
    %318 = vmatprep.subr.mxu0 0.0
    %319 = vmatpush1.msra.mxu0 0.0
    %320 = vmatprep.subr.mxu0 0.0
    %321 = vmatpush1.msra.mxu0 0.0
    %322 = vmatprep.subr.mxu0 0.0
    %323 = vmatpush1.msra.mxu0 0.0
    %324 = vmatprep.subr.mxu0 0.0
    %325 = vmatpush1.msra.mxu0 0.0
    %326 = vmatprep.subr.mxu0 0.0
    %327 = vmatpush1.msra.mxu0 0.0
    %328 = vmatprep.subr.mxu0 0.0
    %329 = vmatpush1.msra.mxu0 0.0
    %330 = vmatprep.subr.mxu0 0.0
    %331 = vmatpush1.msra.mxu0 0.0
    %332 = vmatprep.subr.mxu0 0.0
    %333 = vmatpush1.msra.mxu0 0.0
    %334 = vmatprep.subr.mxu0 0.0
    %335 = vmatpush1.msra.mxu0 0.0
    %336 = vmatprep.subr.mxu0 0.0
    %337 = vmatpush1.msra.mxu0 0.0
    %338 = vmatprep.subr.mxu0 0.0
    %339 = vmatpush1.msra.mxu0 0.0
    %340 = vmatprep.subr.mxu0 0.0
    %341 = vmatpush1.msra.mxu0 0.0
    %342 = vmatprep.subr.mxu0 0.0
    %343 = vmatpush1.msra.mxu0 0.0
    %344 = vmatprep.mubr.f32.mxu0 0.0
    %345 = vmatmul.mubr.f32.gmra.mrb[0].mxu0 %v256
    %v346 = vpop.f32.mrb[0].mxu0
    %v347 = vadd.f32 0.0, %v346
    %v348 = vpop.f32.mrb[0].mxu0
    %349 = vmatprep.mubr.f32.mxu0 0.0
    %350 = vmatmul.mubr.f32.gmra.mrb[0].mxu0 %v261
    %v351 = vpop.f32.mrb[0].mxu0
    %v352 = vadd.f32 0.0, %v351
    %v353 = vpop.f32.mrb[0].mxu0
    %354 = vdwg.mxu0
    %v355 = vadd.f32 %v168, %v347
    %v356 = vadd.f32 %v173, %v352
    %v357 = vtanh.pop %v355
    %v358 = vtanh.pop %v356
    %v359 = vmul.f32 %v357, 0.9
    %v360 = vmul.f32 %v358, 0.9
    %v361 = vmul.f32 %v178, 0.1
    %v362 = vmul.f32 %v179, 0.1
    %v363 = vadd.f32 %v359, %v361
    %v364 = vadd.f32 %v360, %v362
    %v365 = vsub.f32 %v178, %v363
    %v366 = vsub.f32 %v179, %v364
    %v367 = vmul.f32 %v365, %v365
    %v368 = vmul.f32 %v366, %v366
    %v369 = vadd.f32 %v367, %v368
    %370 = vadd.xlane.f32.xlu0 %v369
    %v371 = vpop.xlane.xlu0 %370
    %v372 = vrot.slane %v371, 4
    %v373 = vadd.f32 %v371, %v372
    %v374 = vrot.slane %v373, 2
    %v375 = vadd.f32 %v373, %v374
    %v376 = vrot.slane %v375, 1
    %v377 = vadd.f32 %v375, %v376
    %s378 = vtos %v377
    %379 = vst [vmem:[#allocation10] sm:$0xff] %v363
    %380 = vst [vmem:[#allocation10 + $0x8] sm:$0xff] %v364
    %p381 = scmp.lt.f32.partialorder %s378, 1e-10
    %v382 = vld [vmem:[#allocation10] sm:$0xff]
    %v383 = vld [vmem:[#allocation10 + $0x8] sm:$0xff]
    %v384 = vld [vmem:[#allocation2] sm:$0xff]
    %v385 = vld [vmem:[#allocation2 + $0x8] sm:$0xff]
    %v387 = vsel %vm182, %v384, 0
    %v390 = vsel %vm182, %v385, 0
    %392 = vmatprep.subr.mxu0 0.0
    %393 = vmatpush1.msra.mxu0 %v382
    %394 = vmatprep.subr.mxu0 0.0
    %395 = vmatpush1.msra.mxu0 %v383
    %396 = vmatprep.subr.mxu0 0.0
    %397 = vmatpush1.msra.mxu0 0.0
    %398 = vmatprep.subr.mxu0 0.0
    %399 = vmatpush1.msra.mxu0 0.0
    %400 = vmatprep.subr.mxu0 0.0
    %401 = vmatpush1.msra.mxu0 0.0
    %402 = vmatprep.subr.mxu0 0.0
    %403 = vmatpush1.msra.mxu0 0.0
    %404 = vmatprep.subr.mxu0 0.0
    %405 = vmatpush1.msra.mxu0 0.0
    %406 = vmatprep.subr.mxu0 0.0
    %407 = vmatpush1.msra.mxu0 0.0
    %408 = vmatprep.subr.mxu0 0.0
    %409 = vmatpush1.msra.mxu0 0.0
    %410 = vmatprep.subr.mxu0 0.0
    %411 = vmatpush1.msra.mxu0 0.0
    %412 = vmatprep.subr.mxu0 0.0
    %413 = vmatpush1.msra.mxu0 0.0
    %414 = vmatprep.subr.mxu0 0.0
    %415 = vmatpush1.msra.mxu0 0.0
    %416 = vmatprep.subr.mxu0 0.0
    %417 = vmatpush1.msra.mxu0 0.0
    %418 = vmatprep.subr.mxu0 0.0
    %419 = vmatpush1.msra.mxu0 0.0
    %420 = vmatprep.subr.mxu0 0.0
    %421 = vmatpush1.msra.mxu0 0.0
    %422 = vmatprep.subr.mxu0 0.0
    %423 = vmatpush1.msra.mxu0 0.0
    %424 = vmatprep.subr.mxu0 0.0
    %425 = vmatpush1.msra.mxu0 0.0
    %426 = vmatprep.subr.mxu0 0.0
    %427 = vmatpush1.msra.mxu0 0.0
    %428 = vmatprep.subr.mxu0 0.0
    %429 = vmatpush1.msra.mxu0 0.0
    %430 = vmatprep.subr.mxu0 0.0
    %431 = vmatpush1.msra.mxu0 0.0
    %432 = vmatprep.subr.mxu0 0.0
    %433 = vmatpush1.msra.mxu0 0.0
    %434 = vmatprep.subr.mxu0 0.0
    %435 = vmatpush1.msra.mxu0 0.0
    %436 = vmatprep.subr.mxu0 0.0
    %437 = vmatpush1.msra.mxu0 0.0
    %438 = vmatprep.subr.mxu0 0.0
    %439 = vmatpush1.msra.mxu0 0.0
    %440 = vmatprep.subr.mxu0 0.0
    %441 = vmatpush1.msra.mxu0 0.0
    %442 = vmatprep.subr.mxu0 0.0
    %443 = vmatpush1.msra.mxu0 0.0
    %444 = vmatprep.subr.mxu0 0.0
    %445 = vmatpush1.msra.mxu0 0.0
    %446 = vmatprep.subr.mxu0 0.0
    %447 = vmatpush1.msra.mxu0 0.0
    %448 = vmatprep.subr.mxu0 0.0
    %449 = vmatpush1.msra.mxu0 0.0
    %450 = vmatprep.subr.mxu0 0.0
    %451 = vmatpush1.msra.mxu0 0.0
    %452 = vmatprep.subr.mxu0 0.0
    %453 = vmatpush1.msra.mxu0 0.0
    %454 = vmatprep.subr.mxu0 0.0
    %455 = vmatpush1.msra.mxu0 0.0
    %456 = vmatprep.mubr.f32.mxu0 0.0
    %457 = vmatmul.mubr.f32.gmra.mrb[0].mxu0 %v387
    %v458 = vpop.f32.mrb[0].mxu0
    %v459 = vadd.f32 0.0, %v458
    %v460 = vpop.f32.mrb[0].mxu0
    %461 = vmatprep.mubr.f32.mxu0 0.0
    %462 = vmatmul.mubr.f32.gmra.mrb[0].mxu0 %v390
    %v463 = vpop.f32.mrb[0].mxu0
    %v464 = vadd.f32 0.0, %v463
    %v465 = vpop.f32.mrb[0].mxu0
    %466 = vdwg.mxu0
    %v467 = vld [vmem:[#allocation8] sm:$0xff]
    %v468 = vld [vmem:[#allocation8 + $0x8] sm:$0xff]
    %v469 = vld [vmem:[#allocation8 + $0x10] sm:$0xff]
    %v470 = vld [vmem:[#allocation8 + $0x18] sm:$0xff]
    %v471 = vld [vmem:[#allocation8 + $0x20] sm:$0xff]
    %v472 = vld [vmem:[#allocation8 + $0x28] sm:$0xff]
    %v473 = vld [vmem:[#allocation8 + $0x30] sm:$0xff]
    %v474 = vld [vmem:[#allocation8 + $0x38] sm:$0xff]
    %v475 = vld [vmem:[#allocation8 + $0x40] sm:$0xff]
    %v476 = vld [vmem:[#allocation8 + $0x48] sm:$0xff]
    %v477 = vld [vmem:[#allocation8 + $0x50] sm:$0xff]
    %v478 = vld [vmem:[#allocation8 + $0x58] sm:$0xff]
    %v479 = vld [vmem:[#allocation8 + $0x60] sm:$0xff]
    %v480 = vld [vmem:[#allocation8 + $0x68] sm:$0xff]
    %v481 = vld [vmem:[#allocation8 + $0x70] sm:$0xff]
    %v482 = vld [vmem:[#allocation8 + $0x78] sm:$0xff]
    %483 = vmatprep.subr.mxu0 0.0
    %484 = vmatpush1.msra.mxu0 %v467
    %485 = vmatprep.subr.mxu0 0.0
    %486 = vmatpush1.msra.mxu0 %v468
    %487 = vmatprep.subr.mxu0 0.0
    %488 = vmatpush1.msra.mxu0 %v469
    %489 = vmatprep.subr.mxu0 0.0
    %490 = vmatpush1.msra.mxu0 %v470
    %491 = vmatprep.subr.mxu0 0.0
    %492 = vmatpush1.msra.mxu0 %v471
    %493 = vmatprep.subr.mxu0 0.0
    %494 = vmatpush1.msra.mxu0 %v472
    %495 = vmatprep.subr.mxu0 0.0
    %496 = vmatpush1.msra.mxu0 %v473
    %497 = vmatprep.subr.mxu0 0.0
    %498 = vmatpush1.msra.mxu0 %v474
    %499 = vmatprep.subr.mxu0 0.0
    %500 = vmatpush1.msra.mxu0 %v475
    %501 = vmatprep.subr.mxu0 0.0
    %502 = vmatpush1.msra.mxu0 %v476
    %503 = vmatprep.subr.mxu0 0.0
    %504 = vmatpush1.msra.mxu0 %v477
    %505 = vmatprep.subr.mxu0 0.0
    %506 = vmatpush1.msra.mxu0 %v478
    %507 = vmatprep.subr.mxu0 0.0
    %508 = vmatpush1.msra.mxu0 %v479
    %509 = vmatprep.subr.mxu0 0.0
    %510 = vmatpush1.msra.mxu0 %v480
    %511 = vmatprep.subr.mxu0 0.0
    %512 = vmatpush1.msra.mxu0 %v481
    %513 = vmatprep.subr.mxu0 0.0
    %514 = vmatpush1.msra.mxu0 %v482
    %515 = vmatprep.subr.mxu0 0.0
    %516 = vmatpush1.msra.mxu0 0.0
    %517 = vmatprep.subr.mxu0 0.0
    %518 = vmatpush1.msra.mxu0 0.0
    %519 = vmatprep.subr.mxu0 0.0
    %520 = vmatpush1.msra.mxu0 0.0
    %521 = vmatprep.subr.mxu0 0.0
    %522 = vmatpush1.msra.mxu0 0.0
    %523 = vmatprep.subr.mxu0 0.0
    %524 = vmatpush1.msra.mxu0 0.0
    %525 = vmatprep.subr.mxu0 0.0
    %526 = vmatpush1.msra.mxu0 0.0
    %527 = vmatprep.subr.mxu0 0.0
    %528 = vmatpush1.msra.mxu0 0.0
    %529 = vmatprep.subr.mxu0 0.0
    %530 = vmatpush1.msra.mxu0 0.0
    %531 = vmatprep.subr.mxu0 0.0
    %532 = vmatpush1.msra.mxu0 0.0
    %533 = vmatprep.subr.mxu0 0.0
    %534 = vmatpush1.msra.mxu0 0.0
    %535 = vmatprep.subr.mxu0 0.0
    %536 = vmatpush1.msra.mxu0 0.0
    %537 = vmatprep.subr.mxu0 0.0
    %538 = vmatpush1.msra.mxu0 0.0
    %539 = vmatprep.subr.mxu0 0.0
    %540 = vmatpush1.msra.mxu0 0.0
    %541 = vmatprep.subr.mxu0 0.0
    %542 = vmatpush1.msra.mxu0 0.0
    %543 = vmatprep.subr.mxu0 0.0
    %544 = vmatpush1.msra.mxu0 0.0
    %545 = vmatprep.subr.mxu0 0.0
    %546 = vmatpush1.msra.mxu0 0.0
    %547 = vmatprep.mubr.f32.mxu0 0.0
    %548 = vmatmul.mubr.f32.gmra.mrb[0].mxu0 %v459
    %v549 = vpop.f32.mrb[0].mxu0
    %v550 = vadd.f32 0.0, %v549
    %v551 = vpop.f32.mrb[0].mxu0
    %552 = vmatprep.mubr.f32.mxu0 0.0
    %553 = vmatmul.mubr.f32.gmra.mrb[0].mxu0 %v464
    %v554 = vpop.f32.mrb[0].mxu0
    %v555 = vadd.f32 0.0, %v554
    %v556 = vpop.f32.mrb[0].mxu0
    %557 = vdwg.mxu0
    %v558 = vadd.f32 %v168, %v550
    %v559 = vadd.f32 %v173, %v555
    %v560 = vtanh.pop %v558
    %v561 = vtanh.pop %v559
    %v562 = vmul.f32 %v560, 0.9
    %v563 = vmul.f32 %v561, 0.9
    %v564 = vmul.f32 %v382, 0.1
    %v565 = vmul.f32 %v383, 0.1
    %v566 = vadd.f32 %v562, %v564
    %v567 = vadd.f32 %v563, %v565
    %v568 = vsub.f32 %v382, %v566
    %v569 = vsub.f32 %v383, %v567
    %v570 = vmul.f32 %v568, %v568
    %v571 = vmul.f32 %v569, %v569
    %v572 = vadd.f32 %v570, %v571
    %573 = vadd.xlane.f32.xlu0 %v572
    %v574 = vpop.xlane.xlu0 %573
    %v575 = vrot.slane %v574, 4
    %v576 = vadd.f32 %v574, %v575
    %v577 = vrot.slane %v576, 2
    %v578 = vadd.f32 %v576, %v577
    %v579 = vrot.slane %v578, 1
    %v580 = vadd.f32 %v578, %v579
    %s581 = vtos %v580
    %s582 = scalar_select %p381, 1, 0
    %v583 = vstv %s582
    %vm584 = vcmp.eq.s32.totalorder %v583, 1
    %v585 = vsel %vm584, %v382, %v566
    %v586 = vsel %vm584, %v383, %v567
    %587 = vst [vmem:[#allocation10] sm:$0xff] %v585
    %588 = vst [vmem:[#allocation10 + $0x8] sm:$0xff] %v586
    %p589 = scmp.lt.f32.partialorder %s581, 1e-10
    %p590 = por %p381, %p589
    %v591 = vld [vmem:[#allocation10] sm:$0xff]
    %v592 = vld [vmem:[#allocation10 + $0x8] sm:$0xff]
    %v593 = vld [vmem:[#allocation2] sm:$0xff]
    %v594 = vld [vmem:[#allocation2 + $0x8] sm:$0xff]
    %v596 = vsel %vm182, %v593, 0
    %v599 = vsel %vm182, %v594, 0
    %601 = vmatprep.subr.mxu0 0.0
    %602 = vmatpush1.msra.mxu0 %v591
    %603 = vmatprep.subr.mxu0 0.0
    %604 = vmatpush1.msra.mxu0 %v592
    %605 = vmatprep.subr.mxu0 0.0
    %606 = vmatpush1.msra.mxu0 0.0
    %607 = vmatprep.subr.mxu0 0.0
    %608 = vmatpush1.msra.mxu0 0.0
    %609 = vmatprep.subr.mxu0 0.0
    %610 = vmatpush1.msra.mxu0 0.0
    %611 = vmatprep.subr.mxu0 0.0
    %612 = vmatpush1.msra.mxu0 0.0
    %613 = vmatprep.subr.mxu0 0.0
    %614 = vmatpush1.msra.mxu0 0.0
    %615 = vmatprep.subr.mxu0 0.0
    %616 = vmatpush1.msra.mxu0 0.0
    %617 = vmatprep.subr.mxu0 0.0
    %618 = vmatpush1.msra.mxu0 0.0
    %619 = vmatprep.subr.mxu0 0.0
    %620 = vmatpush1.msra.mxu0 0.0
    %621 = vmatprep.subr.mxu0 0.0
    %622 = vmatpush1.msra.mxu0 0.0
    %623 = vmatprep.subr.mxu0 0.0
    %624 = vmatpush1.msra.mxu0 0.0
    %625 = vmatprep.subr.mxu0 0.0
    %626 = vmatpush1.msra.mxu0 0.0
    %627 = vmatprep.subr.mxu0 0.0
    %628 = vmatpush1.msra.mxu0 0.0
    %629 = vmatprep.subr.mxu0 0.0
    %630 = vmatpush1.msra.mxu0 0.0
    %631 = vmatprep.subr.mxu0 0.0
    %632 = vmatpush1.msra.mxu0 0.0
    %633 = vmatprep.subr.mxu0 0.0
    %634 = vmatpush1.msra.mxu0 0.0
    %635 = vmatprep.subr.mxu0 0.0
    %636 = vmatpush1.msra.mxu0 0.0
    %637 = vmatprep.subr.mxu0 0.0
    %638 = vmatpush1.msra.mxu0 0.0
    %639 = vmatprep.subr.mxu0 0.0
    %640 = vmatpush1.msra.mxu0 0.0
    %641 = vmatprep.subr.mxu0 0.0
    %642 = vmatpush1.msra.mxu0 0.0
    %643 = vmatprep.subr.mxu0 0.0
    %644 = vmatpush1.msra.mxu0 0.0
    %645 = vmatprep.subr.mxu0 0.0
    %646 = vmatpush1.msra.mxu0 0.0
    %647 = vmatprep.subr.mxu0 0.0
    %648 = vmatpush1.msra.mxu0 0.0
    %649 = vmatprep.subr.mxu0 0.0
    %650 = vmatpush1.msra.mxu0 0.0
    %651 = vmatprep.subr.mxu0 0.0
    %652 = vmatpush1.msra.mxu0 0.0
    %653 = vmatprep.subr.mxu0 0.0
    %654 = vmatpush1.msra.mxu0 0.0
    %655 = vmatprep.subr.mxu0 0.0
    %656 = vmatpush1.msra.mxu0 0.0
    %657 = vmatprep.subr.mxu0 0.0
    %658 = vmatpush1.msra.mxu0 0.0
    %659 = vmatprep.subr.mxu0 0.0
    %660 = vmatpush1.msra.mxu0 0.0
    %661 = vmatprep.subr.mxu0 0.0
    %662 = vmatpush1.msra.mxu0 0.0
    %663 = vmatprep.subr.mxu0 0.0
    %664 = vmatpush1.msra.mxu0 0.0
    %665 = vmatprep.mubr.f32.mxu0 0.0
    %666 = vmatmul.mubr.f32.gmra.mrb[0].mxu0 %v596
    %v667 = vpop.f32.mrb[0].mxu0
    %v668 = vadd.f32 0.0, %v667
    %v669 = vpop.f32.mrb[0].mxu0
    %670 = vmatprep.mubr.f32.mxu0 0.0
    %671 = vmatmul.mubr.f32.gmra.mrb[0].mxu0 %v599
    %v672 = vpop.f32.mrb[0].mxu0
    %v673 = vadd.f32 0.0, %v672
    %v674 = vpop.f32.mrb[0].mxu0
    %675 = vdwg.mxu0
    %v676 = vld [vmem:[#allocation8] sm:$0xff]
    %v677 = vld [vmem:[#allocation8 + $0x8] sm:$0xff]
    %v678 = vld [vmem:[#allocation8 + $0x10] sm:$0xff]
    %v679 = vld [vmem:[#allocation8 + $0x18] sm:$0xff]
    %v680 = vld [vmem:[#allocation8 + $0x20] sm:$0xff]
    %v681 = vld [vmem:[#allocation8 + $0x28] sm:$0xff]
    %v682 = vld [vmem:[#allocation8 + $0x30] sm:$0xff]
    %v683 = vld [vmem:[#allocation8 + $0x38] sm:$0xff]
    %v684 = vld [vmem:[#allocation8 + $0x40] sm:$0xff]
    %v685 = vld [vmem:[#allocation8 + $0x48] sm:$0xff]
    %v686 = vld [vmem:[#allocation8 + $0x50] sm:$0xff]
    %v687 = vld [vmem:[#allocation8 + $0x58] sm:$0xff]
    %v688 = vld [vmem:[#allocation8 + $0x60] sm:$0xff]
    %v689 = vld [vmem:[#allocation8 + $0x68] sm:$0xff]
    %v690 = vld [vmem:[#allocation8 + $0x70] sm:$0xff]
    %v691 = vld [vmem:[#allocation8 + $0x78] sm:$0xff]
    %692 = vmatprep.subr.mxu0 0.0
    %693 = vmatpush1.msra.mxu0 %v676
    %694 = vmatprep.subr.mxu0 0.0
    %695 = vmatpush1.msra.mxu0 %v677
    %696 = vmatprep.subr.mxu0 0.0
    %697 = vmatpush1.msra.mxu0 %v678
    %698 = vmatprep.subr.mxu0 0.0
    %699 = vmatpush1.msra.mxu0 %v679
    %700 = vmatprep.subr.mxu0 0.0
    %701 = vmatpush1.msra.mxu0 %v680
    %702 = vmatprep.subr.mxu0 0.0
    %703 = vmatpush1.msra.mxu0 %v681
    %704 = vmatprep.subr.mxu0 0.0
    %705 = vmatpush1.msra.mxu0 %v682
    %706 = vmatprep.subr.mxu0 0.0
    %707 = vmatpush1.msra.mxu0 %v683
    %708 = vmatprep.subr.mxu0 0.0
    %709 = vmatpush1.msra.mxu0 %v684
    %710 = vmatprep.subr.mxu0 0.0
    %711 = vmatpush1.msra.mxu0 %v685
    %712 = vmatprep.subr.mxu0 0.0
    %713 = vmatpush1.msra.mxu0 %v686
    %714 = vmatprep.subr.mxu0 0.0
    %715 = vmatpush1.msra.mxu0 %v687
    %716 = vmatprep.subr.mxu0 0.0
    %717 = vmatpush1.msra.mxu0 %v688
    %718 = vmatprep.subr.mxu0 0.0
    %719 = vmatpush1.msra.mxu0 %v689
    %720 = vmatprep.subr.mxu0 0.0
    %721 = vmatpush1.msra.mxu0 %v690
    %722 = vmatprep.subr.mxu0 0.0
    %723 = vmatpush1.msra.mxu0 %v691
    %724 = vmatprep.subr.mxu0 0.0
    %725 = vmatpush1.msra.mxu0 0.0
    %726 = vmatprep.subr.mxu0 0.0
    %727 = vmatpush1.msra.mxu0 0.0
    %728 = vmatprep.subr.mxu0 0.0
    %729 = vmatpush1.msra.mxu0 0.0
    %730 = vmatprep.subr.mxu0 0.0
    %731 = vmatpush1.msra.mxu0 0.0
    %732 = vmatprep.subr.mxu0 0.0
    %733 = vmatpush1.msra.mxu0 0.0
    %734 = vmatprep.subr.mxu0 0.0
    %735 = vmatpush1.msra.mxu0 0.0
    %736 = vmatprep.subr.mxu0 0.0
    %737 = vmatpush1.msra.mxu0 0.0
    %738 = vmatprep.subr.mxu0 0.0
    %739 = vmatpush1.msra.mxu0 0.0
    %740 = vmatprep.subr.mxu0 0.0
    %741 = vmatpush1.msra.mxu0 0.0
    %742 = vmatprep.subr.mxu0 0.0
    %743 = vmatpush1.msra.mxu0 0.0
    %744 = vmatprep.subr.mxu0 0.0
    %745 = vmatpush1.msra.mxu0 0.0
    %746 = vmatprep.subr.mxu0 0.0
    %747 = vmatpush1.msra.mxu0 0.0
    %748 = vmatprep.subr.mxu0 0.0
    %749 = vmatpush1.msra.mxu0 0.0
    %750 = vmatprep.subr.mxu0 0.0
    %751 = vmatpush1.msra.mxu0 0.0
    %752 = vmatprep.subr.mxu0 0.0
    %753 = vmatpush1.msra.mxu0 0.0
    %754 = vmatprep.subr.mxu0 0.0
    %755 = vmatpush1.msra.mxu0 0.0
    %756 = vmatprep.mubr.f32.mxu0 0.0
    %757 = vmatmul.mubr.f32.gmra.mrb[0].mxu0 %v668
    %v758 = vpop.f32.mrb[0].mxu0
    %v759 = vadd.f32 0.0, %v758
    %v760 = vpop.f32.mrb[0].mxu0
    %761 = vmatprep.mubr.f32.mxu0 0.0
    %762 = vmatmul.mubr.f32.gmra.mrb[0].mxu0 %v673
    %v763 = vpop.f32.mrb[0].mxu0
    %v764 = vadd.f32 0.0, %v763
    %v765 = vpop.f32.mrb[0].mxu0
    %766 = vdwg.mxu0
    %v767 = vadd.f32 %v168, %v759
    %v768 = vadd.f32 %v173, %v764
    %v769 = vtanh.pop %v767
    %v770 = vtanh.pop %v768
    %v771 = vmul.f32 %v769, 0.9
    %v772 = vmul.f32 %v770, 0.9
    %v773 = vmul.f32 %v591, 0.1
    %v774 = vmul.f32 %v592, 0.1
    %v775 = vadd.f32 %v771, %v773
    %v776 = vadd.f32 %v772, %v774
    %v777 = vsub.f32 %v591, %v775
    %v778 = vsub.f32 %v592, %v776
    %v779 = vmul.f32 %v777, %v777
    %v780 = vmul.f32 %v778, %v778
    %v781 = vadd.f32 %v779, %v780
    %782 = vadd.xlane.f32.xlu0 %v781
    %v783 = vpop.xlane.xlu0 %782
    %v784 = vrot.slane %v783, 4
    %v785 = vadd.f32 %v783, %v784
    %v786 = vrot.slane %v785, 2
    %v787 = vadd.f32 %v785, %v786
    %v788 = vrot.slane %v787, 1
    %v789 = vadd.f32 %v787, %v788
    %s790 = vtos %v789
    %s791 = scalar_select %p590, 1, 0
    %v792 = vstv %s791
    %vm793 = vcmp.eq.s32.totalorder %v792, 1
    %v794 = vsel %vm793, %v591, %v775
    %v795 = vsel %vm793, %v592, %v776
    %796 = vst [vmem:[#allocation10] sm:$0xff] %v794
    %797 = vst [vmem:[#allocation10 + $0x8] sm:$0xff] %v795
    %p798 = scmp.lt.f32.partialorder %s790, 1e-10
    %p799 = por %p590, %p798
    %v800 = vld [vmem:[#allocation10] sm:$0xff]
    %v801 = vld [vmem:[#allocation10 + $0x8] sm:$0xff]
    %v802 = vld [vmem:[#allocation2] sm:$0xff]
    %v803 = vld [vmem:[#allocation2 + $0x8] sm:$0xff]
    %v805 = vsel %vm182, %v802, 0
    %v808 = vsel %vm182, %v803, 0
    %810 = vmatprep.subr.mxu0 0.0
    %811 = vmatpush1.msra.mxu0 %v800
    %812 = vmatprep.subr.mxu0 0.0
    %813 = vmatpush1.msra.mxu0 %v801
    %814 = vmatprep.subr.mxu0 0.0
    %815 = vmatpush1.msra.mxu0 0.0
    %816 = vmatprep.subr.mxu0 0.0
    %817 = vmatpush1.msra.mxu0 0.0
    %818 = vmatprep.subr.mxu0 0.0
    %819 = vmatpush1.msra.mxu0 0.0
    %820 = vmatprep.subr.mxu0 0.0
    %821 = vmatpush1.msra.mxu0 0.0
    %822 = vmatprep.subr.mxu0 0.0
    %823 = vmatpush1.msra.mxu0 0.0
    %824 = vmatprep.subr.mxu0 0.0
    %825 = vmatpush1.msra.mxu0 0.0
    %826 = vmatprep.subr.mxu0 0.0
    %827 = vmatpush1.msra.mxu0 0.0
    %828 = vmatprep.subr.mxu0 0.0
    %829 = vmatpush1.msra.mxu0 0.0
    %830 = vmatprep.subr.mxu0 0.0
    %831 = vmatpush1.msra.mxu0 0.0
    %832 = vmatprep.subr.mxu0 0.0
    %833 = vmatpush1.msra.mxu0 0.0
    %834 = vmatprep.subr.mxu0 0.0
    %835 = vmatpush1.msra.mxu0 0.0
    %836 = vmatprep.subr.mxu0 0.0
    %837 = vmatpush1.msra.mxu0 0.0
    %838 = vmatprep.subr.mxu0 0.0
    %839 = vmatpush1.msra.mxu0 0.0
    %840 = vmatprep.subr.mxu0 0.0
    %841 = vmatpush1.msra.mxu0 0.0
    %842 = vmatprep.subr.mxu0 0.0
    %843 = vmatpush1.msra.mxu0 0.0
    %844 = vmatprep.subr.mxu0 0.0
    %845 = vmatpush1.msra.mxu0 0.0
    %846 = vmatprep.subr.mxu0 0.0
    %847 = vmatpush1.msra.mxu0 0.0
    %848 = vmatprep.subr.mxu0 0.0
    %849 = vmatpush1.msra.mxu0 0.0
    %850 = vmatprep.subr.mxu0 0.0
    %851 = vmatpush1.msra.mxu0 0.0
    %852 = vmatprep.subr.mxu0 0.0
    %853 = vmatpush1.msra.mxu0 0.0
    %854 = vmatprep.subr.mxu0 0.0
    %855 = vmatpush1.msra.mxu0 0.0
    %856 = vmatprep.subr.mxu0 0.0
    %857 = vmatpush1.msra.mxu0 0.0
    %858 = vmatprep.subr.mxu0 0.0
    %859 = vmatpush1.msra.mxu0 0.0
    %860 = vmatprep.subr.mxu0 0.0
    %861 = vmatpush1.msra.mxu0 0.0
    %862 = vmatprep.subr.mxu0 0.0
    %863 = vmatpush1.msra.mxu0 0.0
    %864 = vmatprep.subr.mxu0 0.0
    %865 = vmatpush1.msra.mxu0 0.0
    %866 = vmatprep.subr.mxu0 0.0
    %867 = vmatpush1.msra.mxu0 0.0
    %868 = vmatprep.subr.mxu0 0.0
    %869 = vmatpush1.msra.mxu0 0.0
    %870 = vmatprep.subr.mxu0 0.0
    %871 = vmatpush1.msra.mxu0 0.0
    %872 = vmatprep.subr.mxu0 0.0
    %873 = vmatpush1.msra.mxu0 0.0
    %874 = vmatprep.mubr.f32.mxu0 0.0
    %875 = vmatmul.mubr.f32.gmra.mrb[0].mxu0 %v805
    %v876 = vpop.f32.mrb[0].mxu0
    %v877 = vadd.f32 0.0, %v876
    %v878 = vpop.f32.mrb[0].mxu0
    %879 = vmatprep.mubr.f32.mxu0 0.0
    %880 = vmatmul.mubr.f32.gmra.mrb[0].mxu0 %v808
    %v881 = vpop.f32.mrb[0].mxu0
    %v882 = vadd.f32 0.0, %v881
    %v883 = vpop.f32.mrb[0].mxu0
    %884 = vdwg.mxu0
    %v885 = vld [vmem:[#allocation8] sm:$0xff]
    %v886 = vld [vmem:[#allocation8 + $0x8] sm:$0xff]
    %v887 = vld [vmem:[#allocation8 + $0x10] sm:$0xff]
    %v888 = vld [vmem:[#allocation8 + $0x18] sm:$0xff]
    %v889 = vld [vmem:[#allocation8 + $0x20] sm:$0xff]
    %v890 = vld [vmem:[#allocation8 + $0x28] sm:$0xff]
    %v891 = vld [vmem:[#allocation8 + $0x30] sm:$0xff]
    %v892 = vld [vmem:[#allocation8 + $0x38] sm:$0xff]
    %v893 = vld [vmem:[#allocation8 + $0x40] sm:$0xff]
    %v894 = vld [vmem:[#allocation8 + $0x48] sm:$0xff]
    %v895 = vld [vmem:[#allocation8 + $0x50] sm:$0xff]
    %v896 = vld [vmem:[#allocation8 + $0x58] sm:$0xff]
    %v897 = vld [vmem:[#allocation8 + $0x60] sm:$0xff]
    %v898 = vld [vmem:[#allocation8 + $0x68] sm:$0xff]
    %v899 = vld [vmem:[#allocation8 + $0x70] sm:$0xff]
    %v900 = vld [vmem:[#allocation8 + $0x78] sm:$0xff]
    %901 = vmatprep.subr.mxu0 0.0
    %902 = vmatpush1.msra.mxu0 %v885
    %903 = vmatprep.subr.mxu0 0.0
    %904 = vmatpush1.msra.mxu0 %v886
    %905 = vmatprep.subr.mxu0 0.0
    %906 = vmatpush1.msra.mxu0 %v887
    %907 = vmatprep.subr.mxu0 0.0
    %908 = vmatpush1.msra.mxu0 %v888
    %909 = vmatprep.subr.mxu0 0.0
    %910 = vmatpush1.msra.mxu0 %v889
    %911 = vmatprep.subr.mxu0 0.0
    %912 = vmatpush1.msra.mxu0 %v890
    %913 = vmatprep.subr.mxu0 0.0
    %914 = vmatpush1.msra.mxu0 %v891
    %915 = vmatprep.subr.mxu0 0.0
    %916 = vmatpush1.msra.mxu0 %v892
    %917 = vmatprep.subr.mxu0 0.0
    %918 = vmatpush1.msra.mxu0 %v893
    %919 = vmatprep.subr.mxu0 0.0
    %920 = vmatpush1.msra.mxu0 %v894
    %921 = vmatprep.subr.mxu0 0.0
    %922 = vmatpush1.msra.mxu0 %v895
    %923 = vmatprep.subr.mxu0 0.0
    %924 = vmatpush1.msra.mxu0 %v896
    %925 = vmatprep.subr.mxu0 0.0
    %926 = vmatpush1.msra.mxu0 %v897
    %927 = vmatprep.subr.mxu0 0.0
    %928 = vmatpush1.msra.mxu0 %v898
    %929 = vmatprep.subr.mxu0 0.0
    %930 = vmatpush1.msra.mxu0 %v899
    %931 = vmatprep.subr.mxu0 0.0
    %932 = vmatpush1.msra.mxu0 %v900
    %933 = vmatprep.subr.mxu0 0.0
    %934 = vmatpush1.msra.mxu0 0.0
    %935 = vmatprep.subr.mxu0 0.0
    %936 = vmatpush1.msra.mxu0 0.0
    %937 = vmatprep.subr.mxu0 0.0
    %938 = vmatpush1.msra.mxu0 0.0
    %939 = vmatprep.subr.mxu0 0.0
    %940 = vmatpush1.msra.mxu0 0.0
    %941 = vmatprep.subr.mxu0 0.0
    %942 = vmatpush1.msra.mxu0 0.0
    %943 = vmatprep.subr.mxu0 0.0
    %944 = vmatpush1.msra.mxu0 0.0
    %945 = vmatprep.subr.mxu0 0.0
    %946 = vmatpush1.msra.mxu0 0.0
    %947 = vmatprep.subr.mxu0 0.0
    %948 = vmatpush1.msra.mxu0 0.0
    %949 = vmatprep.subr.mxu0 0.0
    %950 = vmatpush1.msra.mxu0 0.0
    %951 = vmatprep.subr.mxu0 0.0
    %952 = vmatpush1.msra.mxu0 0.0
    %953 = vmatprep.subr.mxu0 0.0
    %954 = vmatpush1.msra.mxu0 0.0
    %955 = vmatprep.subr.mxu0 0.0
    %956 = vmatpush1.msra.mxu0 0.0
    %957 = vmatprep.subr.mxu0 0.0
    %958 = vmatpush1.msra.mxu0 0.0
    %959 = vmatprep.subr.mxu0 0.0
    %960 = vmatpush1.msra.mxu0 0.0
    %961 = vmatprep.subr.mxu0 0.0
    %962 = vmatpush1.msra.mxu0 0.0
    %963 = vmatprep.subr.mxu0 0.0
    %964 = vmatpush1.msra.mxu0 0.0
    %965 = vmatprep.mubr.f32.mxu0 0.0
    %966 = vmatmul.mubr.f32.gmra.mrb[0].mxu0 %v877
    %v967 = vpop.f32.mrb[0].mxu0
    %v968 = vadd.f32 0.0, %v967
    %v969 = vpop.f32.mrb[0].mxu0
    %970 = vmatprep.mubr.f32.mxu0 0.0
    %971 = vmatmul.mubr.f32.gmra.mrb[0].mxu0 %v882
    %v972 = vpop.f32.mrb[0].mxu0
    %v973 = vadd.f32 0.0, %v972
    %v974 = vpop.f32.mrb[0].mxu0
    %975 = vdwg.mxu0
    %v976 = vadd.f32 %v168, %v968
    %v977 = vadd.f32 %v173, %v973
    %v978 = vtanh.pop %v976
    %v979 = vtanh.pop %v977
    %v980 = vmul.f32 %v978, 0.9
    %v981 = vmul.f32 %v979, 0.9
    %v982 = vmul.f32 %v800, 0.1
    %v983 = vmul.f32 %v801, 0.1
    %v984 = vadd.f32 %v980, %v982
    %v985 = vadd.f32 %v981, %v983
    %v986 = vsub.f32 %v800, %v984
    %v987 = vsub.f32 %v801, %v985
    %v988 = vmul.f32 %v986, %v986
    %v989 = vmul.f32 %v987, %v987
    %v990 = vadd.f32 %v988, %v989
    %991 = vadd.xlane.f32.xlu0 %v990
    %v992 = vpop.xlane.xlu0 %991
    %v993 = vrot.slane %v992, 4
    %v994 = vadd.f32 %v992, %v993
    %v995 = vrot.slane %v994, 2
    %v996 = vadd.f32 %v994, %v995
    %v997 = vrot.slane %v996, 1
    %v998 = vadd.f32 %v996, %v997
    %s999 = vtos %v998
    %s1000 = scalar_select %p799, 1, 0
    %v1001 = vstv %s1000
    %vm1002 = vcmp.eq.s32.totalorder %v1001, 1
    %v1003 = vsel %vm1002, %v800, %v984
    %v1004 = vsel %vm1002, %v801, %v985
    %1005 = vst [vmem:[#allocation10] sm:$0xff] %v1003
    %1006 = vst [vmem:[#allocation10 + $0x8] sm:$0xff] %v1004
    %p1007 = scmp.lt.f32.partialorder %s999, 1e-10
    %p1008 = por %p799, %p1007
    %v1009 = vld [vmem:[#allocation10] sm:$0xff]
    %v1010 = vld [vmem:[#allocation10 + $0x8] sm:$0xff]
    %v1011 = vld [vmem:[#allocation2] sm:$0xff]
    %v1012 = vld [vmem:[#allocation2 + $0x8] sm:$0xff]
    %v1014 = vsel %vm182, %v1011, 0
    %v1017 = vsel %vm182, %v1012, 0
    %1019 = vmatprep.subr.mxu0 0.0
    %1020 = vmatpush1.msra.mxu0 %v1009
    %1021 = vmatprep.subr.mxu0 0.0
    %1022 = vmatpush1.msra.mxu0 %v1010
    %1023 = vmatprep.subr.mxu0 0.0
    %1024 = vmatpush1.msra.mxu0 0.0
    %1025 = vmatprep.subr.mxu0 0.0
    %1026 = vmatpush1.msra.mxu0 0.0
    %1027 = vmatprep.subr.mxu0 0.0
    %1028 = vmatpush1.msra.mxu0 0.0
    %1029 = vmatprep.subr.mxu0 0.0
    %1030 = vmatpush1.msra.mxu0 0.0
    %1031 = vmatprep.subr.mxu0 0.0
    %1032 = vmatpush1.msra.mxu0 0.0
    %1033 = vmatprep.subr.mxu0 0.0
    %1034 = vmatpush1.msra.mxu0 0.0
    %1035 = vmatprep.subr.mxu0 0.0
    %1036 = vmatpush1.msra.mxu0 0.0
    %1037 = vmatprep.subr.mxu0 0.0
    %1038 = vmatpush1.msra.mxu0 0.0
    %1039 = vmatprep.subr.mxu0 0.0
    %1040 = vmatpush1.msra.mxu0 0.0
    %1041 = vmatprep.subr.mxu0 0.0
    %1042 = vmatpush1.msra.mxu0 0.0
    %1043 = vmatprep.subr.mxu0 0.0
    %1044 = vmatpush1.msra.mxu0 0.0
    %1045 = vmatprep.subr.mxu0 0.0
    %1046 = vmatpush1.msra.mxu0 0.0
    %1047 = vmatprep.subr.mxu0 0.0
    %1048 = vmatpush1.msra.mxu0 0.0
    %1049 = vmatprep.subr.mxu0 0.0
    %1050 = vmatpush1.msra.mxu0 0.0
    %1051 = vmatprep.subr.mxu0 0.0
    %1052 = vmatpush1.msra.mxu0 0.0
    %1053 = vmatprep.subr.mxu0 0.0
    %1054 = vmatpush1.msra.mxu0 0.0
    %1055 = vmatprep.subr.mxu0 0.0
    %1056 = vmatpush1.msra.mxu0 0.0
    %1057 = vmatprep.subr.mxu0 0.0
    %1058 = vmatpush1.msra.mxu0 0.0
    %1059 = vmatprep.subr.mxu0 0.0
    %1060 = vmatpush1.msra.mxu0 0.0
    %1061 = vmatprep.subr.mxu0 0.0
    %1062 = vmatpush1.msra.mxu0 0.0
    %1063 = vmatprep.subr.mxu0 0.0
    %1064 = vmatpush1.msra.mxu0 0.0
    %1065 = vmatprep.subr.mxu0 0.0
    %1066 = vmatpush1.msra.mxu0 0.0
    %1067 = vmatprep.subr.mxu0 0.0
    %1068 = vmatpush1.msra.mxu0 0.0
    %1069 = vmatprep.subr.mxu0 0.0
    %1070 = vmatpush1.msra.mxu0 0.0
    %1071 = vmatprep.subr.mxu0 0.0
    %1072 = vmatpush1.msra.mxu0 0.0
    %1073 = vmatprep.subr.mxu0 0.0
    %1074 = vmatpush1.msra.mxu0 0.0
    %1075 = vmatprep.subr.mxu0 0.0
    %1076 = vmatpush1.msra.mxu0 0.0
    %1077 = vmatprep.subr.mxu0 0.0
    %1078 = vmatpush1.msra.mxu0 0.0
    %1079 = vmatprep.subr.mxu0 0.0
    %1080 = vmatpush1.msra.mxu0 0.0
    %1081 = vmatprep.subr.mxu0 0.0
    %1082 = vmatpush1.msra.mxu0 0.0
    %1083 = vmatprep.mubr.f32.mxu0 0.0
    %1084 = vmatmul.mubr.f32.gmra.mrb[0].mxu0 %v1014
    %v1085 = vpop.f32.mrb[0].mxu0
    %v1086 = vadd.f32 0.0, %v1085
    %v1087 = vpop.f32.mrb[0].mxu0
    %1088 = vmatprep.mubr.f32.mxu0 0.0
    %1089 = vmatmul.mubr.f32.gmra.mrb[0].mxu0 %v1017
    %v1090 = vpop.f32.mrb[0].mxu0
    %v1091 = vadd.f32 0.0, %v1090
    %v1092 = vpop.f32.mrb[0].mxu0
    %1093 = vdwg.mxu0
    %v1094 = vld [vmem:[#allocation8] sm:$0xff]
    %v1095 = vld [vmem:[#allocation8 + $0x8] sm:$0xff]
    %v1096 = vld [vmem:[#allocation8 + $0x10] sm:$0xff]
    %v1097 = vld [vmem:[#allocation8 + $0x18] sm:$0xff]
    %v1098 = vld [vmem:[#allocation8 + $0x20] sm:$0xff]
    %v1099 = vld [vmem:[#allocation8 + $0x28] sm:$0xff]
    %v1100 = vld [vmem:[#allocation8 + $0x30] sm:$0xff]
    %v1101 = vld [vmem:[#allocation8 + $0x38] sm:$0xff]
    %v1102 = vld [vmem:[#allocation8 + $0x40] sm:$0xff]
    %v1103 = vld [vmem:[#allocation8 + $0x48] sm:$0xff]
    %v1104 = vld [vmem:[#allocation8 + $0x50] sm:$0xff]
    %v1105 = vld [vmem:[#allocation8 + $0x58] sm:$0xff]
    %v1106 = vld [vmem:[#allocation8 + $0x60] sm:$0xff]
    %v1107 = vld [vmem:[#allocation8 + $0x68] sm:$0xff]
    %v1108 = vld [vmem:[#allocation8 + $0x70] sm:$0xff]
    %v1109 = vld [vmem:[#allocation8 + $0x78] sm:$0xff]
    %1110 = vmatprep.subr.mxu0 0.0
    %1111 = vmatpush1.msra.mxu0 %v1094
    %1112 = vmatprep.subr.mxu0 0.0
    %1113 = vmatpush1.msra.mxu0 %v1095
    %1114 = vmatprep.subr.mxu0 0.0
    %1115 = vmatpush1.msra.mxu0 %v1096
    %1116 = vmatprep.subr.mxu0 0.0
    %1117 = vmatpush1.msra.mxu0 %v1097
    %1118 = vmatprep.subr.mxu0 0.0
    %1119 = vmatpush1.msra.mxu0 %v1098
    %1120 = vmatprep.subr.mxu0 0.0
    %1121 = vmatpush1.msra.mxu0 %v1099
    %1122 = vmatprep.subr.mxu0 0.0
    %1123 = vmatpush1.msra.mxu0 %v1100
    %1124 = vmatprep.subr.mxu0 0.0
    %1125 = vmatpush1.msra.mxu0 %v1101
    %1126 = vmatprep.subr.mxu0 0.0
    %1127 = vmatpush1.msra.mxu0 %v1102
    %1128 = vmatprep.subr.mxu0 0.0
    %1129 = vmatpush1.msra.mxu0 %v1103
    %1130 = vmatprep.subr.mxu0 0.0
    %1131 = vmatpush1.msra.mxu0 %v1104
    %1132 = vmatprep.subr.mxu0 0.0
    %1133 = vmatpush1.msra.mxu0 %v1105
    %1134 = vmatprep.subr.mxu0 0.0
    %1135 = vmatpush1.msra.mxu0 %v1106
    %1136 = vmatprep.subr.mxu0 0.0
    %1137 = vmatpush1.msra.mxu0 %v1107
    %1138 = vmatprep.subr.mxu0 0.0
    %1139 = vmatpush1.msra.mxu0 %v1108
    %1140 = vmatprep.subr.mxu0 0.0
    %1141 = vmatpush1.msra.mxu0 %v1109
    %1142 = vmatprep.subr.mxu0 0.0
    %1143 = vmatpush1.msra.mxu0 0.0
    %1144 = vmatprep.subr.mxu0 0.0
    %1145 = vmatpush1.msra.mxu0 0.0
    %1146 = vmatprep.subr.mxu0 0.0
    %1147 = vmatpush1.msra.mxu0 0.0
    %1148 = vmatprep.subr.mxu0 0.0
    %1149 = vmatpush1.msra.mxu0 0.0
    %1150 = vmatprep.subr.mxu0 0.0
    %1151 = vmatpush1.msra.mxu0 0.0
    %1152 = vmatprep.subr.mxu0 0.0
    %1153 = vmatpush1.msra.mxu0 0.0
    %1154 = vmatprep.subr.mxu0 0.0
    %1155 = vmatpush1.msra.mxu0 0.0
    %1156 = vmatprep.subr.mxu0 0.0
    %1157 = vmatpush1.msra.mxu0 0.0
    %1158 = vmatprep.subr.mxu0 0.0
    %1159 = vmatpush1.msra.mxu0 0.0
    %1160 = vmatprep.subr.mxu0 0.0
    %1161 = vmatpush1.msra.mxu0 0.0
    %1162 = vmatprep.subr.mxu0 0.0
    %1163 = vmatpush1.msra.mxu0 0.0
    %1164 = vmatprep.subr.mxu0 0.0
    %1165 = vmatpush1.msra.mxu0 0.0
    %1166 = vmatprep.subr.mxu0 0.0
    %1167 = vmatpush1.msra.mxu0 0.0
    %1168 = vmatprep.subr.mxu0 0.0
    %1169 = vmatpush1.msra.mxu0 0.0
    %1170 = vmatprep.subr.mxu0 0.0
    %1171 = vmatpush1.msra.mxu0 0.0
    %1172 = vmatprep.subr.mxu0 0.0
    %1173 = vmatpush1.msra.mxu0 0.0
    %1174 = vmatprep.mubr.f32.mxu0 0.0
    %1175 = vmatmul.mubr.f32.gmra.mrb[0].mxu0 %v1086
    %v1176 = vpop.f32.mrb[0].mxu0
    %v1177 = vadd.f32 0.0, %v1176
    %v1178 = vpop.f32.mrb[0].mxu0
    %1179 = vmatprep.mubr.f32.mxu0 0.0
    %1180 = vmatmul.mubr.f32.gmra.mrb[0].mxu0 %v1091
    %v1181 = vpop.f32.mrb[0].mxu0
    %v1182 = vadd.f32 0.0, %v1181
    %v1183 = vpop.f32.mrb[0].mxu0
    %1184 = vdwg.mxu0
    %v1185 = vadd.f32 %v168, %v1177
    %v1186 = vadd.f32 %v173, %v1182
    %v1187 = vtanh.pop %v1185
    %v1188 = vtanh.pop %v1186
    %v1189 = vmul.f32 %v1187, 0.9
    %v1190 = vmul.f32 %v1188, 0.9
    %v1191 = vmul.f32 %v1009, 0.1
    %v1192 = vmul.f32 %v1010, 0.1
    %v1193 = vadd.f32 %v1189, %v1191
    %v1194 = vadd.f32 %v1190, %v1192
    %v1195 = vsub.f32 %v1009, %v1193
    %v1196 = vsub.f32 %v1010, %v1194
    %v1197 = vmul.f32 %v1195, %v1195
    %v1198 = vmul.f32 %v1196, %v1196
    %v1199 = vadd.f32 %v1197, %v1198
    %1200 = vadd.xlane.f32.xlu0 %v1199
    %v1201 = vpop.xlane.xlu0 %1200
    %v1202 = vrot.slane %v1201, 4
    %v1203 = vadd.f32 %v1201, %v1202
    %v1204 = vrot.slane %v1203, 2
    %v1205 = vadd.f32 %v1203, %v1204
    %v1206 = vrot.slane %v1205, 1
    %v1207 = vadd.f32 %v1205, %v1206
    %s1208 = vtos %v1207
    %s1209 = scalar_select %p1008, 1, 0
    %v1210 = vstv %s1209
    %vm1211 = vcmp.eq.s32.totalorder %v1210, 1
    %v1212 = vsel %vm1211, %v1009, %v1193
    %v1213 = vsel %vm1211, %v1010, %v1194
    %1214 = vst [vmem:[#allocation10] sm:$0xff] %v1212
    %1215 = vst [vmem:[#allocation10 + $0x8] sm:$0xff] %v1213
    %p1216 = scmp.lt.f32.partialorder %s1208, 1e-10
    %p1217 = por %p1008, %p1216
    %v1218 = vld [vmem:[#allocation10] sm:$0xff]
    %v1219 = vld [vmem:[#allocation10 + $0x8] sm:$0xff]
    %v1220 = vld [vmem:[#allocation2] sm:$0xff]
    %v1221 = vld [vmem:[#allocation2 + $0x8] sm:$0xff]
    %v1223 = vsel %vm182, %v1220, 0
    %v1226 = vsel %vm182, %v1221, 0
    %1228 = vmatprep.subr.mxu0 0.0
    %1229 = vmatpush1.msra.mxu0 %v1218
    %1230 = vmatprep.subr.mxu0 0.0
    %1231 = vmatpush1.msra.mxu0 %v1219
    %1232 = vmatprep.subr.mxu0 0.0
    %1233 = vmatpush1.msra.mxu0 0.0
    %1234 = vmatprep.subr.mxu0 0.0
    %1235 = vmatpush1.msra.mxu0 0.0
    %1236 = vmatprep.subr.mxu0 0.0
    %1237 = vmatpush1.msra.mxu0 0.0
    %1238 = vmatprep.subr.mxu0 0.0
    %1239 = vmatpush1.msra.mxu0 0.0
    %1240 = vmatprep.subr.mxu0 0.0
    %1241 = vmatpush1.msra.mxu0 0.0
    %1242 = vmatprep.subr.mxu0 0.0
    %1243 = vmatpush1.msra.mxu0 0.0
    %1244 = vmatprep.subr.mxu0 0.0
    %1245 = vmatpush1.msra.mxu0 0.0
    %1246 = vmatprep.subr.mxu0 0.0
    %1247 = vmatpush1.msra.mxu0 0.0
    %1248 = vmatprep.subr.mxu0 0.0
    %1249 = vmatpush1.msra.mxu0 0.0
    %1250 = vmatprep.subr.mxu0 0.0
    %1251 = vmatpush1.msra.mxu0 0.0
    %1252 = vmatprep.subr.mxu0 0.0
    %1253 = vmatpush1.msra.mxu0 0.0
    %1254 = vmatprep.subr.mxu0 0.0
    %1255 = vmatpush1.msra.mxu0 0.0
    %1256 = vmatprep.subr.mxu0 0.0
    %1257 = vmatpush1.msra.mxu0 0.0
    %1258 = vmatprep.subr.mxu0 0.0
    %1259 = vmatpush1.msra.mxu0 0.0
    %1260 = vmatprep.subr.mxu0 0.0
    %1261 = vmatpush1.msra.mxu0 0.0
    %1262 = vmatprep.subr.mxu0 0.0
    %1263 = vmatpush1.msra.mxu0 0.0
    %1264 = vmatprep.subr.mxu0 0.0
    %1265 = vmatpush1.msra.mxu0 0.0
    %1266 = vmatprep.subr.mxu0 0.0
    %1267 = vmatpush1.msra.mxu0 0.0
    %1268 = vmatprep.subr.mxu0 0.0
    %1269 = vmatpush1.msra.mxu0 0.0
    %1270 = vmatprep.subr.mxu0 0.0
    %1271 = vmatpush1.msra.mxu0 0.0
    %1272 = vmatprep.subr.mxu0 0.0
    %1273 = vmatpush1.msra.mxu0 0.0
    %1274 = vmatprep.subr.mxu0 0.0
    %1275 = vmatpush1.msra.mxu0 0.0
    %1276 = vmatprep.subr.mxu0 0.0
    %1277 = vmatpush1.msra.mxu0 0.0
    %1278 = vmatprep.subr.mxu0 0.0
    %1279 = vmatpush1.msra.mxu0 0.0
    %1280 = vmatprep.subr.mxu0 0.0
    %1281 = vmatpush1.msra.mxu0 0.0
    %1282 = vmatprep.subr.mxu0 0.0
    %1283 = vmatpush1.msra.mxu0 0.0
    %1284 = vmatprep.subr.mxu0 0.0
    %1285 = vmatpush1.msra.mxu0 0.0
    %1286 = vmatprep.subr.mxu0 0.0
    %1287 = vmatpush1.msra.mxu0 0.0
    %1288 = vmatprep.subr.mxu0 0.0
    %1289 = vmatpush1.msra.mxu0 0.0
    %1290 = vmatprep.subr.mxu0 0.0
    %1291 = vmatpush1.msra.mxu0 0.0
    %1292 = vmatprep.mubr.f32.mxu0 0.0
    %1293 = vmatmul.mubr.f32.gmra.mrb[0].mxu0 %v1223
    %v1294 = vpop.f32.mrb[0].mxu0
    %v1295 = vadd.f32 0.0, %v1294
    %v1296 = vpop.f32.mrb[0].mxu0
    %1297 = vmatprep.mubr.f32.mxu0 0.0
    %1298 = vmatmul.mubr.f32.gmra.mrb[0].mxu0 %v1226
    %v1299 = vpop.f32.mrb[0].mxu0
    %v1300 = vadd.f32 0.0, %v1299
    %v1301 = vpop.f32.mrb[0].mxu0
    %1302 = vdwg.mxu0
    %v1303 = vld [vmem:[#allocation8] sm:$0xff]
    %v1304 = vld [vmem:[#allocation8 + $0x8] sm:$0xff]
    %v1305 = vld [vmem:[#allocation8 + $0x10] sm:$0xff]
    %v1306 = vld [vmem:[#allocation8 + $0x18] sm:$0xff]
    %v1307 = vld [vmem:[#allocation8 + $0x20] sm:$0xff]
    %v1308 = vld [vmem:[#allocation8 + $0x28] sm:$0xff]
    %v1309 = vld [vmem:[#allocation8 + $0x30] sm:$0xff]
    %v1310 = vld [vmem:[#allocation8 + $0x38] sm:$0xff]
    %v1311 = vld [vmem:[#allocation8 + $0x40] sm:$0xff]
    %v1312 = vld [vmem:[#allocation8 + $0x48] sm:$0xff]
    %v1313 = vld [vmem:[#allocation8 + $0x50] sm:$0xff]
    %v1314 = vld [vmem:[#allocation8 + $0x58] sm:$0xff]
    %v1315 = vld [vmem:[#allocation8 + $0x60] sm:$0xff]
    %v1316 = vld [vmem:[#allocation8 + $0x68] sm:$0xff]
    %v1317 = vld [vmem:[#allocation8 + $0x70] sm:$0xff]
    %v1318 = vld [vmem:[#allocation8 + $0x78] sm:$0xff]
    %1319 = vmatprep.subr.mxu0 0.0
    %1320 = vmatpush1.msra.mxu0 %v1303
    %1321 = vmatprep.subr.mxu0 0.0
    %1322 = vmatpush1.msra.mxu0 %v1304
    %1323 = vmatprep.subr.mxu0 0.0
    %1324 = vmatpush1.msra.mxu0 %v1305
    %1325 = vmatprep.subr.mxu0 0.0
    %1326 = vmatpush1.msra.mxu0 %v1306
    %1327 = vmatprep.subr.mxu0 0.0
    %1328 = vmatpush1.msra.mxu0 %v1307
    %1329 = vmatprep.subr.mxu0 0.0
    %1330 = vmatpush1.msra.mxu0 %v1308
    %1331 = vmatprep.subr.mxu0 0.0
    %1332 = vmatpush1.msra.mxu0 %v1309
    %1333 = vmatprep.subr.mxu0 0.0
    %1334 = vmatpush1.msra.mxu0 %v1310
    %1335 = vmatprep.subr.mxu0 0.0
    %1336 = vmatpush1.msra.mxu0 %v1311
    %1337 = vmatprep.subr.mxu0 0.0
    %1338 = vmatpush1.msra.mxu0 %v1312
    %1339 = vmatprep.subr.mxu0 0.0
    %1340 = vmatpush1.msra.mxu0 %v1313
    %1341 = vmatprep.subr.mxu0 0.0
    %1342 = vmatpush1.msra.mxu0 %v1314
    %1343 = vmatprep.subr.mxu0 0.0
    %1344 = vmatpush1.msra.mxu0 %v1315
    %1345 = vmatprep.subr.mxu0 0.0
    %1346 = vmatpush1.msra.mxu0 %v1316
    %1347 = vmatprep.subr.mxu0 0.0
    %1348 = vmatpush1.msra.mxu0 %v1317
    %1349 = vmatprep.subr.mxu0 0.0
    %1350 = vmatpush1.msra.mxu0 %v1318
    %1351 = vmatprep.subr.mxu0 0.0
    %1352 = vmatpush1.msra.mxu0 0.0
    %1353 = vmatprep.subr.mxu0 0.0
    %1354 = vmatpush1.msra.mxu0 0.0
    %1355 = vmatprep.subr.mxu0 0.0
    %1356 = vmatpush1.msra.mxu0 0.0
    %1357 = vmatprep.subr.mxu0 0.0
    %1358 = vmatpush1.msra.mxu0 0.0
    %1359 = vmatprep.subr.mxu0 0.0
    %1360 = vmatpush1.msra.mxu0 0.0
    %1361 = vmatprep.subr.mxu0 0.0
    %1362 = vmatpush1.msra.mxu0 0.0
    %1363 = vmatprep.subr.mxu0 0.0
    %1364 = vmatpush1.msra.mxu0 0.0
    %1365 = vmatprep.subr.mxu0 0.0
    %1366 = vmatpush1.msra.mxu0 0.0
    %1367 = vmatprep.subr.mxu0 0.0
    %1368 = vmatpush1.msra.mxu0 0.0
    %1369 = vmatprep.subr.mxu0 0.0
    %1370 = vmatpush1.msra.mxu0 0.0
    %1371 = vmatprep.subr.mxu0 0.0
    %1372 = vmatpush1.msra.mxu0 0.0
    %1373 = vmatprep.subr.mxu0 0.0
    %1374 = vmatpush1.msra.mxu0 0.0
    %1375 = vmatprep.subr.mxu0 0.0
    %1376 = vmatpush1.msra.mxu0 0.0
    %1377 = vmatprep.subr.mxu0 0.0
    %1378 = vmatpush1.msra.mxu0 0.0
    %1379 = vmatprep.subr.mxu0 0.0
    %1380 = vmatpush1.msra.mxu0 0.0
    %1381 = vmatprep.subr.mxu0 0.0
    %1382 = vmatpush1.msra.mxu0 0.0
    %1383 = vmatprep.mubr.f32.mxu0 0.0
    %1384 = vmatmul.mubr.f32.gmra.mrb[0].mxu0 %v1295
    %v1385 = vpop.f32.mrb[0].mxu0
    %v1386 = vadd.f32 0.0, %v1385
    %v1387 = vpop.f32.mrb[0].mxu0
    %1388 = vmatprep.mubr.f32.mxu0 0.0
    %1389 = vmatmul.mubr.f32.gmra.mrb[0].mxu0 %v1300
    %v1390 = vpop.f32.mrb[0].mxu0
    %v1391 = vadd.f32 0.0, %v1390
    %v1392 = vpop.f32.mrb[0].mxu0
    %1393 = vdwg.mxu0
    %v1394 = vadd.f32 %v168, %v1386
    %v1395 = vadd.f32 %v173, %v1391
    %v1396 = vtanh.pop %v1394
    %v1397 = vtanh.pop %v1395
    %v1398 = vmul.f32 %v1396, 0.9
    %v1399 = vmul.f32 %v1397, 0.9
    %v1400 = vmul.f32 %v1218, 0.1
    %v1401 = vmul.f32 %v1219, 0.1
    %v1402 = vadd.f32 %v1398, %v1400
    %v1403 = vadd.f32 %v1399, %v1401
    %v1404 = vsub.f32 %v1218, %v1402
    %v1405 = vsub.f32 %v1219, %v1403
    %v1406 = vmul.f32 %v1404, %v1404
    %v1407 = vmul.f32 %v1405, %v1405
    %v1408 = vadd.f32 %v1406, %v1407
    %1409 = vadd.xlane.f32.xlu0 %v1408
    %v1410 = vpop.xlane.xlu0 %1409
    %v1411 = vrot.slane %v1410, 4
    %v1412 = vadd.f32 %v1410, %v1411
    %v1413 = vrot.slane %v1412, 2
    %v1414 = vadd.f32 %v1412, %v1413
    %v1415 = vrot.slane %v1414, 1
    %v1416 = vadd.f32 %v1414, %v1415
    %s1417 = vtos %v1416
    %s1418 = scalar_select %p1217, 1, 0
    %v1419 = vstv %s1418
    %vm1420 = vcmp.eq.s32.totalorder %v1419, 1
    %v1421 = vsel %vm1420, %v1218, %v1402
    %v1422 = vsel %vm1420, %v1219, %v1403
    %1423 = vst [vmem:[#allocation10] sm:$0xff] %v1421
    %1424 = vst [vmem:[#allocation10 + $0x8] sm:$0xff] %v1422
    %p1425 = scmp.lt.f32.partialorder %s1417, 1e-10
    %p1426 = por %p1217, %p1425
    %v1427 = vld [vmem:[#allocation10] sm:$0xff]
    %v1428 = vld [vmem:[#allocation10 + $0x8] sm:$0xff]
    %v1429 = vld [vmem:[#allocation2] sm:$0xff]
    %v1430 = vld [vmem:[#allocation2 + $0x8] sm:$0xff]
    %v1432 = vsel %vm182, %v1429, 0
    %v1435 = vsel %vm182, %v1430, 0
    %1437 = vmatprep.subr.mxu0 0.0
    %1438 = vmatpush1.msra.mxu0 %v1427
    %1439 = vmatprep.subr.mxu0 0.0
    %1440 = vmatpush1.msra.mxu0 %v1428
    %1441 = vmatprep.subr.mxu0 0.0
    %1442 = vmatpush1.msra.mxu0 0.0
    %1443 = vmatprep.subr.mxu0 0.0
    %1444 = vmatpush1.msra.mxu0 0.0
    %1445 = vmatprep.subr.mxu0 0.0
    %1446 = vmatpush1.msra.mxu0 0.0
    %1447 = vmatprep.subr.mxu0 0.0
    %1448 = vmatpush1.msra.mxu0 0.0
    %1449 = vmatprep.subr.mxu0 0.0
    %1450 = vmatpush1.msra.mxu0 0.0
    %1451 = vmatprep.subr.mxu0 0.0
    %1452 = vmatpush1.msra.mxu0 0.0
    %1453 = vmatprep.subr.mxu0 0.0
    %1454 = vmatpush1.msra.mxu0 0.0
    %1455 = vmatprep.subr.mxu0 0.0
    %1456 = vmatpush1.msra.mxu0 0.0
    %1457 = vmatprep.subr.mxu0 0.0
    %1458 = vmatpush1.msra.mxu0 0.0
    %1459 = vmatprep.subr.mxu0 0.0
    %1460 = vmatpush1.msra.mxu0 0.0
    %1461 = vmatprep.subr.mxu0 0.0
    %1462 = vmatpush1.msra.mxu0 0.0
    %1463 = vmatprep.subr.mxu0 0.0
    %1464 = vmatpush1.msra.mxu0 0.0
    %1465 = vmatprep.subr.mxu0 0.0
    %1466 = vmatpush1.msra.mxu0 0.0
    %1467 = vmatprep.subr.mxu0 0.0
    %1468 = vmatpush1.msra.mxu0 0.0
    %1469 = vmatprep.subr.mxu0 0.0
    %1470 = vmatpush1.msra.mxu0 0.0
    %1471 = vmatprep.subr.mxu0 0.0
    %1472 = vmatpush1.msra.mxu0 0.0
    %1473 = vmatprep.subr.mxu0 0.0
    %1474 = vmatpush1.msra.mxu0 0.0
    %1475 = vmatprep.subr.mxu0 0.0
    %1476 = vmatpush1.msra.mxu0 0.0
    %1477 = vmatprep.subr.mxu0 0.0
    %1478 = vmatpush1.msra.mxu0 0.0
    %1479 = vmatprep.subr.mxu0 0.0
    %1480 = vmatpush1.msra.mxu0 0.0
    %1481 = vmatprep.subr.mxu0 0.0
    %1482 = vmatpush1.msra.mxu0 0.0
    %1483 = vmatprep.subr.mxu0 0.0
    %1484 = vmatpush1.msra.mxu0 0.0
    %1485 = vmatprep.subr.mxu0 0.0
    %1486 = vmatpush1.msra.mxu0 0.0
    %1487 = vmatprep.subr.mxu0 0.0
    %1488 = vmatpush1.msra.mxu0 0.0
    %1489 = vmatprep.subr.mxu0 0.0
    %1490 = vmatpush1.msra.mxu0 0.0
    %1491 = vmatprep.subr.mxu0 0.0
    %1492 = vmatpush1.msra.mxu0 0.0
    %1493 = vmatprep.subr.mxu0 0.0
    %1494 = vmatpush1.msra.mxu0 0.0
    %1495 = vmatprep.subr.mxu0 0.0
    %1496 = vmatpush1.msra.mxu0 0.0
    %1497 = vmatprep.subr.mxu0 0.0
    %1498 = vmatpush1.msra.mxu0 0.0
    %1499 = vmatprep.subr.mxu0 0.0
    %1500 = vmatpush1.msra.mxu0 0.0
    %1501 = vmatprep.mubr.f32.mxu0 0.0
    %1502 = vmatmul.mubr.f32.gmra.mrb[0].mxu0 %v1432
    %v1503 = vpop.f32.mrb[0].mxu0
    %v1504 = vadd.f32 0.0, %v1503
    %v1505 = vpop.f32.mrb[0].mxu0
    %1506 = vmatprep.mubr.f32.mxu0 0.0
    %1507 = vmatmul.mubr.f32.gmra.mrb[0].mxu0 %v1435
    %v1508 = vpop.f32.mrb[0].mxu0
    %v1509 = vadd.f32 0.0, %v1508
    %v1510 = vpop.f32.mrb[0].mxu0
    %1511 = vdwg.mxu0
    %v1512 = vld [vmem:[#allocation8] sm:$0xff]
    %v1513 = vld [vmem:[#allocation8 + $0x8] sm:$0xff]
    %v1514 = vld [vmem:[#allocation8 + $0x10] sm:$0xff]
    %v1515 = vld [vmem:[#allocation8 + $0x18] sm:$0xff]
    %v1516 = vld [vmem:[#allocation8 + $0x20] sm:$0xff]
    %v1517 = vld [vmem:[#allocation8 + $0x28] sm:$0xff]
    %v1518 = vld [vmem:[#allocation8 + $0x30] sm:$0xff]
    %v1519 = vld [vmem:[#allocation8 + $0x38] sm:$0xff]
    %v1520 = vld [vmem:[#allocation8 + $0x40] sm:$0xff]
    %v1521 = vld [vmem:[#allocation8 + $0x48] sm:$0xff]
    %v1522 = vld [vmem:[#allocation8 + $0x50] sm:$0xff]
    %v1523 = vld [vmem:[#allocation8 + $0x58] sm:$0xff]
    %v1524 = vld [vmem:[#allocation8 + $0x60] sm:$0xff]
    %v1525 = vld [vmem:[#allocation8 + $0x68] sm:$0xff]
    %v1526 = vld [vmem:[#allocation8 + $0x70] sm:$0xff]
    %v1527 = vld [vmem:[#allocation8 + $0x78] sm:$0xff]
    %1528 = vmatprep.subr.mxu0 0.0
    %1529 = vmatpush1.msra.mxu0 %v1512
    %1530 = vmatprep.subr.mxu0 0.0
    %1531 = vmatpush1.msra.mxu0 %v1513
    %1532 = vmatprep.subr.mxu0 0.0
    %1533 = vmatpush1.msra.mxu0 %v1514
    %1534 = vmatprep.subr.mxu0 0.0
    %1535 = vmatpush1.msra.mxu0 %v1515
    %1536 = vmatprep.subr.mxu0 0.0
    %1537 = vmatpush1.msra.mxu0 %v1516
    %1538 = vmatprep.subr.mxu0 0.0
    %1539 = vmatpush1.msra.mxu0 %v1517
    %1540 = vmatprep.subr.mxu0 0.0
    %1541 = vmatpush1.msra.mxu0 %v1518
    %1542 = vmatprep.subr.mxu0 0.0
    %1543 = vmatpush1.msra.mxu0 %v1519
    %1544 = vmatprep.subr.mxu0 0.0
    %1545 = vmatpush1.msra.mxu0 %v1520
    %1546 = vmatprep.subr.mxu0 0.0
    %1547 = vmatpush1.msra.mxu0 %v1521
    %1548 = vmatprep.subr.mxu0 0.0
    %1549 = vmatpush1.msra.mxu0 %v1522
    %1550 = vmatprep.subr.mxu0 0.0
    %1551 = vmatpush1.msra.mxu0 %v1523
    %1552 = vmatprep.subr.mxu0 0.0
    %1553 = vmatpush1.msra.mxu0 %v1524
    %1554 = vmatprep.subr.mxu0 0.0
    %1555 = vmatpush1.msra.mxu0 %v1525
    %1556 = vmatprep.subr.mxu0 0.0
    %1557 = vmatpush1.msra.mxu0 %v1526
    %1558 = vmatprep.subr.mxu0 0.0
    %1559 = vmatpush1.msra.mxu0 %v1527
    %1560 = vmatprep.subr.mxu0 0.0
    %1561 = vmatpush1.msra.mxu0 0.0
    %1562 = vmatprep.subr.mxu0 0.0
    %1563 = vmatpush1.msra.mxu0 0.0
    %1564 = vmatprep.subr.mxu0 0.0
    %1565 = vmatpush1.msra.mxu0 0.0
    %1566 = vmatprep.subr.mxu0 0.0
    %1567 = vmatpush1.msra.mxu0 0.0
    %1568 = vmatprep.subr.mxu0 0.0
    %1569 = vmatpush1.msra.mxu0 0.0
    %1570 = vmatprep.subr.mxu0 0.0
    %1571 = vmatpush1.msra.mxu0 0.0
    %1572 = vmatprep.subr.mxu0 0.0
    %1573 = vmatpush1.msra.mxu0 0.0
    %1574 = vmatprep.subr.mxu0 0.0
    %1575 = vmatpush1.msra.mxu0 0.0
    %1576 = vmatprep.subr.mxu0 0.0
    %1577 = vmatpush1.msra.mxu0 0.0
    %1578 = vmatprep.subr.mxu0 0.0
    %1579 = vmatpush1.msra.mxu0 0.0
    %1580 = vmatprep.subr.mxu0 0.0
    %1581 = vmatpush1.msra.mxu0 0.0
    %1582 = vmatprep.subr.mxu0 0.0
    %1583 = vmatpush1.msra.mxu0 0.0
    %1584 = vmatprep.subr.mxu0 0.0
    %1585 = vmatpush1.msra.mxu0 0.0
    %1586 = vmatprep.subr.mxu0 0.0
    %1587 = vmatpush1.msra.mxu0 0.0
    %1588 = vmatprep.subr.mxu0 0.0
    %1589 = vmatpush1.msra.mxu0 0.0
    %1590 = vmatprep.subr.mxu0 0.0
    %1591 = vmatpush1.msra.mxu0 0.0
    %1592 = vmatprep.mubr.f32.mxu0 0.0
    %1593 = vmatmul.mubr.f32.gmra.mrb[0].mxu0 %v1504
    %v1594 = vpop.f32.mrb[0].mxu0
    %v1595 = vadd.f32 0.0, %v1594
    %v1596 = vpop.f32.mrb[0].mxu0
    %1597 = vmatprep.mubr.f32.mxu0 0.0
    %1598 = vmatmul.mubr.f32.gmra.mrb[0].mxu0 %v1509
    %v1599 = vpop.f32.mrb[0].mxu0
    %v1600 = vadd.f32 0.0, %v1599
    %v1601 = vpop.f32.mrb[0].mxu0
    %1602 = vdwg.mxu0
    %v1603 = vadd.f32 %v168, %v1595
    %v1604 = vadd.f32 %v173, %v1600
    %v1605 = vtanh.pop %v1603
    %v1606 = vtanh.pop %v1604
    %v1607 = vmul.f32 %v1605, 0.9
    %v1608 = vmul.f32 %v1606, 0.9
    %v1609 = vmul.f32 %v1427, 0.1
    %v1610 = vmul.f32 %v1428, 0.1
    %v1611 = vadd.f32 %v1607, %v1609
    %v1612 = vadd.f32 %v1608, %v1610
    %v1613 = vsub.f32 %v1427, %v1611
    %v1614 = vsub.f32 %v1428, %v1612
    %v1615 = vmul.f32 %v1613, %v1613
    %v1616 = vmul.f32 %v1614, %v1614
    %v1617 = vadd.f32 %v1615, %v1616
    %1618 = vadd.xlane.f32.xlu0 %v1617
    %v1619 = vpop.xlane.xlu0 %1618
    %v1620 = vrot.slane %v1619, 4
    %v1621 = vadd.f32 %v1619, %v1620
    %v1622 = vrot.slane %v1621, 2
    %v1623 = vadd.f32 %v1621, %v1622
    %v1624 = vrot.slane %v1623, 1
    %v1625 = vadd.f32 %v1623, %v1624
    %s1626 = vtos %v1625
    %s1627 = scalar_select %p1426, 1, 0
    %v1628 = vstv %s1627
    %vm1629 = vcmp.eq.s32.totalorder %v1628, 1
    %v1630 = vsel %vm1629, %v1427, %v1611
    %v1631 = vsel %vm1629, %v1428, %v1612
    %1632 = vst [vmem:[#allocation10] sm:$0xff] %v1630
    %1633 = vst [vmem:[#allocation10 + $0x8] sm:$0xff] %v1631
    %p1634 = scmp.lt.f32.partialorder %s1626, 1e-10
    %p1635 = por %p1426, %p1634
    %v1636 = vld [vmem:[#allocation10] sm:$0xff]
    %v1637 = vld [vmem:[#allocation10 + $0x8] sm:$0xff]
    %v1638 = vld [vmem:[#allocation2] sm:$0xff]
    %v1639 = vld [vmem:[#allocation2 + $0x8] sm:$0xff]
    %v1641 = vsel %vm182, %v1638, 0
    %v1644 = vsel %vm182, %v1639, 0
    %1646 = vmatprep.subr.mxu0 0.0
    %1647 = vmatpush1.msra.mxu0 %v1636
    %1648 = vmatprep.subr.mxu0 0.0
    %1649 = vmatpush1.msra.mxu0 %v1637
    %1650 = vmatprep.subr.mxu0 0.0
    %1651 = vmatpush1.msra.mxu0 0.0
    %1652 = vmatprep.subr.mxu0 0.0
    %1653 = vmatpush1.msra.mxu0 0.0
    %1654 = vmatprep.subr.mxu0 0.0
    %1655 = vmatpush1.msra.mxu0 0.0
    %1656 = vmatprep.subr.mxu0 0.0
    %1657 = vmatpush1.msra.mxu0 0.0
    %1658 = vmatprep.subr.mxu0 0.0
    %1659 = vmatpush1.msra.mxu0 0.0
    %1660 = vmatprep.subr.mxu0 0.0
    %1661 = vmatpush1.msra.mxu0 0.0
    %1662 = vmatprep.subr.mxu0 0.0
    %1663 = vmatpush1.msra.mxu0 0.0
    %1664 = vmatprep.subr.mxu0 0.0
    %1665 = vmatpush1.msra.mxu0 0.0
    %1666 = vmatprep.subr.mxu0 0.0
    %1667 = vmatpush1.msra.mxu0 0.0
    %1668 = vmatprep.subr.mxu0 0.0
    %1669 = vmatpush1.msra.mxu0 0.0
    %1670 = vmatprep.subr.mxu0 0.0
    %1671 = vmatpush1.msra.mxu0 0.0
    %1672 = vmatprep.subr.mxu0 0.0
    %1673 = vmatpush1.msra.mxu0 0.0
    %1674 = vmatprep.subr.mxu0 0.0
    %1675 = vmatpush1.msra.mxu0 0.0
    %1676 = vmatprep.subr.mxu0 0.0
    %1677 = vmatpush1.msra.mxu0 0.0
    %1678 = vmatprep.subr.mxu0 0.0
    %1679 = vmatpush1.msra.mxu0 0.0
    %1680 = vmatprep.subr.mxu0 0.0
    %1681 = vmatpush1.msra.mxu0 0.0
    %1682 = vmatprep.subr.mxu0 0.0
    %1683 = vmatpush1.msra.mxu0 0.0
    %1684 = vmatprep.subr.mxu0 0.0
    %1685 = vmatpush1.msra.mxu0 0.0
    %1686 = vmatprep.subr.mxu0 0.0
    %1687 = vmatpush1.msra.mxu0 0.0
    %1688 = vmatprep.subr.mxu0 0.0
    %1689 = vmatpush1.msra.mxu0 0.0
    %1690 = vmatprep.subr.mxu0 0.0
    %1691 = vmatpush1.msra.mxu0 0.0
    %1692 = vmatprep.subr.mxu0 0.0
    %1693 = vmatpush1.msra.mxu0 0.0
    %1694 = vmatprep.subr.mxu0 0.0
    %1695 = vmatpush1.msra.mxu0 0.0
    %1696 = vmatprep.subr.mxu0 0.0
    %1697 = vmatpush1.msra.mxu0 0.0
    %1698 = vmatprep.subr.mxu0 0.0
    %1699 = vmatpush1.msra.mxu0 0.0
    %1700 = vmatprep.subr.mxu0 0.0
    %1701 = vmatpush1.msra.mxu0 0.0
    %1702 = vmatprep.subr.mxu0 0.0
    %1703 = vmatpush1.msra.mxu0 0.0
    %1704 = vmatprep.subr.mxu0 0.0
    %1705 = vmatpush1.msra.mxu0 0.0
    %1706 = vmatprep.subr.mxu0 0.0
    %1707 = vmatpush1.msra.mxu0 0.0
    %1708 = vmatprep.subr.mxu0 0.0
    %1709 = vmatpush1.msra.mxu0 0.0
    %1710 = vmatprep.mubr.f32.mxu0 0.0
    %1711 = vmatmul.mubr.f32.gmra.mrb[0].mxu0 %v1641
    %v1712 = vpop.f32.mrb[0].mxu0
    %v1713 = vadd.f32 0.0, %v1712
    %v1714 = vpop.f32.mrb[0].mxu0
    %1715 = vmatprep.mubr.f32.mxu0 0.0
    %1716 = vmatmul.mubr.f32.gmra.mrb[0].mxu0 %v1644
    %v1717 = vpop.f32.mrb[0].mxu0
    %v1718 = vadd.f32 0.0, %v1717
    %v1719 = vpop.f32.mrb[0].mxu0
    %1720 = vdwg.mxu0
    %v1721 = vld [vmem:[#allocation8] sm:$0xff]
    %v1722 = vld [vmem:[#allocation8 + $0x8] sm:$0xff]
    %v1723 = vld [vmem:[#allocation8 + $0x10] sm:$0xff]
    %v1724 = vld [vmem:[#allocation8 + $0x18] sm:$0xff]
    %v1725 = vld [vmem:[#allocation8 + $0x20] sm:$0xff]
    %v1726 = vld [vmem:[#allocation8 + $0x28] sm:$0xff]
    %v1727 = vld [vmem:[#allocation8 + $0x30] sm:$0xff]
    %v1728 = vld [vmem:[#allocation8 + $0x38] sm:$0xff]
    %v1729 = vld [vmem:[#allocation8 + $0x40] sm:$0xff]
    %v1730 = vld [vmem:[#allocation8 + $0x48] sm:$0xff]
    %v1731 = vld [vmem:[#allocation8 + $0x50] sm:$0xff]
    %v1732 = vld [vmem:[#allocation8 + $0x58] sm:$0xff]
    %v1733 = vld [vmem:[#allocation8 + $0x60] sm:$0xff]
    %v1734 = vld [vmem:[#allocation8 + $0x68] sm:$0xff]
    %v1735 = vld [vmem:[#allocation8 + $0x70] sm:$0xff]
    %v1736 = vld [vmem:[#allocation8 + $0x78] sm:$0xff]
    %1737 = vmatprep.subr.mxu0 0.0
    %1738 = vmatpush1.msra.mxu0 %v1721
    %1739 = vmatprep.subr.mxu0 0.0
    %1740 = vmatpush1.msra.mxu0 %v1722
    %1741 = vmatprep.subr.mxu0 0.0
    %1742 = vmatpush1.msra.mxu0 %v1723
    %1743 = vmatprep.subr.mxu0 0.0
    %1744 = vmatpush1.msra.mxu0 %v1724
    %1745 = vmatprep.subr.mxu0 0.0
    %1746 = vmatpush1.msra.mxu0 %v1725
    %1747 = vmatprep.subr.mxu0 0.0
    %1748 = vmatpush1.msra.mxu0 %v1726
    %1749 = vmatprep.subr.mxu0 0.0
    %1750 = vmatpush1.msra.mxu0 %v1727
    %1751 = vmatprep.subr.mxu0 0.0
    %1752 = vmatpush1.msra.mxu0 %v1728
    %1753 = vmatprep.subr.mxu0 0.0
    %1754 = vmatpush1.msra.mxu0 %v1729
    %1755 = vmatprep.subr.mxu0 0.0
    %1756 = vmatpush1.msra.mxu0 %v1730
    %1757 = vmatprep.subr.mxu0 0.0
    %1758 = vmatpush1.msra.mxu0 %v1731
    %1759 = vmatprep.subr.mxu0 0.0
    %1760 = vmatpush1.msra.mxu0 %v1732
    %1761 = vmatprep.subr.mxu0 0.0
    %1762 = vmatpush1.msra.mxu0 %v1733
    %1763 = vmatprep.subr.mxu0 0.0
    %1764 = vmatpush1.msra.mxu0 %v1734
    %1765 = vmatprep.subr.mxu0 0.0
    %1766 = vmatpush1.msra.mxu0 %v1735
    %1767 = vmatprep.subr.mxu0 0.0
    %1768 = vmatpush1.msra.mxu0 %v1736
    %1769 = vmatprep.subr.mxu0 0.0
    %1770 = vmatpush1.msra.mxu0 0.0
    %1771 = vmatprep.subr.mxu0 0.0
    %1772 = vmatpush1.msra.mxu0 0.0
    %1773 = vmatprep.subr.mxu0 0.0
    %1774 = vmatpush1.msra.mxu0 0.0
    %1775 = vmatprep.subr.mxu0 0.0
    %1776 = vmatpush1.msra.mxu0 0.0
    %1777 = vmatprep.subr.mxu0 0.0
    %1778 = vmatpush1.msra.mxu0 0.0
    %1779 = vmatprep.subr.mxu0 0.0
    %1780 = vmatpush1.msra.mxu0 0.0
    %1781 = vmatprep.subr.mxu0 0.0
    %1782 = vmatpush1.msra.mxu0 0.0
    %1783 = vmatprep.subr.mxu0 0.0
    %1784 = vmatpush1.msra.mxu0 0.0
    %1785 = vmatprep.subr.mxu0 0.0
    %1786 = vmatpush1.msra.mxu0 0.0
    %1787 = vmatprep.subr.mxu0 0.0
    %1788 = vmatpush1.msra.mxu0 0.0
    %1789 = vmatprep.subr.mxu0 0.0
    %1790 = vmatpush1.msra.mxu0 0.0
    %1791 = vmatprep.subr.mxu0 0.0
    %1792 = vmatpush1.msra.mxu0 0.0
    %1793 = vmatprep.subr.mxu0 0.0
    %1794 = vmatpush1.msra.mxu0 0.0
    %1795 = vmatprep.subr.mxu0 0.0
    %1796 = vmatpush1.msra.mxu0 0.0
    %1797 = vmatprep.subr.mxu0 0.0
    %1798 = vmatpush1.msra.mxu0 0.0
    %1799 = vmatprep.subr.mxu0 0.0
    %1800 = vmatpush1.msra.mxu0 0.0
    %1801 = vmatprep.mubr.f32.mxu0 0.0
    %1802 = vmatmul.mubr.f32.gmra.mrb[0].mxu0 %v1713
    %v1803 = vpop.f32.mrb[0].mxu0
    %v1804 = vadd.f32 0.0, %v1803
    %v1805 = vpop.f32.mrb[0].mxu0
    %1806 = vmatprep.mubr.f32.mxu0 0.0
    %1807 = vmatmul.mubr.f32.gmra.mrb[0].mxu0 %v1718
    %v1808 = vpop.f32.mrb[0].mxu0
    %v1809 = vadd.f32 0.0, %v1808
    %v1810 = vpop.f32.mrb[0].mxu0
    %1811 = vdwg.mxu0
    %v1812 = vadd.f32 %v168, %v1804
    %v1813 = vadd.f32 %v173, %v1809
    %v1814 = vtanh.pop %v1812
    %v1815 = vtanh.pop %v1813
    %v1816 = vmul.f32 %v1814, 0.9
    %v1817 = vmul.f32 %v1815, 0.9
    %v1818 = vmul.f32 %v1636, 0.1
    %v1819 = vmul.f32 %v1637, 0.1
    %v1820 = vadd.f32 %v1816, %v1818
    %v1821 = vadd.f32 %v1817, %v1819
    %v1822 = vsub.f32 %v1636, %v1820
    %v1823 = vsub.f32 %v1637, %v1821
    %v1824 = vmul.f32 %v1822, %v1822
    %v1825 = vmul.f32 %v1823, %v1823
    %v1826 = vadd.f32 %v1824, %v1825
    %1827 = vadd.xlane.f32.xlu0 %v1826
    %v1828 = vpop.xlane.xlu0 %1827
    %v1829 = vrot.slane %v1828, 4
    %v1830 = vadd.f32 %v1828, %v1829
    %v1831 = vrot.slane %v1830, 2
    %v1832 = vadd.f32 %v1830, %v1831
    %v1833 = vrot.slane %v1832, 1
    %v1834 = vadd.f32 %v1832, %v1833
    %s1835 = vtos %v1834
    %s1836 = scalar_select %p1635, 1, 0
    %v1837 = vstv %s1836
    %vm1838 = vcmp.eq.s32.totalorder %v1837, 1
    %v1839 = vsel %vm1838, %v1636, %v1820
    %v1840 = vsel %vm1838, %v1637, %v1821
    %1841 = vst [vmem:[#allocation10] sm:$0xff] %v1839
    %1842 = vst [vmem:[#allocation10 + $0x8] sm:$0xff] %v1840
    %p1843 = scmp.lt.f32.partialorder %s1835, 1e-10
    %p1844 = por %p1635, %p1843
    %v1845 = vld [vmem:[#allocation10] sm:$0xff]
    %v1846 = vld [vmem:[#allocation10 + $0x8] sm:$0xff]
    %v1847 = vld [vmem:[#allocation2] sm:$0xff]
    %v1848 = vld [vmem:[#allocation2 + $0x8] sm:$0xff]
    %v1850 = vsel %vm182, %v1847, 0
    %v1853 = vsel %vm182, %v1848, 0
    %1855 = vmatprep.subr.mxu0 0.0
    %1856 = vmatpush1.msra.mxu0 %v1845
    %1857 = vmatprep.subr.mxu0 0.0
    %1858 = vmatpush1.msra.mxu0 %v1846
    %1859 = vmatprep.subr.mxu0 0.0
    %1860 = vmatpush1.msra.mxu0 0.0
    %1861 = vmatprep.subr.mxu0 0.0
    %1862 = vmatpush1.msra.mxu0 0.0
    %1863 = vmatprep.subr.mxu0 0.0
    %1864 = vmatpush1.msra.mxu0 0.0
    %1865 = vmatprep.subr.mxu0 0.0
    %1866 = vmatpush1.msra.mxu0 0.0
    %1867 = vmatprep.subr.mxu0 0.0
    %1868 = vmatpush1.msra.mxu0 0.0
    %1869 = vmatprep.subr.mxu0 0.0
    %1870 = vmatpush1.msra.mxu0 0.0
    %1871 = vmatprep.subr.mxu0 0.0
    %1872 = vmatpush1.msra.mxu0 0.0
    %1873 = vmatprep.subr.mxu0 0.0
    %1874 = vmatpush1.msra.mxu0 0.0
    %1875 = vmatprep.subr.mxu0 0.0
    %1876 = vmatpush1.msra.mxu0 0.0
    %1877 = vmatprep.subr.mxu0 0.0
    %1878 = vmatpush1.msra.mxu0 0.0
    %1879 = vmatprep.subr.mxu0 0.0
    %1880 = vmatpush1.msra.mxu0 0.0
    %1881 = vmatprep.subr.mxu0 0.0
    %1882 = vmatpush1.msra.mxu0 0.0
    %1883 = vmatprep.subr.mxu0 0.0
    %1884 = vmatpush1.msra.mxu0 0.0
    %1885 = vmatprep.subr.mxu0 0.0
    %1886 = vmatpush1.msra.mxu0 0.0
    %1887 = vmatprep.subr.mxu0 0.0
    %1888 = vmatpush1.msra.mxu0 0.0
    %1889 = vmatprep.subr.mxu0 0.0
    %1890 = vmatpush1.msra.mxu0 0.0
    %1891 = vmatprep.subr.mxu0 0.0
    %1892 = vmatpush1.msra.mxu0 0.0
    %1893 = vmatprep.subr.mxu0 0.0
    %1894 = vmatpush1.msra.mxu0 0.0
    %1895 = vmatprep.subr.mxu0 0.0
    %1896 = vmatpush1.msra.mxu0 0.0
    %1897 = vmatprep.subr.mxu0 0.0
    %1898 = vmatpush1.msra.mxu0 0.0
    %1899 = vmatprep.subr.mxu0 0.0
    %1900 = vmatpush1.msra.mxu0 0.0
    %1901 = vmatprep.subr.mxu0 0.0
    %1902 = vmatpush1.msra.mxu0 0.0
    %1903 = vmatprep.subr.mxu0 0.0
    %1904 = vmatpush1.msra.mxu0 0.0
    %1905 = vmatprep.subr.mxu0 0.0
    %1906 = vmatpush1.msra.mxu0 0.0
    %1907 = vmatprep.subr.mxu0 0.0
    %1908 = vmatpush1.msra.mxu0 0.0
    %1909 = vmatprep.subr.mxu0 0.0
    %1910 = vmatpush1.msra.mxu0 0.0
    %1911 = vmatprep.subr.mxu0 0.0
    %1912 = vmatpush1.msra.mxu0 0.0
    %1913 = vmatprep.subr.mxu0 0.0
    %1914 = vmatpush1.msra.mxu0 0.0
    %1915 = vmatprep.subr.mxu0 0.0
    %1916 = vmatpush1.msra.mxu0 0.0
    %1917 = vmatprep.subr.mxu0 0.0
    %1918 = vmatpush1.msra.mxu0 0.0
    %1919 = vmatprep.mubr.f32.mxu0 0.0
    %1920 = vmatmul.mubr.f32.gmra.mrb[0].mxu0 %v1850
    %v1921 = vpop.f32.mrb[0].mxu0
    %v1922 = vadd.f32 0.0, %v1921
    %v1923 = vpop.f32.mrb[0].mxu0
    %1924 = vmatprep.mubr.f32.mxu0 0.0
    %1925 = vmatmul.mubr.f32.gmra.mrb[0].mxu0 %v1853
    %v1926 = vpop.f32.mrb[0].mxu0
    %v1927 = vadd.f32 0.0, %v1926
    %v1928 = vpop.f32.mrb[0].mxu0
    %1929 = vdwg.mxu0
    %v1930 = vld [vmem:[#allocation8] sm:$0xff]
    %v1931 = vld [vmem:[#allocation8 + $0x8] sm:$0xff]
    %v1932 = vld [vmem:[#allocation8 + $0x10] sm:$0xff]
    %v1933 = vld [vmem:[#allocation8 + $0x18] sm:$0xff]
    %v1934 = vld [vmem:[#allocation8 + $0x20] sm:$0xff]
    %v1935 = vld [vmem:[#allocation8 + $0x28] sm:$0xff]
    %v1936 = vld [vmem:[#allocation8 + $0x30] sm:$0xff]
    %v1937 = vld [vmem:[#allocation8 + $0x38] sm:$0xff]
    %v1938 = vld [vmem:[#allocation8 + $0x40] sm:$0xff]
    %v1939 = vld [vmem:[#allocation8 + $0x48] sm:$0xff]
    %v1940 = vld [vmem:[#allocation8 + $0x50] sm:$0xff]
    %v1941 = vld [vmem:[#allocation8 + $0x58] sm:$0xff]
    %v1942 = vld [vmem:[#allocation8 + $0x60] sm:$0xff]
    %v1943 = vld [vmem:[#allocation8 + $0x68] sm:$0xff]
    %v1944 = vld [vmem:[#allocation8 + $0x70] sm:$0xff]
    %v1945 = vld [vmem:[#allocation8 + $0x78] sm:$0xff]
    %1946 = vmatprep.subr.mxu0 0.0
    %1947 = vmatpush1.msra.mxu0 %v1930
    %1948 = vmatprep.subr.mxu0 0.0
    %1949 = vmatpush1.msra.mxu0 %v1931
    %1950 = vmatprep.subr.mxu0 0.0
    %1951 = vmatpush1.msra.mxu0 %v1932
    %1952 = vmatprep.subr.mxu0 0.0
    %1953 = vmatpush1.msra.mxu0 %v1933
    %1954 = vmatprep.subr.mxu0 0.0
    %1955 = vmatpush1.msra.mxu0 %v1934
    %1956 = vmatprep.subr.mxu0 0.0
    %1957 = vmatpush1.msra.mxu0 %v1935
    %1958 = vmatprep.subr.mxu0 0.0
    %1959 = vmatpush1.msra.mxu0 %v1936
    %1960 = vmatprep.subr.mxu0 0.0
    %1961 = vmatpush1.msra.mxu0 %v1937
    %1962 = vmatprep.subr.mxu0 0.0
    %1963 = vmatpush1.msra.mxu0 %v1938
    %1964 = vmatprep.subr.mxu0 0.0
    %1965 = vmatpush1.msra.mxu0 %v1939
    %1966 = vmatprep.subr.mxu0 0.0
    %1967 = vmatpush1.msra.mxu0 %v1940
    %1968 = vmatprep.subr.mxu0 0.0
    %1969 = vmatpush1.msra.mxu0 %v1941
    %1970 = vmatprep.subr.mxu0 0.0
    %1971 = vmatpush1.msra.mxu0 %v1942
    %1972 = vmatprep.subr.mxu0 0.0
    %1973 = vmatpush1.msra.mxu0 %v1943
    %1974 = vmatprep.subr.mxu0 0.0
    %1975 = vmatpush1.msra.mxu0 %v1944
    %1976 = vmatprep.subr.mxu0 0.0
    %1977 = vmatpush1.msra.mxu0 %v1945
    %1978 = vmatprep.subr.mxu0 0.0
    %1979 = vmatpush1.msra.mxu0 0.0
    %1980 = vmatprep.subr.mxu0 0.0
    %1981 = vmatpush1.msra.mxu0 0.0
    %1982 = vmatprep.subr.mxu0 0.0
    %1983 = vmatpush1.msra.mxu0 0.0
    %1984 = vmatprep.subr.mxu0 0.0
    %1985 = vmatpush1.msra.mxu0 0.0
    %1986 = vmatprep.subr.mxu0 0.0
    %1987 = vmatpush1.msra.mxu0 0.0
    %1988 = vmatprep.subr.mxu0 0.0
    %1989 = vmatpush1.msra.mxu0 0.0
    %1990 = vmatprep.subr.mxu0 0.0
    %1991 = vmatpush1.msra.mxu0 0.0
    %1992 = vmatprep.subr.mxu0 0.0
    %1993 = vmatpush1.msra.mxu0 0.0
    %1994 = vmatprep.subr.mxu0 0.0
    %1995 = vmatpush1.msra.mxu0 0.0
    %1996 = vmatprep.subr.mxu0 0.0
    %1997 = vmatpush1.msra.mxu0 0.0
    %1998 = vmatprep.subr.mxu0 0.0
    %1999 = vmatpush1.msra.mxu0 0.0
    %2000 = vmatprep.subr.mxu0 0.0
    %2001 = vmatpush1.msra.mxu0 0.0
    %2002 = vmatprep.subr.mxu0 0.0
    %2003 = vmatpush1.msra.mxu0 0.0
    %2004 = vmatprep.subr.mxu0 0.0
    %2005 = vmatpush1.msra.mxu0 0.0
    %2006 = vmatprep.subr.mxu0 0.0
    %2007 = vmatpush1.msra.mxu0 0.0
    %2008 = vmatprep.subr.mxu0 0.0
    %2009 = vmatpush1.msra.mxu0 0.0
    %2010 = vmatprep.mubr.f32.mxu0 0.0
    %2011 = vmatmul.mubr.f32.gmra.mrb[0].mxu0 %v1922
    %v2012 = vpop.f32.mrb[0].mxu0
    %v2013 = vadd.f32 0.0, %v2012
    %v2014 = vpop.f32.mrb[0].mxu0
    %2015 = vmatprep.mubr.f32.mxu0 0.0
    %2016 = vmatmul.mubr.f32.gmra.mrb[0].mxu0 %v1927
    %v2017 = vpop.f32.mrb[0].mxu0
    %v2018 = vadd.f32 0.0, %v2017
    %v2019 = vpop.f32.mrb[0].mxu0
    %2020 = vdwg.mxu0
    %v2021 = vadd.f32 %v168, %v2013
    %v2022 = vadd.f32 %v173, %v2018
    %v2023 = vtanh.pop %v2021
    %v2024 = vtanh.pop %v2022
    %v2025 = vmul.f32 %v2023, 0.9
    %v2026 = vmul.f32 %v2024, 0.9
    %v2027 = vmul.f32 %v1845, 0.1
    %v2028 = vmul.f32 %v1846, 0.1
    %v2029 = vadd.f32 %v2025, %v2027
    %v2030 = vadd.f32 %v2026, %v2028
    %s2031 = scalar_select %p1844, 1, 0
    %v2032 = vstv %s2031
    %vm2033 = vcmp.eq.s32.totalorder %v2032, 1
    %v2034 = vsel %vm2033, %v1845, %v2029
    %v2035 = vsel %vm2033, %v1846, %v2030
    %2036 = vst [vmem:[#allocation10] sm:$0xff] %v2034
    %2037 = vst [vmem:[#allocation10 + $0x8] sm:$0xff] %v2035
    %v2038 = vld [vmem:[#allocation10] sm:$0xff]
    %v2039 = vld [vmem:[#allocation10 + $0x8] sm:$0xff]
    %s2040 = scalar_lea.vmem [#allocation7], 128
    %v2041 = vld [vmem:[%s2040] sm:$0xff]
    %v2042 = vld [vmem:[%s2040 + $0x8] sm:$0xff]
    %v2043 = vld [vmem:[%s2040 + $0x10] sm:$0xff]
    %v2044 = vld [vmem:[%s2040 + $0x18] sm:$0xff]
    %v2045 = vld [vmem:[%s2040 + $0x20] sm:$0xff]
    %v2046 = vld [vmem:[%s2040 + $0x28] sm:$0xff]
    %v2047 = vld [vmem:[%s2040 + $0x30] sm:$0xff]
    %v2048 = vld [vmem:[%s2040 + $0x38] sm:$0xff]
    %v2049 = vld [vmem:[%s2040 + $0x40] sm:$0xff]
    %v2050 = vld [vmem:[%s2040 + $0x48] sm:$0xff]
    %v2051 = vld [vmem:[%s2040 + $0x50] sm:$0xff]
    %v2052 = vld [vmem:[%s2040 + $0x58] sm:$0xff]
    %v2053 = vld [vmem:[%s2040 + $0x60] sm:$0xff]
    %v2054 = vld [vmem:[%s2040 + $0x68] sm:$0xff]
    %v2055 = vld [vmem:[%s2040 + $0x70] sm:$0xff]
    %v2056 = vld [vmem:[%s2040 + $0x78] sm:$0xff]
    %s2057 = scalar_lea.vmem %s4, 1
    %v2058 = vld [vmem:[%s2057] sm:$0x1]
    %v2060 = vlaneseq
    %v2061 = vshrl.u32 %v2060, 7
    %v2062 = vsub.s32 0, %v2061
    %v2063 = vrot.slane %v2058, %v2062
    %2065 = vmatprep.subr.mxu0 0.0
    %2066 = vmatpush1.msra.mxu0 %v2041
    %2067 = vmatprep.subr.mxu0 0.0
    %2068 = vmatpush1.msra.mxu0 %v2042
    %2069 = vmatprep.subr.mxu0 0.0
    %2070 = vmatpush1.msra.mxu0 %v2043
    %2071 = vmatprep.subr.mxu0 0.0
    %2072 = vmatpush1.msra.mxu0 %v2044
    %2073 = vmatprep.subr.mxu0 0.0
    %2074 = vmatpush1.msra.mxu0 %v2045
    %2075 = vmatprep.subr.mxu0 0.0
    %2076 = vmatpush1.msra.mxu0 %v2046
    %2077 = vmatprep.subr.mxu0 0.0
    %2078 = vmatpush1.msra.mxu0 %v2047
    %2079 = vmatprep.subr.mxu0 0.0
    %2080 = vmatpush1.msra.mxu0 %v2048
    %2081 = vmatprep.subr.mxu0 0.0
    %2082 = vmatpush1.msra.mxu0 %v2049
    %2083 = vmatprep.subr.mxu0 0.0
    %2084 = vmatpush1.msra.mxu0 %v2050
    %2085 = vmatprep.subr.mxu0 0.0
    %2086 = vmatpush1.msra.mxu0 %v2051
    %2087 = vmatprep.subr.mxu0 0.0
    %2088 = vmatpush1.msra.mxu0 %v2052
    %2089 = vmatprep.subr.mxu0 0.0
    %2090 = vmatpush1.msra.mxu0 %v2053
    %2091 = vmatprep.subr.mxu0 0.0
    %2092 = vmatpush1.msra.mxu0 %v2054
    %2093 = vmatprep.subr.mxu0 0.0
    %2094 = vmatpush1.msra.mxu0 %v2055
    %2095 = vmatprep.subr.mxu0 0.0
    %2096 = vmatpush1.msra.mxu0 %v2056
    %2097 = vmatprep.subr.mxu0 0.0
    %2098 = vmatpush1.msra.mxu0 0.0
    %2099 = vmatprep.subr.mxu0 0.0
    %2100 = vmatpush1.msra.mxu0 0.0
    %2101 = vmatprep.subr.mxu0 0.0
    %2102 = vmatpush1.msra.mxu0 0.0
    %2103 = vmatprep.subr.mxu0 0.0
    %2104 = vmatpush1.msra.mxu0 0.0
    %2105 = vmatprep.subr.mxu0 0.0
    %2106 = vmatpush1.msra.mxu0 0.0
    %2107 = vmatprep.subr.mxu0 0.0
    %2108 = vmatpush1.msra.mxu0 0.0
    %2109 = vmatprep.subr.mxu0 0.0
    %2110 = vmatpush1.msra.mxu0 0.0
    %2111 = vmatprep.subr.mxu0 0.0
    %2112 = vmatpush1.msra.mxu0 0.0
    %2113 = vmatprep.subr.mxu0 0.0
    %2114 = vmatpush1.msra.mxu0 0.0
    %2115 = vmatprep.subr.mxu0 0.0
    %2116 = vmatpush1.msra.mxu0 0.0
    %2117 = vmatprep.subr.mxu0 0.0
    %2118 = vmatpush1.msra.mxu0 0.0
    %2119 = vmatprep.subr.mxu0 0.0
    %2120 = vmatpush1.msra.mxu0 0.0
    %2121 = vmatprep.subr.mxu0 0.0
    %2122 = vmatpush1.msra.mxu0 0.0
    %2123 = vmatprep.subr.mxu0 0.0
    %2124 = vmatpush1.msra.mxu0 0.0
    %2125 = vmatprep.subr.mxu0 0.0
    %2126 = vmatpush1.msra.mxu0 0.0
    %2127 = vmatprep.subr.mxu0 0.0
    %2128 = vmatpush1.msra.mxu0 0.0
    %2129 = vmatprep.mubr.f32.mxu0 0.0
    %2130 = vmatmul.mubr.f32.gmra.mrb[0].mxu0 %v2038
    %v2131 = vpop.f32.mrb[0].mxu0
    %v2132 = vadd.f32 %v2063, %v2131
    %v2133 = vpop.f32.mrb[0].mxu0
    %2134 = vmatprep.mubr.f32.mxu0 0.0
    %2135 = vmatmul.mubr.f32.gmra.mrb[0].mxu0 %v2039
    %v2136 = vpop.f32.mrb[0].mxu0
    %v2137 = vadd.f32 %v2063, %v2136
    %v2138 = vpop.f32.mrb[0].mxu0
    %2139 = vdwg.mxu0
    %s2140 = scalar_lea.vmem [#allocation10], 16
    %2141 = vst [vmem:[%s2140] sm:$0xff] 0.0
    %2142 = vst [vmem:[%s2140 + $0x8] sm:$0xff] 0.0
    %v2143 = vld [vmem:[%s2140] sm:$0xff]
    %v2144 = vld [vmem:[%s2140 + $0x8] sm:$0xff]
    %v2145 = vld [vmem:[#allocation2] sm:$0xff]
    %v2146 = vld [vmem:[#allocation2 + $0x8] sm:$0xff]
    %v2148 = vsel %vm182, %v2145, 0
    %v2151 = vsel %vm182, %v2146, 0
    %2153 = vmatprep.subr.mxu0 0.0
    %2154 = vmatpush1.msra.mxu0 %v2143
    %2155 = vmatprep.subr.mxu0 0.0
    %2156 = vmatpush1.msra.mxu0 %v2144
    %2157 = vmatprep.subr.mxu0 0.0
    %2158 = vmatpush1.msra.mxu0 0.0
    %2159 = vmatprep.subr.mxu0 0.0
    %2160 = vmatpush1.msra.mxu0 0.0
    %2161 = vmatprep.subr.mxu0 0.0
    %2162 = vmatpush1.msra.mxu0 0.0
    %2163 = vmatprep.subr.mxu0 0.0
    %2164 = vmatpush1.msra.mxu0 0.0
    %2165 = vmatprep.subr.mxu0 0.0
    %2166 = vmatpush1.msra.mxu0 0.0
    %2167 = vmatprep.subr.mxu0 0.0
    %2168 = vmatpush1.msra.mxu0 0.0
    %2169 = vmatprep.subr.mxu0 0.0
    %2170 = vmatpush1.msra.mxu0 0.0
    %2171 = vmatprep.subr.mxu0 0.0
    %2172 = vmatpush1.msra.mxu0 0.0
    %2173 = vmatprep.subr.mxu0 0.0
    %2174 = vmatpush1.msra.mxu0 0.0
    %2175 = vmatprep.subr.mxu0 0.0
    %2176 = vmatpush1.msra.mxu0 0.0
    %2177 = vmatprep.subr.mxu0 0.0
    %2178 = vmatpush1.msra.mxu0 0.0
    %2179 = vmatprep.subr.mxu0 0.0
    %2180 = vmatpush1.msra.mxu0 0.0
    %2181 = vmatprep.subr.mxu0 0.0
    %2182 = vmatpush1.msra.mxu0 0.0
    %2183 = vmatprep.subr.mxu0 0.0
    %2184 = vmatpush1.msra.mxu0 0.0
    %2185 = vmatprep.subr.mxu0 0.0
    %2186 = vmatpush1.msra.mxu0 0.0
    %2187 = vmatprep.subr.mxu0 0.0
    %2188 = vmatpush1.msra.mxu0 0.0
    %2189 = vmatprep.subr.mxu0 0.0
    %2190 = vmatpush1.msra.mxu0 0.0
    %2191 = vmatprep.subr.mxu0 0.0
    %2192 = vmatpush1.msra.mxu0 0.0
    %2193 = vmatprep.subr.mxu0 0.0
    %2194 = vmatpush1.msra.mxu0 0.0
    %2195 = vmatprep.subr.mxu0 0.0
    %2196 = vmatpush1.msra.mxu0 0.0
    %2197 = vmatprep.subr.mxu0 0.0
    %2198 = vmatpush1.msra.mxu0 0.0
    %2199 = vmatprep.subr.mxu0 0.0
    %2200 = vmatpush1.msra.mxu0 0.0
    %2201 = vmatprep.subr.mxu0 0.0
    %2202 = vmatpush1.msra.mxu0 0.0
    %2203 = vmatprep.subr.mxu0 0.0
    %2204 = vmatpush1.msra.mxu0 0.0
    %2205 = vmatprep.subr.mxu0 0.0
    %2206 = vmatpush1.msra.mxu0 0.0
    %2207 = vmatprep.subr.mxu0 0.0
    %2208 = vmatpush1.msra.mxu0 0.0
    %2209 = vmatprep.subr.mxu0 0.0
    %2210 = vmatpush1.msra.mxu0 0.0
    %2211 = vmatprep.subr.mxu0 0.0
    %2212 = vmatpush1.msra.mxu0 0.0
    %2213 = vmatprep.subr.mxu0 0.0
    %2214 = vmatpush1.msra.mxu0 0.0
    %2215 = vmatprep.subr.mxu0 0.0
    %2216 = vmatpush1.msra.mxu0 0.0
    %2217 = vmatprep.mubr.f32.mxu0 0.0
    %2218 = vmatmul.mubr.f32.gmra.mrb[0].mxu0 %v2148
    %v2219 = vpop.f32.mrb[0].mxu0
    %v2220 = vadd.f32 0.0, %v2219
    %v2221 = vpop.f32.mrb[0].mxu0
    %2222 = vmatprep.mubr.f32.mxu0 0.0
    %2223 = vmatmul.mubr.f32.gmra.mrb[0].mxu0 %v2151
    %v2224 = vpop.f32.mrb[0].mxu0
    %v2225 = vadd.f32 0.0, %v2224
    %v2226 = vpop.f32.mrb[0].mxu0
    %2227 = vdwg.mxu0
    %s2228 = scalar_lea.vmem [#allocation8], 128
    %v2229 = vld [vmem:[%s2228] sm:$0xff]
    %v2230 = vld [vmem:[%s2228 + $0x8] sm:$0xff]
    %v2231 = vld [vmem:[%s2228 + $0x10] sm:$0xff]
    %v2232 = vld [vmem:[%s2228 + $0x18] sm:$0xff]
    %v2233 = vld [vmem:[%s2228 + $0x20] sm:$0xff]
    %v2234 = vld [vmem:[%s2228 + $0x28] sm:$0xff]
    %v2235 = vld [vmem:[%s2228 + $0x30] sm:$0xff]
    %v2236 = vld [vmem:[%s2228 + $0x38] sm:$0xff]
    %v2237 = vld [vmem:[%s2228 + $0x40] sm:$0xff]
    %v2238 = vld [vmem:[%s2228 + $0x48] sm:$0xff]
    %v2239 = vld [vmem:[%s2228 + $0x50] sm:$0xff]
    %v2240 = vld [vmem:[%s2228 + $0x58] sm:$0xff]
    %v2241 = vld [vmem:[%s2228 + $0x60] sm:$0xff]
    %v2242 = vld [vmem:[%s2228 + $0x68] sm:$0xff]
    %v2243 = vld [vmem:[%s2228 + $0x70] sm:$0xff]
    %v2244 = vld [vmem:[%s2228 + $0x78] sm:$0xff]
    %2245 = vmatprep.subr.mxu0 0.0
    %2246 = vmatpush1.msra.mxu0 %v2229
    %2247 = vmatprep.subr.mxu0 0.0
    %2248 = vmatpush1.msra.mxu0 %v2230
    %2249 = vmatprep.subr.mxu0 0.0
    %2250 = vmatpush1.msra.mxu0 %v2231
    %2251 = vmatprep.subr.mxu0 0.0
    %2252 = vmatpush1.msra.mxu0 %v2232
    %2253 = vmatprep.subr.mxu0 0.0
    %2254 = vmatpush1.msra.mxu0 %v2233
    %2255 = vmatprep.subr.mxu0 0.0
    %2256 = vmatpush1.msra.mxu0 %v2234
    %2257 = vmatprep.subr.mxu0 0.0
    %2258 = vmatpush1.msra.mxu0 %v2235
    %2259 = vmatprep.subr.mxu0 0.0
    %2260 = vmatpush1.msra.mxu0 %v2236
    %2261 = vmatprep.subr.mxu0 0.0
    %2262 = vmatpush1.msra.mxu0 %v2237
    %2263 = vmatprep.subr.mxu0 0.0
    %2264 = vmatpush1.msra.mxu0 %v2238
    %2265 = vmatprep.subr.mxu0 0.0
    %2266 = vmatpush1.msra.mxu0 %v2239
    %2267 = vmatprep.subr.mxu0 0.0
    %2268 = vmatpush1.msra.mxu0 %v2240
    %2269 = vmatprep.subr.mxu0 0.0
    %2270 = vmatpush1.msra.mxu0 %v2241
    %2271 = vmatprep.subr.mxu0 0.0
    %2272 = vmatpush1.msra.mxu0 %v2242
    %2273 = vmatprep.subr.mxu0 0.0
    %2274 = vmatpush1.msra.mxu0 %v2243
    %2275 = vmatprep.subr.mxu0 0.0
    %2276 = vmatpush1.msra.mxu0 %v2244
    %2277 = vmatprep.subr.mxu0 0.0
    %2278 = vmatpush1.msra.mxu0 0.0
    %2279 = vmatprep.subr.mxu0 0.0
    %2280 = vmatpush1.msra.mxu0 0.0
    %2281 = vmatprep.subr.mxu0 0.0
    %2282 = vmatpush1.msra.mxu0 0.0
    %2283 = vmatprep.subr.mxu0 0.0
    %2284 = vmatpush1.msra.mxu0 0.0
    %2285 = vmatprep.subr.mxu0 0.0
    %2286 = vmatpush1.msra.mxu0 0.0
    %2287 = vmatprep.subr.mxu0 0.0
    %2288 = vmatpush1.msra.mxu0 0.0
    %2289 = vmatprep.subr.mxu0 0.0
    %2290 = vmatpush1.msra.mxu0 0.0
    %2291 = vmatprep.subr.mxu0 0.0
    %2292 = vmatpush1.msra.mxu0 0.0
    %2293 = vmatprep.subr.mxu0 0.0
    %2294 = vmatpush1.msra.mxu0 0.0
    %2295 = vmatprep.subr.mxu0 0.0
    %2296 = vmatpush1.msra.mxu0 0.0
    %2297 = vmatprep.subr.mxu0 0.0
    %2298 = vmatpush1.msra.mxu0 0.0
    %2299 = vmatprep.subr.mxu0 0.0
    %2300 = vmatpush1.msra.mxu0 0.0
    %2301 = vmatprep.subr.mxu0 0.0
    %2302 = vmatpush1.msra.mxu0 0.0
    %2303 = vmatprep.subr.mxu0 0.0
    %2304 = vmatpush1.msra.mxu0 0.0
    %2305 = vmatprep.subr.mxu0 0.0
    %2306 = vmatpush1.msra.mxu0 0.0
    %2307 = vmatprep.subr.mxu0 0.0
    %2308 = vmatpush1.msra.mxu0 0.0
    %2309 = vmatprep.mubr.f32.mxu0 0.0
    %2310 = vmatmul.mubr.f32.gmra.mrb[0].mxu0 %v2220
    %v2311 = vpop.f32.mrb[0].mxu0
    %v2312 = vadd.f32 0.0, %v2311
    %v2313 = vpop.f32.mrb[0].mxu0
    %2314 = vmatprep.mubr.f32.mxu0 0.0
    %2315 = vmatmul.mubr.f32.gmra.mrb[0].mxu0 %v2225
    %v2316 = vpop.f32.mrb[0].mxu0
    %v2317 = vadd.f32 0.0, %v2316
    %v2318 = vpop.f32.mrb[0].mxu0
    %2319 = vdwg.mxu0
    %v2320 = vadd.f32 %v2132, %v2312
    %v2321 = vadd.f32 %v2137, %v2317
    %v2322 = vtanh.pop %v2320
    %v2323 = vtanh.pop %v2321
    %v2324 = vmul.f32 %v2322, 0.9
    %v2325 = vmul.f32 %v2323, 0.9
    %v2326 = vmul.f32 %v2143, 0.1
    %v2327 = vmul.f32 %v2144, 0.1
    %v2328 = vadd.f32 %v2324, %v2326
    %v2329 = vadd.f32 %v2325, %v2327
    %v2330 = vsub.f32 %v2143, %v2328
    %v2331 = vsub.f32 %v2144, %v2329
    %v2332 = vmul.f32 %v2330, %v2330
    %v2333 = vmul.f32 %v2331, %v2331
    %v2334 = vadd.f32 %v2332, %v2333
    %2335 = vadd.xlane.f32.xlu0 %v2334
    %v2336 = vpop.xlane.xlu0 %2335
    %v2337 = vrot.slane %v2336, 4
    %v2338 = vadd.f32 %v2336, %v2337
    %v2339 = vrot.slane %v2338, 2
    %v2340 = vadd.f32 %v2338, %v2339
    %v2341 = vrot.slane %v2340, 1
    %v2342 = vadd.f32 %v2340, %v2341
    %s2343 = vtos %v2342
    %2344 = vst [vmem:[%s2140] sm:$0xff] %v2328
    %2345 = vst [vmem:[%s2140 + $0x8] sm:$0xff] %v2329
    %p2346 = scmp.lt.f32.partialorder %s2343, 1e-10
    %v2347 = vld [vmem:[%s2140] sm:$0xff]
    %v2348 = vld [vmem:[%s2140 + $0x8] sm:$0xff]
    %v2349 = vld [vmem:[#allocation2] sm:$0xff]
    %v2350 = vld [vmem:[#allocation2 + $0x8] sm:$0xff]
    %v2352 = vsel %vm182, %v2349, 0
    %v2355 = vsel %vm182, %v2350, 0
    %2357 = vmatprep.subr.mxu0 0.0
    %2358 = vmatpush1.msra.mxu0 %v2347
    %2359 = vmatprep.subr.mxu0 0.0
    %2360 = vmatpush1.msra.mxu0 %v2348
    %2361 = vmatprep.subr.mxu0 0.0
    %2362 = vmatpush1.msra.mxu0 0.0
    %2363 = vmatprep.subr.mxu0 0.0
    %2364 = vmatpush1.msra.mxu0 0.0
    %2365 = vmatprep.subr.mxu0 0.0
    %2366 = vmatpush1.msra.mxu0 0.0
    %2367 = vmatprep.subr.mxu0 0.0
    %2368 = vmatpush1.msra.mxu0 0.0
    %2369 = vmatprep.subr.mxu0 0.0
    %2370 = vmatpush1.msra.mxu0 0.0
    %2371 = vmatprep.subr.mxu0 0.0
    %2372 = vmatpush1.msra.mxu0 0.0
    %2373 = vmatprep.subr.mxu0 0.0
    %2374 = vmatpush1.msra.mxu0 0.0
    %2375 = vmatprep.subr.mxu0 0.0
    %2376 = vmatpush1.msra.mxu0 0.0
    %2377 = vmatprep.subr.mxu0 0.0
    %2378 = vmatpush1.msra.mxu0 0.0
    %2379 = vmatprep.subr.mxu0 0.0
    %2380 = vmatpush1.msra.mxu0 0.0
    %2381 = vmatprep.subr.mxu0 0.0
    %2382 = vmatpush1.msra.mxu0 0.0
    %2383 = vmatprep.subr.mxu0 0.0
    %2384 = vmatpush1.msra.mxu0 0.0
    %2385 = vmatprep.subr.mxu0 0.0
    %2386 = vmatpush1.msra.mxu0 0.0
    %2387 = vmatprep.subr.mxu0 0.0
    %2388 = vmatpush1.msra.mxu0 0.0
    %2389 = vmatprep.subr.mxu0 0.0
    %2390 = vmatpush1.msra.mxu0 0.0
    %2391 = vmatprep.subr.mxu0 0.0
    %2392 = vmatpush1.msra.mxu0 0.0
    %2393 = vmatprep.subr.mxu0 0.0
    %2394 = vmatpush1.msra.mxu0 0.0
    %2395 = vmatprep.subr.mxu0 0.0
    %2396 = vmatpush1.msra.mxu0 0.0
    %2397 = vmatprep.subr.mxu0 0.0
    %2398 = vmatpush1.msra.mxu0 0.0
    %2399 = vmatprep.subr.mxu0 0.0
    %2400 = vmatpush1.msra.mxu0 0.0
    %2401 = vmatprep.subr.mxu0 0.0
    %2402 = vmatpush1.msra.mxu0 0.0
    %2403 = vmatprep.subr.mxu0 0.0
    %2404 = vmatpush1.msra.mxu0 0.0
    %2405 = vmatprep.subr.mxu0 0.0
    %2406 = vmatpush1.msra.mxu0 0.0
    %2407 = vmatprep.subr.mxu0 0.0
    %2408 = vmatpush1.msra.mxu0 0.0
    %2409 = vmatprep.subr.mxu0 0.0
    %2410 = vmatpush1.msra.mxu0 0.0
    %2411 = vmatprep.subr.mxu0 0.0
    %2412 = vmatpush1.msra.mxu0 0.0
    %2413 = vmatprep.subr.mxu0 0.0
    %2414 = vmatpush1.msra.mxu0 0.0
    %2415 = vmatprep.subr.mxu0 0.0
    %2416 = vmatpush1.msra.mxu0 0.0
    %2417 = vmatprep.subr.mxu0 0.0
    %2418 = vmatpush1.msra.mxu0 0.0
    %2419 = vmatprep.subr.mxu0 0.0
    %2420 = vmatpush1.msra.mxu0 0.0
    %2421 = vmatprep.mubr.f32.mxu0 0.0
    %2422 = vmatmul.mubr.f32.gmra.mrb[0].mxu0 %v2352
    %v2423 = vpop.f32.mrb[0].mxu0
    %v2424 = vadd.f32 0.0, %v2423
    %v2425 = vpop.f32.mrb[0].mxu0
    %2426 = vmatprep.mubr.f32.mxu0 0.0
    %2427 = vmatmul.mubr.f32.gmra.mrb[0].mxu0 %v2355
    %v2428 = vpop.f32.mrb[0].mxu0
    %v2429 = vadd.f32 0.0, %v2428
    %v2430 = vpop.f32.mrb[0].mxu0
    %2431 = vdwg.mxu0
    %v2432 = vld [vmem:[%s2228] sm:$0xff]
    %v2433 = vld [vmem:[%s2228 + $0x8] sm:$0xff]
    %v2434 = vld [vmem:[%s2228 + $0x10] sm:$0xff]
    %v2435 = vld [vmem:[%s2228 + $0x18] sm:$0xff]
    %v2436 = vld [vmem:[%s2228 + $0x20] sm:$0xff]
    %v2437 = vld [vmem:[%s2228 + $0x28] sm:$0xff]
    %v2438 = vld [vmem:[%s2228 + $0x30] sm:$0xff]
    %v2439 = vld [vmem:[%s2228 + $0x38] sm:$0xff]
    %v2440 = vld [vmem:[%s2228 + $0x40] sm:$0xff]
    %v2441 = vld [vmem:[%s2228 + $0x48] sm:$0xff]
    %v2442 = vld [vmem:[%s2228 + $0x50] sm:$0xff]
    %v2443 = vld [vmem:[%s2228 + $0x58] sm:$0xff]
    %v2444 = vld [vmem:[%s2228 + $0x60] sm:$0xff]
    %v2445 = vld [vmem:[%s2228 + $0x68] sm:$0xff]
    %v2446 = vld [vmem:[%s2228 + $0x70] sm:$0xff]
    %v2447 = vld [vmem:[%s2228 + $0x78] sm:$0xff]
    %2448 = vmatprep.subr.mxu0 0.0
    %2449 = vmatpush1.msra.mxu0 %v2432
    %2450 = vmatprep.subr.mxu0 0.0
    %2451 = vmatpush1.msra.mxu0 %v2433
    %2452 = vmatprep.subr.mxu0 0.0
    %2453 = vmatpush1.msra.mxu0 %v2434
    %2454 = vmatprep.subr.mxu0 0.0
    %2455 = vmatpush1.msra.mxu0 %v2435
    %2456 = vmatprep.subr.mxu0 0.0
    %2457 = vmatpush1.msra.mxu0 %v2436
    %2458 = vmatprep.subr.mxu0 0.0
    %2459 = vmatpush1.msra.mxu0 %v2437
    %2460 = vmatprep.subr.mxu0 0.0
    %2461 = vmatpush1.msra.mxu0 %v2438
    %2462 = vmatprep.subr.mxu0 0.0
    %2463 = vmatpush1.msra.mxu0 %v2439
    %2464 = vmatprep.subr.mxu0 0.0
    %2465 = vmatpush1.msra.mxu0 %v2440
    %2466 = vmatprep.subr.mxu0 0.0
    %2467 = vmatpush1.msra.mxu0 %v2441
    %2468 = vmatprep.subr.mxu0 0.0
    %2469 = vmatpush1.msra.mxu0 %v2442
    %2470 = vmatprep.subr.mxu0 0.0
    %2471 = vmatpush1.msra.mxu0 %v2443
    %2472 = vmatprep.subr.mxu0 0.0
    %2473 = vmatpush1.msra.mxu0 %v2444
    %2474 = vmatprep.subr.mxu0 0.0
    %2475 = vmatpush1.msra.mxu0 %v2445
    %2476 = vmatprep.subr.mxu0 0.0
    %2477 = vmatpush1.msra.mxu0 %v2446
    %2478 = vmatprep.subr.mxu0 0.0
    %2479 = vmatpush1.msra.mxu0 %v2447
    %2480 = vmatprep.subr.mxu0 0.0
    %2481 = vmatpush1.msra.mxu0 0.0
    %2482 = vmatprep.subr.mxu0 0.0
    %2483 = vmatpush1.msra.mxu0 0.0
    %2484 = vmatprep.subr.mxu0 0.0
    %2485 = vmatpush1.msra.mxu0 0.0
    %2486 = vmatprep.subr.mxu0 0.0
    %2487 = vmatpush1.msra.mxu0 0.0
    %2488 = vmatprep.subr.mxu0 0.0
    %2489 = vmatpush1.msra.mxu0 0.0
    %2490 = vmatprep.subr.mxu0 0.0
    %2491 = vmatpush1.msra.mxu0 0.0
    %2492 = vmatprep.subr.mxu0 0.0
    %2493 = vmatpush1.msra.mxu0 0.0
    %2494 = vmatprep.subr.mxu0 0.0
    %2495 = vmatpush1.msra.mxu0 0.0
    %2496 = vmatprep.subr.mxu0 0.0
    %2497 = vmatpush1.msra.mxu0 0.0
    %2498 = vmatprep.subr.mxu0 0.0
    %2499 = vmatpush1.msra.mxu0 0.0
    %2500 = vmatprep.subr.mxu0 0.0
    %2501 = vmatpush1.msra.mxu0 0.0
    %2502 = vmatprep.subr.mxu0 0.0
    %2503 = vmatpush1.msra.mxu0 0.0
    %2504 = vmatprep.subr.mxu0 0.0
    %2505 = vmatpush1.msra.mxu0 0.0
    %2506 = vmatprep.subr.mxu0 0.0
    %2507 = vmatpush1.msra.mxu0 0.0
    %2508 = vmatprep.subr.mxu0 0.0
    %2509 = vmatpush1.msra.mxu0 0.0
    %2510 = vmatprep.subr.mxu0 0.0
    %2511 = vmatpush1.msra.mxu0 0.0
    %2512 = vmatprep.mubr.f32.mxu0 0.0
    %2513 = vmatmul.mubr.f32.gmra.mrb[0].mxu0 %v2424
    %v2514 = vpop.f32.mrb[0].mxu0
    %v2515 = vadd.f32 0.0, %v2514
    %v2516 = vpop.f32.mrb[0].mxu0
    %2517 = vmatprep.mubr.f32.mxu0 0.0
    %2518 = vmatmul.mubr.f32.gmra.mrb[0].mxu0 %v2429
    %v2519 = vpop.f32.mrb[0].mxu0
    %v2520 = vadd.f32 0.0, %v2519
    %v2521 = vpop.f32.mrb[0].mxu0
    %2522 = vdwg.mxu0
    %v2523 = vadd.f32 %v2132, %v2515
    %v2524 = vadd.f32 %v2137, %v2520
    %v2525 = vtanh.pop %v2523
    %v2526 = vtanh.pop %v2524
    %v2527 = vmul.f32 %v2525, 0.9
    %v2528 = vmul.f32 %v2526, 0.9
    %v2529 = vmul.f32 %v2347, 0.1
    %v2530 = vmul.f32 %v2348, 0.1
    %v2531 = vadd.f32 %v2527, %v2529
    %v2532 = vadd.f32 %v2528, %v2530
    %v2533 = vsub.f32 %v2347, %v2531
    %v2534 = vsub.f32 %v2348, %v2532
    %v2535 = vmul.f32 %v2533, %v2533
    %v2536 = vmul.f32 %v2534, %v2534
    %v2537 = vadd.f32 %v2535, %v2536
    %2538 = vadd.xlane.f32.xlu0 %v2537
    %v2539 = vpop.xlane.xlu0 %2538
    %v2540 = vrot.slane %v2539, 4
    %v2541 = vadd.f32 %v2539, %v2540
    %v2542 = vrot.slane %v2541, 2
    %v2543 = vadd.f32 %v2541, %v2542
    %v2544 = vrot.slane %v2543, 1
    %v2545 = vadd.f32 %v2543, %v2544
    %s2546 = vtos %v2545
    %s2547 = scalar_select %p2346, 1, 0
    %v2548 = vstv %s2547
    %vm2549 = vcmp.eq.s32.totalorder %v2548, 1
    %v2550 = vsel %vm2549, %v2347, %v2531
    %v2551 = vsel %vm2549, %v2348, %v2532
    %2552 = vst [vmem:[%s2140] sm:$0xff] %v2550
    %2553 = vst [vmem:[%s2140 + $0x8] sm:$0xff] %v2551
    %p2554 = scmp.lt.f32.partialorder %s2546, 1e-10
    %p2555 = por %p2346, %p2554
    %v2556 = vld [vmem:[%s2140] sm:$0xff]
    %v2557 = vld [vmem:[%s2140 + $0x8] sm:$0xff]
    %v2558 = vld [vmem:[#allocation2] sm:$0xff]
    %v2559 = vld [vmem:[#allocation2 + $0x8] sm:$0xff]
    %v2561 = vsel %vm182, %v2558, 0
    %v2564 = vsel %vm182, %v2559, 0
    %2566 = vmatprep.subr.mxu0 0.0
    %2567 = vmatpush1.msra.mxu0 %v2556
    %2568 = vmatprep.subr.mxu0 0.0
    %2569 = vmatpush1.msra.mxu0 %v2557
    %2570 = vmatprep.subr.mxu0 0.0
    %2571 = vmatpush1.msra.mxu0 0.0
    %2572 = vmatprep.subr.mxu0 0.0
    %2573 = vmatpush1.msra.mxu0 0.0
    %2574 = vmatprep.subr.mxu0 0.0
    %2575 = vmatpush1.msra.mxu0 0.0
    %2576 = vmatprep.subr.mxu0 0.0
    %2577 = vmatpush1.msra.mxu0 0.0
    %2578 = vmatprep.subr.mxu0 0.0
    %2579 = vmatpush1.msra.mxu0 0.0
    %2580 = vmatprep.subr.mxu0 0.0
    %2581 = vmatpush1.msra.mxu0 0.0
    %2582 = vmatprep.subr.mxu0 0.0
    %2583 = vmatpush1.msra.mxu0 0.0
    %2584 = vmatprep.subr.mxu0 0.0
    %2585 = vmatpush1.msra.mxu0 0.0
    %2586 = vmatprep.subr.mxu0 0.0
    %2587 = vmatpush1.msra.mxu0 0.0
    %2588 = vmatprep.subr.mxu0 0.0
    %2589 = vmatpush1.msra.mxu0 0.0
    %2590 = vmatprep.subr.mxu0 0.0
    %2591 = vmatpush1.msra.mxu0 0.0
    %2592 = vmatprep.subr.mxu0 0.0
    %2593 = vmatpush1.msra.mxu0 0.0
    %2594 = vmatprep.subr.mxu0 0.0
    %2595 = vmatpush1.msra.mxu0 0.0
    %2596 = vmatprep.subr.mxu0 0.0
    %2597 = vmatpush1.msra.mxu0 0.0
    %2598 = vmatprep.subr.mxu0 0.0
    %2599 = vmatpush1.msra.mxu0 0.0
    %2600 = vmatprep.subr.mxu0 0.0
    %2601 = vmatpush1.msra.mxu0 0.0
    %2602 = vmatprep.subr.mxu0 0.0
    %2603 = vmatpush1.msra.mxu0 0.0
    %2604 = vmatprep.subr.mxu0 0.0
    %2605 = vmatpush1.msra.mxu0 0.0
    %2606 = vmatprep.subr.mxu0 0.0
    %2607 = vmatpush1.msra.mxu0 0.0
    %2608 = vmatprep.subr.mxu0 0.0
    %2609 = vmatpush1.msra.mxu0 0.0
    %2610 = vmatprep.subr.mxu0 0.0
    %2611 = vmatpush1.msra.mxu0 0.0
    %2612 = vmatprep.subr.mxu0 0.0
    %2613 = vmatpush1.msra.mxu0 0.0
    %2614 = vmatprep.subr.mxu0 0.0
    %2615 = vmatpush1.msra.mxu0 0.0
    %2616 = vmatprep.subr.mxu0 0.0
    %2617 = vmatpush1.msra.mxu0 0.0
    %2618 = vmatprep.subr.mxu0 0.0
    %2619 = vmatpush1.msra.mxu0 0.0
    %2620 = vmatprep.subr.mxu0 0.0
    %2621 = vmatpush1.msra.mxu0 0.0
    %2622 = vmatprep.subr.mxu0 0.0
    %2623 = vmatpush1.msra.mxu0 0.0
    %2624 = vmatprep.subr.mxu0 0.0
    %2625 = vmatpush1.msra.mxu0 0.0
    %2626 = vmatprep.subr.mxu0 0.0
    %2627 = vmatpush1.msra.mxu0 0.0
    %2628 = vmatprep.subr.mxu0 0.0
    %2629 = vmatpush1.msra.mxu0 0.0
    %2630 = vmatprep.mubr.f32.mxu0 0.0
    %2631 = vmatmul.mubr.f32.gmra.mrb[0].mxu0 %v2561
    %v2632 = vpop.f32.mrb[0].mxu0
    %v2633 = vadd.f32 0.0, %v2632
    %v2634 = vpop.f32.mrb[0].mxu0
    %2635 = vmatprep.mubr.f32.mxu0 0.0
    %2636 = vmatmul.mubr.f32.gmra.mrb[0].mxu0 %v2564
    %v2637 = vpop.f32.mrb[0].mxu0
    %v2638 = vadd.f32 0.0, %v2637
    %v2639 = vpop.f32.mrb[0].mxu0
    %2640 = vdwg.mxu0
    %v2641 = vld [vmem:[%s2228] sm:$0xff]
    %v2642 = vld [vmem:[%s2228 + $0x8] sm:$0xff]
    %v2643 = vld [vmem:[%s2228 + $0x10] sm:$0xff]
    %v2644 = vld [vmem:[%s2228 + $0x18] sm:$0xff]
    %v2645 = vld [vmem:[%s2228 + $0x20] sm:$0xff]
    %v2646 = vld [vmem:[%s2228 + $0x28] sm:$0xff]
    %v2647 = vld [vmem:[%s2228 + $0x30] sm:$0xff]
    %v2648 = vld [vmem:[%s2228 + $0x38] sm:$0xff]
    %v2649 = vld [vmem:[%s2228 + $0x40] sm:$0xff]
    %v2650 = vld [vmem:[%s2228 + $0x48] sm:$0xff]
    %v2651 = vld [vmem:[%s2228 + $0x50] sm:$0xff]
    %v2652 = vld [vmem:[%s2228 + $0x58] sm:$0xff]
    %v2653 = vld [vmem:[%s2228 + $0x60] sm:$0xff]
    %v2654 = vld [vmem:[%s2228 + $0x68] sm:$0xff]
    %v2655 = vld [vmem:[%s2228 + $0x70] sm:$0xff]
    %v2656 = vld [vmem:[%s2228 + $0x78] sm:$0xff]
    %2657 = vmatprep.subr.mxu0 0.0
    %2658 = vmatpush1.msra.mxu0 %v2641
    %2659 = vmatprep.subr.mxu0 0.0
    %2660 = vmatpush1.msra.mxu0 %v2642
    %2661 = vmatprep.subr.mxu0 0.0
    %2662 = vmatpush1.msra.mxu0 %v2643
    %2663 = vmatprep.subr.mxu0 0.0
    %2664 = vmatpush1.msra.mxu0 %v2644
    %2665 = vmatprep.subr.mxu0 0.0
    %2666 = vmatpush1.msra.mxu0 %v2645
    %2667 = vmatprep.subr.mxu0 0.0
    %2668 = vmatpush1.msra.mxu0 %v2646
    %2669 = vmatprep.subr.mxu0 0.0
    %2670 = vmatpush1.msra.mxu0 %v2647
    %2671 = vmatprep.subr.mxu0 0.0
    %2672 = vmatpush1.msra.mxu0 %v2648
    %2673 = vmatprep.subr.mxu0 0.0
    %2674 = vmatpush1.msra.mxu0 %v2649
    %2675 = vmatprep.subr.mxu0 0.0
    %2676 = vmatpush1.msra.mxu0 %v2650
    %2677 = vmatprep.subr.mxu0 0.0
    %2678 = vmatpush1.msra.mxu0 %v2651
    %2679 = vmatprep.subr.mxu0 0.0
    %2680 = vmatpush1.msra.mxu0 %v2652
    %2681 = vmatprep.subr.mxu0 0.0
    %2682 = vmatpush1.msra.mxu0 %v2653
    %2683 = vmatprep.subr.mxu0 0.0
    %2684 = vmatpush1.msra.mxu0 %v2654
    %2685 = vmatprep.subr.mxu0 0.0
    %2686 = vmatpush1.msra.mxu0 %v2655
    %2687 = vmatprep.subr.mxu0 0.0
    %2688 = vmatpush1.msra.mxu0 %v2656
    %2689 = vmatprep.subr.mxu0 0.0
    %2690 = vmatpush1.msra.mxu0 0.0
    %2691 = vmatprep.subr.mxu0 0.0
    %2692 = vmatpush1.msra.mxu0 0.0
    %2693 = vmatprep.subr.mxu0 0.0
    %2694 = vmatpush1.msra.mxu0 0.0
    %2695 = vmatprep.subr.mxu0 0.0
    %2696 = vmatpush1.msra.mxu0 0.0
    %2697 = vmatprep.subr.mxu0 0.0
    %2698 = vmatpush1.msra.mxu0 0.0
    %2699 = vmatprep.subr.mxu0 0.0
    %2700 = vmatpush1.msra.mxu0 0.0
    %2701 = vmatprep.subr.mxu0 0.0
    %2702 = vmatpush1.msra.mxu0 0.0
    %2703 = vmatprep.subr.mxu0 0.0
    %2704 = vmatpush1.msra.mxu0 0.0
    %2705 = vmatprep.subr.mxu0 0.0
    %2706 = vmatpush1.msra.mxu0 0.0
    %2707 = vmatprep.subr.mxu0 0.0
    %2708 = vmatpush1.msra.mxu0 0.0
    %2709 = vmatprep.subr.mxu0 0.0
    %2710 = vmatpush1.msra.mxu0 0.0
    %2711 = vmatprep.subr.mxu0 0.0
    %2712 = vmatpush1.msra.mxu0 0.0
    %2713 = vmatprep.subr.mxu0 0.0
    %2714 = vmatpush1.msra.mxu0 0.0
    %2715 = vmatprep.subr.mxu0 0.0
    %2716 = vmatpush1.msra.mxu0 0.0
    %2717 = vmatprep.subr.mxu0 0.0
    %2718 = vmatpush1.msra.mxu0 0.0
    %2719 = vmatprep.subr.mxu0 0.0
    %2720 = vmatpush1.msra.mxu0 0.0
    %2721 = vmatprep.mubr.f32.mxu0 0.0
    %2722 = vmatmul.mubr.f32.gmra.mrb[0].mxu0 %v2633
    %v2723 = vpop.f32.mrb[0].mxu0
    %v2724 = vadd.f32 0.0, %v2723
    %v2725 = vpop.f32.mrb[0].mxu0
    %2726 = vmatprep.mubr.f32.mxu0 0.0
    %2727 = vmatmul.mubr.f32.gmra.mrb[0].mxu0 %v2638
    %v2728 = vpop.f32.mrb[0].mxu0
    %v2729 = vadd.f32 0.0, %v2728
    %v2730 = vpop.f32.mrb[0].mxu0
    %2731 = vdwg.mxu0
    %v2732 = vadd.f32 %v2132, %v2724
    %v2733 = vadd.f32 %v2137, %v2729
    %v2734 = vtanh.pop %v2732
    %v2735 = vtanh.pop %v2733
    %v2736 = vmul.f32 %v2734, 0.9
    %v2737 = vmul.f32 %v2735, 0.9
    %v2738 = vmul.f32 %v2556, 0.1
    %v2739 = vmul.f32 %v2557, 0.1
    %v2740 = vadd.f32 %v2736, %v2738
    %v2741 = vadd.f32 %v2737, %v2739
    %v2742 = vsub.f32 %v2556, %v2740
    %v2743 = vsub.f32 %v2557, %v2741
    %v2744 = vmul.f32 %v2742, %v2742
    %v2745 = vmul.f32 %v2743, %v2743
    %v2746 = vadd.f32 %v2744, %v2745
    %2747 = vadd.xlane.f32.xlu0 %v2746
    %v2748 = vpop.xlane.xlu0 %2747
    %v2749 = vrot.slane %v2748, 4
    %v2750 = vadd.f32 %v2748, %v2749
    %v2751 = vrot.slane %v2750, 2
    %v2752 = vadd.f32 %v2750, %v2751
    %v2753 = vrot.slane %v2752, 1
    %v2754 = vadd.f32 %v2752, %v2753
    %s2755 = vtos %v2754
    %s2756 = scalar_select %p2555, 1, 0
    %v2757 = vstv %s2756
    %vm2758 = vcmp.eq.s32.totalorder %v2757, 1
    %v2759 = vsel %vm2758, %v2556, %v2740
    %v2760 = vsel %vm2758, %v2557, %v2741
    %2761 = vst [vmem:[%s2140] sm:$0xff] %v2759
    %2762 = vst [vmem:[%s2140 + $0x8] sm:$0xff] %v2760
    %p2763 = scmp.lt.f32.partialorder %s2755, 1e-10
    %p2764 = por %p2555, %p2763
    %v2765 = vld [vmem:[%s2140] sm:$0xff]
    %v2766 = vld [vmem:[%s2140 + $0x8] sm:$0xff]
    %v2767 = vld [vmem:[#allocation2] sm:$0xff]
    %v2768 = vld [vmem:[#allocation2 + $0x8] sm:$0xff]
    %v2770 = vsel %vm182, %v2767, 0
    %v2773 = vsel %vm182, %v2768, 0
    %2775 = vmatprep.subr.mxu0 0.0
    %2776 = vmatpush1.msra.mxu0 %v2765
    %2777 = vmatprep.subr.mxu0 0.0
    %2778 = vmatpush1.msra.mxu0 %v2766
    %2779 = vmatprep.subr.mxu0 0.0
    %2780 = vmatpush1.msra.mxu0 0.0
    %2781 = vmatprep.subr.mxu0 0.0
    %2782 = vmatpush1.msra.mxu0 0.0
    %2783 = vmatprep.subr.mxu0 0.0
    %2784 = vmatpush1.msra.mxu0 0.0
    %2785 = vmatprep.subr.mxu0 0.0
    %2786 = vmatpush1.msra.mxu0 0.0
    %2787 = vmatprep.subr.mxu0 0.0
    %2788 = vmatpush1.msra.mxu0 0.0
    %2789 = vmatprep.subr.mxu0 0.0
    %2790 = vmatpush1.msra.mxu0 0.0
    %2791 = vmatprep.subr.mxu0 0.0
    %2792 = vmatpush1.msra.mxu0 0.0
    %2793 = vmatprep.subr.mxu0 0.0
    %2794 = vmatpush1.msra.mxu0 0.0
    %2795 = vmatprep.subr.mxu0 0.0
    %2796 = vmatpush1.msra.mxu0 0.0
    %2797 = vmatprep.subr.mxu0 0.0
    %2798 = vmatpush1.msra.mxu0 0.0
    %2799 = vmatprep.subr.mxu0 0.0
    %2800 = vmatpush1.msra.mxu0 0.0
    %2801 = vmatprep.subr.mxu0 0.0
    %2802 = vmatpush1.msra.mxu0 0.0
    %2803 = vmatprep.subr.mxu0 0.0
    %2804 = vmatpush1.msra.mxu0 0.0
    %2805 = vmatprep.subr.mxu0 0.0
    %2806 = vmatpush1.msra.mxu0 0.0
    %2807 = vmatprep.subr.mxu0 0.0
    %2808 = vmatpush1.msra.mxu0 0.0
    %2809 = vmatprep.subr.mxu0 0.0
    %2810 = vmatpush1.msra.mxu0 0.0
    %2811 = vmatprep.subr.mxu0 0.0
    %2812 = vmatpush1.msra.mxu0 0.0
    %2813 = vmatprep.subr.mxu0 0.0
    %2814 = vmatpush1.msra.mxu0 0.0
    %2815 = vmatprep.subr.mxu0 0.0
    %2816 = vmatpush1.msra.mxu0 0.0
    %2817 = vmatprep.subr.mxu0 0.0
    %2818 = vmatpush1.msra.mxu0 0.0
    %2819 = vmatprep.subr.mxu0 0.0
    %2820 = vmatpush1.msra.mxu0 0.0
    %2821 = vmatprep.subr.mxu0 0.0
    %2822 = vmatpush1.msra.mxu0 0.0
    %2823 = vmatprep.subr.mxu0 0.0
    %2824 = vmatpush1.msra.mxu0 0.0
    %2825 = vmatprep.subr.mxu0 0.0
    %2826 = vmatpush1.msra.mxu0 0.0
    %2827 = vmatprep.subr.mxu0 0.0
    %2828 = vmatpush1.msra.mxu0 0.0
    %2829 = vmatprep.subr.mxu0 0.0
    %2830 = vmatpush1.msra.mxu0 0.0
    %2831 = vmatprep.subr.mxu0 0.0
    %2832 = vmatpush1.msra.mxu0 0.0
    %2833 = vmatprep.subr.mxu0 0.0
    %2834 = vmatpush1.msra.mxu0 0.0
    %2835 = vmatprep.subr.mxu0 0.0
    %2836 = vmatpush1.msra.mxu0 0.0
    %2837 = vmatprep.subr.mxu0 0.0
    %2838 = vmatpush1.msra.mxu0 0.0
    %2839 = vmatprep.mubr.f32.mxu0 0.0
    %2840 = vmatmul.mubr.f32.gmra.mrb[0].mxu0 %v2770
    %v2841 = vpop.f32.mrb[0].mxu0
    %v2842 = vadd.f32 0.0, %v2841
    %v2843 = vpop.f32.mrb[0].mxu0
    %2844 = vmatprep.mubr.f32.mxu0 0.0
    %2845 = vmatmul.mubr.f32.gmra.mrb[0].mxu0 %v2773
    %v2846 = vpop.f32.mrb[0].mxu0
    %v2847 = vadd.f32 0.0, %v2846
    %v2848 = vpop.f32.mrb[0].mxu0
    %2849 = vdwg.mxu0
    %v2850 = vld [vmem:[%s2228] sm:$0xff]
    %v2851 = vld [vmem:[%s2228 + $0x8] sm:$0xff]
    %v2852 = vld [vmem:[%s2228 + $0x10] sm:$0xff]
    %v2853 = vld [vmem:[%s2228 + $0x18] sm:$0xff]
    %v2854 = vld [vmem:[%s2228 + $0x20] sm:$0xff]
    %v2855 = vld [vmem:[%s2228 + $0x28] sm:$0xff]
    %v2856 = vld [vmem:[%s2228 + $0x30] sm:$0xff]
    %v2857 = vld [vmem:[%s2228 + $0x38] sm:$0xff]
    %v2858 = vld [vmem:[%s2228 + $0x40] sm:$0xff]
    %v2859 = vld [vmem:[%s2228 + $0x48] sm:$0xff]
    %v2860 = vld [vmem:[%s2228 + $0x50] sm:$0xff]
    %v2861 = vld [vmem:[%s2228 + $0x58] sm:$0xff]
    %v2862 = vld [vmem:[%s2228 + $0x60] sm:$0xff]
    %v2863 = vld [vmem:[%s2228 + $0x68] sm:$0xff]
    %v2864 = vld [vmem:[%s2228 + $0x70] sm:$0xff]
    %v2865 = vld [vmem:[%s2228 + $0x78] sm:$0xff]
    %2866 = vmatprep.subr.mxu0 0.0
    %2867 = vmatpush1.msra.mxu0 %v2850
    %2868 = vmatprep.subr.mxu0 0.0
    %2869 = vmatpush1.msra.mxu0 %v2851
    %2870 = vmatprep.subr.mxu0 0.0
    %2871 = vmatpush1.msra.mxu0 %v2852
    %2872 = vmatprep.subr.mxu0 0.0
    %2873 = vmatpush1.msra.mxu0 %v2853
    %2874 = vmatprep.subr.mxu0 0.0
    %2875 = vmatpush1.msra.mxu0 %v2854
    %2876 = vmatprep.subr.mxu0 0.0
    %2877 = vmatpush1.msra.mxu0 %v2855
    %2878 = vmatprep.subr.mxu0 0.0
    %2879 = vmatpush1.msra.mxu0 %v2856
    %2880 = vmatprep.subr.mxu0 0.0
    %2881 = vmatpush1.msra.mxu0 %v2857
    %2882 = vmatprep.subr.mxu0 0.0
    %2883 = vmatpush1.msra.mxu0 %v2858
    %2884 = vmatprep.subr.mxu0 0.0
    %2885 = vmatpush1.msra.mxu0 %v2859
    %2886 = vmatprep.subr.mxu0 0.0
    %2887 = vmatpush1.msra.mxu0 %v2860
    %2888 = vmatprep.subr.mxu0 0.0
    %2889 = vmatpush1.msra.mxu0 %v2861
    %2890 = vmatprep.subr.mxu0 0.0
    %2891 = vmatpush1.msra.mxu0 %v2862
    %2892 = vmatprep.subr.mxu0 0.0
    %2893 = vmatpush1.msra.mxu0 %v2863
    %2894 = vmatprep.subr.mxu0 0.0
    %2895 = vmatpush1.msra.mxu0 %v2864
    %2896 = vmatprep.subr.mxu0 0.0
    %2897 = vmatpush1.msra.mxu0 %v2865
    %2898 = vmatprep.subr.mxu0 0.0
    %2899 = vmatpush1.msra.mxu0 0.0
    %2900 = vmatprep.subr.mxu0 0.0
    %2901 = vmatpush1.msra.mxu0 0.0
    %2902 = vmatprep.subr.mxu0 0.0
    %2903 = vmatpush1.msra.mxu0 0.0
    %2904 = vmatprep.subr.mxu0 0.0
    %2905 = vmatpush1.msra.mxu0 0.0
    %2906 = vmatprep.subr.mxu0 0.0
    %2907 = vmatpush1.msra.mxu0 0.0
    %2908 = vmatprep.subr.mxu0 0.0
    %2909 = vmatpush1.msra.mxu0 0.0
    %2910 = vmatprep.subr.mxu0 0.0
    %2911 = vmatpush1.msra.mxu0 0.0
    %2912 = vmatprep.subr.mxu0 0.0
    %2913 = vmatpush1.msra.mxu0 0.0
    %2914 = vmatprep.subr.mxu0 0.0
    %2915 = vmatpush1.msra.mxu0 0.0
    %2916 = vmatprep.subr.mxu0 0.0
    %2917 = vmatpush1.msra.mxu0 0.0
    %2918 = vmatprep.subr.mxu0 0.0
    %2919 = vmatpush1.msra.mxu0 0.0
    %2920 = vmatprep.subr.mxu0 0.0
    %2921 = vmatpush1.msra.mxu0 0.0
    %2922 = vmatprep.subr.mxu0 0.0
    %2923 = vmatpush1.msra.mxu0 0.0
    %2924 = vmatprep.subr.mxu0 0.0
    %2925 = vmatpush1.msra.mxu0 0.0
    %2926 = vmatprep.subr.mxu0 0.0
    %2927 = vmatpush1.msra.mxu0 0.0
    %2928 = vmatprep.subr.mxu0 0.0
    %2929 = vmatpush1.msra.mxu0 0.0
    %2930 = vmatprep.mubr.f32.mxu0 0.0
    %2931 = vmatmul.mubr.f32.gmra.mrb[0].mxu0 %v2842
    %v2932 = vpop.f32.mrb[0].mxu0
    %v2933 = vadd.f32 0.0, %v2932
    %v2934 = vpop.f32.mrb[0].mxu0
    %2935 = vmatprep.mubr.f32.mxu0 0.0
    %2936 = vmatmul.mubr.f32.gmra.mrb[0].mxu0 %v2847
    %v2937 = vpop.f32.mrb[0].mxu0
    %v2938 = vadd.f32 0.0, %v2937
    %v2939 = vpop.f32.mrb[0].mxu0
    %2940 = vdwg.mxu0
    %v2941 = vadd.f32 %v2132, %v2933
    %v2942 = vadd.f32 %v2137, %v2938
    %v2943 = vtanh.pop %v2941
    %v2944 = vtanh.pop %v2942
    %v2945 = vmul.f32 %v2943, 0.9
    %v2946 = vmul.f32 %v2944, 0.9
    %v2947 = vmul.f32 %v2765, 0.1
    %v2948 = vmul.f32 %v2766, 0.1
    %v2949 = vadd.f32 %v2945, %v2947
    %v2950 = vadd.f32 %v2946, %v2948
    %v2951 = vsub.f32 %v2765, %v2949
    %v2952 = vsub.f32 %v2766, %v2950
    %v2953 = vmul.f32 %v2951, %v2951
    %v2954 = vmul.f32 %v2952, %v2952
    %v2955 = vadd.f32 %v2953, %v2954
    %2956 = vadd.xlane.f32.xlu0 %v2955
    %v2957 = vpop.xlane.xlu0 %2956
    %v2958 = vrot.slane %v2957, 4
    %v2959 = vadd.f32 %v2957, %v2958
    %v2960 = vrot.slane %v2959, 2
    %v2961 = vadd.f32 %v2959, %v2960
    %v2962 = vrot.slane %v2961, 1
    %v2963 = vadd.f32 %v2961, %v2962
    %s2964 = vtos %v2963
    %s2965 = scalar_select %p2764, 1, 0
    %v2966 = vstv %s2965
    %vm2967 = vcmp.eq.s32.totalorder %v2966, 1
    %v2968 = vsel %vm2967, %v2765, %v2949
    %v2969 = vsel %vm2967, %v2766, %v2950
    %2970 = vst [vmem:[%s2140] sm:$0xff] %v2968
    %2971 = vst [vmem:[%s2140 + $0x8] sm:$0xff] %v2969
    %p2972 = scmp.lt.f32.partialorder %s2964, 1e-10
    %p2973 = por %p2764, %p2972
    %v2974 = vld [vmem:[%s2140] sm:$0xff]
    %v2975 = vld [vmem:[%s2140 + $0x8] sm:$0xff]
    %v2976 = vld [vmem:[#allocation2] sm:$0xff]
    %v2977 = vld [vmem:[#allocation2 + $0x8] sm:$0xff]
    %v2979 = vsel %vm182, %v2976, 0
    %v2982 = vsel %vm182, %v2977, 0
    %2984 = vmatprep.subr.mxu0 0.0
    %2985 = vmatpush1.msra.mxu0 %v2974
    %2986 = vmatprep.subr.mxu0 0.0
    %2987 = vmatpush1.msra.mxu0 %v2975
    %2988 = vmatprep.subr.mxu0 0.0
    %2989 = vmatpush1.msra.mxu0 0.0
    %2990 = vmatprep.subr.mxu0 0.0
    %2991 = vmatpush1.msra.mxu0 0.0
    %2992 = vmatprep.subr.mxu0 0.0
    %2993 = vmatpush1.msra.mxu0 0.0
    %2994 = vmatprep.subr.mxu0 0.0
    %2995 = vmatpush1.msra.mxu0 0.0
    %2996 = vmatprep.subr.mxu0 0.0
    %2997 = vmatpush1.msra.mxu0 0.0
    %2998 = vmatprep.subr.mxu0 0.0
    %2999 = vmatpush1.msra.mxu0 0.0
    %3000 = vmatprep.subr.mxu0 0.0
    %3001 = vmatpush1.msra.mxu0 0.0
    %3002 = vmatprep.subr.mxu0 0.0
    %3003 = vmatpush1.msra.mxu0 0.0
    %3004 = vmatprep.subr.mxu0 0.0
    %3005 = vmatpush1.msra.mxu0 0.0
    %3006 = vmatprep.subr.mxu0 0.0
    %3007 = vmatpush1.msra.mxu0 0.0
    %3008 = vmatprep.subr.mxu0 0.0
    %3009 = vmatpush1.msra.mxu0 0.0
    %3010 = vmatprep.subr.mxu0 0.0
    %3011 = vmatpush1.msra.mxu0 0.0
    %3012 = vmatprep.subr.mxu0 0.0
    %3013 = vmatpush1.msra.mxu0 0.0
    %3014 = vmatprep.subr.mxu0 0.0
    %3015 = vmatpush1.msra.mxu0 0.0
    %3016 = vmatprep.subr.mxu0 0.0
    %3017 = vmatpush1.msra.mxu0 0.0
    %3018 = vmatprep.subr.mxu0 0.0
    %3019 = vmatpush1.msra.mxu0 0.0
    %3020 = vmatprep.subr.mxu0 0.0
    %3021 = vmatpush1.msra.mxu0 0.0
    %3022 = vmatprep.subr.mxu0 0.0
    %3023 = vmatpush1.msra.mxu0 0.0
    %3024 = vmatprep.subr.mxu0 0.0
    %3025 = vmatpush1.msra.mxu0 0.0
    %3026 = vmatprep.subr.mxu0 0.0
    %3027 = vmatpush1.msra.mxu0 0.0
    %3028 = vmatprep.subr.mxu0 0.0
    %3029 = vmatpush1.msra.mxu0 0.0
    %3030 = vmatprep.subr.mxu0 0.0
    %3031 = vmatpush1.msra.mxu0 0.0
    %3032 = vmatprep.subr.mxu0 0.0
    %3033 = vmatpush1.msra.mxu0 0.0
    %3034 = vmatprep.subr.mxu0 0.0
    %3035 = vmatpush1.msra.mxu0 0.0
    %3036 = vmatprep.subr.mxu0 0.0
    %3037 = vmatpush1.msra.mxu0 0.0
    %3038 = vmatprep.subr.mxu0 0.0
    %3039 = vmatpush1.msra.mxu0 0.0
    %3040 = vmatprep.subr.mxu0 0.0
    %3041 = vmatpush1.msra.mxu0 0.0
    %3042 = vmatprep.subr.mxu0 0.0
    %3043 = vmatpush1.msra.mxu0 0.0
    %3044 = vmatprep.subr.mxu0 0.0
    %3045 = vmatpush1.msra.mxu0 0.0
    %3046 = vmatprep.subr.mxu0 0.0
    %3047 = vmatpush1.msra.mxu0 0.0
    %3048 = vmatprep.mubr.f32.mxu0 0.0
    %3049 = vmatmul.mubr.f32.gmra.mrb[0].mxu0 %v2979
    %v3050 = vpop.f32.mrb[0].mxu0
    %v3051 = vadd.f32 0.0, %v3050
    %v3052 = vpop.f32.mrb[0].mxu0
    %3053 = vmatprep.mubr.f32.mxu0 0.0
    %3054 = vmatmul.mubr.f32.gmra.mrb[0].mxu0 %v2982
    %v3055 = vpop.f32.mrb[0].mxu0
    %v3056 = vadd.f32 0.0, %v3055
    %v3057 = vpop.f32.mrb[0].mxu0
    %3058 = vdwg.mxu0
    %v3059 = vld [vmem:[%s2228] sm:$0xff]
    %v3060 = vld [vmem:[%s2228 + $0x8] sm:$0xff]
    %v3061 = vld [vmem:[%s2228 + $0x10] sm:$0xff]
    %v3062 = vld [vmem:[%s2228 + $0x18] sm:$0xff]
    %v3063 = vld [vmem:[%s2228 + $0x20] sm:$0xff]
    %v3064 = vld [vmem:[%s2228 + $0x28] sm:$0xff]
    %v3065 = vld [vmem:[%s2228 + $0x30] sm:$0xff]
    %v3066 = vld [vmem:[%s2228 + $0x38] sm:$0xff]
    %v3067 = vld [vmem:[%s2228 + $0x40] sm:$0xff]
    %v3068 = vld [vmem:[%s2228 + $0x48] sm:$0xff]
    %v3069 = vld [vmem:[%s2228 + $0x50] sm:$0xff]
    %v3070 = vld [vmem:[%s2228 + $0x58] sm:$0xff]
    %v3071 = vld [vmem:[%s2228 + $0x60] sm:$0xff]
    %v3072 = vld [vmem:[%s2228 + $0x68] sm:$0xff]
    %v3073 = vld [vmem:[%s2228 + $0x70] sm:$0xff]
    %v3074 = vld [vmem:[%s2228 + $0x78] sm:$0xff]
    %3075 = vmatprep.subr.mxu0 0.0
    %3076 = vmatpush1.msra.mxu0 %v3059
    %3077 = vmatprep.subr.mxu0 0.0
    %3078 = vmatpush1.msra.mxu0 %v3060
    %3079 = vmatprep.subr.mxu0 0.0
    %3080 = vmatpush1.msra.mxu0 %v3061
    %3081 = vmatprep.subr.mxu0 0.0
    %3082 = vmatpush1.msra.mxu0 %v3062
    %3083 = vmatprep.subr.mxu0 0.0
    %3084 = vmatpush1.msra.mxu0 %v3063
    %3085 = vmatprep.subr.mxu0 0.0
    %3086 = vmatpush1.msra.mxu0 %v3064
    %3087 = vmatprep.subr.mxu0 0.0
    %3088 = vmatpush1.msra.mxu0 %v3065
    %3089 = vmatprep.subr.mxu0 0.0
    %3090 = vmatpush1.msra.mxu0 %v3066
    %3091 = vmatprep.subr.mxu0 0.0
    %3092 = vmatpush1.msra.mxu0 %v3067
    %3093 = vmatprep.subr.mxu0 0.0
    %3094 = vmatpush1.msra.mxu0 %v3068
    %3095 = vmatprep.subr.mxu0 0.0
    %3096 = vmatpush1.msra.mxu0 %v3069
    %3097 = vmatprep.subr.mxu0 0.0
    %3098 = vmatpush1.msra.mxu0 %v3070
    %3099 = vmatprep.subr.mxu0 0.0
    %3100 = vmatpush1.msra.mxu0 %v3071
    %3101 = vmatprep.subr.mxu0 0.0
    %3102 = vmatpush1.msra.mxu0 %v3072
    %3103 = vmatprep.subr.mxu0 0.0
    %3104 = vmatpush1.msra.mxu0 %v3073
    %3105 = vmatprep.subr.mxu0 0.0
    %3106 = vmatpush1.msra.mxu0 %v3074
    %3107 = vmatprep.subr.mxu0 0.0
    %3108 = vmatpush1.msra.mxu0 0.0
    %3109 = vmatprep.subr.mxu0 0.0
    %3110 = vmatpush1.msra.mxu0 0.0
    %3111 = vmatprep.subr.mxu0 0.0
    %3112 = vmatpush1.msra.mxu0 0.0
    %3113 = vmatprep.subr.mxu0 0.0
    %3114 = vmatpush1.msra.mxu0 0.0
    %3115 = vmatprep.subr.mxu0 0.0
    %3116 = vmatpush1.msra.mxu0 0.0
    %3117 = vmatprep.subr.mxu0 0.0
    %3118 = vmatpush1.msra.mxu0 0.0
    %3119 = vmatprep.subr.mxu0 0.0
    %3120 = vmatpush1.msra.mxu0 0.0
    %3121 = vmatprep.subr.mxu0 0.0
    %3122 = vmatpush1.msra.mxu0 0.0
    %3123 = vmatprep.subr.mxu0 0.0
    %3124 = vmatpush1.msra.mxu0 0.0
    %3125 = vmatprep.subr.mxu0 0.0
    %3126 = vmatpush1.msra.mxu0 0.0
    %3127 = vmatprep.subr.mxu0 0.0
    %3128 = vmatpush1.msra.mxu0 0.0
    %3129 = vmatprep.subr.mxu0 0.0
    %3130 = vmatpush1.msra.mxu0 0.0
    %3131 = vmatprep.subr.mxu0 0.0
    %3132 = vmatpush1.msra.mxu0 0.0
    %3133 = vmatprep.subr.mxu0 0.0
    %3134 = vmatpush1.msra.mxu0 0.0
    %3135 = vmatprep.subr.mxu0 0.0
    %3136 = vmatpush1.msra.mxu0 0.0
    %3137 = vmatprep.subr.mxu0 0.0
    %3138 = vmatpush1.msra.mxu0 0.0
    %3139 = vmatprep.mubr.f32.mxu0 0.0
    %3140 = vmatmul.mubr.f32.gmra.mrb[0].mxu0 %v3051
    %v3141 = vpop.f32.mrb[0].mxu0
    %v3142 = vadd.f32 0.0, %v3141
    %v3143 = vpop.f32.mrb[0].mxu0
    %3144 = vmatprep.mubr.f32.mxu0 0.0
    %3145 = vmatmul.mubr.f32.gmra.mrb[0].mxu0 %v3056
    %v3146 = vpop.f32.mrb[0].mxu0
    %v3147 = vadd.f32 0.0, %v3146
    %v3148 = vpop.f32.mrb[0].mxu0
    %3149 = vdwg.mxu0
    %v3150 = vadd.f32 %v2132, %v3142
    %v3151 = vadd.f32 %v2137, %v3147
    %v3152 = vtanh.pop %v3150
    %v3153 = vtanh.pop %v3151
    %v3154 = vmul.f32 %v3152, 0.9
    %v3155 = vmul.f32 %v3153, 0.9
    %v3156 = vmul.f32 %v2974, 0.1
    %v3157 = vmul.f32 %v2975, 0.1
    %v3158 = vadd.f32 %v3154, %v3156
    %v3159 = vadd.f32 %v3155, %v3157
    %v3160 = vsub.f32 %v2974, %v3158
    %v3161 = vsub.f32 %v2975, %v3159
    %v3162 = vmul.f32 %v3160, %v3160
    %v3163 = vmul.f32 %v3161, %v3161
    %v3164 = vadd.f32 %v3162, %v3163
    %3165 = vadd.xlane.f32.xlu0 %v3164
    %v3166 = vpop.xlane.xlu0 %3165
    %v3167 = vrot.slane %v3166, 4
    %v3168 = vadd.f32 %v3166, %v3167
    %v3169 = vrot.slane %v3168, 2
    %v3170 = vadd.f32 %v3168, %v3169
    %v3171 = vrot.slane %v3170, 1
    %v3172 = vadd.f32 %v3170, %v3171
    %s3173 = vtos %v3172
    %s3174 = scalar_select %p2973, 1, 0
    %v3175 = vstv %s3174
    %vm3176 = vcmp.eq.s32.totalorder %v3175, 1
    %v3177 = vsel %vm3176, %v2974, %v3158
    %v3178 = vsel %vm3176, %v2975, %v3159
    %3179 = vst [vmem:[%s2140] sm:$0xff] %v3177
    %3180 = vst [vmem:[%s2140 + $0x8] sm:$0xff] %v3178
    %p3181 = scmp.lt.f32.partialorder %s3173, 1e-10
    %p3182 = por %p2973, %p3181
    %v3183 = vld [vmem:[%s2140] sm:$0xff]
    %v3184 = vld [vmem:[%s2140 + $0x8] sm:$0xff]
    %v3185 = vld [vmem:[#allocation2] sm:$0xff]
    %v3186 = vld [vmem:[#allocation2 + $0x8] sm:$0xff]
    %v3188 = vsel %vm182, %v3185, 0
    %v3191 = vsel %vm182, %v3186, 0
    %3193 = vmatprep.subr.mxu0 0.0
    %3194 = vmatpush1.msra.mxu0 %v3183
    %3195 = vmatprep.subr.mxu0 0.0
    %3196 = vmatpush1.msra.mxu0 %v3184
    %3197 = vmatprep.subr.mxu0 0.0
    %3198 = vmatpush1.msra.mxu0 0.0
    %3199 = vmatprep.subr.mxu0 0.0
    %3200 = vmatpush1.msra.mxu0 0.0
    %3201 = vmatprep.subr.mxu0 0.0
    %3202 = vmatpush1.msra.mxu0 0.0
    %3203 = vmatprep.subr.mxu0 0.0
    %3204 = vmatpush1.msra.mxu0 0.0
    %3205 = vmatprep.subr.mxu0 0.0
    %3206 = vmatpush1.msra.mxu0 0.0
    %3207 = vmatprep.subr.mxu0 0.0
    %3208 = vmatpush1.msra.mxu0 0.0
    %3209 = vmatprep.subr.mxu0 0.0
    %3210 = vmatpush1.msra.mxu0 0.0
    %3211 = vmatprep.subr.mxu0 0.0
    %3212 = vmatpush1.msra.mxu0 0.0
    %3213 = vmatprep.subr.mxu0 0.0
    %3214 = vmatpush1.msra.mxu0 0.0
    %3215 = vmatprep.subr.mxu0 0.0
    %3216 = vmatpush1.msra.mxu0 0.0
    %3217 = vmatprep.subr.mxu0 0.0
    %3218 = vmatpush1.msra.mxu0 0.0
    %3219 = vmatprep.subr.mxu0 0.0
    %3220 = vmatpush1.msra.mxu0 0.0
    %3221 = vmatprep.subr.mxu0 0.0
    %3222 = vmatpush1.msra.mxu0 0.0
    %3223 = vmatprep.subr.mxu0 0.0
    %3224 = vmatpush1.msra.mxu0 0.0
    %3225 = vmatprep.subr.mxu0 0.0
    %3226 = vmatpush1.msra.mxu0 0.0
    %3227 = vmatprep.subr.mxu0 0.0
    %3228 = vmatpush1.msra.mxu0 0.0
    %3229 = vmatprep.subr.mxu0 0.0
    %3230 = vmatpush1.msra.mxu0 0.0
    %3231 = vmatprep.subr.mxu0 0.0
    %3232 = vmatpush1.msra.mxu0 0.0
    %3233 = vmatprep.subr.mxu0 0.0
    %3234 = vmatpush1.msra.mxu0 0.0
    %3235 = vmatprep.subr.mxu0 0.0
    %3236 = vmatpush1.msra.mxu0 0.0
    %3237 = vmatprep.subr.mxu0 0.0
    %3238 = vmatpush1.msra.mxu0 0.0
    %3239 = vmatprep.subr.mxu0 0.0
    %3240 = vmatpush1.msra.mxu0 0.0
    %3241 = vmatprep.subr.mxu0 0.0
    %3242 = vmatpush1.msra.mxu0 0.0
    %3243 = vmatprep.subr.mxu0 0.0
    %3244 = vmatpush1.msra.mxu0 0.0
    %3245 = vmatprep.subr.mxu0 0.0
    %3246 = vmatpush1.msra.mxu0 0.0
    %3247 = vmatprep.subr.mxu0 0.0
    %3248 = vmatpush1.msra.mxu0 0.0
    %3249 = vmatprep.subr.mxu0 0.0
    %3250 = vmatpush1.msra.mxu0 0.0
    %3251 = vmatprep.subr.mxu0 0.0
    %3252 = vmatpush1.msra.mxu0 0.0
    %3253 = vmatprep.subr.mxu0 0.0
    %3254 = vmatpush1.msra.mxu0 0.0
    %3255 = vmatprep.subr.mxu0 0.0
    %3256 = vmatpush1.msra.mxu0 0.0
    %3257 = vmatprep.mubr.f32.mxu0 0.0
    %3258 = vmatmul.mubr.f32.gmra.mrb[0].mxu0 %v3188
    %v3259 = vpop.f32.mrb[0].mxu0
    %v3260 = vadd.f32 0.0, %v3259
    %v3261 = vpop.f32.mrb[0].mxu0
    %3262 = vmatprep.mubr.f32.mxu0 0.0
    %3263 = vmatmul.mubr.f32.gmra.mrb[0].mxu0 %v3191
    %v3264 = vpop.f32.mrb[0].mxu0
    %v3265 = vadd.f32 0.0, %v3264
    %v3266 = vpop.f32.mrb[0].mxu0
    %3267 = vdwg.mxu0
    %v3268 = vld [vmem:[%s2228] sm:$0xff]
    %v3269 = vld [vmem:[%s2228 + $0x8] sm:$0xff]
    %v3270 = vld [vmem:[%s2228 + $0x10] sm:$0xff]
    %v3271 = vld [vmem:[%s2228 + $0x18] sm:$0xff]
    %v3272 = vld [vmem:[%s2228 + $0x20] sm:$0xff]
    %v3273 = vld [vmem:[%s2228 + $0x28] sm:$0xff]
    %v3274 = vld [vmem:[%s2228 + $0x30] sm:$0xff]
    %v3275 = vld [vmem:[%s2228 + $0x38] sm:$0xff]
    %v3276 = vld [vmem:[%s2228 + $0x40] sm:$0xff]
    %v3277 = vld [vmem:[%s2228 + $0x48] sm:$0xff]
    %v3278 = vld [vmem:[%s2228 + $0x50] sm:$0xff]
    %v3279 = vld [vmem:[%s2228 + $0x58] sm:$0xff]
    %v3280 = vld [vmem:[%s2228 + $0x60] sm:$0xff]
    %v3281 = vld [vmem:[%s2228 + $0x68] sm:$0xff]
    %v3282 = vld [vmem:[%s2228 + $0x70] sm:$0xff]
    %v3283 = vld [vmem:[%s2228 + $0x78] sm:$0xff]
    %3284 = vmatprep.subr.mxu0 0.0
    %3285 = vmatpush1.msra.mxu0 %v3268
    %3286 = vmatprep.subr.mxu0 0.0
    %3287 = vmatpush1.msra.mxu0 %v3269
    %3288 = vmatprep.subr.mxu0 0.0
    %3289 = vmatpush1.msra.mxu0 %v3270
    %3290 = vmatprep.subr.mxu0 0.0
    %3291 = vmatpush1.msra.mxu0 %v3271
    %3292 = vmatprep.subr.mxu0 0.0
    %3293 = vmatpush1.msra.mxu0 %v3272
    %3294 = vmatprep.subr.mxu0 0.0
    %3295 = vmatpush1.msra.mxu0 %v3273
    %3296 = vmatprep.subr.mxu0 0.0
    %3297 = vmatpush1.msra.mxu0 %v3274
    %3298 = vmatprep.subr.mxu0 0.0
    %3299 = vmatpush1.msra.mxu0 %v3275
    %3300 = vmatprep.subr.mxu0 0.0
    %3301 = vmatpush1.msra.mxu0 %v3276
    %3302 = vmatprep.subr.mxu0 0.0
    %3303 = vmatpush1.msra.mxu0 %v3277
    %3304 = vmatprep.subr.mxu0 0.0
    %3305 = vmatpush1.msra.mxu0 %v3278
    %3306 = vmatprep.subr.mxu0 0.0
    %3307 = vmatpush1.msra.mxu0 %v3279
    %3308 = vmatprep.subr.mxu0 0.0
    %3309 = vmatpush1.msra.mxu0 %v3280
    %3310 = vmatprep.subr.mxu0 0.0
    %3311 = vmatpush1.msra.mxu0 %v3281
    %3312 = vmatprep.subr.mxu0 0.0
    %3313 = vmatpush1.msra.mxu0 %v3282
    %3314 = vmatprep.subr.mxu0 0.0
    %3315 = vmatpush1.msra.mxu0 %v3283
    %3316 = vmatprep.subr.mxu0 0.0
    %3317 = vmatpush1.msra.mxu0 0.0
    %3318 = vmatprep.subr.mxu0 0.0
    %3319 = vmatpush1.msra.mxu0 0.0
    %3320 = vmatprep.subr.mxu0 0.0
    %3321 = vmatpush1.msra.mxu0 0.0
    %3322 = vmatprep.subr.mxu0 0.0
    %3323 = vmatpush1.msra.mxu0 0.0
    %3324 = vmatprep.subr.mxu0 0.0
    %3325 = vmatpush1.msra.mxu0 0.0
    %3326 = vmatprep.subr.mxu0 0.0
    %3327 = vmatpush1.msra.mxu0 0.0
    %3328 = vmatprep.subr.mxu0 0.0
    %3329 = vmatpush1.msra.mxu0 0.0
    %3330 = vmatprep.subr.mxu0 0.0
    %3331 = vmatpush1.msra.mxu0 0.0
    %3332 = vmatprep.subr.mxu0 0.0
    %3333 = vmatpush1.msra.mxu0 0.0
    %3334 = vmatprep.subr.mxu0 0.0
    %3335 = vmatpush1.msra.mxu0 0.0
    %3336 = vmatprep.subr.mxu0 0.0
    %3337 = vmatpush1.msra.mxu0 0.0
    %3338 = vmatprep.subr.mxu0 0.0
    %3339 = vmatpush1.msra.mxu0 0.0
    %3340 = vmatprep.subr.mxu0 0.0
    %3341 = vmatpush1.msra.mxu0 0.0
    %3342 = vmatprep.subr.mxu0 0.0
    %3343 = vmatpush1.msra.mxu0 0.0
    %3344 = vmatprep.subr.mxu0 0.0
    %3345 = vmatpush1.msra.mxu0 0.0
    %3346 = vmatprep.subr.mxu0 0.0
    %3347 = vmatpush1.msra.mxu0 0.0
    %3348 = vmatprep.mubr.f32.mxu0 0.0
    %3349 = vmatmul.mubr.f32.gmra.mrb[0].mxu0 %v3260
    %v3350 = vpop.f32.mrb[0].mxu0
    %v3351 = vadd.f32 0.0, %v3350
    %v3352 = vpop.f32.mrb[0].mxu0
    %3353 = vmatprep.mubr.f32.mxu0 0.0
    %3354 = vmatmul.mubr.f32.gmra.mrb[0].mxu0 %v3265
    %v3355 = vpop.f32.mrb[0].mxu0
    %v3356 = vadd.f32 0.0, %v3355
    %v3357 = vpop.f32.mrb[0].mxu0
    %3358 = vdwg.mxu0
    %v3359 = vadd.f32 %v2132, %v3351
    %v3360 = vadd.f32 %v2137, %v3356
    %v3361 = vtanh.pop %v3359
    %v3362 = vtanh.pop %v3360
    %v3363 = vmul.f32 %v3361, 0.9
    %v3364 = vmul.f32 %v3362, 0.9
    %v3365 = vmul.f32 %v3183, 0.1
    %v3366 = vmul.f32 %v3184, 0.1
    %v3367 = vadd.f32 %v3363, %v3365
    %v3368 = vadd.f32 %v3364, %v3366
    %v3369 = vsub.f32 %v3183, %v3367
    %v3370 = vsub.f32 %v3184, %v3368
    %v3371 = vmul.f32 %v3369, %v3369
    %v3372 = vmul.f32 %v3370, %v3370
    %v3373 = vadd.f32 %v3371, %v3372
    %3374 = vadd.xlane.f32.xlu0 %v3373
    %v3375 = vpop.xlane.xlu0 %3374
    %v3376 = vrot.slane %v3375, 4
    %v3377 = vadd.f32 %v3375, %v3376
    %v3378 = vrot.slane %v3377, 2
    %v3379 = vadd.f32 %v3377, %v3378
    %v3380 = vrot.slane %v3379, 1
    %v3381 = vadd.f32 %v3379, %v3380
    %s3382 = vtos %v3381
    %s3383 = scalar_select %p3182, 1, 0
    %v3384 = vstv %s3383
    %vm3385 = vcmp.eq.s32.totalorder %v3384, 1
    %v3386 = vsel %vm3385, %v3183, %v3367
    %v3387 = vsel %vm3385, %v3184, %v3368
    %3388 = vst [vmem:[%s2140] sm:$0xff] %v3386
    %3389 = vst [vmem:[%s2140 + $0x8] sm:$0xff] %v3387
    %p3390 = scmp.lt.f32.partialorder %s3382, 1e-10
    %p3391 = por %p3182, %p3390
    %v3392 = vld [vmem:[%s2140] sm:$0xff]
    %v3393 = vld [vmem:[%s2140 + $0x8] sm:$0xff]
    %v3394 = vld [vmem:[#allocation2] sm:$0xff]
    %v3395 = vld [vmem:[#allocation2 + $0x8] sm:$0xff]
    %v3397 = vsel %vm182, %v3394, 0
    %v3400 = vsel %vm182, %v3395, 0
    %3402 = vmatprep.subr.mxu0 0.0
    %3403 = vmatpush1.msra.mxu0 %v3392
    %3404 = vmatprep.subr.mxu0 0.0
    %3405 = vmatpush1.msra.mxu0 %v3393
    %3406 = vmatprep.subr.mxu0 0.0
    %3407 = vmatpush1.msra.mxu0 0.0
    %3408 = vmatprep.subr.mxu0 0.0
    %3409 = vmatpush1.msra.mxu0 0.0
    %3410 = vmatprep.subr.mxu0 0.0
    %3411 = vmatpush1.msra.mxu0 0.0
    %3412 = vmatprep.subr.mxu0 0.0
    %3413 = vmatpush1.msra.mxu0 0.0
    %3414 = vmatprep.subr.mxu0 0.0
    %3415 = vmatpush1.msra.mxu0 0.0
    %3416 = vmatprep.subr.mxu0 0.0
    %3417 = vmatpush1.msra.mxu0 0.0
    %3418 = vmatprep.subr.mxu0 0.0
    %3419 = vmatpush1.msra.mxu0 0.0
    %3420 = vmatprep.subr.mxu0 0.0
    %3421 = vmatpush1.msra.mxu0 0.0
    %3422 = vmatprep.subr.mxu0 0.0
    %3423 = vmatpush1.msra.mxu0 0.0
    %3424 = vmatprep.subr.mxu0 0.0
    %3425 = vmatpush1.msra.mxu0 0.0
    %3426 = vmatprep.subr.mxu0 0.0
    %3427 = vmatpush1.msra.mxu0 0.0
    %3428 = vmatprep.subr.mxu0 0.0
    %3429 = vmatpush1.msra.mxu0 0.0
    %3430 = vmatprep.subr.mxu0 0.0
    %3431 = vmatpush1.msra.mxu0 0.0
    %3432 = vmatprep.subr.mxu0 0.0
    %3433 = vmatpush1.msra.mxu0 0.0
    %3434 = vmatprep.subr.mxu0 0.0
    %3435 = vmatpush1.msra.mxu0 0.0
    %3436 = vmatprep.subr.mxu0 0.0
    %3437 = vmatpush1.msra.mxu0 0.0
    %3438 = vmatprep.subr.mxu0 0.0
    %3439 = vmatpush1.msra.mxu0 0.0
    %3440 = vmatprep.subr.mxu0 0.0
    %3441 = vmatpush1.msra.mxu0 0.0
    %3442 = vmatprep.subr.mxu0 0.0
    %3443 = vmatpush1.msra.mxu0 0.0
    %3444 = vmatprep.subr.mxu0 0.0
    %3445 = vmatpush1.msra.mxu0 0.0
    %3446 = vmatprep.subr.mxu0 0.0
    %3447 = vmatpush1.msra.mxu0 0.0
    %3448 = vmatprep.subr.mxu0 0.0
    %3449 = vmatpush1.msra.mxu0 0.0
    %3450 = vmatprep.subr.mxu0 0.0
    %3451 = vmatpush1.msra.mxu0 0.0
    %3452 = vmatprep.subr.mxu0 0.0
    %3453 = vmatpush1.msra.mxu0 0.0
    %3454 = vmatprep.subr.mxu0 0.0
    %3455 = vmatpush1.msra.mxu0 0.0
    %3456 = vmatprep.subr.mxu0 0.0
    %3457 = vmatpush1.msra.mxu0 0.0
    %3458 = vmatprep.subr.mxu0 0.0
    %3459 = vmatpush1.msra.mxu0 0.0
    %3460 = vmatprep.subr.mxu0 0.0
    %3461 = vmatpush1.msra.mxu0 0.0
    %3462 = vmatprep.subr.mxu0 0.0
    %3463 = vmatpush1.msra.mxu0 0.0
    %3464 = vmatprep.subr.mxu0 0.0
    %3465 = vmatpush1.msra.mxu0 0.0
    %3466 = vmatprep.mubr.f32.mxu0 0.0
    %3467 = vmatmul.mubr.f32.gmra.mrb[0].mxu0 %v3397
    %v3468 = vpop.f32.mrb[0].mxu0
    %v3469 = vadd.f32 0.0, %v3468
    %v3470 = vpop.f32.mrb[0].mxu0
    %3471 = vmatprep.mubr.f32.mxu0 0.0
    %3472 = vmatmul.mubr.f32.gmra.mrb[0].mxu0 %v3400
    %v3473 = vpop.f32.mrb[0].mxu0
    %v3474 = vadd.f32 0.0, %v3473
    %v3475 = vpop.f32.mrb[0].mxu0
    %3476 = vdwg.mxu0
    %v3477 = vld [vmem:[%s2228] sm:$0xff]
    %v3478 = vld [vmem:[%s2228 + $0x8] sm:$0xff]
    %v3479 = vld [vmem:[%s2228 + $0x10] sm:$0xff]
    %v3480 = vld [vmem:[%s2228 + $0x18] sm:$0xff]
    %v3481 = vld [vmem:[%s2228 + $0x20] sm:$0xff]
    %v3482 = vld [vmem:[%s2228 + $0x28] sm:$0xff]
    %v3483 = vld [vmem:[%s2228 + $0x30] sm:$0xff]
    %v3484 = vld [vmem:[%s2228 + $0x38] sm:$0xff]
    %v3485 = vld [vmem:[%s2228 + $0x40] sm:$0xff]
    %v3486 = vld [vmem:[%s2228 + $0x48] sm:$0xff]
    %v3487 = vld [vmem:[%s2228 + $0x50] sm:$0xff]
    %v3488 = vld [vmem:[%s2228 + $0x58] sm:$0xff]
    %v3489 = vld [vmem:[%s2228 + $0x60] sm:$0xff]
    %v3490 = vld [vmem:[%s2228 + $0x68] sm:$0xff]
    %v3491 = vld [vmem:[%s2228 + $0x70] sm:$0xff]
    %v3492 = vld [vmem:[%s2228 + $0x78] sm:$0xff]
    %3493 = vmatprep.subr.mxu0 0.0
    %3494 = vmatpush1.msra.mxu0 %v3477
    %3495 = vmatprep.subr.mxu0 0.0
    %3496 = vmatpush1.msra.mxu0 %v3478
    %3497 = vmatprep.subr.mxu0 0.0
    %3498 = vmatpush1.msra.mxu0 %v3479
    %3499 = vmatprep.subr.mxu0 0.0
    %3500 = vmatpush1.msra.mxu0 %v3480
    %3501 = vmatprep.subr.mxu0 0.0
    %3502 = vmatpush1.msra.mxu0 %v3481
    %3503 = vmatprep.subr.mxu0 0.0
    %3504 = vmatpush1.msra.mxu0 %v3482
    %3505 = vmatprep.subr.mxu0 0.0
    %3506 = vmatpush1.msra.mxu0 %v3483
    %3507 = vmatprep.subr.mxu0 0.0
    %3508 = vmatpush1.msra.mxu0 %v3484
    %3509 = vmatprep.subr.mxu0 0.0
    %3510 = vmatpush1.msra.mxu0 %v3485
    %3511 = vmatprep.subr.mxu0 0.0
    %3512 = vmatpush1.msra.mxu0 %v3486
    %3513 = vmatprep.subr.mxu0 0.0
    %3514 = vmatpush1.msra.mxu0 %v3487
    %3515 = vmatprep.subr.mxu0 0.0
    %3516 = vmatpush1.msra.mxu0 %v3488
    %3517 = vmatprep.subr.mxu0 0.0
    %3518 = vmatpush1.msra.mxu0 %v3489
    %3519 = vmatprep.subr.mxu0 0.0
    %3520 = vmatpush1.msra.mxu0 %v3490
    %3521 = vmatprep.subr.mxu0 0.0
    %3522 = vmatpush1.msra.mxu0 %v3491
    %3523 = vmatprep.subr.mxu0 0.0
    %3524 = vmatpush1.msra.mxu0 %v3492
    %3525 = vmatprep.subr.mxu0 0.0
    %3526 = vmatpush1.msra.mxu0 0.0
    %3527 = vmatprep.subr.mxu0 0.0
    %3528 = vmatpush1.msra.mxu0 0.0
    %3529 = vmatprep.subr.mxu0 0.0
    %3530 = vmatpush1.msra.mxu0 0.0
    %3531 = vmatprep.subr.mxu0 0.0
    %3532 = vmatpush1.msra.mxu0 0.0
    %3533 = vmatprep.subr.mxu0 0.0
    %3534 = vmatpush1.msra.mxu0 0.0
    %3535 = vmatprep.subr.mxu0 0.0
    %3536 = vmatpush1.msra.mxu0 0.0
    %3537 = vmatprep.subr.mxu0 0.0
    %3538 = vmatpush1.msra.mxu0 0.0
    %3539 = vmatprep.subr.mxu0 0.0
    %3540 = vmatpush1.msra.mxu0 0.0
    %3541 = vmatprep.subr.mxu0 0.0
    %3542 = vmatpush1.msra.mxu0 0.0
    %3543 = vmatprep.subr.mxu0 0.0
    %3544 = vmatpush1.msra.mxu0 0.0
    %3545 = vmatprep.subr.mxu0 0.0
    %3546 = vmatpush1.msra.mxu0 0.0
    %3547 = vmatprep.subr.mxu0 0.0
    %3548 = vmatpush1.msra.mxu0 0.0
    %3549 = vmatprep.subr.mxu0 0.0
    %3550 = vmatpush1.msra.mxu0 0.0
    %3551 = vmatprep.subr.mxu0 0.0
    %3552 = vmatpush1.msra.mxu0 0.0
    %3553 = vmatprep.subr.mxu0 0.0
    %3554 = vmatpush1.msra.mxu0 0.0
    %3555 = vmatprep.subr.mxu0 0.0
    %3556 = vmatpush1.msra.mxu0 0.0
    %3557 = vmatprep.mubr.f32.mxu0 0.0
    %3558 = vmatmul.mubr.f32.gmra.mrb[0].mxu0 %v3469
    %v3559 = vpop.f32.mrb[0].mxu0
    %v3560 = vadd.f32 0.0, %v3559
    %v3561 = vpop.f32.mrb[0].mxu0
    %3562 = vmatprep.mubr.f32.mxu0 0.0
    %3563 = vmatmul.mubr.f32.gmra.mrb[0].mxu0 %v3474
    %v3564 = vpop.f32.mrb[0].mxu0
    %v3565 = vadd.f32 0.0, %v3564
    %v3566 = vpop.f32.mrb[0].mxu0
    %3567 = vdwg.mxu0
    %v3568 = vadd.f32 %v2132, %v3560
    %v3569 = vadd.f32 %v2137, %v3565
    %v3570 = vtanh.pop %v3568
    %v3571 = vtanh.pop %v3569
    %v3572 = vmul.f32 %v3570, 0.9
    %v3573 = vmul.f32 %v3571, 0.9
    %v3574 = vmul.f32 %v3392, 0.1
    %v3575 = vmul.f32 %v3393, 0.1
    %v3576 = vadd.f32 %v3572, %v3574
    %v3577 = vadd.f32 %v3573, %v3575
    %v3578 = vsub.f32 %v3392, %v3576
    %v3579 = vsub.f32 %v3393, %v3577
    %v3580 = vmul.f32 %v3578, %v3578
    %v3581 = vmul.f32 %v3579, %v3579
    %v3582 = vadd.f32 %v3580, %v3581
    %3583 = vadd.xlane.f32.xlu0 %v3582
    %v3584 = vpop.xlane.xlu0 %3583
    %v3585 = vrot.slane %v3584, 4
    %v3586 = vadd.f32 %v3584, %v3585
    %v3587 = vrot.slane %v3586, 2
    %v3588 = vadd.f32 %v3586, %v3587
    %v3589 = vrot.slane %v3588, 1
    %v3590 = vadd.f32 %v3588, %v3589
    %s3591 = vtos %v3590
    %s3592 = scalar_select %p3391, 1, 0
    %v3593 = vstv %s3592
    %vm3594 = vcmp.eq.s32.totalorder %v3593, 1
    %v3595 = vsel %vm3594, %v3392, %v3576
    %v3596 = vsel %vm3594, %v3393, %v3577
    %3597 = vst [vmem:[%s2140] sm:$0xff] %v3595
    %3598 = vst [vmem:[%s2140 + $0x8] sm:$0xff] %v3596
    %p3599 = scmp.lt.f32.partialorder %s3591, 1e-10
    %p3600 = por %p3391, %p3599
    %v3601 = vld [vmem:[%s2140] sm:$0xff]
    %v3602 = vld [vmem:[%s2140 + $0x8] sm:$0xff]
    %v3603 = vld [vmem:[#allocation2] sm:$0xff]
    %v3604 = vld [vmem:[#allocation2 + $0x8] sm:$0xff]
    %v3606 = vsel %vm182, %v3603, 0
    %v3609 = vsel %vm182, %v3604, 0
    %3611 = vmatprep.subr.mxu0 0.0
    %3612 = vmatpush1.msra.mxu0 %v3601
    %3613 = vmatprep.subr.mxu0 0.0
    %3614 = vmatpush1.msra.mxu0 %v3602
    %3615 = vmatprep.subr.mxu0 0.0
    %3616 = vmatpush1.msra.mxu0 0.0
    %3617 = vmatprep.subr.mxu0 0.0
    %3618 = vmatpush1.msra.mxu0 0.0
    %3619 = vmatprep.subr.mxu0 0.0
    %3620 = vmatpush1.msra.mxu0 0.0
    %3621 = vmatprep.subr.mxu0 0.0
    %3622 = vmatpush1.msra.mxu0 0.0
    %3623 = vmatprep.subr.mxu0 0.0
    %3624 = vmatpush1.msra.mxu0 0.0
    %3625 = vmatprep.subr.mxu0 0.0
    %3626 = vmatpush1.msra.mxu0 0.0
    %3627 = vmatprep.subr.mxu0 0.0
    %3628 = vmatpush1.msra.mxu0 0.0
    %3629 = vmatprep.subr.mxu0 0.0
    %3630 = vmatpush1.msra.mxu0 0.0
    %3631 = vmatprep.subr.mxu0 0.0
    %3632 = vmatpush1.msra.mxu0 0.0
    %3633 = vmatprep.subr.mxu0 0.0
    %3634 = vmatpush1.msra.mxu0 0.0
    %3635 = vmatprep.subr.mxu0 0.0
    %3636 = vmatpush1.msra.mxu0 0.0
    %3637 = vmatprep.subr.mxu0 0.0
    %3638 = vmatpush1.msra.mxu0 0.0
    %3639 = vmatprep.subr.mxu0 0.0
    %3640 = vmatpush1.msra.mxu0 0.0
    %3641 = vmatprep.subr.mxu0 0.0
    %3642 = vmatpush1.msra.mxu0 0.0
    %3643 = vmatprep.subr.mxu0 0.0
    %3644 = vmatpush1.msra.mxu0 0.0
    %3645 = vmatprep.subr.mxu0 0.0
    %3646 = vmatpush1.msra.mxu0 0.0
    %3647 = vmatprep.subr.mxu0 0.0
    %3648 = vmatpush1.msra.mxu0 0.0
    %3649 = vmatprep.subr.mxu0 0.0
    %3650 = vmatpush1.msra.mxu0 0.0
    %3651 = vmatprep.subr.mxu0 0.0
    %3652 = vmatpush1.msra.mxu0 0.0
    %3653 = vmatprep.subr.mxu0 0.0
    %3654 = vmatpush1.msra.mxu0 0.0
    %3655 = vmatprep.subr.mxu0 0.0
    %3656 = vmatpush1.msra.mxu0 0.0
    %3657 = vmatprep.subr.mxu0 0.0
    %3658 = vmatpush1.msra.mxu0 0.0
    %3659 = vmatprep.subr.mxu0 0.0
    %3660 = vmatpush1.msra.mxu0 0.0
    %3661 = vmatprep.subr.mxu0 0.0
    %3662 = vmatpush1.msra.mxu0 0.0
    %3663 = vmatprep.subr.mxu0 0.0
    %3664 = vmatpush1.msra.mxu0 0.0
    %3665 = vmatprep.subr.mxu0 0.0
    %3666 = vmatpush1.msra.mxu0 0.0
    %3667 = vmatprep.subr.mxu0 0.0
    %3668 = vmatpush1.msra.mxu0 0.0
    %3669 = vmatprep.subr.mxu0 0.0
    %3670 = vmatpush1.msra.mxu0 0.0
    %3671 = vmatprep.subr.mxu0 0.0
    %3672 = vmatpush1.msra.mxu0 0.0
    %3673 = vmatprep.subr.mxu0 0.0
    %3674 = vmatpush1.msra.mxu0 0.0
    %3675 = vmatprep.mubr.f32.mxu0 0.0
    %3676 = vmatmul.mubr.f32.gmra.mrb[0].mxu0 %v3606
    %v3677 = vpop.f32.mrb[0].mxu0
    %v3678 = vadd.f32 0.0, %v3677
    %v3679 = vpop.f32.mrb[0].mxu0
    %3680 = vmatprep.mubr.f32.mxu0 0.0
    %3681 = vmatmul.mubr.f32.gmra.mrb[0].mxu0 %v3609
    %v3682 = vpop.f32.mrb[0].mxu0
    %v3683 = vadd.f32 0.0, %v3682
    %v3684 = vpop.f32.mrb[0].mxu0
    %3685 = vdwg.mxu0
    %v3686 = vld [vmem:[%s2228] sm:$0xff]
    %v3687 = vld [vmem:[%s2228 + $0x8] sm:$0xff]
    %v3688 = vld [vmem:[%s2228 + $0x10] sm:$0xff]
    %v3689 = vld [vmem:[%s2228 + $0x18] sm:$0xff]
    %v3690 = vld [vmem:[%s2228 + $0x20] sm:$0xff]
    %v3691 = vld [vmem:[%s2228 + $0x28] sm:$0xff]
    %v3692 = vld [vmem:[%s2228 + $0x30] sm:$0xff]
    %v3693 = vld [vmem:[%s2228 + $0x38] sm:$0xff]
    %v3694 = vld [vmem:[%s2228 + $0x40] sm:$0xff]
    %v3695 = vld [vmem:[%s2228 + $0x48] sm:$0xff]
    %v3696 = vld [vmem:[%s2228 + $0x50] sm:$0xff]
    %v3697 = vld [vmem:[%s2228 + $0x58] sm:$0xff]
    %v3698 = vld [vmem:[%s2228 + $0x60] sm:$0xff]
    %v3699 = vld [vmem:[%s2228 + $0x68] sm:$0xff]
    %v3700 = vld [vmem:[%s2228 + $0x70] sm:$0xff]
    %v3701 = vld [vmem:[%s2228 + $0x78] sm:$0xff]
    %3702 = vmatprep.subr.mxu0 0.0
    %3703 = vmatpush1.msra.mxu0 %v3686
    %3704 = vmatprep.subr.mxu0 0.0
    %3705 = vmatpush1.msra.mxu0 %v3687
    %3706 = vmatprep.subr.mxu0 0.0
    %3707 = vmatpush1.msra.mxu0 %v3688
    %3708 = vmatprep.subr.mxu0 0.0
    %3709 = vmatpush1.msra.mxu0 %v3689
    %3710 = vmatprep.subr.mxu0 0.0
    %3711 = vmatpush1.msra.mxu0 %v3690
    %3712 = vmatprep.subr.mxu0 0.0
    %3713 = vmatpush1.msra.mxu0 %v3691
    %3714 = vmatprep.subr.mxu0 0.0
    %3715 = vmatpush1.msra.mxu0 %v3692
    %3716 = vmatprep.subr.mxu0 0.0
    %3717 = vmatpush1.msra.mxu0 %v3693
    %3718 = vmatprep.subr.mxu0 0.0
    %3719 = vmatpush1.msra.mxu0 %v3694
    %3720 = vmatprep.subr.mxu0 0.0
    %3721 = vmatpush1.msra.mxu0 %v3695
    %3722 = vmatprep.subr.mxu0 0.0
    %3723 = vmatpush1.msra.mxu0 %v3696
    %3724 = vmatprep.subr.mxu0 0.0
    %3725 = vmatpush1.msra.mxu0 %v3697
    %3726 = vmatprep.subr.mxu0 0.0
    %3727 = vmatpush1.msra.mxu0 %v3698
    %3728 = vmatprep.subr.mxu0 0.0
    %3729 = vmatpush1.msra.mxu0 %v3699
    %3730 = vmatprep.subr.mxu0 0.0
    %3731 = vmatpush1.msra.mxu0 %v3700
    %3732 = vmatprep.subr.mxu0 0.0
    %3733 = vmatpush1.msra.mxu0 %v3701
    %3734 = vmatprep.subr.mxu0 0.0
    %3735 = vmatpush1.msra.mxu0 0.0
    %3736 = vmatprep.subr.mxu0 0.0
    %3737 = vmatpush1.msra.mxu0 0.0
    %3738 = vmatprep.subr.mxu0 0.0
    %3739 = vmatpush1.msra.mxu0 0.0
    %3740 = vmatprep.subr.mxu0 0.0
    %3741 = vmatpush1.msra.mxu0 0.0
    %3742 = vmatprep.subr.mxu0 0.0
    %3743 = vmatpush1.msra.mxu0 0.0
    %3744 = vmatprep.subr.mxu0 0.0
    %3745 = vmatpush1.msra.mxu0 0.0
    %3746 = vmatprep.subr.mxu0 0.0
    %3747 = vmatpush1.msra.mxu0 0.0
    %3748 = vmatprep.subr.mxu0 0.0
    %3749 = vmatpush1.msra.mxu0 0.0
    %3750 = vmatprep.subr.mxu0 0.0
    %3751 = vmatpush1.msra.mxu0 0.0
    %3752 = vmatprep.subr.mxu0 0.0
    %3753 = vmatpush1.msra.mxu0 0.0
    %3754 = vmatprep.subr.mxu0 0.0
    %3755 = vmatpush1.msra.mxu0 0.0
    %3756 = vmatprep.subr.mxu0 0.0
    %3757 = vmatpush1.msra.mxu0 0.0
    %3758 = vmatprep.subr.mxu0 0.0
    %3759 = vmatpush1.msra.mxu0 0.0
    %3760 = vmatprep.subr.mxu0 0.0
    %3761 = vmatpush1.msra.mxu0 0.0
    %3762 = vmatprep.subr.mxu0 0.0
    %3763 = vmatpush1.msra.mxu0 0.0
    %3764 = vmatprep.subr.mxu0 0.0
    %3765 = vmatpush1.msra.mxu0 0.0
    %3766 = vmatprep.mubr.f32.mxu0 0.0
    %3767 = vmatmul.mubr.f32.gmra.mrb[0].mxu0 %v3678
    %v3768 = vpop.f32.mrb[0].mxu0
    %v3769 = vadd.f32 0.0, %v3768
    %v3770 = vpop.f32.mrb[0].mxu0
    %3771 = vmatprep.mubr.f32.mxu0 0.0
    %3772 = vmatmul.mubr.f32.gmra.mrb[0].mxu0 %v3683
    %v3773 = vpop.f32.mrb[0].mxu0
    %v3774 = vadd.f32 0.0, %v3773
    %v3775 = vpop.f32.mrb[0].mxu0
    %3776 = vdwg.mxu0
    %v3777 = vadd.f32 %v2132, %v3769
    %v3778 = vadd.f32 %v2137, %v3774
    %v3779 = vtanh.pop %v3777
    %v3780 = vtanh.pop %v3778
    %v3781 = vmul.f32 %v3779, 0.9
    %v3782 = vmul.f32 %v3780, 0.9
    %v3783 = vmul.f32 %v3601, 0.1
    %v3784 = vmul.f32 %v3602, 0.1
    %v3785 = vadd.f32 %v3781, %v3783
    %v3786 = vadd.f32 %v3782, %v3784
    %v3787 = vsub.f32 %v3601, %v3785
    %v3788 = vsub.f32 %v3602, %v3786
    %v3789 = vmul.f32 %v3787, %v3787
    %v3790 = vmul.f32 %v3788, %v3788
    %v3791 = vadd.f32 %v3789, %v3790
    %3792 = vadd.xlane.f32.xlu0 %v3791
    %v3793 = vpop.xlane.xlu0 %3792
    %v3794 = vrot.slane %v3793, 4
    %v3795 = vadd.f32 %v3793, %v3794
    %v3796 = vrot.slane %v3795, 2
    %v3797 = vadd.f32 %v3795, %v3796
    %v3798 = vrot.slane %v3797, 1
    %v3799 = vadd.f32 %v3797, %v3798
    %s3800 = vtos %v3799
    %s3801 = scalar_select %p3600, 1, 0
    %v3802 = vstv %s3801
    %vm3803 = vcmp.eq.s32.totalorder %v3802, 1
    %v3804 = vsel %vm3803, %v3601, %v3785
    %v3805 = vsel %vm3803, %v3602, %v3786
    %3806 = vst [vmem:[%s2140] sm:$0xff] %v3804
    %3807 = vst [vmem:[%s2140 + $0x8] sm:$0xff] %v3805
    %p3808 = scmp.lt.f32.partialorder %s3800, 1e-10
    %p3809 = por %p3600, %p3808
    %v3810 = vld [vmem:[%s2140] sm:$0xff]
    %v3811 = vld [vmem:[%s2140 + $0x8] sm:$0xff]
    %v3812 = vld [vmem:[#allocation2] sm:$0xff]
    %v3813 = vld [vmem:[#allocation2 + $0x8] sm:$0xff]
    %v3815 = vsel %vm182, %v3812, 0
    %v3818 = vsel %vm182, %v3813, 0
    %3820 = vmatprep.subr.mxu0 0.0
    %3821 = vmatpush1.msra.mxu0 %v3810
    %3822 = vmatprep.subr.mxu0 0.0
    %3823 = vmatpush1.msra.mxu0 %v3811
    %3824 = vmatprep.subr.mxu0 0.0
    %3825 = vmatpush1.msra.mxu0 0.0
    %3826 = vmatprep.subr.mxu0 0.0
    %3827 = vmatpush1.msra.mxu0 0.0
    %3828 = vmatprep.subr.mxu0 0.0
    %3829 = vmatpush1.msra.mxu0 0.0
    %3830 = vmatprep.subr.mxu0 0.0
    %3831 = vmatpush1.msra.mxu0 0.0
    %3832 = vmatprep.subr.mxu0 0.0
    %3833 = vmatpush1.msra.mxu0 0.0
    %3834 = vmatprep.subr.mxu0 0.0
    %3835 = vmatpush1.msra.mxu0 0.0
    %3836 = vmatprep.subr.mxu0 0.0
    %3837 = vmatpush1.msra.mxu0 0.0
    %3838 = vmatprep.subr.mxu0 0.0
    %3839 = vmatpush1.msra.mxu0 0.0
    %3840 = vmatprep.subr.mxu0 0.0
    %3841 = vmatpush1.msra.mxu0 0.0
    %3842 = vmatprep.subr.mxu0 0.0
    %3843 = vmatpush1.msra.mxu0 0.0
    %3844 = vmatprep.subr.mxu0 0.0
    %3845 = vmatpush1.msra.mxu0 0.0
    %3846 = vmatprep.subr.mxu0 0.0
    %3847 = vmatpush1.msra.mxu0 0.0
    %3848 = vmatprep.subr.mxu0 0.0
    %3849 = vmatpush1.msra.mxu0 0.0
    %3850 = vmatprep.subr.mxu0 0.0
    %3851 = vmatpush1.msra.mxu0 0.0
    %3852 = vmatprep.subr.mxu0 0.0
    %3853 = vmatpush1.msra.mxu0 0.0
    %3854 = vmatprep.subr.mxu0 0.0
    %3855 = vmatpush1.msra.mxu0 0.0
    %3856 = vmatprep.subr.mxu0 0.0
    %3857 = vmatpush1.msra.mxu0 0.0
    %3858 = vmatprep.subr.mxu0 0.0
    %3859 = vmatpush1.msra.mxu0 0.0
    %3860 = vmatprep.subr.mxu0 0.0
    %3861 = vmatpush1.msra.mxu0 0.0
    %3862 = vmatprep.subr.mxu0 0.0
    %3863 = vmatpush1.msra.mxu0 0.0
    %3864 = vmatprep.subr.mxu0 0.0
    %3865 = vmatpush1.msra.mxu0 0.0
    %3866 = vmatprep.subr.mxu0 0.0
    %3867 = vmatpush1.msra.mxu0 0.0
    %3868 = vmatprep.subr.mxu0 0.0
    %3869 = vmatpush1.msra.mxu0 0.0
    %3870 = vmatprep.subr.mxu0 0.0
    %3871 = vmatpush1.msra.mxu0 0.0
    %3872 = vmatprep.subr.mxu0 0.0
    %3873 = vmatpush1.msra.mxu0 0.0
    %3874 = vmatprep.subr.mxu0 0.0
    %3875 = vmatpush1.msra.mxu0 0.0
    %3876 = vmatprep.subr.mxu0 0.0
    %3877 = vmatpush1.msra.mxu0 0.0
    %3878 = vmatprep.subr.mxu0 0.0
    %3879 = vmatpush1.msra.mxu0 0.0
    %3880 = vmatprep.subr.mxu0 0.0
    %3881 = vmatpush1.msra.mxu0 0.0
    %3882 = vmatprep.subr.mxu0 0.0
    %3883 = vmatpush1.msra.mxu0 0.0
    %3884 = vmatprep.mubr.f32.mxu0 0.0
    %3885 = vmatmul.mubr.f32.gmra.mrb[0].mxu0 %v3815
    %v3886 = vpop.f32.mrb[0].mxu0
    %v3887 = vadd.f32 0.0, %v3886
    %v3888 = vpop.f32.mrb[0].mxu0
    %3889 = vmatprep.mubr.f32.mxu0 0.0
    %3890 = vmatmul.mubr.f32.gmra.mrb[0].mxu0 %v3818
    %v3891 = vpop.f32.mrb[0].mxu0
    %v3892 = vadd.f32 0.0, %v3891
    %v3893 = vpop.f32.mrb[0].mxu0
    %3894 = vdwg.mxu0
    %v3895 = vld [vmem:[%s2228] sm:$0xff]
    %v3896 = vld [vmem:[%s2228 + $0x8] sm:$0xff]
    %v3897 = vld [vmem:[%s2228 + $0x10] sm:$0xff]
    %v3898 = vld [vmem:[%s2228 + $0x18] sm:$0xff]
    %v3899 = vld [vmem:[%s2228 + $0x20] sm:$0xff]
    %v3900 = vld [vmem:[%s2228 + $0x28] sm:$0xff]
    %v3901 = vld [vmem:[%s2228 + $0x30] sm:$0xff]
    %v3902 = vld [vmem:[%s2228 + $0x38] sm:$0xff]
    %v3903 = vld [vmem:[%s2228 + $0x40] sm:$0xff]
    %v3904 = vld [vmem:[%s2228 + $0x48] sm:$0xff]
    %v3905 = vld [vmem:[%s2228 + $0x50] sm:$0xff]
    %v3906 = vld [vmem:[%s2228 + $0x58] sm:$0xff]
    %v3907 = vld [vmem:[%s2228 + $0x60] sm:$0xff]
    %v3908 = vld [vmem:[%s2228 + $0x68] sm:$0xff]
    %v3909 = vld [vmem:[%s2228 + $0x70] sm:$0xff]
    %v3910 = vld [vmem:[%s2228 + $0x78] sm:$0xff]
    %3911 = vmatprep.subr.mxu0 0.0
    %3912 = vmatpush1.msra.mxu0 %v3895
    %3913 = vmatprep.subr.mxu0 0.0
    %3914 = vmatpush1.msra.mxu0 %v3896
    %3915 = vmatprep.subr.mxu0 0.0
    %3916 = vmatpush1.msra.mxu0 %v3897
    %3917 = vmatprep.subr.mxu0 0.0
    %3918 = vmatpush1.msra.mxu0 %v3898
    %3919 = vmatprep.subr.mxu0 0.0
    %3920 = vmatpush1.msra.mxu0 %v3899
    %3921 = vmatprep.subr.mxu0 0.0
    %3922 = vmatpush1.msra.mxu0 %v3900
    %3923 = vmatprep.subr.mxu0 0.0
    %3924 = vmatpush1.msra.mxu0 %v3901
    %3925 = vmatprep.subr.mxu0 0.0
    %3926 = vmatpush1.msra.mxu0 %v3902
    %3927 = vmatprep.subr.mxu0 0.0
    %3928 = vmatpush1.msra.mxu0 %v3903
    %3929 = vmatprep.subr.mxu0 0.0
    %3930 = vmatpush1.msra.mxu0 %v3904
    %3931 = vmatprep.subr.mxu0 0.0
    %3932 = vmatpush1.msra.mxu0 %v3905
    %3933 = vmatprep.subr.mxu0 0.0
    %3934 = vmatpush1.msra.mxu0 %v3906
    %3935 = vmatprep.subr.mxu0 0.0
    %3936 = vmatpush1.msra.mxu0 %v3907
    %3937 = vmatprep.subr.mxu0 0.0
    %3938 = vmatpush1.msra.mxu0 %v3908
    %3939 = vmatprep.subr.mxu0 0.0
    %3940 = vmatpush1.msra.mxu0 %v3909
    %3941 = vmatprep.subr.mxu0 0.0
    %3942 = vmatpush1.msra.mxu0 %v3910
    %3943 = vmatprep.subr.mxu0 0.0
    %3944 = vmatpush1.msra.mxu0 0.0
    %3945 = vmatprep.subr.mxu0 0.0
    %3946 = vmatpush1.msra.mxu0 0.0
    %3947 = vmatprep.subr.mxu0 0.0
    %3948 = vmatpush1.msra.mxu0 0.0
    %3949 = vmatprep.subr.mxu0 0.0
    %3950 = vmatpush1.msra.mxu0 0.0
    %3951 = vmatprep.subr.mxu0 0.0
    %3952 = vmatpush1.msra.mxu0 0.0
    %3953 = vmatprep.subr.mxu0 0.0
    %3954 = vmatpush1.msra.mxu0 0.0
    %3955 = vmatprep.subr.mxu0 0.0
    %3956 = vmatpush1.msra.mxu0 0.0
    %3957 = vmatprep.subr.mxu0 0.0
    %3958 = vmatpush1.msra.mxu0 0.0
    %3959 = vmatprep.subr.mxu0 0.0
    %3960 = vmatpush1.msra.mxu0 0.0
    %3961 = vmatprep.subr.mxu0 0.0
    %3962 = vmatpush1.msra.mxu0 0.0
    %3963 = vmatprep.subr.mxu0 0.0
    %3964 = vmatpush1.msra.mxu0 0.0
    %3965 = vmatprep.subr.mxu0 0.0
    %3966 = vmatpush1.msra.mxu0 0.0
    %3967 = vmatprep.subr.mxu0 0.0
    %3968 = vmatpush1.msra.mxu0 0.0
    %3969 = vmatprep.subr.mxu0 0.0
    %3970 = vmatpush1.msra.mxu0 0.0
    %3971 = vmatprep.subr.mxu0 0.0
    %3972 = vmatpush1.msra.mxu0 0.0
    %3973 = vmatprep.subr.mxu0 0.0
    %3974 = vmatpush1.msra.mxu0 0.0
    %3975 = vmatprep.mubr.f32.mxu0 0.0
    %3976 = vmatmul.mubr.f32.gmra.mrb[0].mxu0 %v3887
    %v3977 = vpop.f32.mrb[0].mxu0
    %v3978 = vadd.f32 0.0, %v3977
    %v3979 = vpop.f32.mrb[0].mxu0
    %3980 = vmatprep.mubr.f32.mxu0 0.0
    %3981 = vmatmul.mubr.f32.gmra.mrb[0].mxu0 %v3892
    %v3982 = vpop.f32.mrb[0].mxu0
    %v3983 = vadd.f32 0.0, %v3982
    %v3984 = vpop.f32.mrb[0].mxu0
    %3985 = vdwg.mxu0
    %v3986 = vadd.f32 %v2132, %v3978
    %v3987 = vadd.f32 %v2137, %v3983
    %v3988 = vtanh.pop %v3986
    %v3989 = vtanh.pop %v3987
    %v3990 = vmul.f32 %v3988, 0.9
    %v3991 = vmul.f32 %v3989, 0.9
    %v3992 = vmul.f32 %v3810, 0.1
    %v3993 = vmul.f32 %v3811, 0.1
    %v3994 = vadd.f32 %v3990, %v3992
    %v3995 = vadd.f32 %v3991, %v3993
    %s3996 = scalar_select %p3809, 1, 0
    %v3997 = vstv %s3996
    %vm3998 = vcmp.eq.s32.totalorder %v3997, 1
    %v3999 = vsel %vm3998, %v3810, %v3994
    %v4000 = vsel %vm3998, %v3811, %v3995
    %4001 = vst [vmem:[%s2140] sm:$0xff] %v3999
    %4002 = vst [vmem:[%s2140 + $0x8] sm:$0xff] %v4000
    // Predicated region
    $region38: #{tpu_custom_call.1} parent=1 // pred_check
      _
    $region39: #{tpu_custom_call.1} parent=1 // pred_check_branch
      %4004 = sbr.rel (0) target = $region41
    $region40: #{tpu_custom_call.1} parent=1 // pred_region
      %s4006 = ssub.s32 512, 512
      %4007 = vsyncadd [#allocation4], %s4006
      %s4008 = sshll.u32 [#allocation10], 4
      %s4009 = int_to_ptr.vmem [resolvable:$true] %s4008
      %4014 = dma.vmem_to_hbm [thread:$0]  %s4009, 512, %s5, [#allocation4], 128, 128, 8
    $region41: #{tpu_custom_call.1} parent=1 // pred_fallthru
      _
    // Predicated region
    $region42: #{tpu_custom_call.1} parent=1 // pred_check
      _
    $region43: #{tpu_custom_call.1} parent=1 // pred_check_branch
      %4016 = sbr.rel (0) target = $region45
    $region44: #{tpu_custom_call.1} parent=1 // pred_region
      %4017 = dma.done [#allocation4], 512
    $region45: #{tpu_custom_call.1} parent=1 // pred_fallthru
      _
    %4018 = vsyncpa [#allocation3], 1
    %4019 = vsyncpa [#allocation6], 1
    %4020 = vsyncpa [#allocation9], 1
    %4021 = vsyncpa [#allocation4], 1

</llo_original>
